<compile_context>
chip_gen: v7x
topology: tpu7x:2x2x1
jax: 0.10.0
libtpu: 0.0.40
codegen_flags: <defaults>
</compile_context>

<pallas_src>
import jax
import jax.numpy as jnp
from jax.experimental import pallas as pl
from jax.experimental.pallas import tpu as pltpu


# ----------------------------- Pallas kernel --------------------------------

def inception_a_kernel(p_ref,
                       w12_ref, sh12_ref,
                       w31_ref, sh31_ref, w32_ref, sh32_ref,
                       w41_ref, sh41_ref, w42_ref, sh42_ref,
                       w43_ref, sh43_ref,
                       o_ref,
                       acc12_ref, acc3_ref, acc4_ref):
    """Whole InceptionA block for one tile of output rows (VMEM-resident)."""
    f32 = jnp.float32
    bf16 = jnp.bfloat16
    tm = o_ref.shape[0]

    # Per-tap-shared 1x1 weights (BN scale already folded, bf16 MXU operands).
    w31 = w31_ref[...]
    w41 = w41_ref[...]
    w42 = w42_ref[...]
    # Hoisted broadcasts of the per-tap shifts (conv bias folded into BN shift).
    b31 = jnp.broadcast_to(sh31_ref[...], (tm, w31.shape[1]))
    b41 = jnp.broadcast_to(sh41_ref[...], (tm, w41.shape[1]))
    b42 = jnp.broadcast_to(sh42_ref[...], (tm, w42.shape[1]))

    acc12_ref[...] = jnp.zeros_like(acc12_ref)
    acc3_ref[...] = jnp.zeros_like(acc3_ref)
    acc4_ref[...] = jnp.zeros_like(acc4_ref)

    # Unrolled loop over the 9 window taps: every matmul is dense (no
    # structural zeros); weight/tap slices are leading-dim indices (cheap).
    for j in range(9):
        pj = p_ref[j]                                            # (tm, Cin) bf16

        # branches 1+2 (avgpool folded into w12): per-tap accumulation.
        acc12_ref[...] += jnp.dot(pj, w12_ref[j],
                                  preferred_element_type=f32)

        # branch 3: 1x1 (shared weight) -> ReLU -> tap-slice of the 3x3 conv.
        t3 = jnp.dot(pj, w31, preferred_element_type=f32)
        t3 = jnp.maximum(t3 + b31, 0.0).astype(bf16)             # (tm, 64)
        acc3_ref[...] += jnp.dot(t3, w32_ref[j],
                                 preferred_element_type=f32)

        # branch 4: 1x1 -> 1x1 (both shared) -> tap-slice of the 3x3 conv.
        t4 = jnp.dot(pj, w41, preferred_element_type=f32)
        t4 = jnp.maximum(t4 + b41, 0.0).astype(bf16)             # (tm, 64)
        t4 = jnp.dot(t4, w42, preferred_element_type=f32)
        t4 = jnp.maximum(t4 + b42, 0.0).astype(bf16)             # (tm, 96)
        acc4_ref[...] += jnp.dot(t4, w43_ref[j],
                                 preferred_element_type=f32)

    # Epilogue: shift + ReLU, one lane-dense (tm, 384 = 3*128) store.
    x12 = jnp.maximum(acc12_ref[...] + sh12_ref[...], 0.0).astype(o_ref.dtype)
    x3 = jnp.maximum(acc3_ref[...] + sh32_ref[...], 0.0).astype(o_ref.dtype)
    x4 = jnp.maximum(acc4_ref[...] + sh43_ref[...], 0.0).astype(o_ref.dtype)
    o_ref[...] = jnp.concatenate([x12, x3, x4], axis=1)


# ----------------------------- Pallas wrapper --------------------------------

_ARG_ORDER = ("w12", "sh12", "w31", "sh31", "w32", "sh32",
              "w41", "sh41", "w42", "sh42", "w43", "sh43")


def inception_a_pallas(patches, params, *, tm=None):
    """patches: (9, M, Cin) bf16 per-tap views.  Returns (M, 384) bf16."""
    _, m, cin = patches.shape
    if tm is None:
        # Big tiles for MXU occupancy, but keep >=2 grid steps (v7x has 2 TCs).
        half = (m + 1) // 2
        tm = min(256, max(8, ((half + 7) // 8) * 8))
    n_blk = pl.cdiv(m, tm)
    m_pad = n_blk * tm
    if m_pad != m:
        # Pad M to a multiple of tm -> full blocks, no masked DMAs, no garbage
        # rows on the tail block.
        patches = jnp.pad(patches, ((0, 0), (0, m_pad - m), (0, 0)))

    w_args = [params[name] for name in _ARG_ORDER]
    in_specs = [pl.BlockSpec((9, tm, cin), lambda i: (0, i, 0))]
    in_specs += [pl.BlockSpec(a.shape, lambda i, nd=a.ndim: (0,) * nd)
                 for a in w_args]

    out = pl.pallas_call(
        inception_a_kernel,
        out_shape=jax.ShapeDtypeStruct((m_pad, 384), jnp.bfloat16),
        grid=(n_blk,),
        in_specs=in_specs,
        out_specs=pl.BlockSpec((tm, 384), lambda i: (i, 0)),
        scratch_shapes=[pltpu.VMEM((tm, 192), jnp.float32),
                        pltpu.VMEM((tm, 96), jnp.float32),
                        pltpu.VMEM((tm, 96), jnp.float32)],
        compiler_params=pltpu.CompilerParams(
            dimension_semantics=("parallel",)),
    )(patches, *w_args)
    return out[:m]


# ------------------------------- glue (JAX) ----------------------------------

def extract_patches_3x3_s2(x_nhwc):
    """Per-tap views for kernel=3, stride=2, pad=0 -> (9, N*Ho*Wo, C), Ho, Wo."""
    n, h, w, c = x_nhwc.shape
    ho = (h - 3) // 2 + 1
    wo = (w - 3) // 2 + 1
    taps = [x_nhwc[:, kh:kh + 2 * ho:2, kw:kw + 2 * wo:2, :].reshape(n * ho * wo, c)
            for kh in range(3) for kw in range(3)]
    return jnp.stack(taps, axis=0), ho, wo


def conv_w_to_mat(w_oihw):
    """PyTorch (Cout, Cin, kh, kw) -> matmul matrix (kh*kw*Cin, Cout)."""
    cout, cin, kh, kw = w_oihw.shape
    return jnp.transpose(w_oihw, (2, 3, 1, 0)).reshape(kh * kw * cin, cout)


# ---------------------------- parameter init ---------------------------------

def init_conv(key, cout, cin, k):
    kw_, kb_ = jax.random.split(key)
    fan_in = cin * k * k
    bound = 1.0 / jnp.sqrt(fan_in)
    w = jax.random.uniform(kw_, (cout, cin, k, k), jnp.float32, -bound, bound)
    b = jax.random.uniform(kb_, (cout,), jnp.float32, -bound, bound)
    return w, b


def init_bn(key, c, eps=1e-5):
    k1, k2, k3, k4 = jax.random.split(key, 4)
    gamma = jax.random.uniform(k1, (c,), jnp.float32, 0.5, 1.5)
    beta = 0.1 * jax.random.normal(k2, (c,), jnp.float32)
    mean = 0.1 * jax.random.normal(k3, (c,), jnp.float32)
    var = jax.random.uniform(k4, (c,), jnp.float32, 0.5, 1.5)
    scale = gamma / jnp.sqrt(var + eps)
    shift = beta - mean * scale
    return scale, shift


_CONV_SPECS = {
    "11": (96, None, 1), "21": (96, None, 3),
    "31": (64, None, 1), "32": (96, 64, 3),
    "41": (64, None, 1), "42": (96, 64, 1), "43": (96, 96, 3),
}


def make_params(n_features, key):
    """Returns (kernel_params, raw_params)."""
    names = list(_CONV_SPECS)
    keys = jax.random.split(key, 2 * len(names))
    raw = {}
    for i, name in enumerate(names):
        cout, cin, k = _CONV_SPECS[name]
        cin = n_features if cin is None else cin
        w, b = init_conv(keys[i], cout, cin, k)
        scale, shift = init_bn(keys[len(names) + i], cout)
        raw[name] = dict(w=w, b=b, scale=scale, shift=shift)

    def wmat(name):
        # BN scale folded into the conv weight (in f32, before any bf16 cast).
        r = raw[name]
        return conv_w_to_mat(r["w"]) * r["scale"][None, :]

    def shift_of(name):
        # Conv bias folded into the BN shift.
        r = raw[name]
        return (r["b"] * r["scale"] + r["shift"])[None, :].astype(jnp.float32)

    cin = n_features
    # Branches 1+2: avgpool is linear -> fold the 1/9 mean into the per-tap
    # weight (same weight every tap); concat with the per-tap rows of conv21.
    w11 = wmat("11") / 9.0                                        # (Cin, 96)
    w21 = wmat("21").reshape(9, cin, 96)                          # (9, Cin, 96)
    w12 = jnp.concatenate(
        [jnp.broadcast_to(w11[None], (9, cin, 96)), w21], axis=2)  # (9, Cin, 192)
    sh12 = jnp.concatenate([shift_of("11"), shift_of("21")], axis=1)  # (1, 192)

    p = {
        "w12": w12, "sh12": sh12,
        "w31": wmat("31"), "sh31": shift_of("31"),                # (Cin, 64)
        "w32": wmat("32").reshape(9, 64, 96), "sh32": shift_of("32"),
        "w41": wmat("41"), "sh41": shift_of("41"),                # (Cin, 64)
        "w42": wmat("42"), "sh42": shift_of("42"),                # (64, 96)
        "w43": wmat("43").reshape(9, 96, 96), "sh43": shift_of("43"),
    }
    for name in ("w12", "w31", "w32", "w41", "w42", "w43"):
        p[name] = p[name].astype(jnp.bfloat16)                    # bf16 MXU operands
    return p, raw


# ------------------------------ forward pass ---------------------------------

def inception_a_forward(x_nchw, params):
    x = jnp.transpose(x_nchw, (0, 2, 3, 1)).astype(jnp.bfloat16)  # NHWC, bf16
    n = x.shape[0]
    patches, ho, wo = extract_patches_3x3_s2(x)                   # (9, M, Cin)
    out = inception_a_pallas(patches, params)                     # (M, 384) bf16
    out = out.reshape(n, ho, wo, 384)
    return jnp.transpose(out, (0, 3, 1, 2))                       # NCHW


# --------------------------- pure-JAX reference ------------------------------

def _ref_avgpool3x3s2(x):
    n, h, w, c = x.shape
    ho, wo = (h - 3) // 2 + 1, (w - 3) // 2 + 1
    acc = jnp.zeros((n, ho, wo, c), jnp.float32)
    for kh in range(3):
        for kw in range(3):
            acc = acc + x[:, kh:kh + 2 * ho:2, kw:kw + 2 * wo:2, :]
    return acc / 9.0


def inception_a_reference(x_nchw, raw):
    x = jnp.transpose(x_nchw, (0, 2, 3, 1)).astype(jnp.float32)

    def cbr(h, name, stride=1):
        r = raw[name]
        w_hwio = jnp.transpose(r["w"], (2, 3, 1, 0))
        y = jax.lax.conv_general_dilated(
            h, w_hwio, (stride, stride), "VALID",
            dimension_numbers=("NHWC", "HWIO", "NHWC"))
        y = (y + r["b"]) * r["scale"] + r["shift"]
        return jnp.maximum(y, 0.0)

    x1 = cbr(_ref_avgpool3x3s2(x), "11")
    x2 = cbr(x, "21", stride=2)
    x3 = cbr(cbr(x, "31"), "32", stride=2)
    x4 = cbr(cbr(cbr(x, "41"), "42"), "43", stride=2)
    out = jnp.concatenate([x1, x2, x3, x4], axis=-1)
    return jnp.transpose(out, (0, 3, 1, 2))


# ---------------------------------- main --------------------------------------

if __name__ == "__main__":
    n_features = 4
    key = jax.random.PRNGKey(0)
    kx, kp = jax.random.split(key)
    x = jax.random.normal(kx, (2, n_features, 16, 16), jnp.float32)  # NCHW
    params, raw = make_params(n_features, kp)

    fwd = jax.jit(inception_a_forward)
    out = jax.block_until_ready(fwd(x, params))

    assert out.shape == (2, 384, 7, 7), out.shape
    assert bool(jnp.all(jnp.isfinite(out)))

    ref = jax.block_until_ready(jax.jit(inception_a_reference)(x, raw))
    out_f32 = out.astype(jnp.float32)
    err = float(jnp.max(jnp.abs(out_f32 - ref) / (1.0 + jnp.abs(ref))))
    assert err < 0.1, f"mismatch vs reference: max scaled err {err}"

    print("KERNEL_OK")
</pallas_src>

<mosaic_0001>
module attributes {stable_mosaic.version = 11 : i64} {
  func.func @inception_a_kernel(%arg0: i32, %arg1: memref<9x56x4xbf16, #tpu.memory_space<vmem>>, %arg2: memref<9x4x192xbf16, #tpu.memory_space<vmem>>, %arg3: memref<1x192xf32, #tpu.memory_space<vmem>>, %arg4: memref<4x64xbf16, #tpu.memory_space<vmem>>, %arg5: memref<1x64xf32, #tpu.memory_space<vmem>>, %arg6: memref<9x64x96xbf16, #tpu.memory_space<vmem>>, %arg7: memref<1x96xf32, #tpu.memory_space<vmem>>, %arg8: memref<4x64xbf16, #tpu.memory_space<vmem>>, %arg9: memref<1x64xf32, #tpu.memory_space<vmem>>, %arg10: memref<64x96xbf16, #tpu.memory_space<vmem>>, %arg11: memref<1x96xf32, #tpu.memory_space<vmem>>, %arg12: memref<9x96x96xbf16, #tpu.memory_space<vmem>>, %arg13: memref<1x96xf32, #tpu.memory_space<vmem>>, %arg14: memref<56x384xbf16, #tpu.memory_space<vmem>>, %arg15: memref<56x192xf32, #tpu.memory_space<vmem>>, %arg16: memref<56x96xf32, #tpu.memory_space<vmem>>, %arg17: memref<56x96xf32, #tpu.memory_space<vmem>>) attributes {dimension_semantics = [#tpu.dimension_semantics<parallel>], iteration_bounds = array<i64: 2>, scalar_prefetch = 0 : i64, scratch_operands = 3 : i64, tpu.core_type = #tpu.core_type<tc>, window_params = [{transform_indices = @transform_0, window_bounds = array<i64: 9, 56, 4>}, {pipeline_mode = #tpu.pipeline_mode<synchronous>, transform_indices = @transform_1, window_bounds = array<i64: 9, 4, 192>}, {pipeline_mode = #tpu.pipeline_mode<synchronous>, transform_indices = @transform_2, window_bounds = array<i64: 1, 192>}, {pipeline_mode = #tpu.pipeline_mode<synchronous>, transform_indices = @transform_3, window_bounds = array<i64: 4, 64>}, {pipeline_mode = #tpu.pipeline_mode<synchronous>, transform_indices = @transform_4, window_bounds = array<i64: 1, 64>}, {pipeline_mode = #tpu.pipeline_mode<synchronous>, transform_indices = @transform_5, window_bounds = array<i64: 9, 64, 96>}, {pipeline_mode = #tpu.pipeline_mode<synchronous>, transform_indices = @transform_6, window_bounds = array<i64: 1, 96>}, {pipeline_mode = #tpu.pipeline_mode<synchronous>, transform_indices = @transform_7, window_bounds = array<i64: 4, 64>}, {pipeline_mode = #tpu.pipeline_mode<synchronous>, transform_indices = @transform_8, window_bounds = array<i64: 1, 64>}, {pipeline_mode = #tpu.pipeline_mode<synchronous>, transform_indices = @transform_9, window_bounds = array<i64: 64, 96>}, {pipeline_mode = #tpu.pipeline_mode<synchronous>, transform_indices = @transform_10, window_bounds = array<i64: 1, 96>}, {pipeline_mode = #tpu.pipeline_mode<synchronous>, transform_indices = @transform_11, window_bounds = array<i64: 9, 96, 96>}, {pipeline_mode = #tpu.pipeline_mode<synchronous>, transform_indices = @transform_12, window_bounds = array<i64: 1, 96>}, {transform_indices = @transform_13, window_bounds = array<i64: 56, 384>}]} {
    %c0 = arith.constant 0 : index
    %c0_0 = arith.constant 0 : index
    %0 = vector.load %arg4[%c0, %c0_0] : memref<4x64xbf16, #tpu.memory_space<vmem>>, vector<4x64xbf16>
    %c0_1 = arith.constant 0 : index
    %c0_2 = arith.constant 0 : index
    %1 = vector.load %arg8[%c0_1, %c0_2] : memref<4x64xbf16, #tpu.memory_space<vmem>>, vector<4x64xbf16>
    %c0_3 = arith.constant 0 : index
    %c0_4 = arith.constant 0 : index
    %2 = vector.load %arg10[%c0_3, %c0_4] : memref<64x96xbf16, #tpu.memory_space<vmem>>, vector<64x96xbf16>
    %c0_5 = arith.constant 0 : index
    %c0_6 = arith.constant 0 : index
    %3 = vector.load %arg5[%c0_5, %c0_6] : memref<1x64xf32, #tpu.memory_space<vmem>>, vector<1x64xf32>
    %4 = vector.shape_cast %3 : vector<1x64xf32> to vector<1x64xf32>
    %5 = vector.broadcast %4 : vector<1x64xf32> to vector<56x64xf32>
    %c0_7 = arith.constant 0 : index
    %c0_8 = arith.constant 0 : index
    %6 = vector.load %arg9[%c0_7, %c0_8] : memref<1x64xf32, #tpu.memory_space<vmem>>, vector<1x64xf32>
    %7 = vector.shape_cast %6 : vector<1x64xf32> to vector<1x64xf32>
    %8 = vector.broadcast %7 : vector<1x64xf32> to vector<56x64xf32>
    %c0_9 = arith.constant 0 : index
    %c0_10 = arith.constant 0 : index
    %9 = vector.load %arg11[%c0_9, %c0_10] : memref<1x96xf32, #tpu.memory_space<vmem>>, vector<1x96xf32>
    %10 = vector.shape_cast %9 : vector<1x96xf32> to vector<1x96xf32>
    %11 = vector.broadcast %10 : vector<1x96xf32> to vector<56x96xf32>
    %cst = arith.constant 0.000000e+00 : f32
    %12 = vector.broadcast %cst : f32 to vector<56x192xf32>
    %c0_11 = arith.constant 0 : index
    %c0_12 = arith.constant 0 : index
    %13 = vector.load %arg15[%c0_11, %c0_12] : memref<56x192xf32, #tpu.memory_space<vmem>>, vector<56x192xf32>
    tpu.vector_store %arg15[%c0_11, %c0_12], %12 {strides = array<i32>} : memref<56x192xf32, #tpu.memory_space<vmem>>, vector<56x192xf32>,
    %cst_13 = arith.constant 0.000000e+00 : f32
    %14 = vector.broadcast %cst_13 : f32 to vector<56x96xf32>
    %c0_14 = arith.constant 0 : index
    %c0_15 = arith.constant 0 : index
    %15 = vector.load %arg16[%c0_14, %c0_15] : memref<56x96xf32, #tpu.memory_space<vmem>>, vector<56x96xf32>
    tpu.vector_store %arg16[%c0_14, %c0_15], %14 {strides = array<i32>} : memref<56x96xf32, #tpu.memory_space<vmem>>, vector<56x96xf32>,
    %cst_16 = arith.constant 0.000000e+00 : f32
    %16 = vector.broadcast %cst_16 : f32 to vector<56x96xf32>
    %c0_17 = arith.constant 0 : index
    %c0_18 = arith.constant 0 : index
    %17 = vector.load %arg17[%c0_17, %c0_18] : memref<56x96xf32, #tpu.memory_space<vmem>>, vector<56x96xf32>
    tpu.vector_store %arg17[%c0_17, %c0_18], %16 {strides = array<i32>} : memref<56x96xf32, #tpu.memory_space<vmem>>, vector<56x96xf32>,
    %c0_19 = arith.constant 0 : index
    %c0_20 = arith.constant 0 : index
    %c0_21 = arith.constant 0 : index
    %18 = vector.load %arg1[%c0_19, %c0_20, %c0_21] : memref<9x56x4xbf16, #tpu.memory_space<vmem>>, vector<1x56x4xbf16>
    %19 = vector.shape_cast %18 : vector<1x56x4xbf16> to vector<56x4xbf16>
    %c0_22 = arith.constant 0 : index
    %c0_23 = arith.constant 0 : index
    %20 = vector.load %arg15[%c0_22, %c0_23] : memref<56x192xf32, #tpu.memory_space<vmem>>, vector<56x192xf32>
    %c0_24 = arith.constant 0 : index
    %c0_25 = arith.constant 0 : index
    %c0_26 = arith.constant 0 : index
    %21 = vector.load %arg2[%c0_24, %c0_25, %c0_26] : memref<9x4x192xbf16, #tpu.memory_space<vmem>>, vector<1x4x192xbf16>
    %22 = vector.shape_cast %21 : vector<1x4x192xbf16> to vector<4x192xbf16>
    %cst_27 = arith.constant dense<0.000000e+00> : vector<56x192xf32>
    %23 = tpu.matmul %19, %22, %cst_27 {dimension_numbers = #tpu.dot_dimension_numbers<[1], [0], [0], [1], [0, 0, 1, 1], [], []>} : vector<56x4xbf16>, vector<4x192xbf16>, vector<56x192xf32> -> vector<56x192xf32>
    %24 = arith.addf %20, %23 : vector<56x192xf32>
    %c0_28 = arith.constant 0 : index
    %c0_29 = arith.constant 0 : index
    %25 = vector.load %arg15[%c0_28, %c0_29] : memref<56x192xf32, #tpu.memory_space<vmem>>, vector<56x192xf32>
    tpu.vector_store %arg15[%c0_28, %c0_29], %24 {strides = array<i32>} : memref<56x192xf32, #tpu.memory_space<vmem>>, vector<56x192xf32>,
    %cst_30 = arith.constant dense<0.000000e+00> : vector<56x64xf32>
    %26 = tpu.matmul %19, %0, %cst_30 {dimension_numbers = #tpu.dot_dimension_numbers<[1], [0], [0], [1], [0, 0, 1, 1], [], []>} : vector<56x4xbf16>, vector<4x64xbf16>, vector<56x64xf32> -> vector<56x64xf32>
    %27 = arith.addf %26, %5 : vector<56x64xf32>
    %cst_31 = arith.constant 0.000000e+00 : f32
    %28 = vector.broadcast %cst_31 : f32 to vector<56x64xf32>
    %29 = arith.maximumf %27, %28 : vector<56x64xf32>
    %30 = arith.truncf %29 : vector<56x64xf32> to vector<56x64xbf16>
    %c0_32 = arith.constant 0 : index
    %c0_33 = arith.constant 0 : index
    %31 = vector.load %arg16[%c0_32, %c0_33] : memref<56x96xf32, #tpu.memory_space<vmem>>, vector<56x96xf32>
    %c0_34 = arith.constant 0 : index
    %c0_35 = arith.constant 0 : index
    %c0_36 = arith.constant 0 : index
    %32 = vector.load %arg6[%c0_34, %c0_35, %c0_36] : memref<9x64x96xbf16, #tpu.memory_space<vmem>>, vector<1x64x96xbf16>
    %33 = vector.shape_cast %32 : vector<1x64x96xbf16> to vector<64x96xbf16>
    %cst_37 = arith.constant dense<0.000000e+00> : vector<56x96xf32>
    %34 = tpu.matmul %30, %33, %cst_37 {dimension_numbers = #tpu.dot_dimension_numbers<[1], [0], [0], [1], [0, 0, 1, 1], [], []>} : vector<56x64xbf16>, vector<64x96xbf16>, vector<56x96xf32> -> vector<56x96xf32>
    %35 = arith.addf %31, %34 : vector<56x96xf32>
    %c0_38 = arith.constant 0 : index
    %c0_39 = arith.constant 0 : index
    %36 = vector.load %arg16[%c0_38, %c0_39] : memref<56x96xf32, #tpu.memory_space<vmem>>, vector<56x96xf32>
    tpu.vector_store %arg16[%c0_38, %c0_39], %35 {strides = array<i32>} : memref<56x96xf32, #tpu.memory_space<vmem>>, vector<56x96xf32>,
    %cst_40 = arith.constant dense<0.000000e+00> : vector<56x64xf32>
    %37 = tpu.matmul %19, %1, %cst_40 {dimension_numbers = #tpu.dot_dimension_numbers<[1], [0], [0], [1], [0, 0, 1, 1], [], []>} : vector<56x4xbf16>, vector<4x64xbf16>, vector<56x64xf32> -> vector<56x64xf32>
    %38 = arith.addf %37, %8 : vector<56x64xf32>
    %cst_41 = arith.constant 0.000000e+00 : f32
    %39 = vector.broadcast %cst_41 : f32 to vector<56x64xf32>
    %40 = arith.maximumf %38, %39 : vector<56x64xf32>
    %41 = arith.truncf %40 : vector<56x64xf32> to vector<56x64xbf16>
    %cst_42 = arith.constant dense<0.000000e+00> : vector<56x96xf32>
    %42 = tpu.matmul %41, %2, %cst_42 {dimension_numbers = #tpu.dot_dimension_numbers<[1], [0], [0], [1], [0, 0, 1, 1], [], []>} : vector<56x64xbf16>, vector<64x96xbf16>, vector<56x96xf32> -> vector<56x96xf32>
    %43 = arith.addf %42, %11 : vector<56x96xf32>
    %cst_43 = arith.constant 0.000000e+00 : f32
    %44 = vector.broadcast %cst_43 : f32 to vector<56x96xf32>
    %45 = arith.maximumf %43, %44 : vector<56x96xf32>
    %46 = arith.truncf %45 : vector<56x96xf32> to vector<56x96xbf16>
    %c0_44 = arith.constant 0 : index
    %c0_45 = arith.constant 0 : index
    %47 = vector.load %arg17[%c0_44, %c0_45] : memref<56x96xf32, #tpu.memory_space<vmem>>, vector<56x96xf32>
    %c0_46 = arith.constant 0 : index
    %c0_47 = arith.constant 0 : index
    %c0_48 = arith.constant 0 : index
    %48 = vector.load %arg12[%c0_46, %c0_47, %c0_48] : memref<9x96x96xbf16, #tpu.memory_space<vmem>>, vector<1x96x96xbf16>
    %49 = vector.shape_cast %48 : vector<1x96x96xbf16> to vector<96x96xbf16>
    %cst_49 = arith.constant dense<0.000000e+00> : vector<56x96xf32>
    %50 = tpu.matmul %46, %49, %cst_49 {dimension_numbers = #tpu.dot_dimension_numbers<[1], [0], [0], [1], [0, 0, 1, 1], [], []>} : vector<56x96xbf16>, vector<96x96xbf16>, vector<56x96xf32> -> vector<56x96xf32>
    %51 = arith.addf %47, %50 : vector<56x96xf32>
    %c0_50 = arith.constant 0 : index
    %c0_51 = arith.constant 0 : index
    %52 = vector.load %arg17[%c0_50, %c0_51] : memref<56x96xf32, #tpu.memory_space<vmem>>, vector<56x96xf32>
    tpu.vector_store %arg17[%c0_50, %c0_51], %51 {strides = array<i32>} : memref<56x96xf32, #tpu.memory_space<vmem>>, vector<56x96xf32>,
    %c1 = arith.constant 1 : index
    %c0_52 = arith.constant 0 : index
    %c0_53 = arith.constant 0 : index
    %53 = vector.load %arg1[%c1, %c0_52, %c0_53] : memref<9x56x4xbf16, #tpu.memory_space<vmem>>, vector<1x56x4xbf16>
    %54 = vector.shape_cast %53 : vector<1x56x4xbf16> to vector<56x4xbf16>
    %c0_54 = arith.constant 0 : index
    %c0_55 = arith.constant 0 : index
    %55 = vector.load %arg15[%c0_54, %c0_55] : memref<56x192xf32, #tpu.memory_space<vmem>>, vector<56x192xf32>
    %c1_56 = arith.constant 1 : index
    %c0_57 = arith.constant 0 : index
    %c0_58 = arith.constant 0 : index
    %56 = vector.load %arg2[%c1_56, %c0_57, %c0_58] : memref<9x4x192xbf16, #tpu.memory_space<vmem>>, vector<1x4x192xbf16>
    %57 = vector.shape_cast %56 : vector<1x4x192xbf16> to vector<4x192xbf16>
    %cst_59 = arith.constant dense<0.000000e+00> : vector<56x192xf32>
    %58 = tpu.matmul %54, %57, %cst_59 {dimension_numbers = #tpu.dot_dimension_numbers<[1], [0], [0], [1], [0, 0, 1, 1], [], []>} : vector<56x4xbf16>, vector<4x192xbf16>, vector<56x192xf32> -> vector<56x192xf32>
    %59 = arith.addf %55, %58 : vector<56x192xf32>
    %c0_60 = arith.constant 0 : index
    %c0_61 = arith.constant 0 : index
    %60 = vector.load %arg15[%c0_60, %c0_61] : memref<56x192xf32, #tpu.memory_space<vmem>>, vector<56x192xf32>
    tpu.vector_store %arg15[%c0_60, %c0_61], %59 {strides = array<i32>} : memref<56x192xf32, #tpu.memory_space<vmem>>, vector<56x192xf32>,
    %cst_62 = arith.constant dense<0.000000e+00> : vector<56x64xf32>
    %61 = tpu.matmul %54, %0, %cst_62 {dimension_numbers = #tpu.dot_dimension_numbers<[1], [0], [0], [1], [0, 0, 1, 1], [], []>} : vector<56x4xbf16>, vector<4x64xbf16>, vector<56x64xf32> -> vector<56x64xf32>
    %62 = arith.addf %61, %5 : vector<56x64xf32>
    %cst_63 = arith.constant 0.000000e+00 : f32
    %63 = vector.broadcast %cst_63 : f32 to vector<56x64xf32>
    %64 = arith.maximumf %62, %63 : vector<56x64xf32>
    %65 = arith.truncf %64 : vector<56x64xf32> to vector<56x64xbf16>
    %c0_64 = arith.constant 0 : index
    %c0_65 = arith.constant 0 : index
    %66 = vector.load %arg16[%c0_64, %c0_65] : memref<56x96xf32, #tpu.memory_space<vmem>>, vector<56x96xf32>
    %c1_66 = arith.constant 1 : index
    %c0_67 = arith.constant 0 : index
    %c0_68 = arith.constant 0 : index
    %67 = vector.load %arg6[%c1_66, %c0_67, %c0_68] : memref<9x64x96xbf16, #tpu.memory_space<vmem>>, vector<1x64x96xbf16>
    %68 = vector.shape_cast %67 : vector<1x64x96xbf16> to vector<64x96xbf16>
    %cst_69 = arith.constant dense<0.000000e+00> : vector<56x96xf32>
    %69 = tpu.matmul %65, %68, %cst_69 {dimension_numbers = #tpu.dot_dimension_numbers<[1], [0], [0], [1], [0, 0, 1, 1], [], []>} : vector<56x64xbf16>, vector<64x96xbf16>, vector<56x96xf32> -> vector<56x96xf32>
    %70 = arith.addf %66, %69 : vector<56x96xf32>
    %c0_70 = arith.constant 0 : index
    %c0_71 = arith.constant 0 : index
    %71 = vector.load %arg16[%c0_70, %c0_71] : memref<56x96xf32, #tpu.memory_space<vmem>>, vector<56x96xf32>
    tpu.vector_store %arg16[%c0_70, %c0_71], %70 {strides = array<i32>} : memref<56x96xf32, #tpu.memory_space<vmem>>, vector<56x96xf32>,
    %cst_72 = arith.constant dense<0.000000e+00> : vector<56x64xf32>
    %72 = tpu.matmul %54, %1, %cst_72 {dimension_numbers = #tpu.dot_dimension_numbers<[1], [0], [0], [1], [0, 0, 1, 1], [], []>} : vector<56x4xbf16>, vector<4x64xbf16>, vector<56x64xf32> -> vector<56x64xf32>
    %73 = arith.addf %72, %8 : vector<56x64xf32>
    %cst_73 = arith.constant 0.000000e+00 : f32
    %74 = vector.broadcast %cst_73 : f32 to vector<56x64xf32>
    %75 = arith.maximumf %73, %74 : vector<56x64xf32>
    %76 = arith.truncf %75 : vector<56x64xf32> to vector<56x64xbf16>
    %cst_74 = arith.constant dense<0.000000e+00> : vector<56x96xf32>
    %77 = tpu.matmul %76, %2, %cst_74 {dimension_numbers = #tpu.dot_dimension_numbers<[1], [0], [0], [1], [0, 0, 1, 1], [], []>} : vector<56x64xbf16>, vector<64x96xbf16>, vector<56x96xf32> -> vector<56x96xf32>
    %78 = arith.addf %77, %11 : vector<56x96xf32>
    %cst_75 = arith.constant 0.000000e+00 : f32
    %79 = vector.broadcast %cst_75 : f32 to vector<56x96xf32>
    %80 = arith.maximumf %78, %79 : vector<56x96xf32>
    %81 = arith.truncf %80 : vector<56x96xf32> to vector<56x96xbf16>
    %c0_76 = arith.constant 0 : index
    %c0_77 = arith.constant 0 : index
    %82 = vector.load %arg17[%c0_76, %c0_77] : memref<56x96xf32, #tpu.memory_space<vmem>>, vector<56x96xf32>
    %c1_78 = arith.constant 1 : index
    %c0_79 = arith.constant 0 : index
    %c0_80 = arith.constant 0 : index
    %83 = vector.load %arg12[%c1_78, %c0_79, %c0_80] : memref<9x96x96xbf16, #tpu.memory_space<vmem>>, vector<1x96x96xbf16>
    %84 = vector.shape_cast %83 : vector<1x96x96xbf16> to vector<96x96xbf16>
    %cst_81 = arith.constant dense<0.000000e+00> : vector<56x96xf32>
    %85 = tpu.matmul %81, %84, %cst_81 {dimension_numbers = #tpu.dot_dimension_numbers<[1], [0], [0], [1], [0, 0, 1, 1], [], []>} : vector<56x96xbf16>, vector<96x96xbf16>, vector<56x96xf32> -> vector<56x96xf32>
    %86 = arith.addf %82, %85 : vector<56x96xf32>
    %c0_82 = arith.constant 0 : index
    %c0_83 = arith.constant 0 : index
    %87 = vector.load %arg17[%c0_82, %c0_83] : memref<56x96xf32, #tpu.memory_space<vmem>>, vector<56x96xf32>
    tpu.vector_store %arg17[%c0_82, %c0_83], %86 {strides = array<i32>} : memref<56x96xf32, #tpu.memory_space<vmem>>, vector<56x96xf32>,
    %c2 = arith.constant 2 : index
    %c0_84 = arith.constant 0 : index
    %c0_85 = arith.constant 0 : index
    %88 = vector.load %arg1[%c2, %c0_84, %c0_85] : memref<9x56x4xbf16, #tpu.memory_space<vmem>>, vector<1x56x4xbf16>
    %89 = vector.shape_cast %88 : vector<1x56x4xbf16> to vector<56x4xbf16>
    %c0_86 = arith.constant 0 : index
    %c0_87 = arith.constant 0 : index
    %90 = vector.load %arg15[%c0_86, %c0_87] : memref<56x192xf32, #tpu.memory_space<vmem>>, vector<56x192xf32>
    %c2_88 = arith.constant 2 : index
    %c0_89 = arith.constant 0 : index
    %c0_90 = arith.constant 0 : index
    %91 = vector.load %arg2[%c2_88, %c0_89, %c0_90] : memref<9x4x192xbf16, #tpu.memory_space<vmem>>, vector<1x4x192xbf16>
    %92 = vector.shape_cast %91 : vector<1x4x192xbf16> to vector<4x192xbf16>
    %cst_91 = arith.constant dense<0.000000e+00> : vector<56x192xf32>
    %93 = tpu.matmul %89, %92, %cst_91 {dimension_numbers = #tpu.dot_dimension_numbers<[1], [0], [0], [1], [0, 0, 1, 1], [], []>} : vector<56x4xbf16>, vector<4x192xbf16>, vector<56x192xf32> -> vector<56x192xf32>
    %94 = arith.addf %90, %93 : vector<56x192xf32>
    %c0_92 = arith.constant 0 : index
    %c0_93 = arith.constant 0 : index
    %95 = vector.load %arg15[%c0_92, %c0_93] : memref<56x192xf32, #tpu.memory_space<vmem>>, vector<56x192xf32>
    tpu.vector_store %arg15[%c0_92, %c0_93], %94 {strides = array<i32>} : memref<56x192xf32, #tpu.memory_space<vmem>>, vector<56x192xf32>,
    %cst_94 = arith.constant dense<0.000000e+00> : vector<56x64xf32>
    %96 = tpu.matmul %89, %0, %cst_94 {dimension_numbers = #tpu.dot_dimension_numbers<[1], [0], [0], [1], [0, 0, 1, 1], [], []>} : vector<56x4xbf16>, vector<4x64xbf16>, vector<56x64xf32> -> vector<56x64xf32>
    %97 = arith.addf %96, %5 : vector<56x64xf32>
    %cst_95 = arith.constant 0.000000e+00 : f32
    %98 = vector.broadcast %cst_95 : f32 to vector<56x64xf32>
    %99 = arith.maximumf %97, %98 : vector<56x64xf32>
    %100 = arith.truncf %99 : vector<56x64xf32> to vector<56x64xbf16>
    %c0_96 = arith.constant 0 : index
    %c0_97 = arith.constant 0 : index
    %101 = vector.load %arg16[%c0_96, %c0_97] : memref<56x96xf32, #tpu.memory_space<vmem>>, vector<56x96xf32>
    %c2_98 = arith.constant 2 : index
    %c0_99 = arith.constant 0 : index
    %c0_100 = arith.constant 0 : index
    %102 = vector.load %arg6[%c2_98, %c0_99, %c0_100] : memref<9x64x96xbf16, #tpu.memory_space<vmem>>, vector<1x64x96xbf16>
    %103 = vector.shape_cast %102 : vector<1x64x96xbf16> to vector<64x96xbf16>
    %cst_101 = arith.constant dense<0.000000e+00> : vector<56x96xf32>
    %104 = tpu.matmul %100, %103, %cst_101 {dimension_numbers = #tpu.dot_dimension_numbers<[1], [0], [0], [1], [0, 0, 1, 1], [], []>} : vector<56x64xbf16>, vector<64x96xbf16>, vector<56x96xf32> -> vector<56x96xf32>
    %105 = arith.addf %101, %104 : vector<56x96xf32>
    %c0_102 = arith.constant 0 : index
    %c0_103 = arith.constant 0 : index
    %106 = vector.load %arg16[%c0_102, %c0_103] : memref<56x96xf32, #tpu.memory_space<vmem>>, vector<56x96xf32>
    tpu.vector_store %arg16[%c0_102, %c0_103], %105 {strides = array<i32>} : memref<56x96xf32, #tpu.memory_space<vmem>>, vector<56x96xf32>,
    %cst_104 = arith.constant dense<0.000000e+00> : vector<56x64xf32>
    %107 = tpu.matmul %89, %1, %cst_104 {dimension_numbers = #tpu.dot_dimension_numbers<[1], [0], [0], [1], [0, 0, 1, 1], [], []>} : vector<56x4xbf16>, vector<4x64xbf16>, vector<56x64xf32> -> vector<56x64xf32>
    %108 = arith.addf %107, %8 : vector<56x64xf32>
    %cst_105 = arith.constant 0.000000e+00 : f32
    %109 = vector.broadcast %cst_105 : f32 to vector<56x64xf32>
    %110 = arith.maximumf %108, %109 : vector<56x64xf32>
    %111 = arith.truncf %110 : vector<56x64xf32> to vector<56x64xbf16>
    %cst_106 = arith.constant dense<0.000000e+00> : vector<56x96xf32>
    %112 = tpu.matmul %111, %2, %cst_106 {dimension_numbers = #tpu.dot_dimension_numbers<[1], [0], [0], [1], [0, 0, 1, 1], [], []>} : vector<56x64xbf16>, vector<64x96xbf16>, vector<56x96xf32> -> vector<56x96xf32>
    %113 = arith.addf %112, %11 : vector<56x96xf32>
    %cst_107 = arith.constant 0.000000e+00 : f32
    %114 = vector.broadcast %cst_107 : f32 to vector<56x96xf32>
    %115 = arith.maximumf %113, %114 : vector<56x96xf32>
    %116 = arith.truncf %115 : vector<56x96xf32> to vector<56x96xbf16>
    %c0_108 = arith.constant 0 : index
    %c0_109 = arith.constant 0 : index
    %117 = vector.load %arg17[%c0_108, %c0_109] : memref<56x96xf32, #tpu.memory_space<vmem>>, vector<56x96xf32>
    %c2_110 = arith.constant 2 : index
    %c0_111 = arith.constant 0 : index
    %c0_112 = arith.constant 0 : index
    %118 = vector.load %arg12[%c2_110, %c0_111, %c0_112] : memref<9x96x96xbf16, #tpu.memory_space<vmem>>, vector<1x96x96xbf16>
    %119 = vector.shape_cast %118 : vector<1x96x96xbf16> to vector<96x96xbf16>
    %cst_113 = arith.constant dense<0.000000e+00> : vector<56x96xf32>
    %120 = tpu.matmul %116, %119, %cst_113 {dimension_numbers = #tpu.dot_dimension_numbers<[1], [0], [0], [1], [0, 0, 1, 1], [], []>} : vector<56x96xbf16>, vector<96x96xbf16>, vector<56x96xf32> -> vector<56x96xf32>
    %121 = arith.addf %117, %120 : vector<56x96xf32>
    %c0_114 = arith.constant 0 : index
    %c0_115 = arith.constant 0 : index
    %122 = vector.load %arg17[%c0_114, %c0_115] : memref<56x96xf32, #tpu.memory_space<vmem>>, vector<56x96xf32>
    tpu.vector_store %arg17[%c0_114, %c0_115], %121 {strides = array<i32>} : memref<56x96xf32, #tpu.memory_space<vmem>>, vector<56x96xf32>,
    %c3 = arith.constant 3 : index
    %c0_116 = arith.constant 0 : index
    %c0_117 = arith.constant 0 : index
    %123 = vector.load %arg1[%c3, %c0_116, %c0_117] : memref<9x56x4xbf16, #tpu.memory_space<vmem>>, vector<1x56x4xbf16>
    %124 = vector.shape_cast %123 : vector<1x56x4xbf16> to vector<56x4xbf16>
    %c0_118 = arith.constant 0 : index
    %c0_119 = arith.constant 0 : index
    %125 = vector.load %arg15[%c0_118, %c0_119] : memref<56x192xf32, #tpu.memory_space<vmem>>, vector<56x192xf32>
    %c3_120 = arith.constant 3 : index
    %c0_121 = arith.constant 0 : index
    %c0_122 = arith.constant 0 : index
    %126 = vector.load %arg2[%c3_120, %c0_121, %c0_122] : memref<9x4x192xbf16, #tpu.memory_space<vmem>>, vector<1x4x192xbf16>
    %127 = vector.shape_cast %126 : vector<1x4x192xbf16> to vector<4x192xbf16>
    %cst_123 = arith.constant dense<0.000000e+00> : vector<56x192xf32>
    %128 = tpu.matmul %124, %127, %cst_123 {dimension_numbers = #tpu.dot_dimension_numbers<[1], [0], [0], [1], [0, 0, 1, 1], [], []>} : vector<56x4xbf16>, vector<4x192xbf16>, vector<56x192xf32> -> vector<56x192xf32>
    %129 = arith.addf %125, %128 : vector<56x192xf32>
    %c0_124 = arith.constant 0 : index
    %c0_125 = arith.constant 0 : index
    %130 = vector.load %arg15[%c0_124, %c0_125] : memref<56x192xf32, #tpu.memory_space<vmem>>, vector<56x192xf32>
    tpu.vector_store %arg15[%c0_124, %c0_125], %129 {strides = array<i32>} : memref<56x192xf32, #tpu.memory_space<vmem>>, vector<56x192xf32>,
    %cst_126 = arith.constant dense<0.000000e+00> : vector<56x64xf32>
    %131 = tpu.matmul %124, %0, %cst_126 {dimension_numbers = #tpu.dot_dimension_numbers<[1], [0], [0], [1], [0, 0, 1, 1], [], []>} : vector<56x4xbf16>, vector<4x64xbf16>, vector<56x64xf32> -> vector<56x64xf32>
    %132 = arith.addf %131, %5 : vector<56x64xf32>
    %cst_127 = arith.constant 0.000000e+00 : f32
    %133 = vector.broadcast %cst_127 : f32 to vector<56x64xf32>
    %134 = arith.maximumf %132, %133 : vector<56x64xf32>
    %135 = arith.truncf %134 : vector<56x64xf32> to vector<56x64xbf16>
    %c0_128 = arith.constant 0 : index
    %c0_129 = arith.constant 0 : index
    %136 = vector.load %arg16[%c0_128, %c0_129] : memref<56x96xf32, #tpu.memory_space<vmem>>, vector<56x96xf32>
    %c3_130 = arith.constant 3 : index
    %c0_131 = arith.constant 0 : index
    %c0_132 = arith.constant 0 : index
    %137 = vector.load %arg6[%c3_130, %c0_131, %c0_132] : memref<9x64x96xbf16, #tpu.memory_space<vmem>>, vector<1x64x96xbf16>
    %138 = vector.shape_cast %137 : vector<1x64x96xbf16> to vector<64x96xbf16>
    %cst_133 = arith.constant dense<0.000000e+00> : vector<56x96xf32>
    %139 = tpu.matmul %135, %138, %cst_133 {dimension_numbers = #tpu.dot_dimension_numbers<[1], [0], [0], [1], [0, 0, 1, 1], [], []>} : vector<56x64xbf16>, vector<64x96xbf16>, vector<56x96xf32> -> vector<56x96xf32>
    %140 = arith.addf %136, %139 : vector<56x96xf32>
    %c0_134 = arith.constant 0 : index
    %c0_135 = arith.constant 0 : index
    %141 = vector.load %arg16[%c0_134, %c0_135] : memref<56x96xf32, #tpu.memory_space<vmem>>, vector<56x96xf32>
    tpu.vector_store %arg16[%c0_134, %c0_135], %140 {strides = array<i32>} : memref<56x96xf32, #tpu.memory_space<vmem>>, vector<56x96xf32>,
    %cst_136 = arith.constant dense<0.000000e+00> : vector<56x64xf32>
    %142 = tpu.matmul %124, %1, %cst_136 {dimension_numbers = #tpu.dot_dimension_numbers<[1], [0], [0], [1], [0, 0, 1, 1], [], []>} : vector<56x4xbf16>, vector<4x64xbf16>, vector<56x64xf32> -> vector<56x64xf32>
    %143 = arith.addf %142, %8 : vector<56x64xf32>
    %cst_137 = arith.constant 0.000000e+00 : f32
    %144 = vector.broadcast %cst_137 : f32 to vector<56x64xf32>
    %145 = arith.maximumf %143, %144 : vector<56x64xf32>
    %146 = arith.truncf %145 : vector<56x64xf32> to vector<56x64xbf16>
    %cst_138 = arith.constant dense<0.000000e+00> : vector<56x96xf32>
    %147 = tpu.matmul %146, %2, %cst_138 {dimension_numbers = #tpu.dot_dimension_numbers<[1], [0], [0], [1], [0, 0, 1, 1], [], []>} : vector<56x64xbf16>, vector<64x96xbf16>, vector<56x96xf32> -> vector<56x96xf32>
    %148 = arith.addf %147, %11 : vector<56x96xf32>
    %cst_139 = arith.constant 0.000000e+00 : f32
    %149 = vector.broadcast %cst_139 : f32 to vector<56x96xf32>
    %150 = arith.maximumf %148, %149 : vector<56x96xf32>
    %151 = arith.truncf %150 : vector<56x96xf32> to vector<56x96xbf16>
    %c0_140 = arith.constant 0 : index
    %c0_141 = arith.constant 0 : index
    %152 = vector.load %arg17[%c0_140, %c0_141] : memref<56x96xf32, #tpu.memory_space<vmem>>, vector<56x96xf32>
    %c3_142 = arith.constant 3 : index
    %c0_143 = arith.constant 0 : index
    %c0_144 = arith.constant 0 : index
    %153 = vector.load %arg12[%c3_142, %c0_143, %c0_144] : memref<9x96x96xbf16, #tpu.memory_space<vmem>>, vector<1x96x96xbf16>
    %154 = vector.shape_cast %153 : vector<1x96x96xbf16> to vector<96x96xbf16>
    %cst_145 = arith.constant dense<0.000000e+00> : vector<56x96xf32>
    %155 = tpu.matmul %151, %154, %cst_145 {dimension_numbers = #tpu.dot_dimension_numbers<[1], [0], [0], [1], [0, 0, 1, 1], [], []>} : vector<56x96xbf16>, vector<96x96xbf16>, vector<56x96xf32> -> vector<56x96xf32>
    %156 = arith.addf %152, %155 : vector<56x96xf32>
    %c0_146 = arith.constant 0 : index
    %c0_147 = arith.constant 0 : index
    %157 = vector.load %arg17[%c0_146, %c0_147] : memref<56x96xf32, #tpu.memory_space<vmem>>, vector<56x96xf32>
    tpu.vector_store %arg17[%c0_146, %c0_147], %156 {strides = array<i32>} : memref<56x96xf32, #tpu.memory_space<vmem>>, vector<56x96xf32>,
    %c4 = arith.constant 4 : index
    %c0_148 = arith.constant 0 : index
    %c0_149 = arith.constant 0 : index
    %158 = vector.load %arg1[%c4, %c0_148, %c0_149] : memref<9x56x4xbf16, #tpu.memory_space<vmem>>, vector<1x56x4xbf16>
    %159 = vector.shape_cast %158 : vector<1x56x4xbf16> to vector<56x4xbf16>
    %c0_150 = arith.constant 0 : index
    %c0_151 = arith.constant 0 : index
    %160 = vector.load %arg15[%c0_150, %c0_151] : memref<56x192xf32, #tpu.memory_space<vmem>>, vector<56x192xf32>
    %c4_152 = arith.constant 4 : index
    %c0_153 = arith.constant 0 : index
    %c0_154 = arith.constant 0 : index
    %161 = vector.load %arg2[%c4_152, %c0_153, %c0_154] : memref<9x4x192xbf16, #tpu.memory_space<vmem>>, vector<1x4x192xbf16>
    %162 = vector.shape_cast %161 : vector<1x4x192xbf16> to vector<4x192xbf16>
    %cst_155 = arith.constant dense<0.000000e+00> : vector<56x192xf32>
    %163 = tpu.matmul %159, %162, %cst_155 {dimension_numbers = #tpu.dot_dimension_numbers<[1], [0], [0], [1], [0, 0, 1, 1], [], []>} : vector<56x4xbf16>, vector<4x192xbf16>, vector<56x192xf32> -> vector<56x192xf32>
    %164 = arith.addf %160, %163 : vector<56x192xf32>
    %c0_156 = arith.constant 0 : index
    %c0_157 = arith.constant 0 : index
    %165 = vector.load %arg15[%c0_156, %c0_157] : memref<56x192xf32, #tpu.memory_space<vmem>>, vector<56x192xf32>
    tpu.vector_store %arg15[%c0_156, %c0_157], %164 {strides = array<i32>} : memref<56x192xf32, #tpu.memory_space<vmem>>, vector<56x192xf32>,
    %cst_158 = arith.constant dense<0.000000e+00> : vector<56x64xf32>
    %166 = tpu.matmul %159, %0, %cst_158 {dimension_numbers = #tpu.dot_dimension_numbers<[1], [0], [0], [1], [0, 0, 1, 1], [], []>} : vector<56x4xbf16>, vector<4x64xbf16>, vector<56x64xf32> -> vector<56x64xf32>
    %167 = arith.addf %166, %5 : vector<56x64xf32>
    %cst_159 = arith.constant 0.000000e+00 : f32
    %168 = vector.broadcast %cst_159 : f32 to vector<56x64xf32>
    %169 = arith.maximumf %167, %168 : vector<56x64xf32>
    %170 = arith.truncf %169 : vector<56x64xf32> to vector<56x64xbf16>
    %c0_160 = arith.constant 0 : index
    %c0_161 = arith.constant 0 : index
    %171 = vector.load %arg16[%c0_160, %c0_161] : memref<56x96xf32, #tpu.memory_space<vmem>>, vector<56x96xf32>
    %c4_162 = arith.constant 4 : index
    %c0_163 = arith.constant 0 : index
    %c0_164 = arith.constant 0 : index
    %172 = vector.load %arg6[%c4_162, %c0_163, %c0_164] : memref<9x64x96xbf16, #tpu.memory_space<vmem>>, vector<1x64x96xbf16>
    %173 = vector.shape_cast %172 : vector<1x64x96xbf16> to vector<64x96xbf16>
    %cst_165 = arith.constant dense<0.000000e+00> : vector<56x96xf32>
    %174 = tpu.matmul %170, %173, %cst_165 {dimension_numbers = #tpu.dot_dimension_numbers<[1], [0], [0], [1], [0, 0, 1, 1], [], []>} : vector<56x64xbf16>, vector<64x96xbf16>, vector<56x96xf32> -> vector<56x96xf32>
    %175 = arith.addf %171, %174 : vector<56x96xf32>
    %c0_166 = arith.constant 0 : index
    %c0_167 = arith.constant 0 : index
    %176 = vector.load %arg16[%c0_166, %c0_167] : memref<56x96xf32, #tpu.memory_space<vmem>>, vector<56x96xf32>
    tpu.vector_store %arg16[%c0_166, %c0_167], %175 {strides = array<i32>} : memref<56x96xf32, #tpu.memory_space<vmem>>, vector<56x96xf32>,
    %cst_168 = arith.constant dense<0.000000e+00> : vector<56x64xf32>
    %177 = tpu.matmul %159, %1, %cst_168 {dimension_numbers = #tpu.dot_dimension_numbers<[1], [0], [0], [1], [0, 0, 1, 1], [], []>} : vector<56x4xbf16>, vector<4x64xbf16>, vector<56x64xf32> -> vector<56x64xf32>
    %178 = arith.addf %177, %8 : vector<56x64xf32>
    %cst_169 = arith.constant 0.000000e+00 : f32
    %179 = vector.broadcast %cst_169 : f32 to vector<56x64xf32>
    %180 = arith.maximumf %178, %179 : vector<56x64xf32>
    %181 = arith.truncf %180 : vector<56x64xf32> to vector<56x64xbf16>
    %cst_170 = arith.constant dense<0.000000e+00> : vector<56x96xf32>
    %182 = tpu.matmul %181, %2, %cst_170 {dimension_numbers = #tpu.dot_dimension_numbers<[1], [0], [0], [1], [0, 0, 1, 1], [], []>} : vector<56x64xbf16>, vector<64x96xbf16>, vector<56x96xf32> -> vector<56x96xf32>
    %183 = arith.addf %182, %11 : vector<56x96xf32>
    %cst_171 = arith.constant 0.000000e+00 : f32
    %184 = vector.broadcast %cst_171 : f32 to vector<56x96xf32>
    %185 = arith.maximumf %183, %184 : vector<56x96xf32>
    %186 = arith.truncf %185 : vector<56x96xf32> to vector<56x96xbf16>
    %c0_172 = arith.constant 0 : index
    %c0_173 = arith.constant 0 : index
    %187 = vector.load %arg17[%c0_172, %c0_173] : memref<56x96xf32, #tpu.memory_space<vmem>>, vector<56x96xf32>
    %c4_174 = arith.constant 4 : index
    %c0_175 = arith.constant 0 : index
    %c0_176 = arith.constant 0 : index
    %188 = vector.load %arg12[%c4_174, %c0_175, %c0_176] : memref<9x96x96xbf16, #tpu.memory_space<vmem>>, vector<1x96x96xbf16>
    %189 = vector.shape_cast %188 : vector<1x96x96xbf16> to vector<96x96xbf16>
    %cst_177 = arith.constant dense<0.000000e+00> : vector<56x96xf32>
    %190 = tpu.matmul %186, %189, %cst_177 {dimension_numbers = #tpu.dot_dimension_numbers<[1], [0], [0], [1], [0, 0, 1, 1], [], []>} : vector<56x96xbf16>, vector<96x96xbf16>, vector<56x96xf32> -> vector<56x96xf32>
    %191 = arith.addf %187, %190 : vector<56x96xf32>
    %c0_178 = arith.constant 0 : index
    %c0_179 = arith.constant 0 : index
    %192 = vector.load %arg17[%c0_178, %c0_179] : memref<56x96xf32, #tpu.memory_space<vmem>>, vector<56x96xf32>
    tpu.vector_store %arg17[%c0_178, %c0_179], %191 {strides = array<i32>} : memref<56x96xf32, #tpu.memory_space<vmem>>, vector<56x96xf32>,
    %c5 = arith.constant 5 : index
    %c0_180 = arith.constant 0 : index
    %c0_181 = arith.constant 0 : index
    %193 = vector.load %arg1[%c5, %c0_180, %c0_181] : memref<9x56x4xbf16, #tpu.memory_space<vmem>>, vector<1x56x4xbf16>
    %194 = vector.shape_cast %193 : vector<1x56x4xbf16> to vector<56x4xbf16>
    %c0_182 = arith.constant 0 : index
    %c0_183 = arith.constant 0 : index
    %195 = vector.load %arg15[%c0_182, %c0_183] : memref<56x192xf32, #tpu.memory_space<vmem>>, vector<56x192xf32>
    %c5_184 = arith.constant 5 : index
    %c0_185 = arith.constant 0 : index
    %c0_186 = arith.constant 0 : index
    %196 = vector.load %arg2[%c5_184, %c0_185, %c0_186] : memref<9x4x192xbf16, #tpu.memory_space<vmem>>, vector<1x4x192xbf16>
    %197 = vector.shape_cast %196 : vector<1x4x192xbf16> to vector<4x192xbf16>
    %cst_187 = arith.constant dense<0.000000e+00> : vector<56x192xf32>
    %198 = tpu.matmul %194, %197, %cst_187 {dimension_numbers = #tpu.dot_dimension_numbers<[1], [0], [0], [1], [0, 0, 1, 1], [], []>} : vector<56x4xbf16>, vector<4x192xbf16>, vector<56x192xf32> -> vector<56x192xf32>
    %199 = arith.addf %195, %198 : vector<56x192xf32>
    %c0_188 = arith.constant 0 : index
    %c0_189 = arith.constant 0 : index
    %200 = vector.load %arg15[%c0_188, %c0_189] : memref<56x192xf32, #tpu.memory_space<vmem>>, vector<56x192xf32>
    tpu.vector_store %arg15[%c0_188, %c0_189], %199 {strides = array<i32>} : memref<56x192xf32, #tpu.memory_space<vmem>>, vector<56x192xf32>,
    %cst_190 = arith.constant dense<0.000000e+00> : vector<56x64xf32>
    %201 = tpu.matmul %194, %0, %cst_190 {dimension_numbers = #tpu.dot_dimension_numbers<[1], [0], [0], [1], [0, 0, 1, 1], [], []>} : vector<56x4xbf16>, vector<4x64xbf16>, vector<56x64xf32> -> vector<56x64xf32>
    %202 = arith.addf %201, %5 : vector<56x64xf32>
    %cst_191 = arith.constant 0.000000e+00 : f32
    %203 = vector.broadcast %cst_191 : f32 to vector<56x64xf32>
    %204 = arith.maximumf %202, %203 : vector<56x64xf32>
    %205 = arith.truncf %204 : vector<56x64xf32> to vector<56x64xbf16>
    %c0_192 = arith.constant 0 : index
    %c0_193 = arith.constant 0 : index
    %206 = vector.load %arg16[%c0_192, %c0_193] : memref<56x96xf32, #tpu.memory_space<vmem>>, vector<56x96xf32>
    %c5_194 = arith.constant 5 : index
    %c0_195 = arith.constant 0 : index
    %c0_196 = arith.constant 0 : index
    %207 = vector.load %arg6[%c5_194, %c0_195, %c0_196] : memref<9x64x96xbf16, #tpu.memory_space<vmem>>, vector<1x64x96xbf16>
    %208 = vector.shape_cast %207 : vector<1x64x96xbf16> to vector<64x96xbf16>
    %cst_197 = arith.constant dense<0.000000e+00> : vector<56x96xf32>
    %209 = tpu.matmul %205, %208, %cst_197 {dimension_numbers = #tpu.dot_dimension_numbers<[1], [0], [0], [1], [0, 0, 1, 1], [], []>} : vector<56x64xbf16>, vector<64x96xbf16>, vector<56x96xf32> -> vector<56x96xf32>
    %210 = arith.addf %206, %209 : vector<56x96xf32>
    %c0_198 = arith.constant 0 : index
    %c0_199 = arith.constant 0 : index
    %211 = vector.load %arg16[%c0_198, %c0_199] : memref<56x96xf32, #tpu.memory_space<vmem>>, vector<56x96xf32>
    tpu.vector_store %arg16[%c0_198, %c0_199], %210 {strides = array<i32>} : memref<56x96xf32, #tpu.memory_space<vmem>>, vector<56x96xf32>,
    %cst_200 = arith.constant dense<0.000000e+00> : vector<56x64xf32>
    %212 = tpu.matmul %194, %1, %cst_200 {dimension_numbers = #tpu.dot_dimension_numbers<[1], [0], [0], [1], [0, 0, 1, 1], [], []>} : vector<56x4xbf16>, vector<4x64xbf16>, vector<56x64xf32> -> vector<56x64xf32>
    %213 = arith.addf %212, %8 : vector<56x64xf32>
    %cst_201 = arith.constant 0.000000e+00 : f32
    %214 = vector.broadcast %cst_201 : f32 to vector<56x64xf32>
    %215 = arith.maximumf %213, %214 : vector<56x64xf32>
    %216 = arith.truncf %215 : vector<56x64xf32> to vector<56x64xbf16>
    %cst_202 = arith.constant dense<0.000000e+00> : vector<56x96xf32>
    %217 = tpu.matmul %216, %2, %cst_202 {dimension_numbers = #tpu.dot_dimension_numbers<[1], [0], [0], [1], [0, 0, 1, 1], [], []>} : vector<56x64xbf16>, vector<64x96xbf16>, vector<56x96xf32> -> vector<56x96xf32>
    %218 = arith.addf %217, %11 : vector<56x96xf32>
    %cst_203 = arith.constant 0.000000e+00 : f32
    %219 = vector.broadcast %cst_203 : f32 to vector<56x96xf32>
    %220 = arith.maximumf %218, %219 : vector<56x96xf32>
    %221 = arith.truncf %220 : vector<56x96xf32> to vector<56x96xbf16>
    %c0_204 = arith.constant 0 : index
    %c0_205 = arith.constant 0 : index
    %222 = vector.load %arg17[%c0_204, %c0_205] : memref<56x96xf32, #tpu.memory_space<vmem>>, vector<56x96xf32>
    %c5_206 = arith.constant 5 : index
    %c0_207 = arith.constant 0 : index
    %c0_208 = arith.constant 0 : index
    %223 = vector.load %arg12[%c5_206, %c0_207, %c0_208] : memref<9x96x96xbf16, #tpu.memory_space<vmem>>, vector<1x96x96xbf16>
    %224 = vector.shape_cast %223 : vector<1x96x96xbf16> to vector<96x96xbf16>
    %cst_209 = arith.constant dense<0.000000e+00> : vector<56x96xf32>
    %225 = tpu.matmul %221, %224, %cst_209 {dimension_numbers = #tpu.dot_dimension_numbers<[1], [0], [0], [1], [0, 0, 1, 1], [], []>} : vector<56x96xbf16>, vector<96x96xbf16>, vector<56x96xf32> -> vector<56x96xf32>
    %226 = arith.addf %222, %225 : vector<56x96xf32>
    %c0_210 = arith.constant 0 : index
    %c0_211 = arith.constant 0 : index
    %227 = vector.load %arg17[%c0_210, %c0_211] : memref<56x96xf32, #tpu.memory_space<vmem>>, vector<56x96xf32>
    tpu.vector_store %arg17[%c0_210, %c0_211], %226 {strides = array<i32>} : memref<56x96xf32, #tpu.memory_space<vmem>>, vector<56x96xf32>,
    %c6 = arith.constant 6 : index
    %c0_212 = arith.constant 0 : index
    %c0_213 = arith.constant 0 : index
    %228 = vector.load %arg1[%c6, %c0_212, %c0_213] : memref<9x56x4xbf16, #tpu.memory_space<vmem>>, vector<1x56x4xbf16>
    %229 = vector.shape_cast %228 : vector<1x56x4xbf16> to vector<56x4xbf16>
    %c0_214 = arith.constant 0 : index
    %c0_215 = arith.constant 0 : index
    %230 = vector.load %arg15[%c0_214, %c0_215] : memref<56x192xf32, #tpu.memory_space<vmem>>, vector<56x192xf32>
    %c6_216 = arith.constant 6 : index
    %c0_217 = arith.constant 0 : index
    %c0_218 = arith.constant 0 : index
    %231 = vector.load %arg2[%c6_216, %c0_217, %c0_218] : memref<9x4x192xbf16, #tpu.memory_space<vmem>>, vector<1x4x192xbf16>
    %232 = vector.shape_cast %231 : vector<1x4x192xbf16> to vector<4x192xbf16>
    %cst_219 = arith.constant dense<0.000000e+00> : vector<56x192xf32>
    %233 = tpu.matmul %229, %232, %cst_219 {dimension_numbers = #tpu.dot_dimension_numbers<[1], [0], [0], [1], [0, 0, 1, 1], [], []>} : vector<56x4xbf16>, vector<4x192xbf16>, vector<56x192xf32> -> vector<56x192xf32>
    %234 = arith.addf %230, %233 : vector<56x192xf32>
    %c0_220 = arith.constant 0 : index
    %c0_221 = arith.constant 0 : index
    %235 = vector.load %arg15[%c0_220, %c0_221] : memref<56x192xf32, #tpu.memory_space<vmem>>, vector<56x192xf32>
    tpu.vector_store %arg15[%c0_220, %c0_221], %234 {strides = array<i32>} : memref<56x192xf32, #tpu.memory_space<vmem>>, vector<56x192xf32>,
    %cst_222 = arith.constant dense<0.000000e+00> : vector<56x64xf32>
    %236 = tpu.matmul %229, %0, %cst_222 {dimension_numbers = #tpu.dot_dimension_numbers<[1], [0], [0], [1], [0, 0, 1, 1], [], []>} : vector<56x4xbf16>, vector<4x64xbf16>, vector<56x64xf32> -> vector<56x64xf32>
    %237 = arith.addf %236, %5 : vector<56x64xf32>
    %cst_223 = arith.constant 0.000000e+00 : f32
    %238 = vector.broadcast %cst_223 : f32 to vector<56x64xf32>
    %239 = arith.maximumf %237, %238 : vector<56x64xf32>
    %240 = arith.truncf %239 : vector<56x64xf32> to vector<56x64xbf16>
    %c0_224 = arith.constant 0 : index
    %c0_225 = arith.constant 0 : index
    %241 = vector.load %arg16[%c0_224, %c0_225] : memref<56x96xf32, #tpu.memory_space<vmem>>, vector<56x96xf32>
    %c6_226 = arith.constant 6 : index
    %c0_227 = arith.constant 0 : index
    %c0_228 = arith.constant 0 : index
    %242 = vector.load %arg6[%c6_226, %c0_227, %c0_228] : memref<9x64x96xbf16, #tpu.memory_space<vmem>>, vector<1x64x96xbf16>
    %243 = vector.shape_cast %242 : vector<1x64x96xbf16> to vector<64x96xbf16>
    %cst_229 = arith.constant dense<0.000000e+00> : vector<56x96xf32>
    %244 = tpu.matmul %240, %243, %cst_229 {dimension_numbers = #tpu.dot_dimension_numbers<[1], [0], [0], [1], [0, 0, 1, 1], [], []>} : vector<56x64xbf16>, vector<64x96xbf16>, vector<56x96xf32> -> vector<56x96xf32>
    %245 = arith.addf %241, %244 : vector<56x96xf32>
    %c0_230 = arith.constant 0 : index
    %c0_231 = arith.constant 0 : index
    %246 = vector.load %arg16[%c0_230, %c0_231] : memref<56x96xf32, #tpu.memory_space<vmem>>, vector<56x96xf32>
    tpu.vector_store %arg16[%c0_230, %c0_231], %245 {strides = array<i32>} : memref<56x96xf32, #tpu.memory_space<vmem>>, vector<56x96xf32>,
    %cst_232 = arith.constant dense<0.000000e+00> : vector<56x64xf32>
    %247 = tpu.matmul %229, %1, %cst_232 {dimension_numbers = #tpu.dot_dimension_numbers<[1], [0], [0], [1], [0, 0, 1, 1], [], []>} : vector<56x4xbf16>, vector<4x64xbf16>, vector<56x64xf32> -> vector<56x64xf32>
    %248 = arith.addf %247, %8 : vector<56x64xf32>
    %cst_233 = arith.constant 0.000000e+00 : f32
    %249 = vector.broadcast %cst_233 : f32 to vector<56x64xf32>
    %250 = arith.maximumf %248, %249 : vector<56x64xf32>
    %251 = arith.truncf %250 : vector<56x64xf32> to vector<56x64xbf16>
    %cst_234 = arith.constant dense<0.000000e+00> : vector<56x96xf32>
    %252 = tpu.matmul %251, %2, %cst_234 {dimension_numbers = #tpu.dot_dimension_numbers<[1], [0], [0], [1], [0, 0, 1, 1], [], []>} : vector<56x64xbf16>, vector<64x96xbf16>, vector<56x96xf32> -> vector<56x96xf32>
    %253 = arith.addf %252, %11 : vector<56x96xf32>
    %cst_235 = arith.constant 0.000000e+00 : f32
    %254 = vector.broadcast %cst_235 : f32 to vector<56x96xf32>
    %255 = arith.maximumf %253, %254 : vector<56x96xf32>
    %256 = arith.truncf %255 : vector<56x96xf32> to vector<56x96xbf16>
    %c0_236 = arith.constant 0 : index
    %c0_237 = arith.constant 0 : index
    %257 = vector.load %arg17[%c0_236, %c0_237] : memref<56x96xf32, #tpu.memory_space<vmem>>, vector<56x96xf32>
    %c6_238 = arith.constant 6 : index
    %c0_239 = arith.constant 0 : index
    %c0_240 = arith.constant 0 : index
    %258 = vector.load %arg12[%c6_238, %c0_239, %c0_240] : memref<9x96x96xbf16, #tpu.memory_space<vmem>>, vector<1x96x96xbf16>
    %259 = vector.shape_cast %258 : vector<1x96x96xbf16> to vector<96x96xbf16>
    %cst_241 = arith.constant dense<0.000000e+00> : vector<56x96xf32>
    %260 = tpu.matmul %256, %259, %cst_241 {dimension_numbers = #tpu.dot_dimension_numbers<[1], [0], [0], [1], [0, 0, 1, 1], [], []>} : vector<56x96xbf16>, vector<96x96xbf16>, vector<56x96xf32> -> vector<56x96xf32>
    %261 = arith.addf %257, %260 : vector<56x96xf32>
    %c0_242 = arith.constant 0 : index
    %c0_243 = arith.constant 0 : index
    %262 = vector.load %arg17[%c0_242, %c0_243] : memref<56x96xf32, #tpu.memory_space<vmem>>, vector<56x96xf32>
    tpu.vector_store %arg17[%c0_242, %c0_243], %261 {strides = array<i32>} : memref<56x96xf32, #tpu.memory_space<vmem>>, vector<56x96xf32>,
    %c7 = arith.constant 7 : index
    %c0_244 = arith.constant 0 : index
    %c0_245 = arith.constant 0 : index
    %263 = vector.load %arg1[%c7, %c0_244, %c0_245] : memref<9x56x4xbf16, #tpu.memory_space<vmem>>, vector<1x56x4xbf16>
    %264 = vector.shape_cast %263 : vector<1x56x4xbf16> to vector<56x4xbf16>
    %c0_246 = arith.constant 0 : index
    %c0_247 = arith.constant 0 : index
    %265 = vector.load %arg15[%c0_246, %c0_247] : memref<56x192xf32, #tpu.memory_space<vmem>>, vector<56x192xf32>
    %c7_248 = arith.constant 7 : index
    %c0_249 = arith.constant 0 : index
    %c0_250 = arith.constant 0 : index
    %266 = vector.load %arg2[%c7_248, %c0_249, %c0_250] : memref<9x4x192xbf16, #tpu.memory_space<vmem>>, vector<1x4x192xbf16>
    %267 = vector.shape_cast %266 : vector<1x4x192xbf16> to vector<4x192xbf16>
    %cst_251 = arith.constant dense<0.000000e+00> : vector<56x192xf32>
    %268 = tpu.matmul %264, %267, %cst_251 {dimension_numbers = #tpu.dot_dimension_numbers<[1], [0], [0], [1], [0, 0, 1, 1], [], []>} : vector<56x4xbf16>, vector<4x192xbf16>, vector<56x192xf32> -> vector<56x192xf32>
    %269 = arith.addf %265, %268 : vector<56x192xf32>
    %c0_252 = arith.constant 0 : index
    %c0_253 = arith.constant 0 : index
    %270 = vector.load %arg15[%c0_252, %c0_253] : memref<56x192xf32, #tpu.memory_space<vmem>>, vector<56x192xf32>
    tpu.vector_store %arg15[%c0_252, %c0_253], %269 {strides = array<i32>} : memref<56x192xf32, #tpu.memory_space<vmem>>, vector<56x192xf32>,
    %cst_254 = arith.constant dense<0.000000e+00> : vector<56x64xf32>
    %271 = tpu.matmul %264, %0, %cst_254 {dimension_numbers = #tpu.dot_dimension_numbers<[1], [0], [0], [1], [0, 0, 1, 1], [], []>} : vector<56x4xbf16>, vector<4x64xbf16>, vector<56x64xf32> -> vector<56x64xf32>
    %272 = arith.addf %271, %5 : vector<56x64xf32>
    %cst_255 = arith.constant 0.000000e+00 : f32
    %273 = vector.broadcast %cst_255 : f32 to vector<56x64xf32>
    %274 = arith.maximumf %272, %273 : vector<56x64xf32>
    %275 = arith.truncf %274 : vector<56x64xf32> to vector<56x64xbf16>
    %c0_256 = arith.constant 0 : index
    %c0_257 = arith.constant 0 : index
    %276 = vector.load %arg16[%c0_256, %c0_257] : memref<56x96xf32, #tpu.memory_space<vmem>>, vector<56x96xf32>
    %c7_258 = arith.constant 7 : index
    %c0_259 = arith.constant 0 : index
    %c0_260 = arith.constant 0 : index
    %277 = vector.load %arg6[%c7_258, %c0_259, %c0_260] : memref<9x64x96xbf16, #tpu.memory_space<vmem>>, vector<1x64x96xbf16>
    %278 = vector.shape_cast %277 : vector<1x64x96xbf16> to vector<64x96xbf16>
    %cst_261 = arith.constant dense<0.000000e+00> : vector<56x96xf32>
    %279 = tpu.matmul %275, %278, %cst_261 {dimension_numbers = #tpu.dot_dimension_numbers<[1], [0], [0], [1], [0, 0, 1, 1], [], []>} : vector<56x64xbf16>, vector<64x96xbf16>, vector<56x96xf32> -> vector<56x96xf32>
    %280 = arith.addf %276, %279 : vector<56x96xf32>
    %c0_262 = arith.constant 0 : index
    %c0_263 = arith.constant 0 : index
    %281 = vector.load %arg16[%c0_262, %c0_263] : memref<56x96xf32, #tpu.memory_space<vmem>>, vector<56x96xf32>
    tpu.vector_store %arg16[%c0_262, %c0_263], %280 {strides = array<i32>} : memref<56x96xf32, #tpu.memory_space<vmem>>, vector<56x96xf32>,
    %cst_264 = arith.constant dense<0.000000e+00> : vector<56x64xf32>
    %282 = tpu.matmul %264, %1, %cst_264 {dimension_numbers = #tpu.dot_dimension_numbers<[1], [0], [0], [1], [0, 0, 1, 1], [], []>} : vector<56x4xbf16>, vector<4x64xbf16>, vector<56x64xf32> -> vector<56x64xf32>
    %283 = arith.addf %282, %8 : vector<56x64xf32>
    %cst_265 = arith.constant 0.000000e+00 : f32
    %284 = vector.broadcast %cst_265 : f32 to vector<56x64xf32>
    %285 = arith.maximumf %283, %284 : vector<56x64xf32>
    %286 = arith.truncf %285 : vector<56x64xf32> to vector<56x64xbf16>
    %cst_266 = arith.constant dense<0.000000e+00> : vector<56x96xf32>
    %287 = tpu.matmul %286, %2, %cst_266 {dimension_numbers = #tpu.dot_dimension_numbers<[1], [0], [0], [1], [0, 0, 1, 1], [], []>} : vector<56x64xbf16>, vector<64x96xbf16>, vector<56x96xf32> -> vector<56x96xf32>
    %288 = arith.addf %287, %11 : vector<56x96xf32>
    %cst_267 = arith.constant 0.000000e+00 : f32
    %289 = vector.broadcast %cst_267 : f32 to vector<56x96xf32>
    %290 = arith.maximumf %288, %289 : vector<56x96xf32>
    %291 = arith.truncf %290 : vector<56x96xf32> to vector<56x96xbf16>
    %c0_268 = arith.constant 0 : index
    %c0_269 = arith.constant 0 : index
    %292 = vector.load %arg17[%c0_268, %c0_269] : memref<56x96xf32, #tpu.memory_space<vmem>>, vector<56x96xf32>
    %c7_270 = arith.constant 7 : index
    %c0_271 = arith.constant 0 : index
    %c0_272 = arith.constant 0 : index
    %293 = vector.load %arg12[%c7_270, %c0_271, %c0_272] : memref<9x96x96xbf16, #tpu.memory_space<vmem>>, vector<1x96x96xbf16>
    %294 = vector.shape_cast %293 : vector<1x96x96xbf16> to vector<96x96xbf16>
    %cst_273 = arith.constant dense<0.000000e+00> : vector<56x96xf32>
    %295 = tpu.matmul %291, %294, %cst_273 {dimension_numbers = #tpu.dot_dimension_numbers<[1], [0], [0], [1], [0, 0, 1, 1], [], []>} : vector<56x96xbf16>, vector<96x96xbf16>, vector<56x96xf32> -> vector<56x96xf32>
    %296 = arith.addf %292, %295 : vector<56x96xf32>
    %c0_274 = arith.constant 0 : index
    %c0_275 = arith.constant 0 : index
    %297 = vector.load %arg17[%c0_274, %c0_275] : memref<56x96xf32, #tpu.memory_space<vmem>>, vector<56x96xf32>
    tpu.vector_store %arg17[%c0_274, %c0_275], %296 {strides = array<i32>} : memref<56x96xf32, #tpu.memory_space<vmem>>, vector<56x96xf32>,
    %c8 = arith.constant 8 : index
    %c0_276 = arith.constant 0 : index
    %c0_277 = arith.constant 0 : index
    %298 = vector.load %arg1[%c8, %c0_276, %c0_277] : memref<9x56x4xbf16, #tpu.memory_space<vmem>>, vector<1x56x4xbf16>
    %299 = vector.shape_cast %298 : vector<1x56x4xbf16> to vector<56x4xbf16>
    %c0_278 = arith.constant 0 : index
    %c0_279 = arith.constant 0 : index
    %300 = vector.load %arg15[%c0_278, %c0_279] : memref<56x192xf32, #tpu.memory_space<vmem>>, vector<56x192xf32>
    %c8_280 = arith.constant 8 : index
    %c0_281 = arith.constant 0 : index
    %c0_282 = arith.constant 0 : index
    %301 = vector.load %arg2[%c8_280, %c0_281, %c0_282] : memref<9x4x192xbf16, #tpu.memory_space<vmem>>, vector<1x4x192xbf16>
    %302 = vector.shape_cast %301 : vector<1x4x192xbf16> to vector<4x192xbf16>
    %cst_283 = arith.constant dense<0.000000e+00> : vector<56x192xf32>
    %303 = tpu.matmul %299, %302, %cst_283 {dimension_numbers = #tpu.dot_dimension_numbers<[1], [0], [0], [1], [0, 0, 1, 1], [], []>} : vector<56x4xbf16>, vector<4x192xbf16>, vector<56x192xf32> -> vector<56x192xf32>
    %304 = arith.addf %300, %303 : vector<56x192xf32>
    %c0_284 = arith.constant 0 : index
    %c0_285 = arith.constant 0 : index
    %305 = vector.load %arg15[%c0_284, %c0_285] : memref<56x192xf32, #tpu.memory_space<vmem>>, vector<56x192xf32>
    tpu.vector_store %arg15[%c0_284, %c0_285], %304 {strides = array<i32>} : memref<56x192xf32, #tpu.memory_space<vmem>>, vector<56x192xf32>,
    %cst_286 = arith.constant dense<0.000000e+00> : vector<56x64xf32>
    %306 = tpu.matmul %299, %0, %cst_286 {dimension_numbers = #tpu.dot_dimension_numbers<[1], [0], [0], [1], [0, 0, 1, 1], [], []>} : vector<56x4xbf16>, vector<4x64xbf16>, vector<56x64xf32> -> vector<56x64xf32>
    %307 = arith.addf %306, %5 : vector<56x64xf32>
    %cst_287 = arith.constant 0.000000e+00 : f32
    %308 = vector.broadcast %cst_287 : f32 to vector<56x64xf32>
    %309 = arith.maximumf %307, %308 : vector<56x64xf32>
    %310 = arith.truncf %309 : vector<56x64xf32> to vector<56x64xbf16>
    %c0_288 = arith.constant 0 : index
    %c0_289 = arith.constant 0 : index
    %311 = vector.load %arg16[%c0_288, %c0_289] : memref<56x96xf32, #tpu.memory_space<vmem>>, vector<56x96xf32>
    %c8_290 = arith.constant 8 : index
    %c0_291 = arith.constant 0 : index
    %c0_292 = arith.constant 0 : index
    %312 = vector.load %arg6[%c8_290, %c0_291, %c0_292] : memref<9x64x96xbf16, #tpu.memory_space<vmem>>, vector<1x64x96xbf16>
    %313 = vector.shape_cast %312 : vector<1x64x96xbf16> to vector<64x96xbf16>
    %cst_293 = arith.constant dense<0.000000e+00> : vector<56x96xf32>
    %314 = tpu.matmul %310, %313, %cst_293 {dimension_numbers = #tpu.dot_dimension_numbers<[1], [0], [0], [1], [0, 0, 1, 1], [], []>} : vector<56x64xbf16>, vector<64x96xbf16>, vector<56x96xf32> -> vector<56x96xf32>
    %315 = arith.addf %311, %314 : vector<56x96xf32>
    %c0_294 = arith.constant 0 : index
    %c0_295 = arith.constant 0 : index
    %316 = vector.load %arg16[%c0_294, %c0_295] : memref<56x96xf32, #tpu.memory_space<vmem>>, vector<56x96xf32>
    tpu.vector_store %arg16[%c0_294, %c0_295], %315 {strides = array<i32>} : memref<56x96xf32, #tpu.memory_space<vmem>>, vector<56x96xf32>,
    %cst_296 = arith.constant dense<0.000000e+00> : vector<56x64xf32>
    %317 = tpu.matmul %299, %1, %cst_296 {dimension_numbers = #tpu.dot_dimension_numbers<[1], [0], [0], [1], [0, 0, 1, 1], [], []>} : vector<56x4xbf16>, vector<4x64xbf16>, vector<56x64xf32> -> vector<56x64xf32>
    %318 = arith.addf %317, %8 : vector<56x64xf32>
    %cst_297 = arith.constant 0.000000e+00 : f32
    %319 = vector.broadcast %cst_297 : f32 to vector<56x64xf32>
    %320 = arith.maximumf %318, %319 : vector<56x64xf32>
    %321 = arith.truncf %320 : vector<56x64xf32> to vector<56x64xbf16>
    %cst_298 = arith.constant dense<0.000000e+00> : vector<56x96xf32>
    %322 = tpu.matmul %321, %2, %cst_298 {dimension_numbers = #tpu.dot_dimension_numbers<[1], [0], [0], [1], [0, 0, 1, 1], [], []>} : vector<56x64xbf16>, vector<64x96xbf16>, vector<56x96xf32> -> vector<56x96xf32>
    %323 = arith.addf %322, %11 : vector<56x96xf32>
    %cst_299 = arith.constant 0.000000e+00 : f32
    %324 = vector.broadcast %cst_299 : f32 to vector<56x96xf32>
    %325 = arith.maximumf %323, %324 : vector<56x96xf32>
    %326 = arith.truncf %325 : vector<56x96xf32> to vector<56x96xbf16>
    %c0_300 = arith.constant 0 : index
    %c0_301 = arith.constant 0 : index
    %327 = vector.load %arg17[%c0_300, %c0_301] : memref<56x96xf32, #tpu.memory_space<vmem>>, vector<56x96xf32>
    %c8_302 = arith.constant 8 : index
    %c0_303 = arith.constant 0 : index
    %c0_304 = arith.constant 0 : index
    %328 = vector.load %arg12[%c8_302, %c0_303, %c0_304] : memref<9x96x96xbf16, #tpu.memory_space<vmem>>, vector<1x96x96xbf16>
    %329 = vector.shape_cast %328 : vector<1x96x96xbf16> to vector<96x96xbf16>
    %cst_305 = arith.constant dense<0.000000e+00> : vector<56x96xf32>
    %330 = tpu.matmul %326, %329, %cst_305 {dimension_numbers = #tpu.dot_dimension_numbers<[1], [0], [0], [1], [0, 0, 1, 1], [], []>} : vector<56x96xbf16>, vector<96x96xbf16>, vector<56x96xf32> -> vector<56x96xf32>
    %331 = arith.addf %327, %330 : vector<56x96xf32>
    %c0_306 = arith.constant 0 : index
    %c0_307 = arith.constant 0 : index
    %332 = vector.load %arg17[%c0_306, %c0_307] : memref<56x96xf32, #tpu.memory_space<vmem>>, vector<56x96xf32>
    tpu.vector_store %arg17[%c0_306, %c0_307], %331 {strides = array<i32>} : memref<56x96xf32, #tpu.memory_space<vmem>>, vector<56x96xf32>,
    %c0_308 = arith.constant 0 : index
    %c0_309 = arith.constant 0 : index
    %333 = vector.load %arg15[%c0_308, %c0_309] : memref<56x192xf32, #tpu.memory_space<vmem>>, vector<56x192xf32>
    %c0_310 = arith.constant 0 : index
    %c0_311 = arith.constant 0 : index
    %334 = vector.load %arg3[%c0_310, %c0_311] : memref<1x192xf32, #tpu.memory_space<vmem>>, vector<1x192xf32>
    %335 = vector.broadcast %334 : vector<1x192xf32> to vector<56x192xf32>
    %336 = arith.addf %333, %335 : vector<56x192xf32>
    %cst_312 = arith.constant 0.000000e+00 : f32
    %337 = vector.broadcast %cst_312 : f32 to vector<56x192xf32>
    %338 = arith.maximumf %336, %337 : vector<56x192xf32>
    %339 = arith.truncf %338 : vector<56x192xf32> to vector<56x192xbf16>
    %c0_313 = arith.constant 0 : index
    %c0_314 = arith.constant 0 : index
    %340 = vector.load %arg16[%c0_313, %c0_314] : memref<56x96xf32, #tpu.memory_space<vmem>>, vector<56x96xf32>
    %c0_315 = arith.constant 0 : index
    %c0_316 = arith.constant 0 : index
    %341 = vector.load %arg7[%c0_315, %c0_316] : memref<1x96xf32, #tpu.memory_space<vmem>>, vector<1x96xf32>
    %342 = vector.broadcast %341 : vector<1x96xf32> to vector<56x96xf32>
    %343 = arith.addf %340, %342 : vector<56x96xf32>
    %cst_317 = arith.constant 0.000000e+00 : f32
    %344 = vector.broadcast %cst_317 : f32 to vector<56x96xf32>
    %345 = arith.maximumf %343, %344 : vector<56x96xf32>
    %346 = arith.truncf %345 : vector<56x96xf32> to vector<56x96xbf16>
    %c0_318 = arith.constant 0 : index
    %c0_319 = arith.constant 0 : index
    %347 = vector.load %arg17[%c0_318, %c0_319] : memref<56x96xf32, #tpu.memory_space<vmem>>, vector<56x96xf32>
    %c0_320 = arith.constant 0 : index
    %c0_321 = arith.constant 0 : index
    %348 = vector.load %arg13[%c0_320, %c0_321] : memref<1x96xf32, #tpu.memory_space<vmem>>, vector<1x96xf32>
    %349 = vector.broadcast %348 : vector<1x96xf32> to vector<56x96xf32>
    %350 = arith.addf %347, %349 : vector<56x96xf32>
    %cst_322 = arith.constant 0.000000e+00 : f32
    %351 = vector.broadcast %cst_322 : f32 to vector<56x96xf32>
    %352 = arith.maximumf %350, %351 : vector<56x96xf32>
    %353 = arith.truncf %352 : vector<56x96xf32> to vector<56x96xbf16>
    %354 = tpu.concatenate %339, %346, %353 in 1 : vector<56x192xbf16>, vector<56x96xbf16>, vector<56x96xbf16> -> vector<56x384xbf16>
    %c0_323 = arith.constant 0 : index
    %c0_324 = arith.constant 0 : index
    %355 = vector.load %arg14[%c0_323, %c0_324] : memref<56x384xbf16, #tpu.memory_space<vmem>>, vector<56x384xbf16>
    tpu.vector_store %arg14[%c0_323, %c0_324], %354 {strides = array<i32>} : memref<56x384xbf16, #tpu.memory_space<vmem>>, vector<56x384xbf16>,
    return
  }
  func.func @transform_0(%arg0: i32) -> (i32, i32, i32) {
    %c0_i32 = arith.constant 0 : i32
    %c0_i32_0 = arith.constant 0 : i32
    %c0_i32_1 = arith.constant 0 : i32
    return %c0_i32, %arg0, %c0_i32_0 : i32, i32, i32
  }
  func.func @transform_1(%arg0: i32) -> (i32, i32, i32) {
    %c0_i32 = arith.constant 0 : i32
    %c0_i32_0 = arith.constant 0 : i32
    %c0_i32_1 = arith.constant 0 : i32
    %c0_i32_2 = arith.constant 0 : i32
    return %c0_i32, %c0_i32_0, %c0_i32_1 : i32, i32, i32
  }
  func.func @transform_2(%arg0: i32) -> (i32, i32) {
    %c0_i32 = arith.constant 0 : i32
    %c0_i32_0 = arith.constant 0 : i32
    %c0_i32_1 = arith.constant 0 : i32
    return %c0_i32, %c0_i32_0 : i32, i32
  }
  func.func @transform_3(%arg0: i32) -> (i32, i32) {
    %c0_i32 = arith.constant 0 : i32
    %c0_i32_0 = arith.constant 0 : i32
    %c0_i32_1 = arith.constant 0 : i32
    return %c0_i32, %c0_i32_0 : i32, i32
  }
  func.func @transform_4(%arg0: i32) -> (i32, i32) {
    %c0_i32 = arith.constant 0 : i32
    %c0_i32_0 = arith.constant 0 : i32
    %c0_i32_1 = arith.constant 0 : i32
    return %c0_i32, %c0_i32_0 : i32, i32
  }
  func.func @transform_5(%arg0: i32) -> (i32, i32, i32) {
    %c0_i32 = arith.constant 0 : i32
    %c0_i32_0 = arith.constant 0 : i32
    %c0_i32_1 = arith.constant 0 : i32
    %c0_i32_2 = arith.constant 0 : i32
    return %c0_i32, %c0_i32_0, %c0_i32_1 : i32, i32, i32
  }
  func.func @transform_6(%arg0: i32) -> (i32, i32) {
    %c0_i32 = arith.constant 0 : i32
    %c0_i32_0 = arith.constant 0 : i32
    %c0_i32_1 = arith.constant 0 : i32
    return %c0_i32, %c0_i32_0 : i32, i32
  }
  func.func @transform_7(%arg0: i32) -> (i32, i32) {
    %c0_i32 = arith.constant 0 : i32
    %c0_i32_0 = arith.constant 0 : i32
    %c0_i32_1 = arith.constant 0 : i32
    return %c0_i32, %c0_i32_0 : i32, i32
  }
  func.func @transform_8(%arg0: i32) -> (i32, i32) {
    %c0_i32 = arith.constant 0 : i32
    %c0_i32_0 = arith.constant 0 : i32
    %c0_i32_1 = arith.constant 0 : i32
    return %c0_i32, %c0_i32_0 : i32, i32
  }
  func.func @transform_9(%arg0: i32) -> (i32, i32) {
    %c0_i32 = arith.constant 0 : i32
    %c0_i32_0 = arith.constant 0 : i32
    %c0_i32_1 = arith.constant 0 : i32
    return %c0_i32, %c0_i32_0 : i32, i32
  }
  func.func @transform_10(%arg0: i32) -> (i32, i32) {
    %c0_i32 = arith.constant 0 : i32
    %c0_i32_0 = arith.constant 0 : i32
    %c0_i32_1 = arith.constant 0 : i32
    return %c0_i32, %c0_i32_0 : i32, i32
  }
  func.func @transform_11(%arg0: i32) -> (i32, i32, i32) {
    %c0_i32 = arith.constant 0 : i32
    %c0_i32_0 = arith.constant 0 : i32
    %c0_i32_1 = arith.constant 0 : i32
    %c0_i32_2 = arith.constant 0 : i32
    return %c0_i32, %c0_i32_0, %c0_i32_1 : i32, i32, i32
  }
  func.func @transform_12(%arg0: i32) -> (i32, i32) {
    %c0_i32 = arith.constant 0 : i32
    %c0_i32_0 = arith.constant 0 : i32
    %c0_i32_1 = arith.constant 0 : i32
    return %c0_i32, %c0_i32_0 : i32, i32
  }
  func.func @transform_13(%arg0: i32) -> (i32, i32) {
    %c0_i32 = arith.constant 0 : i32
    %c0_i32_0 = arith.constant 0 : i32
    return %arg0, %c0_i32 : i32, i32
  }
}

</mosaic_0001>

<llo_original>
// kernel: inception_a_forward.1
$region0: #{inception_a_forward.1}
  #allocation0 [shape = 'u32[]', space=smem, size = 0x4, offset = 0x4, fixed_abs, tag = 'smem constant byte address 0x4 - core index']
  #allocation1 [shape = 'u32[144,128]{1,0:T(1,128)}', space=vmem, size = 0x12000, scoped, tag = 'internal scratch']
  #allocation2 [shape = 'f32[56,192]{1,0:T(8,128)}', space=vmem, size = 0xe000, scoped, tag = 'scratch operand']
  #allocation3 [shape = 'f32[56,96]{1,0:T(8,128)}', space=vmem, size = 0x7000, scoped, tag = 'scratch operand']
  #allocation4 [shape = 'f32[56,96]{1,0:T(8,128)}', space=vmem, size = 0x7000, scoped, tag = 'scratch operand']
  %s0 = inlined_call_operand.vmem [shape: bf16[9,112,4], index: 0, kind: input, shape index: {}]
  %s1 = inlined_call_operand.vmem [shape: bf16[9,4,192], index: 1, kind: input, shape index: {}]
  %s2 = inlined_call_operand.vmem [shape: f32[1,192], index: 2, kind: input, shape index: {}]
  %s3 = inlined_call_operand.vmem [shape: bf16[4,64], index: 3, kind: input, shape index: {}]
  %s4 = inlined_call_operand.vmem [shape: f32[1,64], index: 4, kind: input, shape index: {}]
  %s5 = inlined_call_operand.vmem [shape: bf16[9,64,96], index: 5, kind: input, shape index: {}]
  %s6 = inlined_call_operand.vmem [shape: f32[1,96], index: 6, kind: input, shape index: {}]
  %s7 = inlined_call_operand.vmem [shape: bf16[4,64], index: 7, kind: input, shape index: {}]
  %s8 = inlined_call_operand.vmem [shape: f32[1,64], index: 8, kind: input, shape index: {}]
  %s9 = inlined_call_operand.vmem [shape: bf16[64,96], index: 9, kind: input, shape index: {}]
  %s10 = inlined_call_operand.vmem [shape: f32[1,96], index: 10, kind: input, shape index: {}]
  %s11 = inlined_call_operand.vmem [shape: bf16[9,96,96], index: 11, kind: input, shape index: {}]
  %s12 = inlined_call_operand.vmem [shape: f32[1,96], index: 12, kind: input, shape index: {}]
  %s13 = inlined_call_operand.vmem [shape: bf16[112,384], index: 13, kind: output, shape index: {}]
  %s14 = sld [smem:[#allocation0]]
  $region126: #{inception_a_forward.1} parent=0
    _
  %s16 = ssub.s32 1, %s14
  %s17 = scalar_select 0, %s16, %s14
  $region1: #{inception_a_forward.1} parent=0
    #allocation5 [shape = 'u8[258048]{0}', space=vmem, size = 0x3f000, scoped, tag = 'input window, operand 0']
    loop: start=0, step=1, limit=4
    $region2: #{inception_a_forward.1} parent=1 // loop_pre_header
      _
    $region3: #{inception_a_forward.1} parent=1 // loop_header
      %s19 = sphi 0, %s23
      %p20 = scmp.ge.s32.totalorder %s19, 4
      %s29 = sphi 0, %s31
      %s32 = sphi 0, %s29
      %s33 = sphi 0, %s32
      %s49 = sphi 0, %s33
      %s53 = sphi 0, %s53
      %s55 = sphi 0, %s53
      %s56 = sphi 0, %s55
      %s70 = sphi 0, %s56
      %s74 = sphi 0, %s74
      %s76 = sphi 0, %s74
      %s77 = sphi 0, %s76
      %s91 = sphi 0, %s77
      %s95 = sphi 0, %s95
      %s97 = sphi 0, %s95
      %s98 = sphi 0, %s97
      %s112 = sphi 0, %s98
      %s116 = sphi 0, %s116
      %s118 = sphi 0, %s116
      %s119 = sphi 0, %s118
      %s133 = sphi 0, %s119
      %s137 = sphi 0, %s137
      %s139 = sphi 0, %s137
      %s140 = sphi 0, %s139
      %s154 = sphi 0, %s140
      %s158 = sphi 0, %s158
      %s160 = sphi 0, %s158
      %s161 = sphi 0, %s160
      %s175 = sphi 0, %s161
      %s179 = sphi 0, %s179
      %s181 = sphi 0, %s179
      %s182 = sphi 0, %s181
      %s196 = sphi 0, %s182
      %s200 = sphi 0, %s200
      %s202 = sphi 0, %s200
      %s203 = sphi 0, %s202
      %s217 = sphi 0, %s203
      %s221 = sphi 0, %s221
      %s223 = sphi 0, %s221
      %s224 = sphi 0, %s223
      %s238 = sphi 0, %s224
      %s242 = sphi 0, %s242
      %s244 = sphi 0, %s242
      %s245 = sphi 0, %s244
      %s259 = sphi 0, %s245
      %s263 = sphi 0, %s263
      %s265 = sphi 0, %s263
      %s266 = sphi 0, %s265
      %s280 = sphi 0, %s266
      %s284 = sphi 0, %s284
      %s286 = sphi 0, %s284
      %s287 = sphi 0, %s286
      %s301 = sphi 0, %s287
      %s307 = sphi 0, %s309
      %s310 = sphi 0, %s307
      %s311 = sphi 0, %s310
      %s327 = sphi 0, %s311
    $region4: #{inception_a_forward.1} parent=1 // loop_header_branch
      %22 = sbr.rel (%p20) target = $region8
    $region5: #{inception_a_forward.1} parent=1 // loop_body
      %s24 = ssub.s32 %s19, 1
      %s25 = ssub.s32 %s19, 2
      %s26 = sadd.s32 %s19, 1
      %s27 = ssub.s32 %s19, %s26
      %p28 = scmp.eq.s32.totalorder %s27, 0
      %s30 = sadd.s32 %s29, 1
      %s31 = scalar_select %p28, %s29, %s30
      %p34 = pneg %p28
      %p35 = scmp.eq.s32.totalorder %s19, 1
      %p36 = por %p34, %p35
      %p37 = scmp.ne.s32.totalorder %s29, %s32
      %p38 = scmp.eq.s32.totalorder %s19, 0
      %p39 = por %p37, %p38
      %p40 = scmp.ne.s32.totalorder %s29, %s32
      %p41 = scmp.eq.s32.totalorder %s24, 1
      %p42 = por %p40, %p41
      %p43 = scmp.ne.s32.totalorder %s32, %s33
      %p44 = scmp.eq.s32.totalorder %s24, 0
      %p45 = por %p43, %p44
      %p46 = scmp.ne.s32.totalorder %s32, %s33
      %p47 = scmp.eq.s32.totalorder %s25, 1
      %p48 = por %p46, %p47
      %p50 = scmp.ne.s32.totalorder %s33, %s49
      %p51 = scmp.eq.s32.totalorder %s25, 0
      %p52 = por %p50, %p51
      %s54 = sadd.s32 %s53, 1
      %p57 = scmp.eq.s32.totalorder %s19, 1
      %p58 = scmp.ne.s32.totalorder %s53, %s55
      %p59 = scmp.eq.s32.totalorder %s19, 0
      %p60 = por %p58, %p59
      %p61 = scmp.ne.s32.totalorder %s53, %s55
      %p62 = scmp.eq.s32.totalorder %s24, 1
      %p63 = por %p61, %p62
      %p64 = scmp.ne.s32.totalorder %s55, %s56
      %p65 = scmp.eq.s32.totalorder %s24, 0
      %p66 = por %p64, %p65
      %p67 = scmp.ne.s32.totalorder %s55, %s56
      %p68 = scmp.eq.s32.totalorder %s25, 1
      %p69 = por %p67, %p68
      %p71 = scmp.ne.s32.totalorder %s56, %s70
      %p72 = scmp.eq.s32.totalorder %s25, 0
      %p73 = por %p71, %p72
      %s75 = sadd.s32 %s74, 1
      %p78 = scmp.eq.s32.totalorder %s19, 1
      %p79 = scmp.ne.s32.totalorder %s74, %s76
      %p80 = scmp.eq.s32.totalorder %s19, 0
      %p81 = por %p79, %p80
      %p82 = scmp.ne.s32.totalorder %s74, %s76
      %p83 = scmp.eq.s32.totalorder %s24, 1
      %p84 = por %p82, %p83
      %p85 = scmp.ne.s32.totalorder %s76, %s77
      %p86 = scmp.eq.s32.totalorder %s24, 0
      %p87 = por %p85, %p86
      %p88 = scmp.ne.s32.totalorder %s76, %s77
      %p89 = scmp.eq.s32.totalorder %s25, 1
      %p90 = por %p88, %p89
      %p92 = scmp.ne.s32.totalorder %s77, %s91
      %p93 = scmp.eq.s32.totalorder %s25, 0
      %p94 = por %p92, %p93
      %s96 = sadd.s32 %s95, 1
      %p99 = scmp.eq.s32.totalorder %s19, 1
      %p100 = scmp.ne.s32.totalorder %s95, %s97
      %p101 = scmp.eq.s32.totalorder %s19, 0
      %p102 = por %p100, %p101
      %p103 = scmp.ne.s32.totalorder %s95, %s97
      %p104 = scmp.eq.s32.totalorder %s24, 1
      %p105 = por %p103, %p104
      %p106 = scmp.ne.s32.totalorder %s97, %s98
      %p107 = scmp.eq.s32.totalorder %s24, 0
      %p108 = por %p106, %p107
      %p109 = scmp.ne.s32.totalorder %s97, %s98
      %p110 = scmp.eq.s32.totalorder %s25, 1
      %p111 = por %p109, %p110
      %p113 = scmp.ne.s32.totalorder %s98, %s112
      %p114 = scmp.eq.s32.totalorder %s25, 0
      %p115 = por %p113, %p114
      %s117 = sadd.s32 %s116, 1
      %p120 = scmp.eq.s32.totalorder %s19, 1
      %p121 = scmp.ne.s32.totalorder %s116, %s118
      %p122 = scmp.eq.s32.totalorder %s19, 0
      %p123 = por %p121, %p122
      %p124 = scmp.ne.s32.totalorder %s116, %s118
      %p125 = scmp.eq.s32.totalorder %s24, 1
      %p126 = por %p124, %p125
      %p127 = scmp.ne.s32.totalorder %s118, %s119
      %p128 = scmp.eq.s32.totalorder %s24, 0
      %p129 = por %p127, %p128
      %p130 = scmp.ne.s32.totalorder %s118, %s119
      %p131 = scmp.eq.s32.totalorder %s25, 1
      %p132 = por %p130, %p131
      %p134 = scmp.ne.s32.totalorder %s119, %s133
      %p135 = scmp.eq.s32.totalorder %s25, 0
      %p136 = por %p134, %p135
      %s138 = sadd.s32 %s137, 1
      %p141 = scmp.eq.s32.totalorder %s19, 1
      %p142 = scmp.ne.s32.totalorder %s137, %s139
      %p143 = scmp.eq.s32.totalorder %s19, 0
      %p144 = por %p142, %p143
      %p145 = scmp.ne.s32.totalorder %s137, %s139
      %p146 = scmp.eq.s32.totalorder %s24, 1
      %p147 = por %p145, %p146
      %p148 = scmp.ne.s32.totalorder %s139, %s140
      %p149 = scmp.eq.s32.totalorder %s24, 0
      %p150 = por %p148, %p149
      %p151 = scmp.ne.s32.totalorder %s139, %s140
      %p152 = scmp.eq.s32.totalorder %s25, 1
      %p153 = por %p151, %p152
      %p155 = scmp.ne.s32.totalorder %s140, %s154
      %p156 = scmp.eq.s32.totalorder %s25, 0
      %p157 = por %p155, %p156
      %s159 = sadd.s32 %s158, 1
      %p162 = scmp.eq.s32.totalorder %s19, 1
      %p163 = scmp.ne.s32.totalorder %s158, %s160
      %p164 = scmp.eq.s32.totalorder %s19, 0
      %p165 = por %p163, %p164
      %p166 = scmp.ne.s32.totalorder %s158, %s160
      %p167 = scmp.eq.s32.totalorder %s24, 1
      %p168 = por %p166, %p167
      %p169 = scmp.ne.s32.totalorder %s160, %s161
      %p170 = scmp.eq.s32.totalorder %s24, 0
      %p171 = por %p169, %p170
      %p172 = scmp.ne.s32.totalorder %s160, %s161
      %p173 = scmp.eq.s32.totalorder %s25, 1
      %p174 = por %p172, %p173
      %p176 = scmp.ne.s32.totalorder %s161, %s175
      %p177 = scmp.eq.s32.totalorder %s25, 0
      %p178 = por %p176, %p177
      %s180 = sadd.s32 %s179, 1
      %p183 = scmp.eq.s32.totalorder %s19, 1
      %p184 = scmp.ne.s32.totalorder %s179, %s181
      %p185 = scmp.eq.s32.totalorder %s19, 0
      %p186 = por %p184, %p185
      %p187 = scmp.ne.s32.totalorder %s179, %s181
      %p188 = scmp.eq.s32.totalorder %s24, 1
      %p189 = por %p187, %p188
      %p190 = scmp.ne.s32.totalorder %s181, %s182
      %p191 = scmp.eq.s32.totalorder %s24, 0
      %p192 = por %p190, %p191
      %p193 = scmp.ne.s32.totalorder %s181, %s182
      %p194 = scmp.eq.s32.totalorder %s25, 1
      %p195 = por %p193, %p194
      %p197 = scmp.ne.s32.totalorder %s182, %s196
      %p198 = scmp.eq.s32.totalorder %s25, 0
      %p199 = por %p197, %p198
      %s201 = sadd.s32 %s200, 1
      %p204 = scmp.eq.s32.totalorder %s19, 1
      %p205 = scmp.ne.s32.totalorder %s200, %s202
      %p206 = scmp.eq.s32.totalorder %s19, 0
      %p207 = por %p205, %p206
      %p208 = scmp.ne.s32.totalorder %s200, %s202
      %p209 = scmp.eq.s32.totalorder %s24, 1
      %p210 = por %p208, %p209
      %p211 = scmp.ne.s32.totalorder %s202, %s203
      %p212 = scmp.eq.s32.totalorder %s24, 0
      %p213 = por %p211, %p212
      %p214 = scmp.ne.s32.totalorder %s202, %s203
      %p215 = scmp.eq.s32.totalorder %s25, 1
      %p216 = por %p214, %p215
      %p218 = scmp.ne.s32.totalorder %s203, %s217
      %p219 = scmp.eq.s32.totalorder %s25, 0
      %p220 = por %p218, %p219
      %s222 = sadd.s32 %s221, 1
      %p225 = scmp.eq.s32.totalorder %s19, 1
      %p226 = scmp.ne.s32.totalorder %s221, %s223
      %p227 = scmp.eq.s32.totalorder %s19, 0
      %p228 = por %p226, %p227
      %p229 = scmp.ne.s32.totalorder %s221, %s223
      %p230 = scmp.eq.s32.totalorder %s24, 1
      %p231 = por %p229, %p230
      %p232 = scmp.ne.s32.totalorder %s223, %s224
      %p233 = scmp.eq.s32.totalorder %s24, 0
      %p234 = por %p232, %p233
      %p235 = scmp.ne.s32.totalorder %s223, %s224
      %p236 = scmp.eq.s32.totalorder %s25, 1
      %p237 = por %p235, %p236
      %p239 = scmp.ne.s32.totalorder %s224, %s238
      %p240 = scmp.eq.s32.totalorder %s25, 0
      %p241 = por %p239, %p240
      %s243 = sadd.s32 %s242, 1
      %p246 = scmp.eq.s32.totalorder %s19, 1
      %p247 = scmp.ne.s32.totalorder %s242, %s244
      %p248 = scmp.eq.s32.totalorder %s19, 0
      %p249 = por %p247, %p248
      %p250 = scmp.ne.s32.totalorder %s242, %s244
      %p251 = scmp.eq.s32.totalorder %s24, 1
      %p252 = por %p250, %p251
      %p253 = scmp.ne.s32.totalorder %s244, %s245
      %p254 = scmp.eq.s32.totalorder %s24, 0
      %p255 = por %p253, %p254
      %p256 = scmp.ne.s32.totalorder %s244, %s245
      %p257 = scmp.eq.s32.totalorder %s25, 1
      %p258 = por %p256, %p257
      %p260 = scmp.ne.s32.totalorder %s245, %s259
      %p261 = scmp.eq.s32.totalorder %s25, 0
      %p262 = por %p260, %p261
      %s264 = sadd.s32 %s263, 1
      %p267 = scmp.eq.s32.totalorder %s19, 1
      %p268 = scmp.ne.s32.totalorder %s263, %s265
      %p269 = scmp.eq.s32.totalorder %s19, 0
      %p270 = por %p268, %p269
      %p271 = scmp.ne.s32.totalorder %s263, %s265
      %p272 = scmp.eq.s32.totalorder %s24, 1
      %p273 = por %p271, %p272
      %p274 = scmp.ne.s32.totalorder %s265, %s266
      %p275 = scmp.eq.s32.totalorder %s24, 0
      %p276 = por %p274, %p275
      %p277 = scmp.ne.s32.totalorder %s265, %s266
      %p278 = scmp.eq.s32.totalorder %s25, 1
      %p279 = por %p277, %p278
      %p281 = scmp.ne.s32.totalorder %s266, %s280
      %p282 = scmp.eq.s32.totalorder %s25, 0
      %p283 = por %p281, %p282
      %s285 = sadd.s32 %s284, 1
      %p288 = scmp.eq.s32.totalorder %s19, 1
      %p289 = scmp.ne.s32.totalorder %s284, %s286
      %p290 = scmp.eq.s32.totalorder %s19, 0
      %p291 = por %p289, %p290
      %p292 = scmp.ne.s32.totalorder %s284, %s286
      %p293 = scmp.eq.s32.totalorder %s24, 1
      %p294 = por %p292, %p293
      %p295 = scmp.ne.s32.totalorder %s286, %s287
      %p296 = scmp.eq.s32.totalorder %s24, 0
      %p297 = por %p295, %p296
      %p298 = scmp.ne.s32.totalorder %s286, %s287
      %p299 = scmp.eq.s32.totalorder %s25, 1
      %p300 = por %p298, %p299
      %p302 = scmp.ne.s32.totalorder %s287, %s301
      %p303 = scmp.eq.s32.totalorder %s25, 0
      %p304 = por %p302, %p303
      %s305 = ssub.s32 %s19, %s26
      %p306 = scmp.eq.s32.totalorder %s305, 0
      %s308 = sadd.s32 %s307, 1
      %s309 = scalar_select %p306, %s307, %s308
      %p312 = pneg %p306
      %p313 = scmp.eq.s32.totalorder %s19, 1
      %p314 = por %p312, %p313
      %p315 = scmp.ne.s32.totalorder %s307, %s310
      %p316 = scmp.eq.s32.totalorder %s19, 0
      %p317 = por %p315, %p316
      %p318 = scmp.ne.s32.totalorder %s307, %s310
      %p319 = scmp.eq.s32.totalorder %s24, 1
      %p320 = por %p318, %p319
      %p321 = scmp.ne.s32.totalorder %s310, %s311
      %p322 = scmp.eq.s32.totalorder %s24, 0
      %p323 = por %p321, %p322
      %p324 = scmp.ne.s32.totalorder %s310, %s311
      %p325 = scmp.eq.s32.totalorder %s25, 1
      %p326 = por %p324, %p325
      %p328 = scmp.ne.s32.totalorder %s311, %s327
      %p329 = scmp.eq.s32.totalorder %s25, 0
      %p330 = por %p328, %p329
      %p331 = scmp.le.s32.totalorder 1, %s19
      %p332 = scmp.lt.s32.totalorder %s19, 3
      %p333 = pnand %p331, %p332
      %p334 = pneg %p333
      // Predicated region
      $region9: #{inception_a_forward.1} parent=5 // pred_check
        _
      $region10: #{inception_a_forward.1} parent=5 // pred_check_branch
        %336 = sbr.rel (%p333) target = $region12
      $region11: #{inception_a_forward.1} parent=5 // pred_region
        %s337 = ssub.s32 %s19, 1
        // Predicated region
        $region13: #{inception_a_forward.1} parent=11 // pred_check
          %p338 = pneg %p66
        $region14: #{inception_a_forward.1} parent=11 // pred_check_branch
          %340 = sbr.rel (%p338) target = $region16
        $region15: #{inception_a_forward.1} parent=11 // pred_region
          _
        $region16: #{inception_a_forward.1} parent=11 // pred_fallthru
          _
        // Predicated region
        $region17: #{inception_a_forward.1} parent=11 // pred_check
          %p341 = pneg %p87
        $region18: #{inception_a_forward.1} parent=11 // pred_check_branch
          %343 = sbr.rel (%p341) target = $region20
        $region19: #{inception_a_forward.1} parent=11 // pred_region
          _
        $region20: #{inception_a_forward.1} parent=11 // pred_fallthru
          _
        // Predicated region
        $region21: #{inception_a_forward.1} parent=11 // pred_check
          %p344 = pneg %p108
        $region22: #{inception_a_forward.1} parent=11 // pred_check_branch
          %346 = sbr.rel (%p344) target = $region24
        $region23: #{inception_a_forward.1} parent=11 // pred_region
          _
        $region24: #{inception_a_forward.1} parent=11 // pred_fallthru
          _
        // Predicated region
        $region25: #{inception_a_forward.1} parent=11 // pred_check
          %p347 = pneg %p129
        $region26: #{inception_a_forward.1} parent=11 // pred_check_branch
          %349 = sbr.rel (%p347) target = $region28
        $region27: #{inception_a_forward.1} parent=11 // pred_region
          _
        $region28: #{inception_a_forward.1} parent=11 // pred_fallthru
          _
        // Predicated region
        $region29: #{inception_a_forward.1} parent=11 // pred_check
          %p350 = pneg %p150
        $region30: #{inception_a_forward.1} parent=11 // pred_check_branch
          %352 = sbr.rel (%p350) target = $region32
        $region31: #{inception_a_forward.1} parent=11 // pred_region
          _
        $region32: #{inception_a_forward.1} parent=11 // pred_fallthru
          _
        // Predicated region
        $region33: #{inception_a_forward.1} parent=11 // pred_check
          %p353 = pneg %p171
        $region34: #{inception_a_forward.1} parent=11 // pred_check_branch
          %355 = sbr.rel (%p353) target = $region36
        $region35: #{inception_a_forward.1} parent=11 // pred_region
          _
        $region36: #{inception_a_forward.1} parent=11 // pred_fallthru
          _
        // Predicated region
        $region37: #{inception_a_forward.1} parent=11 // pred_check
          %p356 = pneg %p192
        $region38: #{inception_a_forward.1} parent=11 // pred_check_branch
          %358 = sbr.rel (%p356) target = $region40
        $region39: #{inception_a_forward.1} parent=11 // pred_region
          _
        $region40: #{inception_a_forward.1} parent=11 // pred_fallthru
          _
        // Predicated region
        $region41: #{inception_a_forward.1} parent=11 // pred_check
          %p359 = pneg %p213
        $region42: #{inception_a_forward.1} parent=11 // pred_check_branch
          %361 = sbr.rel (%p359) target = $region44
        $region43: #{inception_a_forward.1} parent=11 // pred_region
          _
        $region44: #{inception_a_forward.1} parent=11 // pred_fallthru
          _
        // Predicated region
        $region45: #{inception_a_forward.1} parent=11 // pred_check
          %p362 = pneg %p234
        $region46: #{inception_a_forward.1} parent=11 // pred_check_branch
          %364 = sbr.rel (%p362) target = $region48
        $region47: #{inception_a_forward.1} parent=11 // pred_region
          _
        $region48: #{inception_a_forward.1} parent=11 // pred_fallthru
          _
        // Predicated region
        $region49: #{inception_a_forward.1} parent=11 // pred_check
          %p365 = pneg %p255
        $region50: #{inception_a_forward.1} parent=11 // pred_check_branch
          %367 = sbr.rel (%p365) target = $region52
        $region51: #{inception_a_forward.1} parent=11 // pred_region
          _
        $region52: #{inception_a_forward.1} parent=11 // pred_fallthru
          _
        // Predicated region
        $region53: #{inception_a_forward.1} parent=11 // pred_check
          %p368 = pneg %p276
        $region54: #{inception_a_forward.1} parent=11 // pred_check_branch
          %370 = sbr.rel (%p368) target = $region56
        $region55: #{inception_a_forward.1} parent=11 // pred_region
          _
        $region56: #{inception_a_forward.1} parent=11 // pred_fallthru
          _
        // Predicated region
        $region57: #{inception_a_forward.1} parent=11 // pred_check
          %p371 = pneg %p297
        $region58: #{inception_a_forward.1} parent=11 // pred_check_branch
          %373 = sbr.rel (%p371) target = $region60
        $region59: #{inception_a_forward.1} parent=11 // pred_region
          _
        $region60: #{inception_a_forward.1} parent=11 // pred_fallthru
          _
      $region12: #{inception_a_forward.1} parent=5 // pred_fallthru
        _
      %p374 = scmp.lt.s32.totalorder %s19, 2
      // Predicated region
      $region61: #{inception_a_forward.1} parent=5 // pred_check
        %p375 = pneg %p374
      $region62: #{inception_a_forward.1} parent=5 // pred_check_branch
        %377 = sbr.rel (%p375) target = $region64
      $region63: #{inception_a_forward.1} parent=5 // pred_region
        // Predicated region
        $region65: #{inception_a_forward.1} parent=63 // pred_check
          %p378 = pneg %p39
        $region66: #{inception_a_forward.1} parent=63 // pred_check_branch
          %380 = sbr.rel (%p378) target = $region68
        $region67: #{inception_a_forward.1} parent=63 // pred_region
          %s381 = sand.u32 %s29, 1
          %s382 = sand.u32 %s29, 1
          %s383 = smul.addr %s382, 252
          %s384 = scalar_lea.vmem [#allocation5], %s383
          %s385 = smul.u32 7, %s19
          %s386 = smul.addr %s385, 4
          %s387 = scalar_lea.vmem %s0, %s386
          // Predicated region
          $region69: #{inception_a_forward.1} parent=67 // pred_check
            _
          $region70: #{inception_a_forward.1} parent=67 // pred_check_branch
            %389 = sbr.rel (0) target = $region72
          $region71: #{inception_a_forward.1} parent=67 // pred_region
            // Predicated region
            $region73: #{inception_a_forward.1} parent=71 // pred_check
              _
            $region74: #{inception_a_forward.1} parent=71 // pred_check_branch
              %391 = sbr.rel target = $region76
            $region75: #{inception_a_forward.1} parent=71 // pred_region
              // Predicated region
              $region88: #{inception_a_forward.1} parent=75 // pred_check
                _
              $region89: #{inception_a_forward.1} parent=75 // pred_check_branch
                %530 = sbr.rel (0) target = $region91
              $region90: #{inception_a_forward.1} parent=75 // pred_region
                loop: start=0, step=1, limit=1
                $region92: #{inception_a_forward.1} parent=90 // loop_pre_header
                  _
                $region93: #{inception_a_forward.1} parent=90 // loop_header
                  %s532 = sphi 0, %s536
                  %p533 = scmp.ge.s32.totalorder %s532, 1
                  %s537 = sphi %s387, %s387
                  %s538 = sphi %s384, %s384
                $region94: #{inception_a_forward.1} parent=90 // loop_header_branch
                  %535 = sbr.rel (%p533) target = $region98
                $region95: #{inception_a_forward.1} parent=90 // loop_body
                  _
                $region96: #{inception_a_forward.1} parent=90 // loop_footer
                  %s536 = sadd.s32 1, %s532
                $region97: #{inception_a_forward.1} parent=90 // loop_footer_branch
                  %531 = sbr.rel target = $region93
                $region98: #{inception_a_forward.1} parent=90 // loop_exit
                  _
                loop: start=0, step=1, limit=1
                $region99: #{inception_a_forward.1} parent=90 // loop_pre_header
                  _
                $region100: #{inception_a_forward.1} parent=90 // loop_header
                  %s541 = sphi 0, %s545
                  %p542 = scmp.ge.s32.totalorder %s541, 1
                  %s546 = sphi %s387, %s387
                  %s547 = sphi %s384, %s384
                $region101: #{inception_a_forward.1} parent=90 // loop_header_branch
                  %544 = sbr.rel (%p542) target = $region105
                $region102: #{inception_a_forward.1} parent=90 // loop_body
                  %v548 = vld [vmem:[%s546] sm:$0xf]
                  %549 = vst [vmem:[%s547] sm:$0xf] %v548
                  %v550 = vld [vmem:[%s546 + $0x4] sm:$0xf]
                  %551 = vst [vmem:[%s547 + $0x4] sm:$0xf] %v550
                  %v552 = vld [vmem:[%s546 + $0x8] sm:$0xf]
                  %553 = vst [vmem:[%s547 + $0x8] sm:$0xf] %v552
                  %v554 = vld [vmem:[%s546 + $0xc] sm:$0xf]
                  %555 = vst [vmem:[%s547 + $0xc] sm:$0xf] %v554
                  %v556 = vld [vmem:[%s546 + $0x10] sm:$0xf]
                  %557 = vst [vmem:[%s547 + $0x10] sm:$0xf] %v556
                  %v558 = vld [vmem:[%s546 + $0x14] sm:$0xf]
                  %559 = vst [vmem:[%s547 + $0x14] sm:$0xf] %v558
                  %v560 = vld [vmem:[%s546 + $0x18] sm:$0xf]
                  %561 = vst [vmem:[%s547 + $0x18] sm:$0xf] %v560
                  %v562 = vld [vmem:[%s546 + $0x38] sm:$0xf]
                  %563 = vst [vmem:[%s547 + $0x1c] sm:$0xf] %v562
                  %v564 = vld [vmem:[%s546 + $0x3c] sm:$0xf]
                  %565 = vst [vmem:[%s547 + $0x20] sm:$0xf] %v564
                  %v566 = vld [vmem:[%s546 + $0x40] sm:$0xf]
                  %567 = vst [vmem:[%s547 + $0x24] sm:$0xf] %v566
                  %v568 = vld [vmem:[%s546 + $0x44] sm:$0xf]
                  %569 = vst [vmem:[%s547 + $0x28] sm:$0xf] %v568
                  %v570 = vld [vmem:[%s546 + $0x48] sm:$0xf]
                  %571 = vst [vmem:[%s547 + $0x2c] sm:$0xf] %v570
                  %v572 = vld [vmem:[%s546 + $0x4c] sm:$0xf]
                  %573 = vst [vmem:[%s547 + $0x30] sm:$0xf] %v572
                  %v574 = vld [vmem:[%s546 + $0x50] sm:$0xf]
                  %575 = vst [vmem:[%s547 + $0x34] sm:$0xf] %v574
                  %v576 = vld [vmem:[%s546 + $0x70] sm:$0xf]
                  %577 = vst [vmem:[%s547 + $0x38] sm:$0xf] %v576
                  %v578 = vld [vmem:[%s546 + $0x74] sm:$0xf]
                  %579 = vst [vmem:[%s547 + $0x3c] sm:$0xf] %v578
                  %v580 = vld [vmem:[%s546 + $0x78] sm:$0xf]
                  %581 = vst [vmem:[%s547 + $0x40] sm:$0xf] %v580
                  %v582 = vld [vmem:[%s546 + $0x7c] sm:$0xf]
                  %583 = vst [vmem:[%s547 + $0x44] sm:$0xf] %v582
                  %v584 = vld [vmem:[%s546 + $0x80] sm:$0xf]
                  %585 = vst [vmem:[%s547 + $0x48] sm:$0xf] %v584
                  %v586 = vld [vmem:[%s546 + $0x84] sm:$0xf]
                  %587 = vst [vmem:[%s547 + $0x4c] sm:$0xf] %v586
                  %v588 = vld [vmem:[%s546 + $0x88] sm:$0xf]
                  %589 = vst [vmem:[%s547 + $0x50] sm:$0xf] %v588
                  %v590 = vld [vmem:[%s546 + $0xa8] sm:$0xf]
                  %591 = vst [vmem:[%s547 + $0x54] sm:$0xf] %v590
                  %v592 = vld [vmem:[%s546 + $0xac] sm:$0xf]
                  %593 = vst [vmem:[%s547 + $0x58] sm:$0xf] %v592
                  %v594 = vld [vmem:[%s546 + $0xb0] sm:$0xf]
                  %595 = vst [vmem:[%s547 + $0x5c] sm:$0xf] %v594
                  %v596 = vld [vmem:[%s546 + $0xb4] sm:$0xf]
                  %597 = vst [vmem:[%s547 + $0x60] sm:$0xf] %v596
                  %v598 = vld [vmem:[%s546 + $0xb8] sm:$0xf]
                  %599 = vst [vmem:[%s547 + $0x64] sm:$0xf] %v598
                  %v600 = vld [vmem:[%s546 + $0xbc] sm:$0xf]
                  %601 = vst [vmem:[%s547 + $0x68] sm:$0xf] %v600
                  %v602 = vld [vmem:[%s546 + $0xc0] sm:$0xf]
                  %603 = vst [vmem:[%s547 + $0x6c] sm:$0xf] %v602
                  %v604 = vld [vmem:[%s546 + $0xe0] sm:$0xf]
                  %605 = vst [vmem:[%s547 + $0x70] sm:$0xf] %v604
                  %v606 = vld [vmem:[%s546 + $0xe4] sm:$0xf]
                  %607 = vst [vmem:[%s547 + $0x74] sm:$0xf] %v606
                  %v608 = vld [vmem:[%s546 + $0xe8] sm:$0xf]
                  %609 = vst [vmem:[%s547 + $0x78] sm:$0xf] %v608
                  %v610 = vld [vmem:[%s546 + $0xec] sm:$0xf]
                  %611 = vst [vmem:[%s547 + $0x7c] sm:$0xf] %v610
                  %v612 = vld [vmem:[%s546 + $0xf0] sm:$0xf]
                  %613 = vst [vmem:[%s547 + $0x80] sm:$0xf] %v612
                  %v614 = vld [vmem:[%s546 + $0xf4] sm:$0xf]
                  %615 = vst [vmem:[%s547 + $0x84] sm:$0xf] %v614
                  %v616 = vld [vmem:[%s546 + $0xf8] sm:$0xf]
                  %617 = vst [vmem:[%s547 + $0x88] sm:$0xf] %v616
                  %v618 = vld [vmem:[%s546 + $0x118] sm:$0xf]
                  %619 = vst [vmem:[%s547 + $0x8c] sm:$0xf] %v618
                  %v620 = vld [vmem:[%s546 + $0x11c] sm:$0xf]
                  %621 = vst [vmem:[%s547 + $0x90] sm:$0xf] %v620
                  %v622 = vld [vmem:[%s546 + $0x120] sm:$0xf]
                  %623 = vst [vmem:[%s547 + $0x94] sm:$0xf] %v622
                  %v624 = vld [vmem:[%s546 + $0x124] sm:$0xf]
                  %625 = vst [vmem:[%s547 + $0x98] sm:$0xf] %v624
                  %v626 = vld [vmem:[%s546 + $0x128] sm:$0xf]
                  %627 = vst [vmem:[%s547 + $0x9c] sm:$0xf] %v626
                  %v628 = vld [vmem:[%s546 + $0x12c] sm:$0xf]
                  %629 = vst [vmem:[%s547 + $0xa0] sm:$0xf] %v628
                  %v630 = vld [vmem:[%s546 + $0x130] sm:$0xf]
                  %631 = vst [vmem:[%s547 + $0xa4] sm:$0xf] %v630
                  %v632 = vld [vmem:[%s546 + $0x150] sm:$0xf]
                  %633 = vst [vmem:[%s547 + $0xa8] sm:$0xf] %v632
                  %v634 = vld [vmem:[%s546 + $0x154] sm:$0xf]
                  %635 = vst [vmem:[%s547 + $0xac] sm:$0xf] %v634
                  %v636 = vld [vmem:[%s546 + $0x158] sm:$0xf]
                  %637 = vst [vmem:[%s547 + $0xb0] sm:$0xf] %v636
                  %v638 = vld [vmem:[%s546 + $0x15c] sm:$0xf]
                  %639 = vst [vmem:[%s547 + $0xb4] sm:$0xf] %v638
                  %v640 = vld [vmem:[%s546 + $0x160] sm:$0xf]
                  %641 = vst [vmem:[%s547 + $0xb8] sm:$0xf] %v640
                  %v642 = vld [vmem:[%s546 + $0x164] sm:$0xf]
                  %643 = vst [vmem:[%s547 + $0xbc] sm:$0xf] %v642
                  %v644 = vld [vmem:[%s546 + $0x168] sm:$0xf]
                  %645 = vst [vmem:[%s547 + $0xc0] sm:$0xf] %v644
                  %v646 = vld [vmem:[%s546 + $0x188] sm:$0xf]
                  %647 = vst [vmem:[%s547 + $0xc4] sm:$0xf] %v646
                  %v648 = vld [vmem:[%s546 + $0x18c] sm:$0xf]
                  %649 = vst [vmem:[%s547 + $0xc8] sm:$0xf] %v648
                  %v650 = vld [vmem:[%s546 + $0x190] sm:$0xf]
                  %651 = vst [vmem:[%s547 + $0xcc] sm:$0xf] %v650
                  %v652 = vld [vmem:[%s546 + $0x194] sm:$0xf]
                  %653 = vst [vmem:[%s547 + $0xd0] sm:$0xf] %v652
                  %v654 = vld [vmem:[%s546 + $0x198] sm:$0xf]
                  %655 = vst [vmem:[%s547 + $0xd4] sm:$0xf] %v654
                  %v656 = vld [vmem:[%s546 + $0x19c] sm:$0xf]
                  %657 = vst [vmem:[%s547 + $0xd8] sm:$0xf] %v656
                  %v658 = vld [vmem:[%s546 + $0x1a0] sm:$0xf]
                  %659 = vst [vmem:[%s547 + $0xdc] sm:$0xf] %v658
                  %v660 = vld [vmem:[%s546 + $0x1c0] sm:$0xf]
                  %661 = vst [vmem:[%s547 + $0xe0] sm:$0xf] %v660
                  %v662 = vld [vmem:[%s546 + $0x1c4] sm:$0xf]
                  %663 = vst [vmem:[%s547 + $0xe4] sm:$0xf] %v662
                  %v664 = vld [vmem:[%s546 + $0x1c8] sm:$0xf]
                  %665 = vst [vmem:[%s547 + $0xe8] sm:$0xf] %v664
                  %v666 = vld [vmem:[%s546 + $0x1cc] sm:$0xf]
                  %667 = vst [vmem:[%s547 + $0xec] sm:$0xf] %v666
                  %v668 = vld [vmem:[%s546 + $0x1d0] sm:$0xf]
                  %669 = vst [vmem:[%s547 + $0xf0] sm:$0xf] %v668
                  %v670 = vld [vmem:[%s546 + $0x1d4] sm:$0xf]
                  %671 = vst [vmem:[%s547 + $0xf4] sm:$0xf] %v670
                  %v672 = vld [vmem:[%s546 + $0x1d8] sm:$0xf]
                  %673 = vst [vmem:[%s547 + $0xf8] sm:$0xf] %v672
                $region103: #{inception_a_forward.1} parent=90 // loop_footer
                  %s545 = sadd.s32 1, %s541
                $region104: #{inception_a_forward.1} parent=90 // loop_footer_branch
                  %540 = sbr.rel target = $region100
                $region105: #{inception_a_forward.1} parent=90 // loop_exit
                  _
              $region91: #{inception_a_forward.1} parent=75 // pred_fallthru
                _
            $region76: #{inception_a_forward.1} parent=71 // pred_fallthru
              _
            // Predicated region
            $region77: #{inception_a_forward.1} parent=71 // pred_check
              _
            $region78: #{inception_a_forward.1} parent=71 // pred_check_branch
              %393 = sbr.rel (0) target = $region80
            $region79: #{inception_a_forward.1} parent=71 // pred_region
              loop: start=0, step=1, limit=1
              $region81: #{inception_a_forward.1} parent=79 // loop_pre_header
                _
              $region82: #{inception_a_forward.1} parent=79 // loop_header
                %s396 = sphi 0, %s400
                %p397 = scmp.ge.s32.totalorder %s396, 1
                %s401 = sphi %s387, %s387
                %s402 = sphi %s384, %s384
              $region83: #{inception_a_forward.1} parent=79 // loop_header_branch
                %399 = sbr.rel (%p397) target = $region87
              $region84: #{inception_a_forward.1} parent=79 // loop_body
                %v403 = vld [vmem:[%s401] sm:$0xf]
                %404 = vst [vmem:[%s402] sm:$0xf] %v403
                %v405 = vld [vmem:[%s401 + $0x4] sm:$0xf]
                %406 = vst [vmem:[%s402 + $0x4] sm:$0xf] %v405
                %v407 = vld [vmem:[%s401 + $0x8] sm:$0xf]
                %408 = vst [vmem:[%s402 + $0x8] sm:$0xf] %v407
                %v409 = vld [vmem:[%s401 + $0xc] sm:$0xf]
                %410 = vst [vmem:[%s402 + $0xc] sm:$0xf] %v409
                %v411 = vld [vmem:[%s401 + $0x10] sm:$0xf]
                %412 = vst [vmem:[%s402 + $0x10] sm:$0xf] %v411
                %v413 = vld [vmem:[%s401 + $0x14] sm:$0xf]
                %414 = vst [vmem:[%s402 + $0x14] sm:$0xf] %v413
                %v415 = vld [vmem:[%s401 + $0x18] sm:$0xf]
                %416 = vst [vmem:[%s402 + $0x18] sm:$0xf] %v415
                %v417 = vld [vmem:[%s401 + $0x38] sm:$0xf]
                %418 = vst [vmem:[%s402 + $0x1c] sm:$0xf] %v417
                %v419 = vld [vmem:[%s401 + $0x3c] sm:$0xf]
                %420 = vst [vmem:[%s402 + $0x20] sm:$0xf] %v419
                %v421 = vld [vmem:[%s401 + $0x40] sm:$0xf]
                %422 = vst [vmem:[%s402 + $0x24] sm:$0xf] %v421
                %v423 = vld [vmem:[%s401 + $0x44] sm:$0xf]
                %424 = vst [vmem:[%s402 + $0x28] sm:$0xf] %v423
                %v425 = vld [vmem:[%s401 + $0x48] sm:$0xf]
                %426 = vst [vmem:[%s402 + $0x2c] sm:$0xf] %v425
                %v427 = vld [vmem:[%s401 + $0x4c] sm:$0xf]
                %428 = vst [vmem:[%s402 + $0x30] sm:$0xf] %v427
                %v429 = vld [vmem:[%s401 + $0x50] sm:$0xf]
                %430 = vst [vmem:[%s402 + $0x34] sm:$0xf] %v429
                %v431 = vld [vmem:[%s401 + $0x70] sm:$0xf]
                %432 = vst [vmem:[%s402 + $0x38] sm:$0xf] %v431
                %v433 = vld [vmem:[%s401 + $0x74] sm:$0xf]
                %434 = vst [vmem:[%s402 + $0x3c] sm:$0xf] %v433
                %v435 = vld [vmem:[%s401 + $0x78] sm:$0xf]
                %436 = vst [vmem:[%s402 + $0x40] sm:$0xf] %v435
                %v437 = vld [vmem:[%s401 + $0x7c] sm:$0xf]
                %438 = vst [vmem:[%s402 + $0x44] sm:$0xf] %v437
                %v439 = vld [vmem:[%s401 + $0x80] sm:$0xf]
                %440 = vst [vmem:[%s402 + $0x48] sm:$0xf] %v439
                %v441 = vld [vmem:[%s401 + $0x84] sm:$0xf]
                %442 = vst [vmem:[%s402 + $0x4c] sm:$0xf] %v441
                %v443 = vld [vmem:[%s401 + $0x88] sm:$0xf]
                %444 = vst [vmem:[%s402 + $0x50] sm:$0xf] %v443
                %v445 = vld [vmem:[%s401 + $0xa8] sm:$0xf]
                %446 = vst [vmem:[%s402 + $0x54] sm:$0xf] %v445
                %v447 = vld [vmem:[%s401 + $0xac] sm:$0xf]
                %448 = vst [vmem:[%s402 + $0x58] sm:$0xf] %v447
                %v449 = vld [vmem:[%s401 + $0xb0] sm:$0xf]
                %450 = vst [vmem:[%s402 + $0x5c] sm:$0xf] %v449
                %v451 = vld [vmem:[%s401 + $0xb4] sm:$0xf]
                %452 = vst [vmem:[%s402 + $0x60] sm:$0xf] %v451
                %v453 = vld [vmem:[%s401 + $0xb8] sm:$0xf]
                %454 = vst [vmem:[%s402 + $0x64] sm:$0xf] %v453
                %v455 = vld [vmem:[%s401 + $0xbc] sm:$0xf]
                %456 = vst [vmem:[%s402 + $0x68] sm:$0xf] %v455
                %v457 = vld [vmem:[%s401 + $0xc0] sm:$0xf]
                %458 = vst [vmem:[%s402 + $0x6c] sm:$0xf] %v457
                %v459 = vld [vmem:[%s401 + $0xe0] sm:$0xf]
                %460 = vst [vmem:[%s402 + $0x70] sm:$0xf] %v459
                %v461 = vld [vmem:[%s401 + $0xe4] sm:$0xf]
                %462 = vst [vmem:[%s402 + $0x74] sm:$0xf] %v461
                %v463 = vld [vmem:[%s401 + $0xe8] sm:$0xf]
                %464 = vst [vmem:[%s402 + $0x78] sm:$0xf] %v463
                %v465 = vld [vmem:[%s401 + $0xec] sm:$0xf]
                %466 = vst [vmem:[%s402 + $0x7c] sm:$0xf] %v465
                %v467 = vld [vmem:[%s401 + $0xf0] sm:$0xf]
                %468 = vst [vmem:[%s402 + $0x80] sm:$0xf] %v467
                %v469 = vld [vmem:[%s401 + $0xf4] sm:$0xf]
                %470 = vst [vmem:[%s402 + $0x84] sm:$0xf] %v469
                %v471 = vld [vmem:[%s401 + $0xf8] sm:$0xf]
                %472 = vst [vmem:[%s402 + $0x88] sm:$0xf] %v471
                %v473 = vld [vmem:[%s401 + $0x118] sm:$0xf]
                %474 = vst [vmem:[%s402 + $0x8c] sm:$0xf] %v473
                %v475 = vld [vmem:[%s401 + $0x11c] sm:$0xf]
                %476 = vst [vmem:[%s402 + $0x90] sm:$0xf] %v475
                %v477 = vld [vmem:[%s401 + $0x120] sm:$0xf]
                %478 = vst [vmem:[%s402 + $0x94] sm:$0xf] %v477
                %v479 = vld [vmem:[%s401 + $0x124] sm:$0xf]
                %480 = vst [vmem:[%s402 + $0x98] sm:$0xf] %v479
                %v481 = vld [vmem:[%s401 + $0x128] sm:$0xf]
                %482 = vst [vmem:[%s402 + $0x9c] sm:$0xf] %v481
                %v483 = vld [vmem:[%s401 + $0x12c] sm:$0xf]
                %484 = vst [vmem:[%s402 + $0xa0] sm:$0xf] %v483
                %v485 = vld [vmem:[%s401 + $0x130] sm:$0xf]
                %486 = vst [vmem:[%s402 + $0xa4] sm:$0xf] %v485
                %v487 = vld [vmem:[%s401 + $0x150] sm:$0xf]
                %488 = vst [vmem:[%s402 + $0xa8] sm:$0xf] %v487
                %v489 = vld [vmem:[%s401 + $0x154] sm:$0xf]
                %490 = vst [vmem:[%s402 + $0xac] sm:$0xf] %v489
                %v491 = vld [vmem:[%s401 + $0x158] sm:$0xf]
                %492 = vst [vmem:[%s402 + $0xb0] sm:$0xf] %v491
                %v493 = vld [vmem:[%s401 + $0x15c] sm:$0xf]
                %494 = vst [vmem:[%s402 + $0xb4] sm:$0xf] %v493
                %v495 = vld [vmem:[%s401 + $0x160] sm:$0xf]
                %496 = vst [vmem:[%s402 + $0xb8] sm:$0xf] %v495
                %v497 = vld [vmem:[%s401 + $0x164] sm:$0xf]
                %498 = vst [vmem:[%s402 + $0xbc] sm:$0xf] %v497
                %v499 = vld [vmem:[%s401 + $0x168] sm:$0xf]
                %500 = vst [vmem:[%s402 + $0xc0] sm:$0xf] %v499
                %v501 = vld [vmem:[%s401 + $0x188] sm:$0xf]
                %502 = vst [vmem:[%s402 + $0xc4] sm:$0xf] %v501
                %v503 = vld [vmem:[%s401 + $0x18c] sm:$0xf]
                %504 = vst [vmem:[%s402 + $0xc8] sm:$0xf] %v503
                %v505 = vld [vmem:[%s401 + $0x190] sm:$0xf]
                %506 = vst [vmem:[%s402 + $0xcc] sm:$0xf] %v505
                %v507 = vld [vmem:[%s401 + $0x194] sm:$0xf]
                %508 = vst [vmem:[%s402 + $0xd0] sm:$0xf] %v507
                %v509 = vld [vmem:[%s401 + $0x198] sm:$0xf]
                %510 = vst [vmem:[%s402 + $0xd4] sm:$0xf] %v509
                %v511 = vld [vmem:[%s401 + $0x19c] sm:$0xf]
                %512 = vst [vmem:[%s402 + $0xd8] sm:$0xf] %v511
                %v513 = vld [vmem:[%s401 + $0x1a0] sm:$0xf]
                %514 = vst [vmem:[%s402 + $0xdc] sm:$0xf] %v513
                %v515 = vld [vmem:[%s401 + $0x1c0] sm:$0xf]
                %516 = vst [vmem:[%s402 + $0xe0] sm:$0xf] %v515
                %v517 = vld [vmem:[%s401 + $0x1c4] sm:$0xf]
                %518 = vst [vmem:[%s402 + $0xe4] sm:$0xf] %v517
                %v519 = vld [vmem:[%s401 + $0x1c8] sm:$0xf]
                %520 = vst [vmem:[%s402 + $0xe8] sm:$0xf] %v519
                %v521 = vld [vmem:[%s401 + $0x1cc] sm:$0xf]
                %522 = vst [vmem:[%s402 + $0xec] sm:$0xf] %v521
                %v523 = vld [vmem:[%s401 + $0x1d0] sm:$0xf]
                %524 = vst [vmem:[%s402 + $0xf0] sm:$0xf] %v523
                %v525 = vld [vmem:[%s401 + $0x1d4] sm:$0xf]
                %526 = vst [vmem:[%s402 + $0xf4] sm:$0xf] %v525
                %v527 = vld [vmem:[%s401 + $0x1d8] sm:$0xf]
                %528 = vst [vmem:[%s402 + $0xf8] sm:$0xf] %v527
              $region85: #{inception_a_forward.1} parent=79 // loop_footer
                %s400 = sadd.s32 1, %s396
              $region86: #{inception_a_forward.1} parent=79 // loop_footer_branch
                %395 = sbr.rel target = $region82
              $region87: #{inception_a_forward.1} parent=79 // loop_exit
                _
            $region80: #{inception_a_forward.1} parent=71 // pred_fallthru
              _
          $region72: #{inception_a_forward.1} parent=67 // pred_fallthru
            _
          %674 = vnop
        $region68: #{inception_a_forward.1} parent=63 // pred_fallthru
          _
      $region64: #{inception_a_forward.1} parent=5 // pred_fallthru
        _
      %p675 = scmp.le.s32.totalorder 1, %s19
      %p676 = scmp.lt.s32.totalorder %s19, 3
      %p677 = pnand %p675, %p676
      %p678 = pneg %p677
      // Predicated region
      $region106: #{inception_a_forward.1} parent=5 // pred_check
        _
      $region107: #{inception_a_forward.1} parent=5 // pred_check_branch
        %680 = sbr.rel (%p677) target = $region109
      $region108: #{inception_a_forward.1} parent=5 // pred_region
        %s681 = ssub.s32 %s19, 1
        %s682 = sand.u32 %s32, 1
        %s683 = sand.u32 %s32, 1
        %s684 = smul.addr %s683, 252
        %s685 = scalar_lea.vmem [#allocation5], %s684
        // Predicated region
        $region110: #{inception_a_forward.1} parent=108 // pred_check
          %p686 = pneg %p45
        $region111: #{inception_a_forward.1} parent=108 // pred_check_branch
          %688 = sbr.rel (%p686) target = $region113
        $region112: #{inception_a_forward.1} parent=108 // pred_region
          _
        $region113: #{inception_a_forward.1} parent=108 // pred_fallthru
          _
        %s689 = sand.u32 %s32, 1
        %s690 = sand.u32 %s32, 1
        %s691 = smul.addr %s690, 252
        %s692 = scalar_lea.vmem [#allocation5], %s691
        %p693 = pneg %p45
        %p694 = pneg %p42
        %p695 = pneg %p66
        %p696 = pneg %p63
        %p697 = pneg %p87
        %p698 = pneg %p84
        %p699 = pneg %p108
        %p700 = pneg %p105
        %p701 = pneg %p129
        %p702 = pneg %p126
        %p703 = pneg %p150
        %p704 = pneg %p147
        %p705 = pneg %p171
        %p706 = pneg %p168
        %p707 = pneg %p192
        %p708 = pneg %p189
        %p709 = pneg %p213
        %p710 = pneg %p210
        %p711 = pneg %p234
        %p712 = pneg %p231
        %p713 = pneg %p255
        %p714 = pneg %p252
        %p715 = pneg %p276
        %p716 = pneg %p273
        %p717 = pneg %p297
        %p718 = pneg %p294
        %p719 = pneg %p323
        %p720 = pneg %p320
        %s721 = smul.u32 7, %s24
        %p722 = scmp.lt.s32.totalorder %s721, 13
        %s723 = scalar_select %p722, %s721, 13
        %s724 = smul.addr %s723, 3
        %s725 = smul.addr %s724, 4
        %s726 = scalar_lea.vmem %s13, %s725
        %s727 = smul.u32 7, %s24
        %s728 = smul.u32 7, %s24
        %p729 = scmp.lt.s32.totalorder %s728, 13
        %s730 = scalar_select %p729, %s728, 13
        %s731 = smul.addr %s730, 3
        %s732 = smul.addr %s731, 4
        %s733 = scalar_lea.vmem %s13, %s732
        %s734 = smul.u32 7, %s24
        %v736 = vld [vmem:[%s3] sm:$0x3]
        %v737 = vld [vmem:[%s7] sm:$0x3]
        %v738 = vld [vmem:[%s9] sm:$0xf]
        %v739 = vld [vmem:[%s9 + $0x4] sm:$0xf]
        %v740 = vld [vmem:[%s9 + $0x8] sm:$0xf]
        %v741 = vld [vmem:[%s9 + $0xc] sm:$0xf]
        %v742 = vld [vmem:[%s9 + $0x10] sm:$0xf]
        %v743 = vld [vmem:[%s9 + $0x14] sm:$0xf]
        %v744 = vld [vmem:[%s9 + $0x18] sm:$0xf]
        %v745 = vld [vmem:[%s9 + $0x1c] sm:$0xf]
        %v746 = vld [vmem:[%s4] sm:$0x1]
        %v748 = vlaneseq
        %v749 = vshrl.u32 %v748, 7
        %v750 = vsub.s32 0, %v749
        %v751 = vrot.slane %v746, %v750
        %v753 = vld [vmem:[%s8] sm:$0x1]
        %v755 = vlaneseq
        %v756 = vshrl.u32 %v755, 7
        %v757 = vsub.s32 0, %v756
        %v758 = vrot.slane %v753, %v757
        %v760 = vld [vmem:[%s10] sm:$0x1]
        %v762 = vlaneseq
        %v763 = vshrl.u32 %v762, 7
        %v764 = vsub.s32 0, %v763
        %v765 = vrot.slane %v760, %v764
        %767 = vst [vmem:[#allocation2] sm:$0xff] 0.0
        %vm768 = vcmask 523264
        %769 = vst.msk [vmem:[#allocation2 + $0x8] sm:$0xff] %vm768, 0.0
        %770 = vst [vmem:[#allocation2 + $0x10] sm:$0xff] 0.0
        %771 = vst.msk [vmem:[#allocation2 + $0x18] sm:$0xff] %vm768, 0.0
        %772 = vst [vmem:[#allocation2 + $0x20] sm:$0xff] 0.0
        %773 = vst.msk [vmem:[#allocation2 + $0x28] sm:$0xff] %vm768, 0.0
        %774 = vst [vmem:[#allocation2 + $0x30] sm:$0xff] 0.0
        %775 = vst.msk [vmem:[#allocation2 + $0x38] sm:$0xff] %vm768, 0.0
        %776 = vst [vmem:[#allocation2 + $0x40] sm:$0xff] 0.0
        %777 = vst.msk [vmem:[#allocation2 + $0x48] sm:$0xff] %vm768, 0.0
        %778 = vst [vmem:[#allocation2 + $0x50] sm:$0xff] 0.0
        %779 = vst.msk [vmem:[#allocation2 + $0x58] sm:$0xff] %vm768, 0.0
        %780 = vst [vmem:[#allocation2 + $0x60] sm:$0xff] 0.0
        %781 = vst.msk [vmem:[#allocation2 + $0x68] sm:$0xff] %vm768, 0.0
        %vm782 = vcmask 785408
        %783 = vst.msk [vmem:[#allocation3] sm:$0xff] %vm782, 0.0
        %784 = vst.msk [vmem:[#allocation3 + $0x8] sm:$0xff] %vm782, 0.0
        %785 = vst.msk [vmem:[#allocation3 + $0x10] sm:$0xff] %vm782, 0.0
        %786 = vst.msk [vmem:[#allocation3 + $0x18] sm:$0xff] %vm782, 0.0
        %787 = vst.msk [vmem:[#allocation3 + $0x20] sm:$0xff] %vm782, 0.0
        %788 = vst.msk [vmem:[#allocation3 + $0x28] sm:$0xff] %vm782, 0.0
        %789 = vst.msk [vmem:[#allocation3 + $0x30] sm:$0xff] %vm782, 0.0
        %790 = vst.msk [vmem:[#allocation4] sm:$0xff] %vm782, 0.0
        %791 = vst.msk [vmem:[#allocation4 + $0x8] sm:$0xff] %vm782, 0.0
        %792 = vst.msk [vmem:[#allocation4 + $0x10] sm:$0xff] %vm782, 0.0
        %793 = vst.msk [vmem:[#allocation4 + $0x18] sm:$0xff] %vm782, 0.0
        %794 = vst.msk [vmem:[#allocation4 + $0x20] sm:$0xff] %vm782, 0.0
        %795 = vst.msk [vmem:[#allocation4 + $0x28] sm:$0xff] %vm782, 0.0
        %796 = vst.msk [vmem:[#allocation4 + $0x30] sm:$0xff] %vm782, 0.0
        %v797 = vld [vmem:[%s685] sm:$0xf]
        %v798 = vld [vmem:[%s685 + $0x4] sm:$0xf]
        %v799 = vld [vmem:[%s685 + $0x8] sm:$0xf]
        %v800 = vld [vmem:[%s685 + $0xc] sm:$0xf]
        %v801 = vld [vmem:[%s685 + $0x10] sm:$0xf]
        %v802 = vld [vmem:[%s685 + $0x14] sm:$0xf]
        %v803 = vld [vmem:[%s685 + $0x18] sm:$0xf]
        %v804 = vld [vmem:[#allocation2] sm:$0xff]
        %v805 = vld [vmem:[#allocation2 + $0x8] sm:$0xff]
        %v806 = vld [vmem:[#allocation2 + $0x10] sm:$0xff]
        %v807 = vld [vmem:[#allocation2 + $0x18] sm:$0xff]
        %v808 = vld [vmem:[#allocation2 + $0x20] sm:$0xff]
        %v809 = vld [vmem:[#allocation2 + $0x28] sm:$0xff]
        %v810 = vld [vmem:[#allocation2 + $0x30] sm:$0xff]
        %v811 = vld [vmem:[#allocation2 + $0x38] sm:$0xff]
        %v812 = vld [vmem:[#allocation2 + $0x40] sm:$0xff]
        %v813 = vld [vmem:[#allocation2 + $0x48] sm:$0xff]
        %v814 = vld [vmem:[#allocation2 + $0x50] sm:$0xff]
        %v815 = vld [vmem:[#allocation2 + $0x58] sm:$0xff]
        %v816 = vld [vmem:[#allocation2 + $0x60] sm:$0xff]
        %v817 = vld [vmem:[#allocation2 + $0x68] sm:$0xff]
        %v818 = vld [vmem:[%s1] sm:$0xf]
        %v826 = vunpack.c.l.b16 %v797
        %v827 = vunpack.c.l.b16 %v798
        %v828 = vunpack.c.l.b16 %v799
        %v829 = vunpack.c.l.b16 %v800
        %v830 = vunpack.c.l.b16 %v801
        %v831 = vunpack.c.l.b16 %v802
        %v832 = vunpack.c.l.b16 %v803
        %v833 = vpack.c.b16 %v827, %v826
        %v834 = vpack.c.b16 %v829, %v828
        %v835 = vpack.c.b16 %v831, %v830
        %v836 = vpack.c.b16 %v832, %v832
        %v839 = vunpack.c.l.s4 1983009808
        %v840 = vunpack.c.0.s8 %v839
        %v841 = vlaneseq
        %v842 = vshrl.u32 %v841, 7
        %v843 = vsub.s32 %v840, %v842
        %v844 = vrot.slane %v818, %v843
        %v845 = vcombine.high %v844, %v844
        %vm846 = vcmask 31744
        %v848 = vsel %vm846, %v833, 0
        %v851 = vsel %vm846, %v834, 0
        %v854 = vsel %vm846, %v835, 0
        %v857 = vsel %vm846, %v836, 0
        %vm859 = vcmask 1041408
        %v861 = vsel %vm859, %v844, 0
        %v864 = vsel %vm859, %v845, 0
        %866 = vmatprep.subr.bf16.mxu0 %v864
        %867 = vmatpush1.bf16.msra.mxu0 %v861
        %868 = vmatprep.subr.bf16.mxu0 0
        %869 = vmatpush1.bf16.msra.mxu0 0
        %870 = vmatprep.subr.bf16.mxu0 0
        %871 = vmatpush1.bf16.msra.mxu0 0
        %872 = vmatprep.subr.bf16.mxu0 0
        %873 = vmatpush1.bf16.msra.mxu0 0
        %874 = vmatprep.subr.bf16.mxu0 0
        %875 = vmatpush1.bf16.msra.mxu0 0
        %876 = vmatprep.subr.bf16.mxu0 0
        %877 = vmatpush1.bf16.msra.mxu0 0
        %878 = vmatprep.subr.bf16.mxu0 0
        %879 = vmatpush1.bf16.msra.mxu0 0
        %880 = vmatprep.subr.bf16.mxu0 0
        %881 = vmatpush1.bf16.msra.mxu0 0
        %882 = vmatprep.subr.bf16.mxu0 0
        %883 = vmatpush1.bf16.msra.mxu0 0
        %884 = vmatprep.subr.bf16.mxu0 0
        %885 = vmatpush1.bf16.msra.mxu0 0
        %886 = vmatprep.subr.bf16.mxu0 0
        %887 = vmatpush1.bf16.msra.mxu0 0
        %888 = vmatprep.subr.bf16.mxu0 0
        %889 = vmatpush1.bf16.msra.mxu0 0
        %890 = vmatprep.subr.bf16.mxu0 0
        %891 = vmatpush1.bf16.msra.mxu0 0
        %892 = vmatprep.subr.bf16.mxu0 0
        %893 = vmatpush1.bf16.msra.mxu0 0
        %894 = vmatprep.subr.bf16.mxu0 0
        %895 = vmatpush1.bf16.msra.mxu0 0
        %896 = vmatprep.subr.bf16.mxu0 0
        %897 = vmatpush1.bf16.msra.mxu0 0
        %898 = vmatprep.mubr.bf16.mxu0 0
        %899 = vmatmul.mubr.bf16.gmra.mrb[0].mxu0 %v848
        %v900 = vpop.f32.mrb[0].mxu0
        %v901 = vadd.f32 0.0, %v900
        %v902 = vpop.f32.mrb[0].mxu0
        %v903 = vadd.f32 0.0, %v902
        %v904 = vpop.f32.mrb[0].mxu0
        %v905 = vadd.f32 0.0, %v904
        %v906 = vpop.f32.mrb[0].mxu0
        %v907 = vadd.f32 0.0, %v906
        %908 = vmatprep.mubr.bf16.mxu0 0
        %909 = vmatmul.mubr.bf16.gmra.mrb[0].mxu0 %v851
        %v910 = vpop.f32.mrb[0].mxu0
        %v911 = vadd.f32 0.0, %v910
        %v912 = vpop.f32.mrb[0].mxu0
        %v913 = vadd.f32 0.0, %v912
        %v914 = vpop.f32.mrb[0].mxu0
        %v915 = vadd.f32 0.0, %v914
        %v916 = vpop.f32.mrb[0].mxu0
        %v917 = vadd.f32 0.0, %v916
        %918 = vmatprep.mubr.bf16.mxu0 0
        %919 = vmatmul.mubr.bf16.gmra.mrb[0].mxu0 %v854
        %v920 = vpop.f32.mrb[0].mxu0
        %v921 = vadd.f32 0.0, %v920
        %v922 = vpop.f32.mrb[0].mxu0
        %v923 = vadd.f32 0.0, %v922
        %v924 = vpop.f32.mrb[0].mxu0
        %v925 = vadd.f32 0.0, %v924
        %v926 = vpop.f32.mrb[0].mxu0
        %v927 = vadd.f32 0.0, %v926
        %928 = vmatprep.mubr.bf16.mxu0 0
        %929 = vmatmul.mubr.bf16.gmra.mrb[0].mxu0 %v857
        %v930 = vpop.f32.mrb[0].mxu0
        %v931 = vadd.f32 0.0, %v930
        %v932 = vpop.f32.mrb[0].mxu0
        %v933 = vadd.f32 0.0, %v932
        %v934 = vpop.f32.mrb[0].mxu0
        %v935 = vpop.f32.mrb[0].mxu0
        %936 = vdwg.mxu0
        %v937 = vadd.f32 %v804, %v901
        %v938 = vadd.f32 %v805, %v903
        %v939 = vadd.f32 %v806, %v905
        %v940 = vadd.f32 %v807, %v907
        %v941 = vadd.f32 %v808, %v911
        %v942 = vadd.f32 %v809, %v913
        %v943 = vadd.f32 %v810, %v915
        %v944 = vadd.f32 %v811, %v917
        %v945 = vadd.f32 %v812, %v921
        %v946 = vadd.f32 %v813, %v923
        %v947 = vadd.f32 %v814, %v925
        %v948 = vadd.f32 %v815, %v927
        %v949 = vadd.f32 %v816, %v931
        %v950 = vadd.f32 %v817, %v933
        %951 = vst [vmem:[#allocation2] sm:$0xff] %v937
        %952 = vst.msk [vmem:[#allocation2 + $0x8] sm:$0xff] %vm768, %v938
        %953 = vst [vmem:[#allocation2 + $0x10] sm:$0xff] %v939
        %954 = vst.msk [vmem:[#allocation2 + $0x18] sm:$0xff] %vm768, %v940
        %955 = vst [vmem:[#allocation2 + $0x20] sm:$0xff] %v941
        %956 = vst.msk [vmem:[#allocation2 + $0x28] sm:$0xff] %vm768, %v942
        %957 = vst [vmem:[#allocation2 + $0x30] sm:$0xff] %v943
        %958 = vst.msk [vmem:[#allocation2 + $0x38] sm:$0xff] %vm768, %v944
        %959 = vst [vmem:[#allocation2 + $0x40] sm:$0xff] %v945
        %960 = vst.msk [vmem:[#allocation2 + $0x48] sm:$0xff] %vm768, %v946
        %961 = vst [vmem:[#allocation2 + $0x50] sm:$0xff] %v947
        %962 = vst.msk [vmem:[#allocation2 + $0x58] sm:$0xff] %vm768, %v948
        %963 = vst [vmem:[#allocation2 + $0x60] sm:$0xff] %v949
        %964 = vst.msk [vmem:[#allocation2 + $0x68] sm:$0xff] %vm768, %v950
        %v966 = vsel %vm859, %v736, 0
        %968 = vmatprep.subr.bf16.mxu0 0
        %969 = vmatpush1.bf16.msra.mxu0 %v966
        %970 = vmatprep.subr.bf16.mxu0 0
        %971 = vmatpush1.bf16.msra.mxu0 0
        %972 = vmatprep.subr.bf16.mxu0 0
        %973 = vmatpush1.bf16.msra.mxu0 0
        %974 = vmatprep.subr.bf16.mxu0 0
        %975 = vmatpush1.bf16.msra.mxu0 0
        %976 = vmatprep.subr.bf16.mxu0 0
        %977 = vmatpush1.bf16.msra.mxu0 0
        %978 = vmatprep.subr.bf16.mxu0 0
        %979 = vmatpush1.bf16.msra.mxu0 0
        %980 = vmatprep.subr.bf16.mxu0 0
        %981 = vmatpush1.bf16.msra.mxu0 0
        %982 = vmatprep.subr.bf16.mxu0 0
        %983 = vmatpush1.bf16.msra.mxu0 0
        %984 = vmatprep.subr.bf16.mxu0 0
        %985 = vmatpush1.bf16.msra.mxu0 0
        %986 = vmatprep.subr.bf16.mxu0 0
        %987 = vmatpush1.bf16.msra.mxu0 0
        %988 = vmatprep.subr.bf16.mxu0 0
        %989 = vmatpush1.bf16.msra.mxu0 0
        %990 = vmatprep.subr.bf16.mxu0 0
        %991 = vmatpush1.bf16.msra.mxu0 0
        %992 = vmatprep.subr.bf16.mxu0 0
        %993 = vmatpush1.bf16.msra.mxu0 0
        %994 = vmatprep.subr.bf16.mxu0 0
        %995 = vmatpush1.bf16.msra.mxu0 0
        %996 = vmatprep.subr.bf16.mxu0 0
        %997 = vmatpush1.bf16.msra.mxu0 0
        %998 = vmatprep.subr.bf16.mxu0 0
        %999 = vmatpush1.bf16.msra.mxu0 0
        %1000 = vmatprep.mubr.bf16.mxu0 0
        %1001 = vmatmul.mubr.bf16.gmra.mrb[0].mxu0 %v848
        %v1002 = vpop.f32.mrb[0].mxu0
        %v1003 = vadd.f32 %v751, %v1002
        %v1004 = vpop.f32.mrb[0].mxu0
        %v1005 = vpop.f32.mrb[0].mxu0
        %v1006 = vadd.f32 %v751, %v1005
        %v1007 = vpop.f32.mrb[0].mxu0
        %1008 = vmatprep.mubr.bf16.mxu0 0
        %1009 = vmatmul.mubr.bf16.gmra.mrb[0].mxu0 %v851
        %v1010 = vpop.f32.mrb[0].mxu0
        %v1011 = vadd.f32 %v751, %v1010
        %v1012 = vpop.f32.mrb[0].mxu0
        %v1013 = vpop.f32.mrb[0].mxu0
        %v1014 = vadd.f32 %v751, %v1013
        %v1015 = vpop.f32.mrb[0].mxu0
        %1016 = vmatprep.mubr.bf16.mxu0 0
        %1017 = vmatmul.mubr.bf16.gmra.mrb[0].mxu0 %v854
        %v1018 = vpop.f32.mrb[0].mxu0
        %v1019 = vadd.f32 %v751, %v1018
        %v1020 = vpop.f32.mrb[0].mxu0
        %v1021 = vpop.f32.mrb[0].mxu0
        %v1022 = vadd.f32 %v751, %v1021
        %v1023 = vpop.f32.mrb[0].mxu0
        %1024 = vmatprep.mubr.bf16.mxu0 0
        %1025 = vmatmul.mubr.bf16.gmra.mrb[0].mxu0 %v857
        %v1026 = vpop.f32.mrb[0].mxu0
        %v1027 = vadd.f32 %v751, %v1026
        %v1028 = vpop.f32.mrb[0].mxu0
        %v1029 = vpop.f32.mrb[0].mxu0
        %v1030 = vpop.f32.mrb[0].mxu0
        %1031 = vdwg.mxu0
        %v1032 = vmax.f32 %v1003, 0.0
        %v1033 = vmax.f32 %v1006, 0.0
        %v1034 = vmax.f32 %v1011, 0.0
        %v1035 = vmax.f32 %v1014, 0.0
        %v1036 = vmax.f32 %v1019, 0.0
        %v1037 = vmax.f32 %v1022, 0.0
        %v1038 = vmax.f32 %v1027, 0.0
        %v1039 = vpack.c.bf16 %v1033, %v1032
        %v1040 = vpack.c.bf16 %v1035, %v1034
        %v1041 = vpack.c.bf16 %v1037, %v1036
        %v1042 = vpack.c.bf16 %v1038, %v1038
        %v1043 = vld [vmem:[#allocation3] sm:$0xff]
        %v1044 = vld [vmem:[#allocation3 + $0x8] sm:$0xff]
        %v1045 = vld [vmem:[#allocation3 + $0x10] sm:$0xff]
        %v1046 = vld [vmem:[#allocation3 + $0x18] sm:$0xff]
        %v1047 = vld [vmem:[#allocation3 + $0x20] sm:$0xff]
        %v1048 = vld [vmem:[#allocation3 + $0x28] sm:$0xff]
        %v1049 = vld [vmem:[#allocation3 + $0x30] sm:$0xff]
        %v1050 = vld [vmem:[%s5] sm:$0xf]
        %v1051 = vld [vmem:[%s5 + $0x4] sm:$0xf]
        %v1052 = vld [vmem:[%s5 + $0x8] sm:$0xf]
        %v1053 = vld [vmem:[%s5 + $0xc] sm:$0xf]
        %v1054 = vld [vmem:[%s5 + $0x10] sm:$0xf]
        %v1055 = vld [vmem:[%s5 + $0x14] sm:$0xf]
        %v1056 = vld [vmem:[%s5 + $0x18] sm:$0xf]
        %v1057 = vld [vmem:[%s5 + $0x1c] sm:$0xf]
        %v1066 = vunpack.c.l.b16 %v1050
        %v1067 = vunpack.c.l.b16 %v1051
        %v1068 = vunpack.c.l.b16 %v1052
        %v1069 = vunpack.c.l.b16 %v1053
        %v1070 = vunpack.c.l.b16 %v1054
        %v1071 = vunpack.c.l.b16 %v1055
        %v1072 = vunpack.c.l.b16 %v1056
        %v1073 = vunpack.c.l.b16 %v1057
        %v1074 = vpack.c.b16 %v1067, %v1066
        %v1075 = vpack.c.b16 %v1069, %v1068
        %v1076 = vpack.c.b16 %v1071, %v1070
        %v1077 = vpack.c.b16 %v1073, %v1072
        %v1083 = vsel %vm768, %v1039, 0
        %v1086 = vsel %vm768, %v1040, 0
        %v1089 = vsel %vm768, %v1041, 0
        %v1092 = vsel %vm768, %v1042, 0
        %1094 = vmatprep.subr.bf16.mxu0 0
        %1095 = vmatpush1.bf16.msra.mxu0 %v1074
        %1096 = vmatprep.subr.bf16.mxu0 0
        %1097 = vmatpush1.bf16.msra.mxu0 %v1075
        %1098 = vmatprep.subr.bf16.mxu0 0
        %1099 = vmatpush1.bf16.msra.mxu0 %v1076
        %1100 = vmatprep.subr.bf16.mxu0 0
        %1101 = vmatpush1.bf16.msra.mxu0 %v1077
        %1102 = vmatprep.subr.bf16.mxu0 0
        %1103 = vmatpush1.bf16.msra.mxu0 0
        %1104 = vmatprep.subr.bf16.mxu0 0
        %1105 = vmatpush1.bf16.msra.mxu0 0
        %1106 = vmatprep.subr.bf16.mxu0 0
        %1107 = vmatpush1.bf16.msra.mxu0 0
        %1108 = vmatprep.subr.bf16.mxu0 0
        %1109 = vmatpush1.bf16.msra.mxu0 0
        %1110 = vmatprep.subr.bf16.mxu0 0
        %1111 = vmatpush1.bf16.msra.mxu0 0
        %1112 = vmatprep.subr.bf16.mxu0 0
        %1113 = vmatpush1.bf16.msra.mxu0 0
        %1114 = vmatprep.subr.bf16.mxu0 0
        %1115 = vmatpush1.bf16.msra.mxu0 0
        %1116 = vmatprep.subr.bf16.mxu0 0
        %1117 = vmatpush1.bf16.msra.mxu0 0
        %1118 = vmatprep.subr.bf16.mxu0 0
        %1119 = vmatpush1.bf16.msra.mxu0 0
        %1120 = vmatprep.subr.bf16.mxu0 0
        %1121 = vmatpush1.bf16.msra.mxu0 0
        %1122 = vmatprep.subr.bf16.mxu0 0
        %1123 = vmatpush1.bf16.msra.mxu0 0
        %1124 = vmatprep.subr.bf16.mxu0 0
        %1125 = vmatpush1.bf16.msra.mxu0 0
        %1126 = vmatprep.mubr.bf16.mxu0 0
        %1127 = vmatmul.mubr.bf16.gmra.mrb[0].mxu0 %v1083
        %v1128 = vpop.f32.mrb[0].mxu0
        %v1129 = vadd.f32 0.0, %v1128
        %v1130 = vpop.f32.mrb[0].mxu0
        %v1131 = vpop.f32.mrb[0].mxu0
        %v1132 = vadd.f32 0.0, %v1131
        %v1133 = vpop.f32.mrb[0].mxu0
        %1134 = vmatprep.mubr.bf16.mxu0 0
        %1135 = vmatmul.mubr.bf16.gmra.mrb[0].mxu0 %v1086
        %v1136 = vpop.f32.mrb[0].mxu0
        %v1137 = vadd.f32 0.0, %v1136
        %v1138 = vpop.f32.mrb[0].mxu0
        %v1139 = vpop.f32.mrb[0].mxu0
        %v1140 = vadd.f32 0.0, %v1139
        %v1141 = vpop.f32.mrb[0].mxu0
        %1142 = vmatprep.mubr.bf16.mxu0 0
        %1143 = vmatmul.mubr.bf16.gmra.mrb[0].mxu0 %v1089
        %v1144 = vpop.f32.mrb[0].mxu0
        %v1145 = vadd.f32 0.0, %v1144
        %v1146 = vpop.f32.mrb[0].mxu0
        %v1147 = vpop.f32.mrb[0].mxu0
        %v1148 = vadd.f32 0.0, %v1147
        %v1149 = vpop.f32.mrb[0].mxu0
        %1150 = vmatprep.mubr.bf16.mxu0 0
        %1151 = vmatmul.mubr.bf16.gmra.mrb[0].mxu0 %v1092
        %v1152 = vpop.f32.mrb[0].mxu0
        %v1153 = vadd.f32 0.0, %v1152
        %v1154 = vpop.f32.mrb[0].mxu0
        %v1155 = vpop.f32.mrb[0].mxu0
        %v1156 = vpop.f32.mrb[0].mxu0
        %1157 = vdwg.mxu0
        %v1158 = vadd.f32 %v1043, %v1129
        %v1159 = vadd.f32 %v1044, %v1132
        %v1160 = vadd.f32 %v1045, %v1137
        %v1161 = vadd.f32 %v1046, %v1140
        %v1162 = vadd.f32 %v1047, %v1145
        %v1163 = vadd.f32 %v1048, %v1148
        %v1164 = vadd.f32 %v1049, %v1153
        %1165 = vst.msk [vmem:[#allocation3] sm:$0xff] %vm782, %v1158
        %1166 = vst.msk [vmem:[#allocation3 + $0x8] sm:$0xff] %vm782, %v1159
        %1167 = vst.msk [vmem:[#allocation3 + $0x10] sm:$0xff] %vm782, %v1160
        %1168 = vst.msk [vmem:[#allocation3 + $0x18] sm:$0xff] %vm782, %v1161
        %1169 = vst.msk [vmem:[#allocation3 + $0x20] sm:$0xff] %vm782, %v1162
        %1170 = vst.msk [vmem:[#allocation3 + $0x28] sm:$0xff] %vm782, %v1163
        %1171 = vst.msk [vmem:[#allocation3 + $0x30] sm:$0xff] %vm782, %v1164
        %v1173 = vsel %vm859, %v737, 0
        %1175 = vmatprep.subr.bf16.mxu0 0
        %1176 = vmatpush1.bf16.msra.mxu0 %v1173
        %1177 = vmatprep.subr.bf16.mxu0 0
        %1178 = vmatpush1.bf16.msra.mxu0 0
        %1179 = vmatprep.subr.bf16.mxu0 0
        %1180 = vmatpush1.bf16.msra.mxu0 0
        %1181 = vmatprep.subr.bf16.mxu0 0
        %1182 = vmatpush1.bf16.msra.mxu0 0
        %1183 = vmatprep.subr.bf16.mxu0 0
        %1184 = vmatpush1.bf16.msra.mxu0 0
        %1185 = vmatprep.subr.bf16.mxu0 0
        %1186 = vmatpush1.bf16.msra.mxu0 0
        %1187 = vmatprep.subr.bf16.mxu0 0
        %1188 = vmatpush1.bf16.msra.mxu0 0
        %1189 = vmatprep.subr.bf16.mxu0 0
        %1190 = vmatpush1.bf16.msra.mxu0 0
        %1191 = vmatprep.subr.bf16.mxu0 0
        %1192 = vmatpush1.bf16.msra.mxu0 0
        %1193 = vmatprep.subr.bf16.mxu0 0
        %1194 = vmatpush1.bf16.msra.mxu0 0
        %1195 = vmatprep.subr.bf16.mxu0 0
        %1196 = vmatpush1.bf16.msra.mxu0 0
        %1197 = vmatprep.subr.bf16.mxu0 0
        %1198 = vmatpush1.bf16.msra.mxu0 0
        %1199 = vmatprep.subr.bf16.mxu0 0
        %1200 = vmatpush1.bf16.msra.mxu0 0
        %1201 = vmatprep.subr.bf16.mxu0 0
        %1202 = vmatpush1.bf16.msra.mxu0 0
        %1203 = vmatprep.subr.bf16.mxu0 0
        %1204 = vmatpush1.bf16.msra.mxu0 0
        %1205 = vmatprep.subr.bf16.mxu0 0
        %1206 = vmatpush1.bf16.msra.mxu0 0
        %1207 = vmatprep.mubr.bf16.mxu0 0
        %1208 = vmatmul.mubr.bf16.gmra.mrb[0].mxu0 %v848
        %v1209 = vpop.f32.mrb[0].mxu0
        %v1210 = vadd.f32 %v758, %v1209
        %v1211 = vpop.f32.mrb[0].mxu0
        %v1212 = vpop.f32.mrb[0].mxu0
        %v1213 = vadd.f32 %v758, %v1212
        %v1214 = vpop.f32.mrb[0].mxu0
        %1215 = vmatprep.mubr.bf16.mxu0 0
        %1216 = vmatmul.mubr.bf16.gmra.mrb[0].mxu0 %v851
        %v1217 = vpop.f32.mrb[0].mxu0
        %v1218 = vadd.f32 %v758, %v1217
        %v1219 = vpop.f32.mrb[0].mxu0
        %v1220 = vpop.f32.mrb[0].mxu0
        %v1221 = vadd.f32 %v758, %v1220
        %v1222 = vpop.f32.mrb[0].mxu0
        %1223 = vmatprep.mubr.bf16.mxu0 0
        %1224 = vmatmul.mubr.bf16.gmra.mrb[0].mxu0 %v854
        %v1225 = vpop.f32.mrb[0].mxu0
        %v1226 = vadd.f32 %v758, %v1225
        %v1227 = vpop.f32.mrb[0].mxu0
        %v1228 = vpop.f32.mrb[0].mxu0
        %v1229 = vadd.f32 %v758, %v1228
        %v1230 = vpop.f32.mrb[0].mxu0
        %1231 = vmatprep.mubr.bf16.mxu0 0
        %1232 = vmatmul.mubr.bf16.gmra.mrb[0].mxu0 %v857
        %v1233 = vpop.f32.mrb[0].mxu0
        %v1234 = vadd.f32 %v758, %v1233
        %v1235 = vpop.f32.mrb[0].mxu0
        %v1236 = vpop.f32.mrb[0].mxu0
        %v1237 = vpop.f32.mrb[0].mxu0
        %1238 = vdwg.mxu0
        %v1239 = vmax.f32 %v1210, 0.0
        %v1240 = vmax.f32 %v1213, 0.0
        %v1241 = vmax.f32 %v1218, 0.0
        %v1242 = vmax.f32 %v1221, 0.0
        %v1243 = vmax.f32 %v1226, 0.0
        %v1244 = vmax.f32 %v1229, 0.0
        %v1245 = vmax.f32 %v1234, 0.0
        %v1246 = vpack.c.bf16 %v1240, %v1239
        %v1247 = vpack.c.bf16 %v1242, %v1241
        %v1248 = vpack.c.bf16 %v1244, %v1243
        %v1249 = vpack.c.bf16 %v1245, %v1245
        %v1258 = vunpack.c.l.b16 %v738
        %v1259 = vunpack.c.l.b16 %v739
        %v1260 = vunpack.c.l.b16 %v740
        %v1261 = vunpack.c.l.b16 %v741
        %v1262 = vunpack.c.l.b16 %v742
        %v1263 = vunpack.c.l.b16 %v743
        %v1264 = vunpack.c.l.b16 %v744
        %v1265 = vunpack.c.l.b16 %v745
        %v1266 = vpack.c.b16 %v1259, %v1258
        %v1267 = vpack.c.b16 %v1261, %v1260
        %v1268 = vpack.c.b16 %v1263, %v1262
        %v1269 = vpack.c.b16 %v1265, %v1264
        %v1275 = vsel %vm768, %v1246, 0
        %v1278 = vsel %vm768, %v1247, 0
        %v1281 = vsel %vm768, %v1248, 0
        %v1284 = vsel %vm768, %v1249, 0
        %1286 = vmatprep.subr.bf16.mxu0 0
        %1287 = vmatpush1.bf16.msra.mxu0 %v1266
        %1288 = vmatprep.subr.bf16.mxu0 0
        %1289 = vmatpush1.bf16.msra.mxu0 %v1267
        %1290 = vmatprep.subr.bf16.mxu0 0
        %1291 = vmatpush1.bf16.msra.mxu0 %v1268
        %1292 = vmatprep.subr.bf16.mxu0 0
        %1293 = vmatpush1.bf16.msra.mxu0 %v1269
        %1294 = vmatprep.subr.bf16.mxu0 0
        %1295 = vmatpush1.bf16.msra.mxu0 0
        %1296 = vmatprep.subr.bf16.mxu0 0
        %1297 = vmatpush1.bf16.msra.mxu0 0
        %1298 = vmatprep.subr.bf16.mxu0 0
        %1299 = vmatpush1.bf16.msra.mxu0 0
        %1300 = vmatprep.subr.bf16.mxu0 0
        %1301 = vmatpush1.bf16.msra.mxu0 0
        %1302 = vmatprep.subr.bf16.mxu0 0
        %1303 = vmatpush1.bf16.msra.mxu0 0
        %1304 = vmatprep.subr.bf16.mxu0 0
        %1305 = vmatpush1.bf16.msra.mxu0 0
        %1306 = vmatprep.subr.bf16.mxu0 0
        %1307 = vmatpush1.bf16.msra.mxu0 0
        %1308 = vmatprep.subr.bf16.mxu0 0
        %1309 = vmatpush1.bf16.msra.mxu0 0
        %1310 = vmatprep.subr.bf16.mxu0 0
        %1311 = vmatpush1.bf16.msra.mxu0 0
        %1312 = vmatprep.subr.bf16.mxu0 0
        %1313 = vmatpush1.bf16.msra.mxu0 0
        %1314 = vmatprep.subr.bf16.mxu0 0
        %1315 = vmatpush1.bf16.msra.mxu0 0
        %1316 = vmatprep.subr.bf16.mxu0 0
        %1317 = vmatpush1.bf16.msra.mxu0 0
        %1318 = vmatprep.mubr.bf16.mxu0 0
        %1319 = vmatmul.mubr.bf16.gmra.mrb[0].mxu0 %v1275
        %v1320 = vpop.f32.mrb[0].mxu0
        %v1321 = vadd.f32 %v765, %v1320
        %v1322 = vpop.f32.mrb[0].mxu0
        %v1323 = vpop.f32.mrb[0].mxu0
        %v1324 = vadd.f32 %v765, %v1323
        %v1325 = vpop.f32.mrb[0].mxu0
        %1326 = vmatprep.mubr.bf16.mxu0 0
        %1327 = vmatmul.mubr.bf16.gmra.mrb[0].mxu0 %v1278
        %v1328 = vpop.f32.mrb[0].mxu0
        %v1329 = vadd.f32 %v765, %v1328
        %v1330 = vpop.f32.mrb[0].mxu0
        %v1331 = vpop.f32.mrb[0].mxu0
        %v1332 = vadd.f32 %v765, %v1331
        %v1333 = vpop.f32.mrb[0].mxu0
        %1334 = vmatprep.mubr.bf16.mxu0 0
        %1335 = vmatmul.mubr.bf16.gmra.mrb[0].mxu0 %v1281
        %v1336 = vpop.f32.mrb[0].mxu0
        %v1337 = vadd.f32 %v765, %v1336
        %v1338 = vpop.f32.mrb[0].mxu0
        %v1339 = vpop.f32.mrb[0].mxu0
        %v1340 = vadd.f32 %v765, %v1339
        %v1341 = vpop.f32.mrb[0].mxu0
        %1342 = vmatprep.mubr.bf16.mxu0 0
        %1343 = vmatmul.mubr.bf16.gmra.mrb[0].mxu0 %v1284
        %v1344 = vpop.f32.mrb[0].mxu0
        %v1345 = vadd.f32 %v765, %v1344
        %v1346 = vpop.f32.mrb[0].mxu0
        %v1347 = vpop.f32.mrb[0].mxu0
        %v1348 = vpop.f32.mrb[0].mxu0
        %1349 = vdwg.mxu0
        %v1350 = vmax.f32 %v1321, 0.0
        %v1351 = vmax.f32 %v1324, 0.0
        %v1352 = vmax.f32 %v1329, 0.0
        %v1353 = vmax.f32 %v1332, 0.0
        %v1354 = vmax.f32 %v1337, 0.0
        %v1355 = vmax.f32 %v1340, 0.0
        %v1356 = vmax.f32 %v1345, 0.0
        %v1357 = vpack.c.bf16 %v1351, %v1350
        %v1358 = vpack.c.bf16 %v1353, %v1352
        %v1359 = vpack.c.bf16 %v1355, %v1354
        %v1360 = vpack.c.bf16 %v1356, %v1356
        %v1361 = vld [vmem:[#allocation4] sm:$0xff]
        %v1362 = vld [vmem:[#allocation4 + $0x8] sm:$0xff]
        %v1363 = vld [vmem:[#allocation4 + $0x10] sm:$0xff]
        %v1364 = vld [vmem:[#allocation4 + $0x18] sm:$0xff]
        %v1365 = vld [vmem:[#allocation4 + $0x20] sm:$0xff]
        %v1366 = vld [vmem:[#allocation4 + $0x28] sm:$0xff]
        %v1367 = vld [vmem:[#allocation4 + $0x30] sm:$0xff]
        %v1368 = vld [vmem:[%s11] sm:$0xf]
        %v1369 = vld [vmem:[%s11 + $0x4] sm:$0xf]
        %v1370 = vld [vmem:[%s11 + $0x8] sm:$0xf]
        %v1371 = vld [vmem:[%s11 + $0xc] sm:$0xf]
        %v1372 = vld [vmem:[%s11 + $0x10] sm:$0xf]
        %v1373 = vld [vmem:[%s11 + $0x14] sm:$0xf]
        %v1374 = vld [vmem:[%s11 + $0x18] sm:$0xf]
        %v1375 = vld [vmem:[%s11 + $0x1c] sm:$0xf]
        %v1376 = vld [vmem:[%s11 + $0x20] sm:$0xf]
        %v1377 = vld [vmem:[%s11 + $0x24] sm:$0xf]
        %v1378 = vld [vmem:[%s11 + $0x28] sm:$0xf]
        %v1379 = vld [vmem:[%s11 + $0x2c] sm:$0xf]
        %v1392 = vunpack.c.l.b16 %v1368
        %v1393 = vunpack.c.l.b16 %v1369
        %v1394 = vunpack.c.l.b16 %v1370
        %v1395 = vunpack.c.l.b16 %v1371
        %v1396 = vunpack.c.l.b16 %v1372
        %v1397 = vunpack.c.l.b16 %v1373
        %v1398 = vunpack.c.l.b16 %v1374
        %v1399 = vunpack.c.l.b16 %v1375
        %v1400 = vunpack.c.l.b16 %v1376
        %v1401 = vunpack.c.l.b16 %v1377
        %v1402 = vunpack.c.l.b16 %v1378
        %v1403 = vunpack.c.l.b16 %v1379
        %v1404 = vpack.c.b16 %v1393, %v1392
        %v1405 = vpack.c.b16 %v1395, %v1394
        %v1406 = vpack.c.b16 %v1397, %v1396
        %v1407 = vpack.c.b16 %v1399, %v1398
        %v1408 = vpack.c.b16 %v1401, %v1400
        %v1409 = vpack.c.b16 %v1403, %v1402
        %v1417 = vsel %vm782, %v1357, 0
        %v1420 = vsel %vm782, %v1358, 0
        %v1423 = vsel %vm782, %v1359, 0
        %v1426 = vsel %vm782, %v1360, 0
        %1428 = vmatprep.subr.bf16.mxu0 0
        %1429 = vmatpush1.bf16.msra.mxu0 %v1404
        %1430 = vmatprep.subr.bf16.mxu0 0
        %1431 = vmatpush1.bf16.msra.mxu0 %v1405
        %1432 = vmatprep.subr.bf16.mxu0 0
        %1433 = vmatpush1.bf16.msra.mxu0 %v1406
        %1434 = vmatprep.subr.bf16.mxu0 0
        %1435 = vmatpush1.bf16.msra.mxu0 %v1407
        %1436 = vmatprep.subr.bf16.mxu0 0
        %1437 = vmatpush1.bf16.msra.mxu0 %v1408
        %1438 = vmatprep.subr.bf16.mxu0 0
        %1439 = vmatpush1.bf16.msra.mxu0 %v1409
        %1440 = vmatprep.subr.bf16.mxu0 0
        %1441 = vmatpush1.bf16.msra.mxu0 0
        %1442 = vmatprep.subr.bf16.mxu0 0
        %1443 = vmatpush1.bf16.msra.mxu0 0
        %1444 = vmatprep.subr.bf16.mxu0 0
        %1445 = vmatpush1.bf16.msra.mxu0 0
        %1446 = vmatprep.subr.bf16.mxu0 0
        %1447 = vmatpush1.bf16.msra.mxu0 0
        %1448 = vmatprep.subr.bf16.mxu0 0
        %1449 = vmatpush1.bf16.msra.mxu0 0
        %1450 = vmatprep.subr.bf16.mxu0 0
        %1451 = vmatpush1.bf16.msra.mxu0 0
        %1452 = vmatprep.subr.bf16.mxu0 0
        %1453 = vmatpush1.bf16.msra.mxu0 0
        %1454 = vmatprep.subr.bf16.mxu0 0
        %1455 = vmatpush1.bf16.msra.mxu0 0
        %1456 = vmatprep.subr.bf16.mxu0 0
        %1457 = vmatpush1.bf16.msra.mxu0 0
        %1458 = vmatprep.subr.bf16.mxu0 0
        %1459 = vmatpush1.bf16.msra.mxu0 0
        %1460 = vmatprep.mubr.bf16.mxu0 0
        %1461 = vmatmul.mubr.bf16.gmra.mrb[0].mxu0 %v1417
        %v1462 = vpop.f32.mrb[0].mxu0
        %v1463 = vadd.f32 0.0, %v1462
        %v1464 = vpop.f32.mrb[0].mxu0
        %v1465 = vpop.f32.mrb[0].mxu0
        %v1466 = vadd.f32 0.0, %v1465
        %v1467 = vpop.f32.mrb[0].mxu0
        %1468 = vmatprep.mubr.bf16.mxu0 0
        %1469 = vmatmul.mubr.bf16.gmra.mrb[0].mxu0 %v1420
        %v1470 = vpop.f32.mrb[0].mxu0
        %v1471 = vadd.f32 0.0, %v1470
        %v1472 = vpop.f32.mrb[0].mxu0
        %v1473 = vpop.f32.mrb[0].mxu0
        %v1474 = vadd.f32 0.0, %v1473
        %v1475 = vpop.f32.mrb[0].mxu0
        %1476 = vmatprep.mubr.bf16.mxu0 0
        %1477 = vmatmul.mubr.bf16.gmra.mrb[0].mxu0 %v1423
        %v1478 = vpop.f32.mrb[0].mxu0
        %v1479 = vadd.f32 0.0, %v1478
        %v1480 = vpop.f32.mrb[0].mxu0
        %v1481 = vpop.f32.mrb[0].mxu0
        %v1482 = vadd.f32 0.0, %v1481
        %v1483 = vpop.f32.mrb[0].mxu0
        %1484 = vmatprep.mubr.bf16.mxu0 0
        %1485 = vmatmul.mubr.bf16.gmra.mrb[0].mxu0 %v1426
        %v1486 = vpop.f32.mrb[0].mxu0
        %v1487 = vadd.f32 0.0, %v1486
        %v1488 = vpop.f32.mrb[0].mxu0
        %v1489 = vpop.f32.mrb[0].mxu0
        %v1490 = vpop.f32.mrb[0].mxu0
        %1491 = vdwg.mxu0
        %v1492 = vadd.f32 %v1361, %v1463
        %v1493 = vadd.f32 %v1362, %v1466
        %v1494 = vadd.f32 %v1363, %v1471
        %v1495 = vadd.f32 %v1364, %v1474
        %v1496 = vadd.f32 %v1365, %v1479
        %v1497 = vadd.f32 %v1366, %v1482
        %v1498 = vadd.f32 %v1367, %v1487
        %1499 = vst.msk [vmem:[#allocation4] sm:$0xff] %vm782, %v1492
        %1500 = vst.msk [vmem:[#allocation4 + $0x8] sm:$0xff] %vm782, %v1493
        %1501 = vst.msk [vmem:[#allocation4 + $0x10] sm:$0xff] %vm782, %v1494
        %1502 = vst.msk [vmem:[#allocation4 + $0x18] sm:$0xff] %vm782, %v1495
        %1503 = vst.msk [vmem:[#allocation4 + $0x20] sm:$0xff] %vm782, %v1496
        %1504 = vst.msk [vmem:[#allocation4 + $0x28] sm:$0xff] %vm782, %v1497
        %1505 = vst.msk [vmem:[#allocation4 + $0x30] sm:$0xff] %vm782, %v1498
        %s1506 = scalar_lea.vmem %s685, 28 [#allocation5]
        %v1507 = vld [vmem:[%s1506] sm:$0xf]
        %v1508 = vld [vmem:[%s1506 + $0x4] sm:$0xf]
        %v1509 = vld [vmem:[%s1506 + $0x8] sm:$0xf]
        %v1510 = vld [vmem:[%s1506 + $0xc] sm:$0xf]
        %v1511 = vld [vmem:[%s1506 + $0x10] sm:$0xf]
        %v1512 = vld [vmem:[%s1506 + $0x14] sm:$0xf]
        %v1513 = vld [vmem:[%s1506 + $0x18] sm:$0xf]
        %v1514 = vld [vmem:[#allocation2] sm:$0xff]
        %v1515 = vld [vmem:[#allocation2 + $0x8] sm:$0xff]
        %v1516 = vld [vmem:[#allocation2 + $0x10] sm:$0xff]
        %v1517 = vld [vmem:[#allocation2 + $0x18] sm:$0xff]
        %v1518 = vld [vmem:[#allocation2 + $0x20] sm:$0xff]
        %v1519 = vld [vmem:[#allocation2 + $0x28] sm:$0xff]
        %v1520 = vld [vmem:[#allocation2 + $0x30] sm:$0xff]
        %v1521 = vld [vmem:[#allocation2 + $0x38] sm:$0xff]
        %v1522 = vld [vmem:[#allocation2 + $0x40] sm:$0xff]
        %v1523 = vld [vmem:[#allocation2 + $0x48] sm:$0xff]
        %v1524 = vld [vmem:[#allocation2 + $0x50] sm:$0xff]
        %v1525 = vld [vmem:[#allocation2 + $0x58] sm:$0xff]
        %v1526 = vld [vmem:[#allocation2 + $0x60] sm:$0xff]
        %v1527 = vld [vmem:[#allocation2 + $0x68] sm:$0xff]
        %s1528 = scalar_lea.vmem %s1, 4
        %v1529 = vld [vmem:[%s1528] sm:$0xf]
        %v1537 = vunpack.c.l.b16 %v1507
        %v1538 = vunpack.c.l.b16 %v1508
        %v1539 = vunpack.c.l.b16 %v1509
        %v1540 = vunpack.c.l.b16 %v1510
        %v1541 = vunpack.c.l.b16 %v1511
        %v1542 = vunpack.c.l.b16 %v1512
        %v1543 = vunpack.c.l.b16 %v1513
        %v1544 = vpack.c.b16 %v1538, %v1537
        %v1545 = vpack.c.b16 %v1540, %v1539
        %v1546 = vpack.c.b16 %v1542, %v1541
        %v1547 = vpack.c.b16 %v1543, %v1543
        %v1550 = vunpack.c.l.s4 1983009808
        %v1551 = vunpack.c.0.s8 %v1550
        %v1552 = vlaneseq
        %v1553 = vshrl.u32 %v1552, 7
        %v1554 = vsub.s32 %v1551, %v1553
        %v1555 = vrot.slane %v1529, %v1554
        %v1556 = vcombine.high %v1555, %v1555
        %v1558 = vsel %vm846, %v1544, 0
        %v1561 = vsel %vm846, %v1545, 0
        %v1564 = vsel %vm846, %v1546, 0
        %v1567 = vsel %vm846, %v1547, 0
        %v1570 = vsel %vm859, %v1555, 0
        %v1573 = vsel %vm859, %v1556, 0
        %1575 = vmatprep.subr.bf16.mxu0 %v1573
        %1576 = vmatpush1.bf16.msra.mxu0 %v1570
        %1577 = vmatprep.subr.bf16.mxu0 0
        %1578 = vmatpush1.bf16.msra.mxu0 0
        %1579 = vmatprep.subr.bf16.mxu0 0
        %1580 = vmatpush1.bf16.msra.mxu0 0
        %1581 = vmatprep.subr.bf16.mxu0 0
        %1582 = vmatpush1.bf16.msra.mxu0 0
        %1583 = vmatprep.subr.bf16.mxu0 0
        %1584 = vmatpush1.bf16.msra.mxu0 0
        %1585 = vmatprep.subr.bf16.mxu0 0
        %1586 = vmatpush1.bf16.msra.mxu0 0
        %1587 = vmatprep.subr.bf16.mxu0 0
        %1588 = vmatpush1.bf16.msra.mxu0 0
        %1589 = vmatprep.subr.bf16.mxu0 0
        %1590 = vmatpush1.bf16.msra.mxu0 0
        %1591 = vmatprep.subr.bf16.mxu0 0
        %1592 = vmatpush1.bf16.msra.mxu0 0
        %1593 = vmatprep.subr.bf16.mxu0 0
        %1594 = vmatpush1.bf16.msra.mxu0 0
        %1595 = vmatprep.subr.bf16.mxu0 0
        %1596 = vmatpush1.bf16.msra.mxu0 0
        %1597 = vmatprep.subr.bf16.mxu0 0
        %1598 = vmatpush1.bf16.msra.mxu0 0
        %1599 = vmatprep.subr.bf16.mxu0 0
        %1600 = vmatpush1.bf16.msra.mxu0 0
        %1601 = vmatprep.subr.bf16.mxu0 0
        %1602 = vmatpush1.bf16.msra.mxu0 0
        %1603 = vmatprep.subr.bf16.mxu0 0
        %1604 = vmatpush1.bf16.msra.mxu0 0
        %1605 = vmatprep.subr.bf16.mxu0 0
        %1606 = vmatpush1.bf16.msra.mxu0 0
        %1607 = vmatprep.mubr.bf16.mxu0 0
        %1608 = vmatmul.mubr.bf16.gmra.mrb[0].mxu0 %v1558
        %v1609 = vpop.f32.mrb[0].mxu0
        %v1610 = vadd.f32 0.0, %v1609
        %v1611 = vpop.f32.mrb[0].mxu0
        %v1612 = vadd.f32 0.0, %v1611
        %v1613 = vpop.f32.mrb[0].mxu0
        %v1614 = vadd.f32 0.0, %v1613
        %v1615 = vpop.f32.mrb[0].mxu0
        %v1616 = vadd.f32 0.0, %v1615
        %1617 = vmatprep.mubr.bf16.mxu0 0
        %1618 = vmatmul.mubr.bf16.gmra.mrb[0].mxu0 %v1561
        %v1619 = vpop.f32.mrb[0].mxu0
        %v1620 = vadd.f32 0.0, %v1619
        %v1621 = vpop.f32.mrb[0].mxu0
        %v1622 = vadd.f32 0.0, %v1621
        %v1623 = vpop.f32.mrb[0].mxu0
        %v1624 = vadd.f32 0.0, %v1623
        %v1625 = vpop.f32.mrb[0].mxu0
        %v1626 = vadd.f32 0.0, %v1625
        %1627 = vmatprep.mubr.bf16.mxu0 0
        %1628 = vmatmul.mubr.bf16.gmra.mrb[0].mxu0 %v1564
        %v1629 = vpop.f32.mrb[0].mxu0
        %v1630 = vadd.f32 0.0, %v1629
        %v1631 = vpop.f32.mrb[0].mxu0
        %v1632 = vadd.f32 0.0, %v1631
        %v1633 = vpop.f32.mrb[0].mxu0
        %v1634 = vadd.f32 0.0, %v1633
        %v1635 = vpop.f32.mrb[0].mxu0
        %v1636 = vadd.f32 0.0, %v1635
        %1637 = vmatprep.mubr.bf16.mxu0 0
        %1638 = vmatmul.mubr.bf16.gmra.mrb[0].mxu0 %v1567
        %v1639 = vpop.f32.mrb[0].mxu0
        %v1640 = vadd.f32 0.0, %v1639
        %v1641 = vpop.f32.mrb[0].mxu0
        %v1642 = vadd.f32 0.0, %v1641
        %v1643 = vpop.f32.mrb[0].mxu0
        %v1644 = vpop.f32.mrb[0].mxu0
        %1645 = vdwg.mxu0
        %v1646 = vadd.f32 %v1514, %v1610
        %v1647 = vadd.f32 %v1515, %v1612
        %v1648 = vadd.f32 %v1516, %v1614
        %v1649 = vadd.f32 %v1517, %v1616
        %v1650 = vadd.f32 %v1518, %v1620
        %v1651 = vadd.f32 %v1519, %v1622
        %v1652 = vadd.f32 %v1520, %v1624
        %v1653 = vadd.f32 %v1521, %v1626
        %v1654 = vadd.f32 %v1522, %v1630
        %v1655 = vadd.f32 %v1523, %v1632
        %v1656 = vadd.f32 %v1524, %v1634
        %v1657 = vadd.f32 %v1525, %v1636
        %v1658 = vadd.f32 %v1526, %v1640
        %v1659 = vadd.f32 %v1527, %v1642
        %1660 = vst [vmem:[#allocation2] sm:$0xff] %v1646
        %1661 = vst.msk [vmem:[#allocation2 + $0x8] sm:$0xff] %vm768, %v1647
        %1662 = vst [vmem:[#allocation2 + $0x10] sm:$0xff] %v1648
        %1663 = vst.msk [vmem:[#allocation2 + $0x18] sm:$0xff] %vm768, %v1649
        %1664 = vst [vmem:[#allocation2 + $0x20] sm:$0xff] %v1650
        %1665 = vst.msk [vmem:[#allocation2 + $0x28] sm:$0xff] %vm768, %v1651
        %1666 = vst [vmem:[#allocation2 + $0x30] sm:$0xff] %v1652
        %1667 = vst.msk [vmem:[#allocation2 + $0x38] sm:$0xff] %vm768, %v1653
        %1668 = vst [vmem:[#allocation2 + $0x40] sm:$0xff] %v1654
        %1669 = vst.msk [vmem:[#allocation2 + $0x48] sm:$0xff] %vm768, %v1655
        %1670 = vst [vmem:[#allocation2 + $0x50] sm:$0xff] %v1656
        %1671 = vst.msk [vmem:[#allocation2 + $0x58] sm:$0xff] %vm768, %v1657
        %1672 = vst [vmem:[#allocation2 + $0x60] sm:$0xff] %v1658
        %1673 = vst.msk [vmem:[#allocation2 + $0x68] sm:$0xff] %vm768, %v1659
        %1674 = vmatprep.subr.bf16.mxu0 0
        %1675 = vmatpush1.bf16.msra.mxu0 %v966
        %1676 = vmatprep.subr.bf16.mxu0 0
        %1677 = vmatpush1.bf16.msra.mxu0 0
        %1678 = vmatprep.subr.bf16.mxu0 0
        %1679 = vmatpush1.bf16.msra.mxu0 0
        %1680 = vmatprep.subr.bf16.mxu0 0
        %1681 = vmatpush1.bf16.msra.mxu0 0
        %1682 = vmatprep.subr.bf16.mxu0 0
        %1683 = vmatpush1.bf16.msra.mxu0 0
        %1684 = vmatprep.subr.bf16.mxu0 0
        %1685 = vmatpush1.bf16.msra.mxu0 0
        %1686 = vmatprep.subr.bf16.mxu0 0
        %1687 = vmatpush1.bf16.msra.mxu0 0
        %1688 = vmatprep.subr.bf16.mxu0 0
        %1689 = vmatpush1.bf16.msra.mxu0 0
        %1690 = vmatprep.subr.bf16.mxu0 0
        %1691 = vmatpush1.bf16.msra.mxu0 0
        %1692 = vmatprep.subr.bf16.mxu0 0
        %1693 = vmatpush1.bf16.msra.mxu0 0
        %1694 = vmatprep.subr.bf16.mxu0 0
        %1695 = vmatpush1.bf16.msra.mxu0 0
        %1696 = vmatprep.subr.bf16.mxu0 0
        %1697 = vmatpush1.bf16.msra.mxu0 0
        %1698 = vmatprep.subr.bf16.mxu0 0
        %1699 = vmatpush1.bf16.msra.mxu0 0
        %1700 = vmatprep.subr.bf16.mxu0 0
        %1701 = vmatpush1.bf16.msra.mxu0 0
        %1702 = vmatprep.subr.bf16.mxu0 0
        %1703 = vmatpush1.bf16.msra.mxu0 0
        %1704 = vmatprep.subr.bf16.mxu0 0
        %1705 = vmatpush1.bf16.msra.mxu0 0
        %1706 = vmatprep.mubr.bf16.mxu0 0
        %1707 = vmatmul.mubr.bf16.gmra.mrb[0].mxu0 %v1558
        %v1708 = vpop.f32.mrb[0].mxu0
        %v1709 = vadd.f32 %v751, %v1708
        %v1710 = vpop.f32.mrb[0].mxu0
        %v1711 = vpop.f32.mrb[0].mxu0
        %v1712 = vadd.f32 %v751, %v1711
        %v1713 = vpop.f32.mrb[0].mxu0
        %1714 = vmatprep.mubr.bf16.mxu0 0
        %1715 = vmatmul.mubr.bf16.gmra.mrb[0].mxu0 %v1561
        %v1716 = vpop.f32.mrb[0].mxu0
        %v1717 = vadd.f32 %v751, %v1716
        %v1718 = vpop.f32.mrb[0].mxu0
        %v1719 = vpop.f32.mrb[0].mxu0
        %v1720 = vadd.f32 %v751, %v1719
        %v1721 = vpop.f32.mrb[0].mxu0
        %1722 = vmatprep.mubr.bf16.mxu0 0
        %1723 = vmatmul.mubr.bf16.gmra.mrb[0].mxu0 %v1564
        %v1724 = vpop.f32.mrb[0].mxu0
        %v1725 = vadd.f32 %v751, %v1724
        %v1726 = vpop.f32.mrb[0].mxu0
        %v1727 = vpop.f32.mrb[0].mxu0
        %v1728 = vadd.f32 %v751, %v1727
        %v1729 = vpop.f32.mrb[0].mxu0
        %1730 = vmatprep.mubr.bf16.mxu0 0
        %1731 = vmatmul.mubr.bf16.gmra.mrb[0].mxu0 %v1567
        %v1732 = vpop.f32.mrb[0].mxu0
        %v1733 = vadd.f32 %v751, %v1732
        %v1734 = vpop.f32.mrb[0].mxu0
        %v1735 = vpop.f32.mrb[0].mxu0
        %v1736 = vpop.f32.mrb[0].mxu0
        %1737 = vdwg.mxu0
        %v1738 = vmax.f32 %v1709, 0.0
        %v1739 = vmax.f32 %v1712, 0.0
        %v1740 = vmax.f32 %v1717, 0.0
        %v1741 = vmax.f32 %v1720, 0.0
        %v1742 = vmax.f32 %v1725, 0.0
        %v1743 = vmax.f32 %v1728, 0.0
        %v1744 = vmax.f32 %v1733, 0.0
        %v1745 = vpack.c.bf16 %v1739, %v1738
        %v1746 = vpack.c.bf16 %v1741, %v1740
        %v1747 = vpack.c.bf16 %v1743, %v1742
        %v1748 = vpack.c.bf16 %v1744, %v1744
        %v1749 = vld [vmem:[#allocation3] sm:$0xff]
        %v1750 = vld [vmem:[#allocation3 + $0x8] sm:$0xff]
        %v1751 = vld [vmem:[#allocation3 + $0x10] sm:$0xff]
        %v1752 = vld [vmem:[#allocation3 + $0x18] sm:$0xff]
        %v1753 = vld [vmem:[#allocation3 + $0x20] sm:$0xff]
        %v1754 = vld [vmem:[#allocation3 + $0x28] sm:$0xff]
        %v1755 = vld [vmem:[#allocation3 + $0x30] sm:$0xff]
        %s1756 = scalar_lea.vmem %s5, 32
        %v1757 = vld [vmem:[%s1756] sm:$0xf]
        %v1758 = vld [vmem:[%s1756 + $0x4] sm:$0xf]
        %v1759 = vld [vmem:[%s1756 + $0x8] sm:$0xf]
        %v1760 = vld [vmem:[%s1756 + $0xc] sm:$0xf]
        %v1761 = vld [vmem:[%s1756 + $0x10] sm:$0xf]
        %v1762 = vld [vmem:[%s1756 + $0x14] sm:$0xf]
        %v1763 = vld [vmem:[%s1756 + $0x18] sm:$0xf]
        %v1764 = vld [vmem:[%s1756 + $0x1c] sm:$0xf]
        %v1773 = vunpack.c.l.b16 %v1757
        %v1774 = vunpack.c.l.b16 %v1758
        %v1775 = vunpack.c.l.b16 %v1759
        %v1776 = vunpack.c.l.b16 %v1760
        %v1777 = vunpack.c.l.b16 %v1761
        %v1778 = vunpack.c.l.b16 %v1762
        %v1779 = vunpack.c.l.b16 %v1763
        %v1780 = vunpack.c.l.b16 %v1764
        %v1781 = vpack.c.b16 %v1774, %v1773
        %v1782 = vpack.c.b16 %v1776, %v1775
        %v1783 = vpack.c.b16 %v1778, %v1777
        %v1784 = vpack.c.b16 %v1780, %v1779
        %v1790 = vsel %vm768, %v1745, 0
        %v1793 = vsel %vm768, %v1746, 0
        %v1796 = vsel %vm768, %v1747, 0
        %v1799 = vsel %vm768, %v1748, 0
        %1801 = vmatprep.subr.bf16.mxu0 0
        %1802 = vmatpush1.bf16.msra.mxu0 %v1781
        %1803 = vmatprep.subr.bf16.mxu0 0
        %1804 = vmatpush1.bf16.msra.mxu0 %v1782
        %1805 = vmatprep.subr.bf16.mxu0 0
        %1806 = vmatpush1.bf16.msra.mxu0 %v1783
        %1807 = vmatprep.subr.bf16.mxu0 0
        %1808 = vmatpush1.bf16.msra.mxu0 %v1784
        %1809 = vmatprep.subr.bf16.mxu0 0
        %1810 = vmatpush1.bf16.msra.mxu0 0
        %1811 = vmatprep.subr.bf16.mxu0 0
        %1812 = vmatpush1.bf16.msra.mxu0 0
        %1813 = vmatprep.subr.bf16.mxu0 0
        %1814 = vmatpush1.bf16.msra.mxu0 0
        %1815 = vmatprep.subr.bf16.mxu0 0
        %1816 = vmatpush1.bf16.msra.mxu0 0
        %1817 = vmatprep.subr.bf16.mxu0 0
        %1818 = vmatpush1.bf16.msra.mxu0 0
        %1819 = vmatprep.subr.bf16.mxu0 0
        %1820 = vmatpush1.bf16.msra.mxu0 0
        %1821 = vmatprep.subr.bf16.mxu0 0
        %1822 = vmatpush1.bf16.msra.mxu0 0
        %1823 = vmatprep.subr.bf16.mxu0 0
        %1824 = vmatpush1.bf16.msra.mxu0 0
        %1825 = vmatprep.subr.bf16.mxu0 0
        %1826 = vmatpush1.bf16.msra.mxu0 0
        %1827 = vmatprep.subr.bf16.mxu0 0
        %1828 = vmatpush1.bf16.msra.mxu0 0
        %1829 = vmatprep.subr.bf16.mxu0 0
        %1830 = vmatpush1.bf16.msra.mxu0 0
        %1831 = vmatprep.subr.bf16.mxu0 0
        %1832 = vmatpush1.bf16.msra.mxu0 0
        %1833 = vmatprep.mubr.bf16.mxu0 0
        %1834 = vmatmul.mubr.bf16.gmra.mrb[0].mxu0 %v1790
        %v1835 = vpop.f32.mrb[0].mxu0
        %v1836 = vadd.f32 0.0, %v1835
        %v1837 = vpop.f32.mrb[0].mxu0
        %v1838 = vpop.f32.mrb[0].mxu0
        %v1839 = vadd.f32 0.0, %v1838
        %v1840 = vpop.f32.mrb[0].mxu0
        %1841 = vmatprep.mubr.bf16.mxu0 0
        %1842 = vmatmul.mubr.bf16.gmra.mrb[0].mxu0 %v1793
        %v1843 = vpop.f32.mrb[0].mxu0
        %v1844 = vadd.f32 0.0, %v1843
        %v1845 = vpop.f32.mrb[0].mxu0
        %v1846 = vpop.f32.mrb[0].mxu0
        %v1847 = vadd.f32 0.0, %v1846
        %v1848 = vpop.f32.mrb[0].mxu0
        %1849 = vmatprep.mubr.bf16.mxu0 0
        %1850 = vmatmul.mubr.bf16.gmra.mrb[0].mxu0 %v1796
        %v1851 = vpop.f32.mrb[0].mxu0
        %v1852 = vadd.f32 0.0, %v1851
        %v1853 = vpop.f32.mrb[0].mxu0
        %v1854 = vpop.f32.mrb[0].mxu0
        %v1855 = vadd.f32 0.0, %v1854
        %v1856 = vpop.f32.mrb[0].mxu0
        %1857 = vmatprep.mubr.bf16.mxu0 0
        %1858 = vmatmul.mubr.bf16.gmra.mrb[0].mxu0 %v1799
        %v1859 = vpop.f32.mrb[0].mxu0
        %v1860 = vadd.f32 0.0, %v1859
        %v1861 = vpop.f32.mrb[0].mxu0
        %v1862 = vpop.f32.mrb[0].mxu0
        %v1863 = vpop.f32.mrb[0].mxu0
        %1864 = vdwg.mxu0
        %v1865 = vadd.f32 %v1749, %v1836
        %v1866 = vadd.f32 %v1750, %v1839
        %v1867 = vadd.f32 %v1751, %v1844
        %v1868 = vadd.f32 %v1752, %v1847
        %v1869 = vadd.f32 %v1753, %v1852
        %v1870 = vadd.f32 %v1754, %v1855
        %v1871 = vadd.f32 %v1755, %v1860
        %1872 = vst.msk [vmem:[#allocation3] sm:$0xff] %vm782, %v1865
        %1873 = vst.msk [vmem:[#allocation3 + $0x8] sm:$0xff] %vm782, %v1866
        %1874 = vst.msk [vmem:[#allocation3 + $0x10] sm:$0xff] %vm782, %v1867
        %1875 = vst.msk [vmem:[#allocation3 + $0x18] sm:$0xff] %vm782, %v1868
        %1876 = vst.msk [vmem:[#allocation3 + $0x20] sm:$0xff] %vm782, %v1869
        %1877 = vst.msk [vmem:[#allocation3 + $0x28] sm:$0xff] %vm782, %v1870
        %1878 = vst.msk [vmem:[#allocation3 + $0x30] sm:$0xff] %vm782, %v1871
        %1879 = vmatprep.subr.bf16.mxu0 0
        %1880 = vmatpush1.bf16.msra.mxu0 %v1173
        %1881 = vmatprep.subr.bf16.mxu0 0
        %1882 = vmatpush1.bf16.msra.mxu0 0
        %1883 = vmatprep.subr.bf16.mxu0 0
        %1884 = vmatpush1.bf16.msra.mxu0 0
        %1885 = vmatprep.subr.bf16.mxu0 0
        %1886 = vmatpush1.bf16.msra.mxu0 0
        %1887 = vmatprep.subr.bf16.mxu0 0
        %1888 = vmatpush1.bf16.msra.mxu0 0
        %1889 = vmatprep.subr.bf16.mxu0 0
        %1890 = vmatpush1.bf16.msra.mxu0 0
        %1891 = vmatprep.subr.bf16.mxu0 0
        %1892 = vmatpush1.bf16.msra.mxu0 0
        %1893 = vmatprep.subr.bf16.mxu0 0
        %1894 = vmatpush1.bf16.msra.mxu0 0
        %1895 = vmatprep.subr.bf16.mxu0 0
        %1896 = vmatpush1.bf16.msra.mxu0 0
        %1897 = vmatprep.subr.bf16.mxu0 0
        %1898 = vmatpush1.bf16.msra.mxu0 0
        %1899 = vmatprep.subr.bf16.mxu0 0
        %1900 = vmatpush1.bf16.msra.mxu0 0
        %1901 = vmatprep.subr.bf16.mxu0 0
        %1902 = vmatpush1.bf16.msra.mxu0 0
        %1903 = vmatprep.subr.bf16.mxu0 0
        %1904 = vmatpush1.bf16.msra.mxu0 0
        %1905 = vmatprep.subr.bf16.mxu0 0
        %1906 = vmatpush1.bf16.msra.mxu0 0
        %1907 = vmatprep.subr.bf16.mxu0 0
        %1908 = vmatpush1.bf16.msra.mxu0 0
        %1909 = vmatprep.subr.bf16.mxu0 0
        %1910 = vmatpush1.bf16.msra.mxu0 0
        %1911 = vmatprep.mubr.bf16.mxu0 0
        %1912 = vmatmul.mubr.bf16.gmra.mrb[0].mxu0 %v1558
        %v1913 = vpop.f32.mrb[0].mxu0
        %v1914 = vadd.f32 %v758, %v1913
        %v1915 = vpop.f32.mrb[0].mxu0
        %v1916 = vpop.f32.mrb[0].mxu0
        %v1917 = vadd.f32 %v758, %v1916
        %v1918 = vpop.f32.mrb[0].mxu0
        %1919 = vmatprep.mubr.bf16.mxu0 0
        %1920 = vmatmul.mubr.bf16.gmra.mrb[0].mxu0 %v1561
        %v1921 = vpop.f32.mrb[0].mxu0
        %v1922 = vadd.f32 %v758, %v1921
        %v1923 = vpop.f32.mrb[0].mxu0
        %v1924 = vpop.f32.mrb[0].mxu0
        %v1925 = vadd.f32 %v758, %v1924
        %v1926 = vpop.f32.mrb[0].mxu0
        %1927 = vmatprep.mubr.bf16.mxu0 0
        %1928 = vmatmul.mubr.bf16.gmra.mrb[0].mxu0 %v1564
        %v1929 = vpop.f32.mrb[0].mxu0
        %v1930 = vadd.f32 %v758, %v1929
        %v1931 = vpop.f32.mrb[0].mxu0
        %v1932 = vpop.f32.mrb[0].mxu0
        %v1933 = vadd.f32 %v758, %v1932
        %v1934 = vpop.f32.mrb[0].mxu0
        %1935 = vmatprep.mubr.bf16.mxu0 0
        %1936 = vmatmul.mubr.bf16.gmra.mrb[0].mxu0 %v1567
        %v1937 = vpop.f32.mrb[0].mxu0
        %v1938 = vadd.f32 %v758, %v1937
        %v1939 = vpop.f32.mrb[0].mxu0
        %v1940 = vpop.f32.mrb[0].mxu0
        %v1941 = vpop.f32.mrb[0].mxu0
        %1942 = vdwg.mxu0
        %v1943 = vmax.f32 %v1914, 0.0
        %v1944 = vmax.f32 %v1917, 0.0
        %v1945 = vmax.f32 %v1922, 0.0
        %v1946 = vmax.f32 %v1925, 0.0
        %v1947 = vmax.f32 %v1930, 0.0
        %v1948 = vmax.f32 %v1933, 0.0
        %v1949 = vmax.f32 %v1938, 0.0
        %v1950 = vpack.c.bf16 %v1944, %v1943
        %v1951 = vpack.c.bf16 %v1946, %v1945
        %v1952 = vpack.c.bf16 %v1948, %v1947
        %v1953 = vpack.c.bf16 %v1949, %v1949
        %v1955 = vsel %vm768, %v1950, 0
        %v1958 = vsel %vm768, %v1951, 0
        %v1961 = vsel %vm768, %v1952, 0
        %v1964 = vsel %vm768, %v1953, 0
        %1966 = vmatprep.subr.bf16.mxu0 0
        %1967 = vmatpush1.bf16.msra.mxu0 %v1266
        %1968 = vmatprep.subr.bf16.mxu0 0
        %1969 = vmatpush1.bf16.msra.mxu0 %v1267
        %1970 = vmatprep.subr.bf16.mxu0 0
        %1971 = vmatpush1.bf16.msra.mxu0 %v1268
        %1972 = vmatprep.subr.bf16.mxu0 0
        %1973 = vmatpush1.bf16.msra.mxu0 %v1269
        %1974 = vmatprep.subr.bf16.mxu0 0
        %1975 = vmatpush1.bf16.msra.mxu0 0
        %1976 = vmatprep.subr.bf16.mxu0 0
        %1977 = vmatpush1.bf16.msra.mxu0 0
        %1978 = vmatprep.subr.bf16.mxu0 0
        %1979 = vmatpush1.bf16.msra.mxu0 0
        %1980 = vmatprep.subr.bf16.mxu0 0
        %1981 = vmatpush1.bf16.msra.mxu0 0
        %1982 = vmatprep.subr.bf16.mxu0 0
        %1983 = vmatpush1.bf16.msra.mxu0 0
        %1984 = vmatprep.subr.bf16.mxu0 0
        %1985 = vmatpush1.bf16.msra.mxu0 0
        %1986 = vmatprep.subr.bf16.mxu0 0
        %1987 = vmatpush1.bf16.msra.mxu0 0
        %1988 = vmatprep.subr.bf16.mxu0 0
        %1989 = vmatpush1.bf16.msra.mxu0 0
        %1990 = vmatprep.subr.bf16.mxu0 0
        %1991 = vmatpush1.bf16.msra.mxu0 0
        %1992 = vmatprep.subr.bf16.mxu0 0
        %1993 = vmatpush1.bf16.msra.mxu0 0
        %1994 = vmatprep.subr.bf16.mxu0 0
        %1995 = vmatpush1.bf16.msra.mxu0 0
        %1996 = vmatprep.subr.bf16.mxu0 0
        %1997 = vmatpush1.bf16.msra.mxu0 0
        %1998 = vmatprep.mubr.bf16.mxu0 0
        %1999 = vmatmul.mubr.bf16.gmra.mrb[0].mxu0 %v1955
        %v2000 = vpop.f32.mrb[0].mxu0
        %v2001 = vadd.f32 %v765, %v2000
        %v2002 = vpop.f32.mrb[0].mxu0
        %v2003 = vpop.f32.mrb[0].mxu0
        %v2004 = vadd.f32 %v765, %v2003
        %v2005 = vpop.f32.mrb[0].mxu0
        %2006 = vmatprep.mubr.bf16.mxu0 0
        %2007 = vmatmul.mubr.bf16.gmra.mrb[0].mxu0 %v1958
        %v2008 = vpop.f32.mrb[0].mxu0
        %v2009 = vadd.f32 %v765, %v2008
        %v2010 = vpop.f32.mrb[0].mxu0
        %v2011 = vpop.f32.mrb[0].mxu0
        %v2012 = vadd.f32 %v765, %v2011
        %v2013 = vpop.f32.mrb[0].mxu0
        %2014 = vmatprep.mubr.bf16.mxu0 0
        %2015 = vmatmul.mubr.bf16.gmra.mrb[0].mxu0 %v1961
        %v2016 = vpop.f32.mrb[0].mxu0
        %v2017 = vadd.f32 %v765, %v2016
        %v2018 = vpop.f32.mrb[0].mxu0
        %v2019 = vpop.f32.mrb[0].mxu0
        %v2020 = vadd.f32 %v765, %v2019
        %v2021 = vpop.f32.mrb[0].mxu0
        %2022 = vmatprep.mubr.bf16.mxu0 0
        %2023 = vmatmul.mubr.bf16.gmra.mrb[0].mxu0 %v1964
        %v2024 = vpop.f32.mrb[0].mxu0
        %v2025 = vadd.f32 %v765, %v2024
        %v2026 = vpop.f32.mrb[0].mxu0
        %v2027 = vpop.f32.mrb[0].mxu0
        %v2028 = vpop.f32.mrb[0].mxu0
        %2029 = vdwg.mxu0
        %v2030 = vmax.f32 %v2001, 0.0
        %v2031 = vmax.f32 %v2004, 0.0
        %v2032 = vmax.f32 %v2009, 0.0
        %v2033 = vmax.f32 %v2012, 0.0
        %v2034 = vmax.f32 %v2017, 0.0
        %v2035 = vmax.f32 %v2020, 0.0
        %v2036 = vmax.f32 %v2025, 0.0
        %v2037 = vpack.c.bf16 %v2031, %v2030
        %v2038 = vpack.c.bf16 %v2033, %v2032
        %v2039 = vpack.c.bf16 %v2035, %v2034
        %v2040 = vpack.c.bf16 %v2036, %v2036
        %v2041 = vld [vmem:[#allocation4] sm:$0xff]
        %v2042 = vld [vmem:[#allocation4 + $0x8] sm:$0xff]
        %v2043 = vld [vmem:[#allocation4 + $0x10] sm:$0xff]
        %v2044 = vld [vmem:[#allocation4 + $0x18] sm:$0xff]
        %v2045 = vld [vmem:[#allocation4 + $0x20] sm:$0xff]
        %v2046 = vld [vmem:[#allocation4 + $0x28] sm:$0xff]
        %v2047 = vld [vmem:[#allocation4 + $0x30] sm:$0xff]
        %s2048 = scalar_lea.vmem %s11, 48
        %v2049 = vld [vmem:[%s2048] sm:$0xf]
        %v2050 = vld [vmem:[%s2048 + $0x4] sm:$0xf]
        %v2051 = vld [vmem:[%s2048 + $0x8] sm:$0xf]
        %v2052 = vld [vmem:[%s2048 + $0xc] sm:$0xf]
        %v2053 = vld [vmem:[%s2048 + $0x10] sm:$0xf]
        %v2054 = vld [vmem:[%s2048 + $0x14] sm:$0xf]
        %v2055 = vld [vmem:[%s2048 + $0x18] sm:$0xf]
        %v2056 = vld [vmem:[%s2048 + $0x1c] sm:$0xf]
        %v2057 = vld [vmem:[%s2048 + $0x20] sm:$0xf]
        %v2058 = vld [vmem:[%s2048 + $0x24] sm:$0xf]
        %v2059 = vld [vmem:[%s2048 + $0x28] sm:$0xf]
        %v2060 = vld [vmem:[%s2048 + $0x2c] sm:$0xf]
        %v2073 = vunpack.c.l.b16 %v2049
        %v2074 = vunpack.c.l.b16 %v2050
        %v2075 = vunpack.c.l.b16 %v2051
        %v2076 = vunpack.c.l.b16 %v2052
        %v2077 = vunpack.c.l.b16 %v2053
        %v2078 = vunpack.c.l.b16 %v2054
        %v2079 = vunpack.c.l.b16 %v2055
        %v2080 = vunpack.c.l.b16 %v2056
        %v2081 = vunpack.c.l.b16 %v2057
        %v2082 = vunpack.c.l.b16 %v2058
        %v2083 = vunpack.c.l.b16 %v2059
        %v2084 = vunpack.c.l.b16 %v2060
        %v2085 = vpack.c.b16 %v2074, %v2073
        %v2086 = vpack.c.b16 %v2076, %v2075
        %v2087 = vpack.c.b16 %v2078, %v2077
        %v2088 = vpack.c.b16 %v2080, %v2079
        %v2089 = vpack.c.b16 %v2082, %v2081
        %v2090 = vpack.c.b16 %v2084, %v2083
        %v2098 = vsel %vm782, %v2037, 0
        %v2101 = vsel %vm782, %v2038, 0
        %v2104 = vsel %vm782, %v2039, 0
        %v2107 = vsel %vm782, %v2040, 0
        %2109 = vmatprep.subr.bf16.mxu0 0
        %2110 = vmatpush1.bf16.msra.mxu0 %v2085
        %2111 = vmatprep.subr.bf16.mxu0 0
        %2112 = vmatpush1.bf16.msra.mxu0 %v2086
        %2113 = vmatprep.subr.bf16.mxu0 0
        %2114 = vmatpush1.bf16.msra.mxu0 %v2087
        %2115 = vmatprep.subr.bf16.mxu0 0
        %2116 = vmatpush1.bf16.msra.mxu0 %v2088
        %2117 = vmatprep.subr.bf16.mxu0 0
        %2118 = vmatpush1.bf16.msra.mxu0 %v2089
        %2119 = vmatprep.subr.bf16.mxu0 0
        %2120 = vmatpush1.bf16.msra.mxu0 %v2090
        %2121 = vmatprep.subr.bf16.mxu0 0
        %2122 = vmatpush1.bf16.msra.mxu0 0
        %2123 = vmatprep.subr.bf16.mxu0 0
        %2124 = vmatpush1.bf16.msra.mxu0 0
        %2125 = vmatprep.subr.bf16.mxu0 0
        %2126 = vmatpush1.bf16.msra.mxu0 0
        %2127 = vmatprep.subr.bf16.mxu0 0
        %2128 = vmatpush1.bf16.msra.mxu0 0
        %2129 = vmatprep.subr.bf16.mxu0 0
        %2130 = vmatpush1.bf16.msra.mxu0 0
        %2131 = vmatprep.subr.bf16.mxu0 0
        %2132 = vmatpush1.bf16.msra.mxu0 0
        %2133 = vmatprep.subr.bf16.mxu0 0
        %2134 = vmatpush1.bf16.msra.mxu0 0
        %2135 = vmatprep.subr.bf16.mxu0 0
        %2136 = vmatpush1.bf16.msra.mxu0 0
        %2137 = vmatprep.subr.bf16.mxu0 0
        %2138 = vmatpush1.bf16.msra.mxu0 0
        %2139 = vmatprep.subr.bf16.mxu0 0
        %2140 = vmatpush1.bf16.msra.mxu0 0
        %2141 = vmatprep.mubr.bf16.mxu0 0
        %2142 = vmatmul.mubr.bf16.gmra.mrb[0].mxu0 %v2098
        %v2143 = vpop.f32.mrb[0].mxu0
        %v2144 = vadd.f32 0.0, %v2143
        %v2145 = vpop.f32.mrb[0].mxu0
        %v2146 = vpop.f32.mrb[0].mxu0
        %v2147 = vadd.f32 0.0, %v2146
        %v2148 = vpop.f32.mrb[0].mxu0
        %2149 = vmatprep.mubr.bf16.mxu0 0
        %2150 = vmatmul.mubr.bf16.gmra.mrb[0].mxu0 %v2101
        %v2151 = vpop.f32.mrb[0].mxu0
        %v2152 = vadd.f32 0.0, %v2151
        %v2153 = vpop.f32.mrb[0].mxu0
        %v2154 = vpop.f32.mrb[0].mxu0
        %v2155 = vadd.f32 0.0, %v2154
        %v2156 = vpop.f32.mrb[0].mxu0
        %2157 = vmatprep.mubr.bf16.mxu0 0
        %2158 = vmatmul.mubr.bf16.gmra.mrb[0].mxu0 %v2104
        %v2159 = vpop.f32.mrb[0].mxu0
        %v2160 = vadd.f32 0.0, %v2159
        %v2161 = vpop.f32.mrb[0].mxu0
        %v2162 = vpop.f32.mrb[0].mxu0
        %v2163 = vadd.f32 0.0, %v2162
        %v2164 = vpop.f32.mrb[0].mxu0
        %2165 = vmatprep.mubr.bf16.mxu0 0
        %2166 = vmatmul.mubr.bf16.gmra.mrb[0].mxu0 %v2107
        %v2167 = vpop.f32.mrb[0].mxu0
        %v2168 = vadd.f32 0.0, %v2167
        %v2169 = vpop.f32.mrb[0].mxu0
        %v2170 = vpop.f32.mrb[0].mxu0
        %v2171 = vpop.f32.mrb[0].mxu0
        %2172 = vdwg.mxu0
        %v2173 = vadd.f32 %v2041, %v2144
        %v2174 = vadd.f32 %v2042, %v2147
        %v2175 = vadd.f32 %v2043, %v2152
        %v2176 = vadd.f32 %v2044, %v2155
        %v2177 = vadd.f32 %v2045, %v2160
        %v2178 = vadd.f32 %v2046, %v2163
        %v2179 = vadd.f32 %v2047, %v2168
        %2180 = vst.msk [vmem:[#allocation4] sm:$0xff] %vm782, %v2173
        %2181 = vst.msk [vmem:[#allocation4 + $0x8] sm:$0xff] %vm782, %v2174
        %2182 = vst.msk [vmem:[#allocation4 + $0x10] sm:$0xff] %vm782, %v2175
        %2183 = vst.msk [vmem:[#allocation4 + $0x18] sm:$0xff] %vm782, %v2176
        %2184 = vst.msk [vmem:[#allocation4 + $0x20] sm:$0xff] %vm782, %v2177
        %2185 = vst.msk [vmem:[#allocation4 + $0x28] sm:$0xff] %vm782, %v2178
        %2186 = vst.msk [vmem:[#allocation4 + $0x30] sm:$0xff] %vm782, %v2179
        %s2187 = scalar_lea.vmem %s685, 56 [#allocation5]
        %v2188 = vld [vmem:[%s2187] sm:$0xf]
        %v2189 = vld [vmem:[%s2187 + $0x4] sm:$0xf]
        %v2190 = vld [vmem:[%s2187 + $0x8] sm:$0xf]
        %v2191 = vld [vmem:[%s2187 + $0xc] sm:$0xf]
        %v2192 = vld [vmem:[%s2187 + $0x10] sm:$0xf]
        %v2193 = vld [vmem:[%s2187 + $0x14] sm:$0xf]
        %v2194 = vld [vmem:[%s2187 + $0x18] sm:$0xf]
        %v2195 = vld [vmem:[#allocation2] sm:$0xff]
        %v2196 = vld [vmem:[#allocation2 + $0x8] sm:$0xff]
        %v2197 = vld [vmem:[#allocation2 + $0x10] sm:$0xff]
        %v2198 = vld [vmem:[#allocation2 + $0x18] sm:$0xff]
        %v2199 = vld [vmem:[#allocation2 + $0x20] sm:$0xff]
        %v2200 = vld [vmem:[#allocation2 + $0x28] sm:$0xff]
        %v2201 = vld [vmem:[#allocation2 + $0x30] sm:$0xff]
        %v2202 = vld [vmem:[#allocation2 + $0x38] sm:$0xff]
        %v2203 = vld [vmem:[#allocation2 + $0x40] sm:$0xff]
        %v2204 = vld [vmem:[#allocation2 + $0x48] sm:$0xff]
        %v2205 = vld [vmem:[#allocation2 + $0x50] sm:$0xff]
        %v2206 = vld [vmem:[#allocation2 + $0x58] sm:$0xff]
        %v2207 = vld [vmem:[#allocation2 + $0x60] sm:$0xff]
        %v2208 = vld [vmem:[#allocation2 + $0x68] sm:$0xff]
        %s2209 = scalar_lea.vmem %s1, 8
        %v2210 = vld [vmem:[%s2209] sm:$0xf]
        %v2218 = vunpack.c.l.b16 %v2188
        %v2219 = vunpack.c.l.b16 %v2189
        %v2220 = vunpack.c.l.b16 %v2190
        %v2221 = vunpack.c.l.b16 %v2191
        %v2222 = vunpack.c.l.b16 %v2192
        %v2223 = vunpack.c.l.b16 %v2193
        %v2224 = vunpack.c.l.b16 %v2194
        %v2225 = vpack.c.b16 %v2219, %v2218
        %v2226 = vpack.c.b16 %v2221, %v2220
        %v2227 = vpack.c.b16 %v2223, %v2222
        %v2228 = vpack.c.b16 %v2224, %v2224
        %v2231 = vunpack.c.l.s4 1983009808
        %v2232 = vunpack.c.0.s8 %v2231
        %v2233 = vlaneseq
        %v2234 = vshrl.u32 %v2233, 7
        %v2235 = vsub.s32 %v2232, %v2234
        %v2236 = vrot.slane %v2210, %v2235
        %v2237 = vcombine.high %v2236, %v2236
        %v2239 = vsel %vm846, %v2225, 0
        %v2242 = vsel %vm846, %v2226, 0
        %v2245 = vsel %vm846, %v2227, 0
        %v2248 = vsel %vm846, %v2228, 0
        %v2251 = vsel %vm859, %v2236, 0
        %v2254 = vsel %vm859, %v2237, 0
        %2256 = vmatprep.subr.bf16.mxu0 %v2254
        %2257 = vmatpush1.bf16.msra.mxu0 %v2251
        %2258 = vmatprep.subr.bf16.mxu0 0
        %2259 = vmatpush1.bf16.msra.mxu0 0
        %2260 = vmatprep.subr.bf16.mxu0 0
        %2261 = vmatpush1.bf16.msra.mxu0 0
        %2262 = vmatprep.subr.bf16.mxu0 0
        %2263 = vmatpush1.bf16.msra.mxu0 0
        %2264 = vmatprep.subr.bf16.mxu0 0
        %2265 = vmatpush1.bf16.msra.mxu0 0
        %2266 = vmatprep.subr.bf16.mxu0 0
        %2267 = vmatpush1.bf16.msra.mxu0 0
        %2268 = vmatprep.subr.bf16.mxu0 0
        %2269 = vmatpush1.bf16.msra.mxu0 0
        %2270 = vmatprep.subr.bf16.mxu0 0
        %2271 = vmatpush1.bf16.msra.mxu0 0
        %2272 = vmatprep.subr.bf16.mxu0 0
        %2273 = vmatpush1.bf16.msra.mxu0 0
        %2274 = vmatprep.subr.bf16.mxu0 0
        %2275 = vmatpush1.bf16.msra.mxu0 0
        %2276 = vmatprep.subr.bf16.mxu0 0
        %2277 = vmatpush1.bf16.msra.mxu0 0
        %2278 = vmatprep.subr.bf16.mxu0 0
        %2279 = vmatpush1.bf16.msra.mxu0 0
        %2280 = vmatprep.subr.bf16.mxu0 0
        %2281 = vmatpush1.bf16.msra.mxu0 0
        %2282 = vmatprep.subr.bf16.mxu0 0
        %2283 = vmatpush1.bf16.msra.mxu0 0
        %2284 = vmatprep.subr.bf16.mxu0 0
        %2285 = vmatpush1.bf16.msra.mxu0 0
        %2286 = vmatprep.subr.bf16.mxu0 0
        %2287 = vmatpush1.bf16.msra.mxu0 0
        %2288 = vmatprep.mubr.bf16.mxu0 0
        %2289 = vmatmul.mubr.bf16.gmra.mrb[0].mxu0 %v2239
        %v2290 = vpop.f32.mrb[0].mxu0
        %v2291 = vadd.f32 0.0, %v2290
        %v2292 = vpop.f32.mrb[0].mxu0
        %v2293 = vadd.f32 0.0, %v2292
        %v2294 = vpop.f32.mrb[0].mxu0
        %v2295 = vadd.f32 0.0, %v2294
        %v2296 = vpop.f32.mrb[0].mxu0
        %v2297 = vadd.f32 0.0, %v2296
        %2298 = vmatprep.mubr.bf16.mxu0 0
        %2299 = vmatmul.mubr.bf16.gmra.mrb[0].mxu0 %v2242
        %v2300 = vpop.f32.mrb[0].mxu0
        %v2301 = vadd.f32 0.0, %v2300
        %v2302 = vpop.f32.mrb[0].mxu0
        %v2303 = vadd.f32 0.0, %v2302
        %v2304 = vpop.f32.mrb[0].mxu0
        %v2305 = vadd.f32 0.0, %v2304
        %v2306 = vpop.f32.mrb[0].mxu0
        %v2307 = vadd.f32 0.0, %v2306
        %2308 = vmatprep.mubr.bf16.mxu0 0
        %2309 = vmatmul.mubr.bf16.gmra.mrb[0].mxu0 %v2245
        %v2310 = vpop.f32.mrb[0].mxu0
        %v2311 = vadd.f32 0.0, %v2310
        %v2312 = vpop.f32.mrb[0].mxu0
        %v2313 = vadd.f32 0.0, %v2312
        %v2314 = vpop.f32.mrb[0].mxu0
        %v2315 = vadd.f32 0.0, %v2314
        %v2316 = vpop.f32.mrb[0].mxu0
        %v2317 = vadd.f32 0.0, %v2316
        %2318 = vmatprep.mubr.bf16.mxu0 0
        %2319 = vmatmul.mubr.bf16.gmra.mrb[0].mxu0 %v2248
        %v2320 = vpop.f32.mrb[0].mxu0
        %v2321 = vadd.f32 0.0, %v2320
        %v2322 = vpop.f32.mrb[0].mxu0
        %v2323 = vadd.f32 0.0, %v2322
        %v2324 = vpop.f32.mrb[0].mxu0
        %v2325 = vpop.f32.mrb[0].mxu0
        %2326 = vdwg.mxu0
        %v2327 = vadd.f32 %v2195, %v2291
        %v2328 = vadd.f32 %v2196, %v2293
        %v2329 = vadd.f32 %v2197, %v2295
        %v2330 = vadd.f32 %v2198, %v2297
        %v2331 = vadd.f32 %v2199, %v2301
        %v2332 = vadd.f32 %v2200, %v2303
        %v2333 = vadd.f32 %v2201, %v2305
        %v2334 = vadd.f32 %v2202, %v2307
        %v2335 = vadd.f32 %v2203, %v2311
        %v2336 = vadd.f32 %v2204, %v2313
        %v2337 = vadd.f32 %v2205, %v2315
        %v2338 = vadd.f32 %v2206, %v2317
        %v2339 = vadd.f32 %v2207, %v2321
        %v2340 = vadd.f32 %v2208, %v2323
        %2341 = vst [vmem:[#allocation2] sm:$0xff] %v2327
        %2342 = vst.msk [vmem:[#allocation2 + $0x8] sm:$0xff] %vm768, %v2328
        %2343 = vst [vmem:[#allocation2 + $0x10] sm:$0xff] %v2329
        %2344 = vst.msk [vmem:[#allocation2 + $0x18] sm:$0xff] %vm768, %v2330
        %2345 = vst [vmem:[#allocation2 + $0x20] sm:$0xff] %v2331
        %2346 = vst.msk [vmem:[#allocation2 + $0x28] sm:$0xff] %vm768, %v2332
        %2347 = vst [vmem:[#allocation2 + $0x30] sm:$0xff] %v2333
        %2348 = vst.msk [vmem:[#allocation2 + $0x38] sm:$0xff] %vm768, %v2334
        %2349 = vst [vmem:[#allocation2 + $0x40] sm:$0xff] %v2335
        %2350 = vst.msk [vmem:[#allocation2 + $0x48] sm:$0xff] %vm768, %v2336
        %2351 = vst [vmem:[#allocation2 + $0x50] sm:$0xff] %v2337
        %2352 = vst.msk [vmem:[#allocation2 + $0x58] sm:$0xff] %vm768, %v2338
        %2353 = vst [vmem:[#allocation2 + $0x60] sm:$0xff] %v2339
        %2354 = vst.msk [vmem:[#allocation2 + $0x68] sm:$0xff] %vm768, %v2340
        %2355 = vmatprep.subr.bf16.mxu0 0
        %2356 = vmatpush1.bf16.msra.mxu0 %v966
        %2357 = vmatprep.subr.bf16.mxu0 0
        %2358 = vmatpush1.bf16.msra.mxu0 0
        %2359 = vmatprep.subr.bf16.mxu0 0
        %2360 = vmatpush1.bf16.msra.mxu0 0
        %2361 = vmatprep.subr.bf16.mxu0 0
        %2362 = vmatpush1.bf16.msra.mxu0 0
        %2363 = vmatprep.subr.bf16.mxu0 0
        %2364 = vmatpush1.bf16.msra.mxu0 0
        %2365 = vmatprep.subr.bf16.mxu0 0
        %2366 = vmatpush1.bf16.msra.mxu0 0
        %2367 = vmatprep.subr.bf16.mxu0 0
        %2368 = vmatpush1.bf16.msra.mxu0 0
        %2369 = vmatprep.subr.bf16.mxu0 0
        %2370 = vmatpush1.bf16.msra.mxu0 0
        %2371 = vmatprep.subr.bf16.mxu0 0
        %2372 = vmatpush1.bf16.msra.mxu0 0
        %2373 = vmatprep.subr.bf16.mxu0 0
        %2374 = vmatpush1.bf16.msra.mxu0 0
        %2375 = vmatprep.subr.bf16.mxu0 0
        %2376 = vmatpush1.bf16.msra.mxu0 0
        %2377 = vmatprep.subr.bf16.mxu0 0
        %2378 = vmatpush1.bf16.msra.mxu0 0
        %2379 = vmatprep.subr.bf16.mxu0 0
        %2380 = vmatpush1.bf16.msra.mxu0 0
        %2381 = vmatprep.subr.bf16.mxu0 0
        %2382 = vmatpush1.bf16.msra.mxu0 0
        %2383 = vmatprep.subr.bf16.mxu0 0
        %2384 = vmatpush1.bf16.msra.mxu0 0
        %2385 = vmatprep.subr.bf16.mxu0 0
        %2386 = vmatpush1.bf16.msra.mxu0 0
        %2387 = vmatprep.mubr.bf16.mxu0 0
        %2388 = vmatmul.mubr.bf16.gmra.mrb[0].mxu0 %v2239
        %v2389 = vpop.f32.mrb[0].mxu0
        %v2390 = vadd.f32 %v751, %v2389
        %v2391 = vpop.f32.mrb[0].mxu0
        %v2392 = vpop.f32.mrb[0].mxu0
        %v2393 = vadd.f32 %v751, %v2392
        %v2394 = vpop.f32.mrb[0].mxu0
        %2395 = vmatprep.mubr.bf16.mxu0 0
        %2396 = vmatmul.mubr.bf16.gmra.mrb[0].mxu0 %v2242
        %v2397 = vpop.f32.mrb[0].mxu0
        %v2398 = vadd.f32 %v751, %v2397
        %v2399 = vpop.f32.mrb[0].mxu0
        %v2400 = vpop.f32.mrb[0].mxu0
        %v2401 = vadd.f32 %v751, %v2400
        %v2402 = vpop.f32.mrb[0].mxu0
        %2403 = vmatprep.mubr.bf16.mxu0 0
        %2404 = vmatmul.mubr.bf16.gmra.mrb[0].mxu0 %v2245
        %v2405 = vpop.f32.mrb[0].mxu0
        %v2406 = vadd.f32 %v751, %v2405
        %v2407 = vpop.f32.mrb[0].mxu0
        %v2408 = vpop.f32.mrb[0].mxu0
        %v2409 = vadd.f32 %v751, %v2408
        %v2410 = vpop.f32.mrb[0].mxu0
        %2411 = vmatprep.mubr.bf16.mxu0 0
        %2412 = vmatmul.mubr.bf16.gmra.mrb[0].mxu0 %v2248
        %v2413 = vpop.f32.mrb[0].mxu0
        %v2414 = vadd.f32 %v751, %v2413
        %v2415 = vpop.f32.mrb[0].mxu0
        %v2416 = vpop.f32.mrb[0].mxu0
        %v2417 = vpop.f32.mrb[0].mxu0
        %2418 = vdwg.mxu0
        %v2419 = vmax.f32 %v2390, 0.0
        %v2420 = vmax.f32 %v2393, 0.0
        %v2421 = vmax.f32 %v2398, 0.0
        %v2422 = vmax.f32 %v2401, 0.0
        %v2423 = vmax.f32 %v2406, 0.0
        %v2424 = vmax.f32 %v2409, 0.0
        %v2425 = vmax.f32 %v2414, 0.0
        %v2426 = vpack.c.bf16 %v2420, %v2419
        %v2427 = vpack.c.bf16 %v2422, %v2421
        %v2428 = vpack.c.bf16 %v2424, %v2423
        %v2429 = vpack.c.bf16 %v2425, %v2425
        %v2430 = vld [vmem:[#allocation3] sm:$0xff]
        %v2431 = vld [vmem:[#allocation3 + $0x8] sm:$0xff]
        %v2432 = vld [vmem:[#allocation3 + $0x10] sm:$0xff]
        %v2433 = vld [vmem:[#allocation3 + $0x18] sm:$0xff]
        %v2434 = vld [vmem:[#allocation3 + $0x20] sm:$0xff]
        %v2435 = vld [vmem:[#allocation3 + $0x28] sm:$0xff]
        %v2436 = vld [vmem:[#allocation3 + $0x30] sm:$0xff]
        %s2437 = scalar_lea.vmem %s5, 64
        %v2438 = vld [vmem:[%s2437] sm:$0xf]
        %v2439 = vld [vmem:[%s2437 + $0x4] sm:$0xf]
        %v2440 = vld [vmem:[%s2437 + $0x8] sm:$0xf]
        %v2441 = vld [vmem:[%s2437 + $0xc] sm:$0xf]
        %v2442 = vld [vmem:[%s2437 + $0x10] sm:$0xf]
        %v2443 = vld [vmem:[%s2437 + $0x14] sm:$0xf]
        %v2444 = vld [vmem:[%s2437 + $0x18] sm:$0xf]
        %v2445 = vld [vmem:[%s2437 + $0x1c] sm:$0xf]
        %v2454 = vunpack.c.l.b16 %v2438
        %v2455 = vunpack.c.l.b16 %v2439
        %v2456 = vunpack.c.l.b16 %v2440
        %v2457 = vunpack.c.l.b16 %v2441
        %v2458 = vunpack.c.l.b16 %v2442
        %v2459 = vunpack.c.l.b16 %v2443
        %v2460 = vunpack.c.l.b16 %v2444
        %v2461 = vunpack.c.l.b16 %v2445
        %v2462 = vpack.c.b16 %v2455, %v2454
        %v2463 = vpack.c.b16 %v2457, %v2456
        %v2464 = vpack.c.b16 %v2459, %v2458
        %v2465 = vpack.c.b16 %v2461, %v2460
        %v2471 = vsel %vm768, %v2426, 0
        %v2474 = vsel %vm768, %v2427, 0
        %v2477 = vsel %vm768, %v2428, 0
        %v2480 = vsel %vm768, %v2429, 0
        %2482 = vmatprep.subr.bf16.mxu0 0
        %2483 = vmatpush1.bf16.msra.mxu0 %v2462
        %2484 = vmatprep.subr.bf16.mxu0 0
        %2485 = vmatpush1.bf16.msra.mxu0 %v2463
        %2486 = vmatprep.subr.bf16.mxu0 0
        %2487 = vmatpush1.bf16.msra.mxu0 %v2464
        %2488 = vmatprep.subr.bf16.mxu0 0
        %2489 = vmatpush1.bf16.msra.mxu0 %v2465
        %2490 = vmatprep.subr.bf16.mxu0 0
        %2491 = vmatpush1.bf16.msra.mxu0 0
        %2492 = vmatprep.subr.bf16.mxu0 0
        %2493 = vmatpush1.bf16.msra.mxu0 0
        %2494 = vmatprep.subr.bf16.mxu0 0
        %2495 = vmatpush1.bf16.msra.mxu0 0
        %2496 = vmatprep.subr.bf16.mxu0 0
        %2497 = vmatpush1.bf16.msra.mxu0 0
        %2498 = vmatprep.subr.bf16.mxu0 0
        %2499 = vmatpush1.bf16.msra.mxu0 0
        %2500 = vmatprep.subr.bf16.mxu0 0
        %2501 = vmatpush1.bf16.msra.mxu0 0
        %2502 = vmatprep.subr.bf16.mxu0 0
        %2503 = vmatpush1.bf16.msra.mxu0 0
        %2504 = vmatprep.subr.bf16.mxu0 0
        %2505 = vmatpush1.bf16.msra.mxu0 0
        %2506 = vmatprep.subr.bf16.mxu0 0
        %2507 = vmatpush1.bf16.msra.mxu0 0
        %2508 = vmatprep.subr.bf16.mxu0 0
        %2509 = vmatpush1.bf16.msra.mxu0 0
        %2510 = vmatprep.subr.bf16.mxu0 0
        %2511 = vmatpush1.bf16.msra.mxu0 0
        %2512 = vmatprep.subr.bf16.mxu0 0
        %2513 = vmatpush1.bf16.msra.mxu0 0
        %2514 = vmatprep.mubr.bf16.mxu0 0
        %2515 = vmatmul.mubr.bf16.gmra.mrb[0].mxu0 %v2471
        %v2516 = vpop.f32.mrb[0].mxu0
        %v2517 = vadd.f32 0.0, %v2516
        %v2518 = vpop.f32.mrb[0].mxu0
        %v2519 = vpop.f32.mrb[0].mxu0
        %v2520 = vadd.f32 0.0, %v2519
        %v2521 = vpop.f32.mrb[0].mxu0
        %2522 = vmatprep.mubr.bf16.mxu0 0
        %2523 = vmatmul.mubr.bf16.gmra.mrb[0].mxu0 %v2474
        %v2524 = vpop.f32.mrb[0].mxu0
        %v2525 = vadd.f32 0.0, %v2524
        %v2526 = vpop.f32.mrb[0].mxu0
        %v2527 = vpop.f32.mrb[0].mxu0
        %v2528 = vadd.f32 0.0, %v2527
        %v2529 = vpop.f32.mrb[0].mxu0
        %2530 = vmatprep.mubr.bf16.mxu0 0
        %2531 = vmatmul.mubr.bf16.gmra.mrb[0].mxu0 %v2477
        %v2532 = vpop.f32.mrb[0].mxu0
        %v2533 = vadd.f32 0.0, %v2532
        %v2534 = vpop.f32.mrb[0].mxu0
        %v2535 = vpop.f32.mrb[0].mxu0
        %v2536 = vadd.f32 0.0, %v2535
        %v2537 = vpop.f32.mrb[0].mxu0
        %2538 = vmatprep.mubr.bf16.mxu0 0
        %2539 = vmatmul.mubr.bf16.gmra.mrb[0].mxu0 %v2480
        %v2540 = vpop.f32.mrb[0].mxu0
        %v2541 = vadd.f32 0.0, %v2540
        %v2542 = vpop.f32.mrb[0].mxu0
        %v2543 = vpop.f32.mrb[0].mxu0
        %v2544 = vpop.f32.mrb[0].mxu0
        %2545 = vdwg.mxu0
        %v2546 = vadd.f32 %v2430, %v2517
        %v2547 = vadd.f32 %v2431, %v2520
        %v2548 = vadd.f32 %v2432, %v2525
        %v2549 = vadd.f32 %v2433, %v2528
        %v2550 = vadd.f32 %v2434, %v2533
        %v2551 = vadd.f32 %v2435, %v2536
        %v2552 = vadd.f32 %v2436, %v2541
        %2553 = vst.msk [vmem:[#allocation3] sm:$0xff] %vm782, %v2546
        %2554 = vst.msk [vmem:[#allocation3 + $0x8] sm:$0xff] %vm782, %v2547
        %2555 = vst.msk [vmem:[#allocation3 + $0x10] sm:$0xff] %vm782, %v2548
        %2556 = vst.msk [vmem:[#allocation3 + $0x18] sm:$0xff] %vm782, %v2549
        %2557 = vst.msk [vmem:[#allocation3 + $0x20] sm:$0xff] %vm782, %v2550
        %2558 = vst.msk [vmem:[#allocation3 + $0x28] sm:$0xff] %vm782, %v2551
        %2559 = vst.msk [vmem:[#allocation3 + $0x30] sm:$0xff] %vm782, %v2552
        %2560 = vmatprep.subr.bf16.mxu0 0
        %2561 = vmatpush1.bf16.msra.mxu0 %v1173
        %2562 = vmatprep.subr.bf16.mxu0 0
        %2563 = vmatpush1.bf16.msra.mxu0 0
        %2564 = vmatprep.subr.bf16.mxu0 0
        %2565 = vmatpush1.bf16.msra.mxu0 0
        %2566 = vmatprep.subr.bf16.mxu0 0
        %2567 = vmatpush1.bf16.msra.mxu0 0
        %2568 = vmatprep.subr.bf16.mxu0 0
        %2569 = vmatpush1.bf16.msra.mxu0 0
        %2570 = vmatprep.subr.bf16.mxu0 0
        %2571 = vmatpush1.bf16.msra.mxu0 0
        %2572 = vmatprep.subr.bf16.mxu0 0
        %2573 = vmatpush1.bf16.msra.mxu0 0
        %2574 = vmatprep.subr.bf16.mxu0 0
        %2575 = vmatpush1.bf16.msra.mxu0 0
        %2576 = vmatprep.subr.bf16.mxu0 0
        %2577 = vmatpush1.bf16.msra.mxu0 0
        %2578 = vmatprep.subr.bf16.mxu0 0
        %2579 = vmatpush1.bf16.msra.mxu0 0
        %2580 = vmatprep.subr.bf16.mxu0 0
        %2581 = vmatpush1.bf16.msra.mxu0 0
        %2582 = vmatprep.subr.bf16.mxu0 0
        %2583 = vmatpush1.bf16.msra.mxu0 0
        %2584 = vmatprep.subr.bf16.mxu0 0
        %2585 = vmatpush1.bf16.msra.mxu0 0
        %2586 = vmatprep.subr.bf16.mxu0 0
        %2587 = vmatpush1.bf16.msra.mxu0 0
        %2588 = vmatprep.subr.bf16.mxu0 0
        %2589 = vmatpush1.bf16.msra.mxu0 0
        %2590 = vmatprep.subr.bf16.mxu0 0
        %2591 = vmatpush1.bf16.msra.mxu0 0
        %2592 = vmatprep.mubr.bf16.mxu0 0
        %2593 = vmatmul.mubr.bf16.gmra.mrb[0].mxu0 %v2239
        %v2594 = vpop.f32.mrb[0].mxu0
        %v2595 = vadd.f32 %v758, %v2594
        %v2596 = vpop.f32.mrb[0].mxu0
        %v2597 = vpop.f32.mrb[0].mxu0
        %v2598 = vadd.f32 %v758, %v2597
        %v2599 = vpop.f32.mrb[0].mxu0
        %2600 = vmatprep.mubr.bf16.mxu0 0
        %2601 = vmatmul.mubr.bf16.gmra.mrb[0].mxu0 %v2242
        %v2602 = vpop.f32.mrb[0].mxu0
        %v2603 = vadd.f32 %v758, %v2602
        %v2604 = vpop.f32.mrb[0].mxu0
        %v2605 = vpop.f32.mrb[0].mxu0
        %v2606 = vadd.f32 %v758, %v2605
        %v2607 = vpop.f32.mrb[0].mxu0
        %2608 = vmatprep.mubr.bf16.mxu0 0
        %2609 = vmatmul.mubr.bf16.gmra.mrb[0].mxu0 %v2245
        %v2610 = vpop.f32.mrb[0].mxu0
        %v2611 = vadd.f32 %v758, %v2610
        %v2612 = vpop.f32.mrb[0].mxu0
        %v2613 = vpop.f32.mrb[0].mxu0
        %v2614 = vadd.f32 %v758, %v2613
        %v2615 = vpop.f32.mrb[0].mxu0
        %2616 = vmatprep.mubr.bf16.mxu0 0
        %2617 = vmatmul.mubr.bf16.gmra.mrb[0].mxu0 %v2248
        %v2618 = vpop.f32.mrb[0].mxu0
        %v2619 = vadd.f32 %v758, %v2618
        %v2620 = vpop.f32.mrb[0].mxu0
        %v2621 = vpop.f32.mrb[0].mxu0
        %v2622 = vpop.f32.mrb[0].mxu0
        %2623 = vdwg.mxu0
        %v2624 = vmax.f32 %v2595, 0.0
        %v2625 = vmax.f32 %v2598, 0.0
        %v2626 = vmax.f32 %v2603, 0.0
        %v2627 = vmax.f32 %v2606, 0.0
        %v2628 = vmax.f32 %v2611, 0.0
        %v2629 = vmax.f32 %v2614, 0.0
        %v2630 = vmax.f32 %v2619, 0.0
        %v2631 = vpack.c.bf16 %v2625, %v2624
        %v2632 = vpack.c.bf16 %v2627, %v2626
        %v2633 = vpack.c.bf16 %v2629, %v2628
        %v2634 = vpack.c.bf16 %v2630, %v2630
        %v2636 = vsel %vm768, %v2631, 0
        %v2639 = vsel %vm768, %v2632, 0
        %v2642 = vsel %vm768, %v2633, 0
        %v2645 = vsel %vm768, %v2634, 0
        %2647 = vmatprep.subr.bf16.mxu0 0
        %2648 = vmatpush1.bf16.msra.mxu0 %v1266
        %2649 = vmatprep.subr.bf16.mxu0 0
        %2650 = vmatpush1.bf16.msra.mxu0 %v1267
        %2651 = vmatprep.subr.bf16.mxu0 0
        %2652 = vmatpush1.bf16.msra.mxu0 %v1268
        %2653 = vmatprep.subr.bf16.mxu0 0
        %2654 = vmatpush1.bf16.msra.mxu0 %v1269
        %2655 = vmatprep.subr.bf16.mxu0 0
        %2656 = vmatpush1.bf16.msra.mxu0 0
        %2657 = vmatprep.subr.bf16.mxu0 0
        %2658 = vmatpush1.bf16.msra.mxu0 0
        %2659 = vmatprep.subr.bf16.mxu0 0
        %2660 = vmatpush1.bf16.msra.mxu0 0
        %2661 = vmatprep.subr.bf16.mxu0 0
        %2662 = vmatpush1.bf16.msra.mxu0 0
        %2663 = vmatprep.subr.bf16.mxu0 0
        %2664 = vmatpush1.bf16.msra.mxu0 0
        %2665 = vmatprep.subr.bf16.mxu0 0
        %2666 = vmatpush1.bf16.msra.mxu0 0
        %2667 = vmatprep.subr.bf16.mxu0 0
        %2668 = vmatpush1.bf16.msra.mxu0 0
        %2669 = vmatprep.subr.bf16.mxu0 0
        %2670 = vmatpush1.bf16.msra.mxu0 0
        %2671 = vmatprep.subr.bf16.mxu0 0
        %2672 = vmatpush1.bf16.msra.mxu0 0
        %2673 = vmatprep.subr.bf16.mxu0 0
        %2674 = vmatpush1.bf16.msra.mxu0 0
        %2675 = vmatprep.subr.bf16.mxu0 0
        %2676 = vmatpush1.bf16.msra.mxu0 0
        %2677 = vmatprep.subr.bf16.mxu0 0
        %2678 = vmatpush1.bf16.msra.mxu0 0
        %2679 = vmatprep.mubr.bf16.mxu0 0
        %2680 = vmatmul.mubr.bf16.gmra.mrb[0].mxu0 %v2636
        %v2681 = vpop.f32.mrb[0].mxu0
        %v2682 = vadd.f32 %v765, %v2681
        %v2683 = vpop.f32.mrb[0].mxu0
        %v2684 = vpop.f32.mrb[0].mxu0
        %v2685 = vadd.f32 %v765, %v2684
        %v2686 = vpop.f32.mrb[0].mxu0
        %2687 = vmatprep.mubr.bf16.mxu0 0
        %2688 = vmatmul.mubr.bf16.gmra.mrb[0].mxu0 %v2639
        %v2689 = vpop.f32.mrb[0].mxu0
        %v2690 = vadd.f32 %v765, %v2689
        %v2691 = vpop.f32.mrb[0].mxu0
        %v2692 = vpop.f32.mrb[0].mxu0
        %v2693 = vadd.f32 %v765, %v2692
        %v2694 = vpop.f32.mrb[0].mxu0
        %2695 = vmatprep.mubr.bf16.mxu0 0
        %2696 = vmatmul.mubr.bf16.gmra.mrb[0].mxu0 %v2642
        %v2697 = vpop.f32.mrb[0].mxu0
        %v2698 = vadd.f32 %v765, %v2697
        %v2699 = vpop.f32.mrb[0].mxu0
        %v2700 = vpop.f32.mrb[0].mxu0
        %v2701 = vadd.f32 %v765, %v2700
        %v2702 = vpop.f32.mrb[0].mxu0
        %2703 = vmatprep.mubr.bf16.mxu0 0
        %2704 = vmatmul.mubr.bf16.gmra.mrb[0].mxu0 %v2645
        %v2705 = vpop.f32.mrb[0].mxu0
        %v2706 = vadd.f32 %v765, %v2705
        %v2707 = vpop.f32.mrb[0].mxu0
        %v2708 = vpop.f32.mrb[0].mxu0
        %v2709 = vpop.f32.mrb[0].mxu0
        %2710 = vdwg.mxu0
        %v2711 = vmax.f32 %v2682, 0.0
        %v2712 = vmax.f32 %v2685, 0.0
        %v2713 = vmax.f32 %v2690, 0.0
        %v2714 = vmax.f32 %v2693, 0.0
        %v2715 = vmax.f32 %v2698, 0.0
        %v2716 = vmax.f32 %v2701, 0.0
        %v2717 = vmax.f32 %v2706, 0.0
        %v2718 = vpack.c.bf16 %v2712, %v2711
        %v2719 = vpack.c.bf16 %v2714, %v2713
        %v2720 = vpack.c.bf16 %v2716, %v2715
        %v2721 = vpack.c.bf16 %v2717, %v2717
        %v2722 = vld [vmem:[#allocation4] sm:$0xff]
        %v2723 = vld [vmem:[#allocation4 + $0x8] sm:$0xff]
        %v2724 = vld [vmem:[#allocation4 + $0x10] sm:$0xff]
        %v2725 = vld [vmem:[#allocation4 + $0x18] sm:$0xff]
        %v2726 = vld [vmem:[#allocation4 + $0x20] sm:$0xff]
        %v2727 = vld [vmem:[#allocation4 + $0x28] sm:$0xff]
        %v2728 = vld [vmem:[#allocation4 + $0x30] sm:$0xff]
        %s2729 = scalar_lea.vmem %s11, 96
        %v2730 = vld [vmem:[%s2729] sm:$0xf]
        %v2731 = vld [vmem:[%s2729 + $0x4] sm:$0xf]
        %v2732 = vld [vmem:[%s2729 + $0x8] sm:$0xf]
        %v2733 = vld [vmem:[%s2729 + $0xc] sm:$0xf]
        %v2734 = vld [vmem:[%s2729 + $0x10] sm:$0xf]
        %v2735 = vld [vmem:[%s2729 + $0x14] sm:$0xf]
        %v2736 = vld [vmem:[%s2729 + $0x18] sm:$0xf]
        %v2737 = vld [vmem:[%s2729 + $0x1c] sm:$0xf]
        %v2738 = vld [vmem:[%s2729 + $0x20] sm:$0xf]
        %v2739 = vld [vmem:[%s2729 + $0x24] sm:$0xf]
        %v2740 = vld [vmem:[%s2729 + $0x28] sm:$0xf]
        %v2741 = vld [vmem:[%s2729 + $0x2c] sm:$0xf]
        %v2754 = vunpack.c.l.b16 %v2730
        %v2755 = vunpack.c.l.b16 %v2731
        %v2756 = vunpack.c.l.b16 %v2732
        %v2757 = vunpack.c.l.b16 %v2733
        %v2758 = vunpack.c.l.b16 %v2734
        %v2759 = vunpack.c.l.b16 %v2735
        %v2760 = vunpack.c.l.b16 %v2736
        %v2761 = vunpack.c.l.b16 %v2737
        %v2762 = vunpack.c.l.b16 %v2738
        %v2763 = vunpack.c.l.b16 %v2739
        %v2764 = vunpack.c.l.b16 %v2740
        %v2765 = vunpack.c.l.b16 %v2741
        %v2766 = vpack.c.b16 %v2755, %v2754
        %v2767 = vpack.c.b16 %v2757, %v2756
        %v2768 = vpack.c.b16 %v2759, %v2758
        %v2769 = vpack.c.b16 %v2761, %v2760
        %v2770 = vpack.c.b16 %v2763, %v2762
        %v2771 = vpack.c.b16 %v2765, %v2764
        %v2779 = vsel %vm782, %v2718, 0
        %v2782 = vsel %vm782, %v2719, 0
        %v2785 = vsel %vm782, %v2720, 0
        %v2788 = vsel %vm782, %v2721, 0
        %2790 = vmatprep.subr.bf16.mxu0 0
        %2791 = vmatpush1.bf16.msra.mxu0 %v2766
        %2792 = vmatprep.subr.bf16.mxu0 0
        %2793 = vmatpush1.bf16.msra.mxu0 %v2767
        %2794 = vmatprep.subr.bf16.mxu0 0
        %2795 = vmatpush1.bf16.msra.mxu0 %v2768
        %2796 = vmatprep.subr.bf16.mxu0 0
        %2797 = vmatpush1.bf16.msra.mxu0 %v2769
        %2798 = vmatprep.subr.bf16.mxu0 0
        %2799 = vmatpush1.bf16.msra.mxu0 %v2770
        %2800 = vmatprep.subr.bf16.mxu0 0
        %2801 = vmatpush1.bf16.msra.mxu0 %v2771
        %2802 = vmatprep.subr.bf16.mxu0 0
        %2803 = vmatpush1.bf16.msra.mxu0 0
        %2804 = vmatprep.subr.bf16.mxu0 0
        %2805 = vmatpush1.bf16.msra.mxu0 0
        %2806 = vmatprep.subr.bf16.mxu0 0
        %2807 = vmatpush1.bf16.msra.mxu0 0
        %2808 = vmatprep.subr.bf16.mxu0 0
        %2809 = vmatpush1.bf16.msra.mxu0 0
        %2810 = vmatprep.subr.bf16.mxu0 0
        %2811 = vmatpush1.bf16.msra.mxu0 0
        %2812 = vmatprep.subr.bf16.mxu0 0
        %2813 = vmatpush1.bf16.msra.mxu0 0
        %2814 = vmatprep.subr.bf16.mxu0 0
        %2815 = vmatpush1.bf16.msra.mxu0 0
        %2816 = vmatprep.subr.bf16.mxu0 0
        %2817 = vmatpush1.bf16.msra.mxu0 0
        %2818 = vmatprep.subr.bf16.mxu0 0
        %2819 = vmatpush1.bf16.msra.mxu0 0
        %2820 = vmatprep.subr.bf16.mxu0 0
        %2821 = vmatpush1.bf16.msra.mxu0 0
        %2822 = vmatprep.mubr.bf16.mxu0 0
        %2823 = vmatmul.mubr.bf16.gmra.mrb[0].mxu0 %v2779
        %v2824 = vpop.f32.mrb[0].mxu0
        %v2825 = vadd.f32 0.0, %v2824
        %v2826 = vpop.f32.mrb[0].mxu0
        %v2827 = vpop.f32.mrb[0].mxu0
        %v2828 = vadd.f32 0.0, %v2827
        %v2829 = vpop.f32.mrb[0].mxu0
        %2830 = vmatprep.mubr.bf16.mxu0 0
        %2831 = vmatmul.mubr.bf16.gmra.mrb[0].mxu0 %v2782
        %v2832 = vpop.f32.mrb[0].mxu0
        %v2833 = vadd.f32 0.0, %v2832
        %v2834 = vpop.f32.mrb[0].mxu0
        %v2835 = vpop.f32.mrb[0].mxu0
        %v2836 = vadd.f32 0.0, %v2835
        %v2837 = vpop.f32.mrb[0].mxu0
        %2838 = vmatprep.mubr.bf16.mxu0 0
        %2839 = vmatmul.mubr.bf16.gmra.mrb[0].mxu0 %v2785
        %v2840 = vpop.f32.mrb[0].mxu0
        %v2841 = vadd.f32 0.0, %v2840
        %v2842 = vpop.f32.mrb[0].mxu0
        %v2843 = vpop.f32.mrb[0].mxu0
        %v2844 = vadd.f32 0.0, %v2843
        %v2845 = vpop.f32.mrb[0].mxu0
        %2846 = vmatprep.mubr.bf16.mxu0 0
        %2847 = vmatmul.mubr.bf16.gmra.mrb[0].mxu0 %v2788
        %v2848 = vpop.f32.mrb[0].mxu0
        %v2849 = vadd.f32 0.0, %v2848
        %v2850 = vpop.f32.mrb[0].mxu0
        %v2851 = vpop.f32.mrb[0].mxu0
        %v2852 = vpop.f32.mrb[0].mxu0
        %2853 = vdwg.mxu0
        %v2854 = vadd.f32 %v2722, %v2825
        %v2855 = vadd.f32 %v2723, %v2828
        %v2856 = vadd.f32 %v2724, %v2833
        %v2857 = vadd.f32 %v2725, %v2836
        %v2858 = vadd.f32 %v2726, %v2841
        %v2859 = vadd.f32 %v2727, %v2844
        %v2860 = vadd.f32 %v2728, %v2849
        %2861 = vst.msk [vmem:[#allocation4] sm:$0xff] %vm782, %v2854
        %2862 = vst.msk [vmem:[#allocation4 + $0x8] sm:$0xff] %vm782, %v2855
        %2863 = vst.msk [vmem:[#allocation4 + $0x10] sm:$0xff] %vm782, %v2856
        %2864 = vst.msk [vmem:[#allocation4 + $0x18] sm:$0xff] %vm782, %v2857
        %2865 = vst.msk [vmem:[#allocation4 + $0x20] sm:$0xff] %vm782, %v2858
        %2866 = vst.msk [vmem:[#allocation4 + $0x28] sm:$0xff] %vm782, %v2859
        %2867 = vst.msk [vmem:[#allocation4 + $0x30] sm:$0xff] %vm782, %v2860
        %s2868 = scalar_lea.vmem %s685, 84 [#allocation5]
        %v2869 = vld [vmem:[%s2868] sm:$0xf]
        %v2870 = vld [vmem:[%s2868 + $0x4] sm:$0xf]
        %v2871 = vld [vmem:[%s2868 + $0x8] sm:$0xf]
        %v2872 = vld [vmem:[%s2868 + $0xc] sm:$0xf]
        %v2873 = vld [vmem:[%s2868 + $0x10] sm:$0xf]
        %v2874 = vld [vmem:[%s2868 + $0x14] sm:$0xf]
        %v2875 = vld [vmem:[%s2868 + $0x18] sm:$0xf]
        %v2876 = vld [vmem:[#allocation2] sm:$0xff]
        %v2877 = vld [vmem:[#allocation2 + $0x8] sm:$0xff]
        %v2878 = vld [vmem:[#allocation2 + $0x10] sm:$0xff]
        %v2879 = vld [vmem:[#allocation2 + $0x18] sm:$0xff]
        %v2880 = vld [vmem:[#allocation2 + $0x20] sm:$0xff]
        %v2881 = vld [vmem:[#allocation2 + $0x28] sm:$0xff]
        %v2882 = vld [vmem:[#allocation2 + $0x30] sm:$0xff]
        %v2883 = vld [vmem:[#allocation2 + $0x38] sm:$0xff]
        %v2884 = vld [vmem:[#allocation2 + $0x40] sm:$0xff]
        %v2885 = vld [vmem:[#allocation2 + $0x48] sm:$0xff]
        %v2886 = vld [vmem:[#allocation2 + $0x50] sm:$0xff]
        %v2887 = vld [vmem:[#allocation2 + $0x58] sm:$0xff]
        %v2888 = vld [vmem:[#allocation2 + $0x60] sm:$0xff]
        %v2889 = vld [vmem:[#allocation2 + $0x68] sm:$0xff]
        %s2890 = scalar_lea.vmem %s1, 12
        %v2891 = vld [vmem:[%s2890] sm:$0xf]
        %v2899 = vunpack.c.l.b16 %v2869
        %v2900 = vunpack.c.l.b16 %v2870
        %v2901 = vunpack.c.l.b16 %v2871
        %v2902 = vunpack.c.l.b16 %v2872
        %v2903 = vunpack.c.l.b16 %v2873
        %v2904 = vunpack.c.l.b16 %v2874
        %v2905 = vunpack.c.l.b16 %v2875
        %v2906 = vpack.c.b16 %v2900, %v2899
        %v2907 = vpack.c.b16 %v2902, %v2901
        %v2908 = vpack.c.b16 %v2904, %v2903
        %v2909 = vpack.c.b16 %v2905, %v2905
        %v2912 = vunpack.c.l.s4 1983009808
        %v2913 = vunpack.c.0.s8 %v2912
        %v2914 = vlaneseq
        %v2915 = vshrl.u32 %v2914, 7
        %v2916 = vsub.s32 %v2913, %v2915
        %v2917 = vrot.slane %v2891, %v2916
        %v2918 = vcombine.high %v2917, %v2917
        %v2920 = vsel %vm846, %v2906, 0
        %v2923 = vsel %vm846, %v2907, 0
        %v2926 = vsel %vm846, %v2908, 0
        %v2929 = vsel %vm846, %v2909, 0
        %v2932 = vsel %vm859, %v2917, 0
        %v2935 = vsel %vm859, %v2918, 0
        %2937 = vmatprep.subr.bf16.mxu0 %v2935
        %2938 = vmatpush1.bf16.msra.mxu0 %v2932
        %2939 = vmatprep.subr.bf16.mxu0 0
        %2940 = vmatpush1.bf16.msra.mxu0 0
        %2941 = vmatprep.subr.bf16.mxu0 0
        %2942 = vmatpush1.bf16.msra.mxu0 0
        %2943 = vmatprep.subr.bf16.mxu0 0
        %2944 = vmatpush1.bf16.msra.mxu0 0
        %2945 = vmatprep.subr.bf16.mxu0 0
        %2946 = vmatpush1.bf16.msra.mxu0 0
        %2947 = vmatprep.subr.bf16.mxu0 0
        %2948 = vmatpush1.bf16.msra.mxu0 0
        %2949 = vmatprep.subr.bf16.mxu0 0
        %2950 = vmatpush1.bf16.msra.mxu0 0
        %2951 = vmatprep.subr.bf16.mxu0 0
        %2952 = vmatpush1.bf16.msra.mxu0 0
        %2953 = vmatprep.subr.bf16.mxu0 0
        %2954 = vmatpush1.bf16.msra.mxu0 0
        %2955 = vmatprep.subr.bf16.mxu0 0
        %2956 = vmatpush1.bf16.msra.mxu0 0
        %2957 = vmatprep.subr.bf16.mxu0 0
        %2958 = vmatpush1.bf16.msra.mxu0 0
        %2959 = vmatprep.subr.bf16.mxu0 0
        %2960 = vmatpush1.bf16.msra.mxu0 0
        %2961 = vmatprep.subr.bf16.mxu0 0
        %2962 = vmatpush1.bf16.msra.mxu0 0
        %2963 = vmatprep.subr.bf16.mxu0 0
        %2964 = vmatpush1.bf16.msra.mxu0 0
        %2965 = vmatprep.subr.bf16.mxu0 0
        %2966 = vmatpush1.bf16.msra.mxu0 0
        %2967 = vmatprep.subr.bf16.mxu0 0
        %2968 = vmatpush1.bf16.msra.mxu0 0
        %2969 = vmatprep.mubr.bf16.mxu0 0
        %2970 = vmatmul.mubr.bf16.gmra.mrb[0].mxu0 %v2920
        %v2971 = vpop.f32.mrb[0].mxu0
        %v2972 = vadd.f32 0.0, %v2971
        %v2973 = vpop.f32.mrb[0].mxu0
        %v2974 = vadd.f32 0.0, %v2973
        %v2975 = vpop.f32.mrb[0].mxu0
        %v2976 = vadd.f32 0.0, %v2975
        %v2977 = vpop.f32.mrb[0].mxu0
        %v2978 = vadd.f32 0.0, %v2977
        %2979 = vmatprep.mubr.bf16.mxu0 0
        %2980 = vmatmul.mubr.bf16.gmra.mrb[0].mxu0 %v2923
        %v2981 = vpop.f32.mrb[0].mxu0
        %v2982 = vadd.f32 0.0, %v2981
        %v2983 = vpop.f32.mrb[0].mxu0
        %v2984 = vadd.f32 0.0, %v2983
        %v2985 = vpop.f32.mrb[0].mxu0
        %v2986 = vadd.f32 0.0, %v2985
        %v2987 = vpop.f32.mrb[0].mxu0
        %v2988 = vadd.f32 0.0, %v2987
        %2989 = vmatprep.mubr.bf16.mxu0 0
        %2990 = vmatmul.mubr.bf16.gmra.mrb[0].mxu0 %v2926
        %v2991 = vpop.f32.mrb[0].mxu0
        %v2992 = vadd.f32 0.0, %v2991
        %v2993 = vpop.f32.mrb[0].mxu0
        %v2994 = vadd.f32 0.0, %v2993
        %v2995 = vpop.f32.mrb[0].mxu0
        %v2996 = vadd.f32 0.0, %v2995
        %v2997 = vpop.f32.mrb[0].mxu0
        %v2998 = vadd.f32 0.0, %v2997
        %2999 = vmatprep.mubr.bf16.mxu0 0
        %3000 = vmatmul.mubr.bf16.gmra.mrb[0].mxu0 %v2929
        %v3001 = vpop.f32.mrb[0].mxu0
        %v3002 = vadd.f32 0.0, %v3001
        %v3003 = vpop.f32.mrb[0].mxu0
        %v3004 = vadd.f32 0.0, %v3003
        %v3005 = vpop.f32.mrb[0].mxu0
        %v3006 = vpop.f32.mrb[0].mxu0
        %3007 = vdwg.mxu0
        %v3008 = vadd.f32 %v2876, %v2972
        %v3009 = vadd.f32 %v2877, %v2974
        %v3010 = vadd.f32 %v2878, %v2976
        %v3011 = vadd.f32 %v2879, %v2978
        %v3012 = vadd.f32 %v2880, %v2982
        %v3013 = vadd.f32 %v2881, %v2984
        %v3014 = vadd.f32 %v2882, %v2986
        %v3015 = vadd.f32 %v2883, %v2988
        %v3016 = vadd.f32 %v2884, %v2992
        %v3017 = vadd.f32 %v2885, %v2994
        %v3018 = vadd.f32 %v2886, %v2996
        %v3019 = vadd.f32 %v2887, %v2998
        %v3020 = vadd.f32 %v2888, %v3002
        %v3021 = vadd.f32 %v2889, %v3004
        %3022 = vst [vmem:[#allocation2] sm:$0xff] %v3008
        %3023 = vst.msk [vmem:[#allocation2 + $0x8] sm:$0xff] %vm768, %v3009
        %3024 = vst [vmem:[#allocation2 + $0x10] sm:$0xff] %v3010
        %3025 = vst.msk [vmem:[#allocation2 + $0x18] sm:$0xff] %vm768, %v3011
        %3026 = vst [vmem:[#allocation2 + $0x20] sm:$0xff] %v3012
        %3027 = vst.msk [vmem:[#allocation2 + $0x28] sm:$0xff] %vm768, %v3013
        %3028 = vst [vmem:[#allocation2 + $0x30] sm:$0xff] %v3014
        %3029 = vst.msk [vmem:[#allocation2 + $0x38] sm:$0xff] %vm768, %v3015
        %3030 = vst [vmem:[#allocation2 + $0x40] sm:$0xff] %v3016
        %3031 = vst.msk [vmem:[#allocation2 + $0x48] sm:$0xff] %vm768, %v3017
        %3032 = vst [vmem:[#allocation2 + $0x50] sm:$0xff] %v3018
        %3033 = vst.msk [vmem:[#allocation2 + $0x58] sm:$0xff] %vm768, %v3019
        %3034 = vst [vmem:[#allocation2 + $0x60] sm:$0xff] %v3020
        %3035 = vst.msk [vmem:[#allocation2 + $0x68] sm:$0xff] %vm768, %v3021
        %3036 = vmatprep.subr.bf16.mxu0 0
        %3037 = vmatpush1.bf16.msra.mxu0 %v966
        %3038 = vmatprep.subr.bf16.mxu0 0
        %3039 = vmatpush1.bf16.msra.mxu0 0
        %3040 = vmatprep.subr.bf16.mxu0 0
        %3041 = vmatpush1.bf16.msra.mxu0 0
        %3042 = vmatprep.subr.bf16.mxu0 0
        %3043 = vmatpush1.bf16.msra.mxu0 0
        %3044 = vmatprep.subr.bf16.mxu0 0
        %3045 = vmatpush1.bf16.msra.mxu0 0
        %3046 = vmatprep.subr.bf16.mxu0 0
        %3047 = vmatpush1.bf16.msra.mxu0 0
        %3048 = vmatprep.subr.bf16.mxu0 0
        %3049 = vmatpush1.bf16.msra.mxu0 0
        %3050 = vmatprep.subr.bf16.mxu0 0
        %3051 = vmatpush1.bf16.msra.mxu0 0
        %3052 = vmatprep.subr.bf16.mxu0 0
        %3053 = vmatpush1.bf16.msra.mxu0 0
        %3054 = vmatprep.subr.bf16.mxu0 0
        %3055 = vmatpush1.bf16.msra.mxu0 0
        %3056 = vmatprep.subr.bf16.mxu0 0
        %3057 = vmatpush1.bf16.msra.mxu0 0
        %3058 = vmatprep.subr.bf16.mxu0 0
        %3059 = vmatpush1.bf16.msra.mxu0 0
        %3060 = vmatprep.subr.bf16.mxu0 0
        %3061 = vmatpush1.bf16.msra.mxu0 0
        %3062 = vmatprep.subr.bf16.mxu0 0
        %3063 = vmatpush1.bf16.msra.mxu0 0
        %3064 = vmatprep.subr.bf16.mxu0 0
        %3065 = vmatpush1.bf16.msra.mxu0 0
        %3066 = vmatprep.subr.bf16.mxu0 0
        %3067 = vmatpush1.bf16.msra.mxu0 0
        %3068 = vmatprep.mubr.bf16.mxu0 0
        %3069 = vmatmul.mubr.bf16.gmra.mrb[0].mxu0 %v2920
        %v3070 = vpop.f32.mrb[0].mxu0
        %v3071 = vadd.f32 %v751, %v3070
        %v3072 = vpop.f32.mrb[0].mxu0
        %v3073 = vpop.f32.mrb[0].mxu0
        %v3074 = vadd.f32 %v751, %v3073
        %v3075 = vpop.f32.mrb[0].mxu0
        %3076 = vmatprep.mubr.bf16.mxu0 0
        %3077 = vmatmul.mubr.bf16.gmra.mrb[0].mxu0 %v2923
        %v3078 = vpop.f32.mrb[0].mxu0
        %v3079 = vadd.f32 %v751, %v3078
        %v3080 = vpop.f32.mrb[0].mxu0
        %v3081 = vpop.f32.mrb[0].mxu0
        %v3082 = vadd.f32 %v751, %v3081
        %v3083 = vpop.f32.mrb[0].mxu0
        %3084 = vmatprep.mubr.bf16.mxu0 0
        %3085 = vmatmul.mubr.bf16.gmra.mrb[0].mxu0 %v2926
        %v3086 = vpop.f32.mrb[0].mxu0
        %v3087 = vadd.f32 %v751, %v3086
        %v3088 = vpop.f32.mrb[0].mxu0
        %v3089 = vpop.f32.mrb[0].mxu0
        %v3090 = vadd.f32 %v751, %v3089
        %v3091 = vpop.f32.mrb[0].mxu0
        %3092 = vmatprep.mubr.bf16.mxu0 0
        %3093 = vmatmul.mubr.bf16.gmra.mrb[0].mxu0 %v2929
        %v3094 = vpop.f32.mrb[0].mxu0
        %v3095 = vadd.f32 %v751, %v3094
        %v3096 = vpop.f32.mrb[0].mxu0
        %v3097 = vpop.f32.mrb[0].mxu0
        %v3098 = vpop.f32.mrb[0].mxu0
        %3099 = vdwg.mxu0
        %v3100 = vmax.f32 %v3071, 0.0
        %v3101 = vmax.f32 %v3074, 0.0
        %v3102 = vmax.f32 %v3079, 0.0
        %v3103 = vmax.f32 %v3082, 0.0
        %v3104 = vmax.f32 %v3087, 0.0
        %v3105 = vmax.f32 %v3090, 0.0
        %v3106 = vmax.f32 %v3095, 0.0
        %v3107 = vpack.c.bf16 %v3101, %v3100
        %v3108 = vpack.c.bf16 %v3103, %v3102
        %v3109 = vpack.c.bf16 %v3105, %v3104
        %v3110 = vpack.c.bf16 %v3106, %v3106
        %v3111 = vld [vmem:[#allocation3] sm:$0xff]
        %v3112 = vld [vmem:[#allocation3 + $0x8] sm:$0xff]
        %v3113 = vld [vmem:[#allocation3 + $0x10] sm:$0xff]
        %v3114 = vld [vmem:[#allocation3 + $0x18] sm:$0xff]
        %v3115 = vld [vmem:[#allocation3 + $0x20] sm:$0xff]
        %v3116 = vld [vmem:[#allocation3 + $0x28] sm:$0xff]
        %v3117 = vld [vmem:[#allocation3 + $0x30] sm:$0xff]
        %s3118 = scalar_lea.vmem %s5, 96
        %v3119 = vld [vmem:[%s3118] sm:$0xf]
        %v3120 = vld [vmem:[%s3118 + $0x4] sm:$0xf]
        %v3121 = vld [vmem:[%s3118 + $0x8] sm:$0xf]
        %v3122 = vld [vmem:[%s3118 + $0xc] sm:$0xf]
        %v3123 = vld [vmem:[%s3118 + $0x10] sm:$0xf]
        %v3124 = vld [vmem:[%s3118 + $0x14] sm:$0xf]
        %v3125 = vld [vmem:[%s3118 + $0x18] sm:$0xf]
        %v3126 = vld [vmem:[%s3118 + $0x1c] sm:$0xf]
        %v3135 = vunpack.c.l.b16 %v3119
        %v3136 = vunpack.c.l.b16 %v3120
        %v3137 = vunpack.c.l.b16 %v3121
        %v3138 = vunpack.c.l.b16 %v3122
        %v3139 = vunpack.c.l.b16 %v3123
        %v3140 = vunpack.c.l.b16 %v3124
        %v3141 = vunpack.c.l.b16 %v3125
        %v3142 = vunpack.c.l.b16 %v3126
        %v3143 = vpack.c.b16 %v3136, %v3135
        %v3144 = vpack.c.b16 %v3138, %v3137
        %v3145 = vpack.c.b16 %v3140, %v3139
        %v3146 = vpack.c.b16 %v3142, %v3141
        %v3152 = vsel %vm768, %v3107, 0
        %v3155 = vsel %vm768, %v3108, 0
        %v3158 = vsel %vm768, %v3109, 0
        %v3161 = vsel %vm768, %v3110, 0
        %3163 = vmatprep.subr.bf16.mxu0 0
        %3164 = vmatpush1.bf16.msra.mxu0 %v3143
        %3165 = vmatprep.subr.bf16.mxu0 0
        %3166 = vmatpush1.bf16.msra.mxu0 %v3144
        %3167 = vmatprep.subr.bf16.mxu0 0
        %3168 = vmatpush1.bf16.msra.mxu0 %v3145
        %3169 = vmatprep.subr.bf16.mxu0 0
        %3170 = vmatpush1.bf16.msra.mxu0 %v3146
        %3171 = vmatprep.subr.bf16.mxu0 0
        %3172 = vmatpush1.bf16.msra.mxu0 0
        %3173 = vmatprep.subr.bf16.mxu0 0
        %3174 = vmatpush1.bf16.msra.mxu0 0
        %3175 = vmatprep.subr.bf16.mxu0 0
        %3176 = vmatpush1.bf16.msra.mxu0 0
        %3177 = vmatprep.subr.bf16.mxu0 0
        %3178 = vmatpush1.bf16.msra.mxu0 0
        %3179 = vmatprep.subr.bf16.mxu0 0
        %3180 = vmatpush1.bf16.msra.mxu0 0
        %3181 = vmatprep.subr.bf16.mxu0 0
        %3182 = vmatpush1.bf16.msra.mxu0 0
        %3183 = vmatprep.subr.bf16.mxu0 0
        %3184 = vmatpush1.bf16.msra.mxu0 0
        %3185 = vmatprep.subr.bf16.mxu0 0
        %3186 = vmatpush1.bf16.msra.mxu0 0
        %3187 = vmatprep.subr.bf16.mxu0 0
        %3188 = vmatpush1.bf16.msra.mxu0 0
        %3189 = vmatprep.subr.bf16.mxu0 0
        %3190 = vmatpush1.bf16.msra.mxu0 0
        %3191 = vmatprep.subr.bf16.mxu0 0
        %3192 = vmatpush1.bf16.msra.mxu0 0
        %3193 = vmatprep.subr.bf16.mxu0 0
        %3194 = vmatpush1.bf16.msra.mxu0 0
        %3195 = vmatprep.mubr.bf16.mxu0 0
        %3196 = vmatmul.mubr.bf16.gmra.mrb[0].mxu0 %v3152
        %v3197 = vpop.f32.mrb[0].mxu0
        %v3198 = vadd.f32 0.0, %v3197
        %v3199 = vpop.f32.mrb[0].mxu0
        %v3200 = vpop.f32.mrb[0].mxu0
        %v3201 = vadd.f32 0.0, %v3200
        %v3202 = vpop.f32.mrb[0].mxu0
        %3203 = vmatprep.mubr.bf16.mxu0 0
        %3204 = vmatmul.mubr.bf16.gmra.mrb[0].mxu0 %v3155
        %v3205 = vpop.f32.mrb[0].mxu0
        %v3206 = vadd.f32 0.0, %v3205
        %v3207 = vpop.f32.mrb[0].mxu0
        %v3208 = vpop.f32.mrb[0].mxu0
        %v3209 = vadd.f32 0.0, %v3208
        %v3210 = vpop.f32.mrb[0].mxu0
        %3211 = vmatprep.mubr.bf16.mxu0 0
        %3212 = vmatmul.mubr.bf16.gmra.mrb[0].mxu0 %v3158
        %v3213 = vpop.f32.mrb[0].mxu0
        %v3214 = vadd.f32 0.0, %v3213
        %v3215 = vpop.f32.mrb[0].mxu0
        %v3216 = vpop.f32.mrb[0].mxu0
        %v3217 = vadd.f32 0.0, %v3216
        %v3218 = vpop.f32.mrb[0].mxu0
        %3219 = vmatprep.mubr.bf16.mxu0 0
        %3220 = vmatmul.mubr.bf16.gmra.mrb[0].mxu0 %v3161
        %v3221 = vpop.f32.mrb[0].mxu0
        %v3222 = vadd.f32 0.0, %v3221
        %v3223 = vpop.f32.mrb[0].mxu0
        %v3224 = vpop.f32.mrb[0].mxu0
        %v3225 = vpop.f32.mrb[0].mxu0
        %3226 = vdwg.mxu0
        %v3227 = vadd.f32 %v3111, %v3198
        %v3228 = vadd.f32 %v3112, %v3201
        %v3229 = vadd.f32 %v3113, %v3206
        %v3230 = vadd.f32 %v3114, %v3209
        %v3231 = vadd.f32 %v3115, %v3214
        %v3232 = vadd.f32 %v3116, %v3217
        %v3233 = vadd.f32 %v3117, %v3222
        %3234 = vst.msk [vmem:[#allocation3] sm:$0xff] %vm782, %v3227
        %3235 = vst.msk [vmem:[#allocation3 + $0x8] sm:$0xff] %vm782, %v3228
        %3236 = vst.msk [vmem:[#allocation3 + $0x10] sm:$0xff] %vm782, %v3229
        %3237 = vst.msk [vmem:[#allocation3 + $0x18] sm:$0xff] %vm782, %v3230
        %3238 = vst.msk [vmem:[#allocation3 + $0x20] sm:$0xff] %vm782, %v3231
        %3239 = vst.msk [vmem:[#allocation3 + $0x28] sm:$0xff] %vm782, %v3232
        %3240 = vst.msk [vmem:[#allocation3 + $0x30] sm:$0xff] %vm782, %v3233
        %3241 = vmatprep.subr.bf16.mxu0 0
        %3242 = vmatpush1.bf16.msra.mxu0 %v1173
        %3243 = vmatprep.subr.bf16.mxu0 0
        %3244 = vmatpush1.bf16.msra.mxu0 0
        %3245 = vmatprep.subr.bf16.mxu0 0
        %3246 = vmatpush1.bf16.msra.mxu0 0
        %3247 = vmatprep.subr.bf16.mxu0 0
        %3248 = vmatpush1.bf16.msra.mxu0 0
        %3249 = vmatprep.subr.bf16.mxu0 0
        %3250 = vmatpush1.bf16.msra.mxu0 0
        %3251 = vmatprep.subr.bf16.mxu0 0
        %3252 = vmatpush1.bf16.msra.mxu0 0
        %3253 = vmatprep.subr.bf16.mxu0 0
        %3254 = vmatpush1.bf16.msra.mxu0 0
        %3255 = vmatprep.subr.bf16.mxu0 0
        %3256 = vmatpush1.bf16.msra.mxu0 0
        %3257 = vmatprep.subr.bf16.mxu0 0
        %3258 = vmatpush1.bf16.msra.mxu0 0
        %3259 = vmatprep.subr.bf16.mxu0 0
        %3260 = vmatpush1.bf16.msra.mxu0 0
        %3261 = vmatprep.subr.bf16.mxu0 0
        %3262 = vmatpush1.bf16.msra.mxu0 0
        %3263 = vmatprep.subr.bf16.mxu0 0
        %3264 = vmatpush1.bf16.msra.mxu0 0
        %3265 = vmatprep.subr.bf16.mxu0 0
        %3266 = vmatpush1.bf16.msra.mxu0 0
        %3267 = vmatprep.subr.bf16.mxu0 0
        %3268 = vmatpush1.bf16.msra.mxu0 0
        %3269 = vmatprep.subr.bf16.mxu0 0
        %3270 = vmatpush1.bf16.msra.mxu0 0
        %3271 = vmatprep.subr.bf16.mxu0 0
        %3272 = vmatpush1.bf16.msra.mxu0 0
        %3273 = vmatprep.mubr.bf16.mxu0 0
        %3274 = vmatmul.mubr.bf16.gmra.mrb[0].mxu0 %v2920
        %v3275 = vpop.f32.mrb[0].mxu0
        %v3276 = vadd.f32 %v758, %v3275
        %v3277 = vpop.f32.mrb[0].mxu0
        %v3278 = vpop.f32.mrb[0].mxu0
        %v3279 = vadd.f32 %v758, %v3278
        %v3280 = vpop.f32.mrb[0].mxu0
        %3281 = vmatprep.mubr.bf16.mxu0 0
        %3282 = vmatmul.mubr.bf16.gmra.mrb[0].mxu0 %v2923
        %v3283 = vpop.f32.mrb[0].mxu0
        %v3284 = vadd.f32 %v758, %v3283
        %v3285 = vpop.f32.mrb[0].mxu0
        %v3286 = vpop.f32.mrb[0].mxu0
        %v3287 = vadd.f32 %v758, %v3286
        %v3288 = vpop.f32.mrb[0].mxu0
        %3289 = vmatprep.mubr.bf16.mxu0 0
        %3290 = vmatmul.mubr.bf16.gmra.mrb[0].mxu0 %v2926
        %v3291 = vpop.f32.mrb[0].mxu0
        %v3292 = vadd.f32 %v758, %v3291
        %v3293 = vpop.f32.mrb[0].mxu0
        %v3294 = vpop.f32.mrb[0].mxu0
        %v3295 = vadd.f32 %v758, %v3294
        %v3296 = vpop.f32.mrb[0].mxu0
        %3297 = vmatprep.mubr.bf16.mxu0 0
        %3298 = vmatmul.mubr.bf16.gmra.mrb[0].mxu0 %v2929
        %v3299 = vpop.f32.mrb[0].mxu0
        %v3300 = vadd.f32 %v758, %v3299
        %v3301 = vpop.f32.mrb[0].mxu0
        %v3302 = vpop.f32.mrb[0].mxu0
        %v3303 = vpop.f32.mrb[0].mxu0
        %3304 = vdwg.mxu0
        %v3305 = vmax.f32 %v3276, 0.0
        %v3306 = vmax.f32 %v3279, 0.0
        %v3307 = vmax.f32 %v3284, 0.0
        %v3308 = vmax.f32 %v3287, 0.0
        %v3309 = vmax.f32 %v3292, 0.0
        %v3310 = vmax.f32 %v3295, 0.0
        %v3311 = vmax.f32 %v3300, 0.0
        %v3312 = vpack.c.bf16 %v3306, %v3305
        %v3313 = vpack.c.bf16 %v3308, %v3307
        %v3314 = vpack.c.bf16 %v3310, %v3309
        %v3315 = vpack.c.bf16 %v3311, %v3311
        %v3317 = vsel %vm768, %v3312, 0
        %v3320 = vsel %vm768, %v3313, 0
        %v3323 = vsel %vm768, %v3314, 0
        %v3326 = vsel %vm768, %v3315, 0
        %3328 = vmatprep.subr.bf16.mxu0 0
        %3329 = vmatpush1.bf16.msra.mxu0 %v1266
        %3330 = vmatprep.subr.bf16.mxu0 0
        %3331 = vmatpush1.bf16.msra.mxu0 %v1267
        %3332 = vmatprep.subr.bf16.mxu0 0
        %3333 = vmatpush1.bf16.msra.mxu0 %v1268
        %3334 = vmatprep.subr.bf16.mxu0 0
        %3335 = vmatpush1.bf16.msra.mxu0 %v1269
        %3336 = vmatprep.subr.bf16.mxu0 0
        %3337 = vmatpush1.bf16.msra.mxu0 0
        %3338 = vmatprep.subr.bf16.mxu0 0
        %3339 = vmatpush1.bf16.msra.mxu0 0
        %3340 = vmatprep.subr.bf16.mxu0 0
        %3341 = vmatpush1.bf16.msra.mxu0 0
        %3342 = vmatprep.subr.bf16.mxu0 0
        %3343 = vmatpush1.bf16.msra.mxu0 0
        %3344 = vmatprep.subr.bf16.mxu0 0
        %3345 = vmatpush1.bf16.msra.mxu0 0
        %3346 = vmatprep.subr.bf16.mxu0 0
        %3347 = vmatpush1.bf16.msra.mxu0 0
        %3348 = vmatprep.subr.bf16.mxu0 0
        %3349 = vmatpush1.bf16.msra.mxu0 0
        %3350 = vmatprep.subr.bf16.mxu0 0
        %3351 = vmatpush1.bf16.msra.mxu0 0
        %3352 = vmatprep.subr.bf16.mxu0 0
        %3353 = vmatpush1.bf16.msra.mxu0 0
        %3354 = vmatprep.subr.bf16.mxu0 0
        %3355 = vmatpush1.bf16.msra.mxu0 0
        %3356 = vmatprep.subr.bf16.mxu0 0
        %3357 = vmatpush1.bf16.msra.mxu0 0
        %3358 = vmatprep.subr.bf16.mxu0 0
        %3359 = vmatpush1.bf16.msra.mxu0 0
        %3360 = vmatprep.mubr.bf16.mxu0 0
        %3361 = vmatmul.mubr.bf16.gmra.mrb[0].mxu0 %v3317
        %v3362 = vpop.f32.mrb[0].mxu0
        %v3363 = vadd.f32 %v765, %v3362
        %v3364 = vpop.f32.mrb[0].mxu0
        %v3365 = vpop.f32.mrb[0].mxu0
        %v3366 = vadd.f32 %v765, %v3365
        %v3367 = vpop.f32.mrb[0].mxu0
        %3368 = vmatprep.mubr.bf16.mxu0 0
        %3369 = vmatmul.mubr.bf16.gmra.mrb[0].mxu0 %v3320
        %v3370 = vpop.f32.mrb[0].mxu0
        %v3371 = vadd.f32 %v765, %v3370
        %v3372 = vpop.f32.mrb[0].mxu0
        %v3373 = vpop.f32.mrb[0].mxu0
        %v3374 = vadd.f32 %v765, %v3373
        %v3375 = vpop.f32.mrb[0].mxu0
        %3376 = vmatprep.mubr.bf16.mxu0 0
        %3377 = vmatmul.mubr.bf16.gmra.mrb[0].mxu0 %v3323
        %v3378 = vpop.f32.mrb[0].mxu0
        %v3379 = vadd.f32 %v765, %v3378
        %v3380 = vpop.f32.mrb[0].mxu0
        %v3381 = vpop.f32.mrb[0].mxu0
        %v3382 = vadd.f32 %v765, %v3381
        %v3383 = vpop.f32.mrb[0].mxu0
        %3384 = vmatprep.mubr.bf16.mxu0 0
        %3385 = vmatmul.mubr.bf16.gmra.mrb[0].mxu0 %v3326
        %v3386 = vpop.f32.mrb[0].mxu0
        %v3387 = vadd.f32 %v765, %v3386
        %v3388 = vpop.f32.mrb[0].mxu0
        %v3389 = vpop.f32.mrb[0].mxu0
        %v3390 = vpop.f32.mrb[0].mxu0
        %3391 = vdwg.mxu0
        %v3392 = vmax.f32 %v3363, 0.0
        %v3393 = vmax.f32 %v3366, 0.0
        %v3394 = vmax.f32 %v3371, 0.0
        %v3395 = vmax.f32 %v3374, 0.0
        %v3396 = vmax.f32 %v3379, 0.0
        %v3397 = vmax.f32 %v3382, 0.0
        %v3398 = vmax.f32 %v3387, 0.0
        %v3399 = vpack.c.bf16 %v3393, %v3392
        %v3400 = vpack.c.bf16 %v3395, %v3394
        %v3401 = vpack.c.bf16 %v3397, %v3396
        %v3402 = vpack.c.bf16 %v3398, %v3398
        %v3403 = vld [vmem:[#allocation4] sm:$0xff]
        %v3404 = vld [vmem:[#allocation4 + $0x8] sm:$0xff]
        %v3405 = vld [vmem:[#allocation4 + $0x10] sm:$0xff]
        %v3406 = vld [vmem:[#allocation4 + $0x18] sm:$0xff]
        %v3407 = vld [vmem:[#allocation4 + $0x20] sm:$0xff]
        %v3408 = vld [vmem:[#allocation4 + $0x28] sm:$0xff]
        %v3409 = vld [vmem:[#allocation4 + $0x30] sm:$0xff]
        %s3410 = scalar_lea.vmem %s11, 144
        %v3411 = vld [vmem:[%s3410] sm:$0xf]
        %v3412 = vld [vmem:[%s3410 + $0x4] sm:$0xf]
        %v3413 = vld [vmem:[%s3410 + $0x8] sm:$0xf]
        %v3414 = vld [vmem:[%s3410 + $0xc] sm:$0xf]
        %v3415 = vld [vmem:[%s3410 + $0x10] sm:$0xf]
        %v3416 = vld [vmem:[%s3410 + $0x14] sm:$0xf]
        %v3417 = vld [vmem:[%s3410 + $0x18] sm:$0xf]
        %v3418 = vld [vmem:[%s3410 + $0x1c] sm:$0xf]
        %v3419 = vld [vmem:[%s3410 + $0x20] sm:$0xf]
        %v3420 = vld [vmem:[%s3410 + $0x24] sm:$0xf]
        %v3421 = vld [vmem:[%s3410 + $0x28] sm:$0xf]
        %v3422 = vld [vmem:[%s3410 + $0x2c] sm:$0xf]
        %v3435 = vunpack.c.l.b16 %v3411
        %v3436 = vunpack.c.l.b16 %v3412
        %v3437 = vunpack.c.l.b16 %v3413
        %v3438 = vunpack.c.l.b16 %v3414
        %v3439 = vunpack.c.l.b16 %v3415
        %v3440 = vunpack.c.l.b16 %v3416
        %v3441 = vunpack.c.l.b16 %v3417
        %v3442 = vunpack.c.l.b16 %v3418
        %v3443 = vunpack.c.l.b16 %v3419
        %v3444 = vunpack.c.l.b16 %v3420
        %v3445 = vunpack.c.l.b16 %v3421
        %v3446 = vunpack.c.l.b16 %v3422
        %v3447 = vpack.c.b16 %v3436, %v3435
        %v3448 = vpack.c.b16 %v3438, %v3437
        %v3449 = vpack.c.b16 %v3440, %v3439
        %v3450 = vpack.c.b16 %v3442, %v3441
        %v3451 = vpack.c.b16 %v3444, %v3443
        %v3452 = vpack.c.b16 %v3446, %v3445
        %v3460 = vsel %vm782, %v3399, 0
        %v3463 = vsel %vm782, %v3400, 0
        %v3466 = vsel %vm782, %v3401, 0
        %v3469 = vsel %vm782, %v3402, 0
        %3471 = vmatprep.subr.bf16.mxu0 0
        %3472 = vmatpush1.bf16.msra.mxu0 %v3447
        %3473 = vmatprep.subr.bf16.mxu0 0
        %3474 = vmatpush1.bf16.msra.mxu0 %v3448
        %3475 = vmatprep.subr.bf16.mxu0 0
        %3476 = vmatpush1.bf16.msra.mxu0 %v3449
        %3477 = vmatprep.subr.bf16.mxu0 0
        %3478 = vmatpush1.bf16.msra.mxu0 %v3450
        %3479 = vmatprep.subr.bf16.mxu0 0
        %3480 = vmatpush1.bf16.msra.mxu0 %v3451
        %3481 = vmatprep.subr.bf16.mxu0 0
        %3482 = vmatpush1.bf16.msra.mxu0 %v3452
        %3483 = vmatprep.subr.bf16.mxu0 0
        %3484 = vmatpush1.bf16.msra.mxu0 0
        %3485 = vmatprep.subr.bf16.mxu0 0
        %3486 = vmatpush1.bf16.msra.mxu0 0
        %3487 = vmatprep.subr.bf16.mxu0 0
        %3488 = vmatpush1.bf16.msra.mxu0 0
        %3489 = vmatprep.subr.bf16.mxu0 0
        %3490 = vmatpush1.bf16.msra.mxu0 0
        %3491 = vmatprep.subr.bf16.mxu0 0
        %3492 = vmatpush1.bf16.msra.mxu0 0
        %3493 = vmatprep.subr.bf16.mxu0 0
        %3494 = vmatpush1.bf16.msra.mxu0 0
        %3495 = vmatprep.subr.bf16.mxu0 0
        %3496 = vmatpush1.bf16.msra.mxu0 0
        %3497 = vmatprep.subr.bf16.mxu0 0
        %3498 = vmatpush1.bf16.msra.mxu0 0
        %3499 = vmatprep.subr.bf16.mxu0 0
        %3500 = vmatpush1.bf16.msra.mxu0 0
        %3501 = vmatprep.subr.bf16.mxu0 0
        %3502 = vmatpush1.bf16.msra.mxu0 0
        %3503 = vmatprep.mubr.bf16.mxu0 0
        %3504 = vmatmul.mubr.bf16.gmra.mrb[0].mxu0 %v3460
        %v3505 = vpop.f32.mrb[0].mxu0
        %v3506 = vadd.f32 0.0, %v3505
        %v3507 = vpop.f32.mrb[0].mxu0
        %v3508 = vpop.f32.mrb[0].mxu0
        %v3509 = vadd.f32 0.0, %v3508
        %v3510 = vpop.f32.mrb[0].mxu0
        %3511 = vmatprep.mubr.bf16.mxu0 0
        %3512 = vmatmul.mubr.bf16.gmra.mrb[0].mxu0 %v3463
        %v3513 = vpop.f32.mrb[0].mxu0
        %v3514 = vadd.f32 0.0, %v3513
        %v3515 = vpop.f32.mrb[0].mxu0
        %v3516 = vpop.f32.mrb[0].mxu0
        %v3517 = vadd.f32 0.0, %v3516
        %v3518 = vpop.f32.mrb[0].mxu0
        %3519 = vmatprep.mubr.bf16.mxu0 0
        %3520 = vmatmul.mubr.bf16.gmra.mrb[0].mxu0 %v3466
        %v3521 = vpop.f32.mrb[0].mxu0
        %v3522 = vadd.f32 0.0, %v3521
        %v3523 = vpop.f32.mrb[0].mxu0
        %v3524 = vpop.f32.mrb[0].mxu0
        %v3525 = vadd.f32 0.0, %v3524
        %v3526 = vpop.f32.mrb[0].mxu0
        %3527 = vmatprep.mubr.bf16.mxu0 0
        %3528 = vmatmul.mubr.bf16.gmra.mrb[0].mxu0 %v3469
        %v3529 = vpop.f32.mrb[0].mxu0
        %v3530 = vadd.f32 0.0, %v3529
        %v3531 = vpop.f32.mrb[0].mxu0
        %v3532 = vpop.f32.mrb[0].mxu0
        %v3533 = vpop.f32.mrb[0].mxu0
        %3534 = vdwg.mxu0
        %v3535 = vadd.f32 %v3403, %v3506
        %v3536 = vadd.f32 %v3404, %v3509
        %v3537 = vadd.f32 %v3405, %v3514
        %v3538 = vadd.f32 %v3406, %v3517
        %v3539 = vadd.f32 %v3407, %v3522
        %v3540 = vadd.f32 %v3408, %v3525
        %v3541 = vadd.f32 %v3409, %v3530
        %3542 = vst.msk [vmem:[#allocation4] sm:$0xff] %vm782, %v3535
        %3543 = vst.msk [vmem:[#allocation4 + $0x8] sm:$0xff] %vm782, %v3536
        %3544 = vst.msk [vmem:[#allocation4 + $0x10] sm:$0xff] %vm782, %v3537
        %3545 = vst.msk [vmem:[#allocation4 + $0x18] sm:$0xff] %vm782, %v3538
        %3546 = vst.msk [vmem:[#allocation4 + $0x20] sm:$0xff] %vm782, %v3539
        %3547 = vst.msk [vmem:[#allocation4 + $0x28] sm:$0xff] %vm782, %v3540
        %3548 = vst.msk [vmem:[#allocation4 + $0x30] sm:$0xff] %vm782, %v3541
        %s3549 = scalar_lea.vmem %s685, 112 [#allocation5]
        %v3550 = vld [vmem:[%s3549] sm:$0xf]
        %v3551 = vld [vmem:[%s3549 + $0x4] sm:$0xf]
        %v3552 = vld [vmem:[%s3549 + $0x8] sm:$0xf]
        %v3553 = vld [vmem:[%s3549 + $0xc] sm:$0xf]
        %v3554 = vld [vmem:[%s3549 + $0x10] sm:$0xf]
        %v3555 = vld [vmem:[%s3549 + $0x14] sm:$0xf]
        %v3556 = vld [vmem:[%s3549 + $0x18] sm:$0xf]
        %v3557 = vld [vmem:[#allocation2] sm:$0xff]
        %v3558 = vld [vmem:[#allocation2 + $0x8] sm:$0xff]
        %v3559 = vld [vmem:[#allocation2 + $0x10] sm:$0xff]
        %v3560 = vld [vmem:[#allocation2 + $0x18] sm:$0xff]
        %v3561 = vld [vmem:[#allocation2 + $0x20] sm:$0xff]
        %v3562 = vld [vmem:[#allocation2 + $0x28] sm:$0xff]
        %v3563 = vld [vmem:[#allocation2 + $0x30] sm:$0xff]
        %v3564 = vld [vmem:[#allocation2 + $0x38] sm:$0xff]
        %v3565 = vld [vmem:[#allocation2 + $0x40] sm:$0xff]
        %v3566 = vld [vmem:[#allocation2 + $0x48] sm:$0xff]
        %v3567 = vld [vmem:[#allocation2 + $0x50] sm:$0xff]
        %v3568 = vld [vmem:[#allocation2 + $0x58] sm:$0xff]
        %v3569 = vld [vmem:[#allocation2 + $0x60] sm:$0xff]
        %v3570 = vld [vmem:[#allocation2 + $0x68] sm:$0xff]
        %s3571 = scalar_lea.vmem %s1, 16
        %v3572 = vld [vmem:[%s3571] sm:$0xf]
        %v3580 = vunpack.c.l.b16 %v3550
        %v3581 = vunpack.c.l.b16 %v3551
        %v3582 = vunpack.c.l.b16 %v3552
        %v3583 = vunpack.c.l.b16 %v3553
        %v3584 = vunpack.c.l.b16 %v3554
        %v3585 = vunpack.c.l.b16 %v3555
        %v3586 = vunpack.c.l.b16 %v3556
        %v3587 = vpack.c.b16 %v3581, %v3580
        %v3588 = vpack.c.b16 %v3583, %v3582
        %v3589 = vpack.c.b16 %v3585, %v3584
        %v3590 = vpack.c.b16 %v3586, %v3586
        %v3593 = vunpack.c.l.s4 1983009808
        %v3594 = vunpack.c.0.s8 %v3593
        %v3595 = vlaneseq
        %v3596 = vshrl.u32 %v3595, 7
        %v3597 = vsub.s32 %v3594, %v3596
        %v3598 = vrot.slane %v3572, %v3597
        %v3599 = vcombine.high %v3598, %v3598
        %v3601 = vsel %vm846, %v3587, 0
        %v3604 = vsel %vm846, %v3588, 0
        %v3607 = vsel %vm846, %v3589, 0
        %v3610 = vsel %vm846, %v3590, 0
        %v3613 = vsel %vm859, %v3598, 0
        %v3616 = vsel %vm859, %v3599, 0
        %3618 = vmatprep.subr.bf16.mxu0 %v3616
        %3619 = vmatpush1.bf16.msra.mxu0 %v3613
        %3620 = vmatprep.subr.bf16.mxu0 0
        %3621 = vmatpush1.bf16.msra.mxu0 0
        %3622 = vmatprep.subr.bf16.mxu0 0
        %3623 = vmatpush1.bf16.msra.mxu0 0
        %3624 = vmatprep.subr.bf16.mxu0 0
        %3625 = vmatpush1.bf16.msra.mxu0 0
        %3626 = vmatprep.subr.bf16.mxu0 0
        %3627 = vmatpush1.bf16.msra.mxu0 0
        %3628 = vmatprep.subr.bf16.mxu0 0
        %3629 = vmatpush1.bf16.msra.mxu0 0
        %3630 = vmatprep.subr.bf16.mxu0 0
        %3631 = vmatpush1.bf16.msra.mxu0 0
        %3632 = vmatprep.subr.bf16.mxu0 0
        %3633 = vmatpush1.bf16.msra.mxu0 0
        %3634 = vmatprep.subr.bf16.mxu0 0
        %3635 = vmatpush1.bf16.msra.mxu0 0
        %3636 = vmatprep.subr.bf16.mxu0 0
        %3637 = vmatpush1.bf16.msra.mxu0 0
        %3638 = vmatprep.subr.bf16.mxu0 0
        %3639 = vmatpush1.bf16.msra.mxu0 0
        %3640 = vmatprep.subr.bf16.mxu0 0
        %3641 = vmatpush1.bf16.msra.mxu0 0
        %3642 = vmatprep.subr.bf16.mxu0 0
        %3643 = vmatpush1.bf16.msra.mxu0 0
        %3644 = vmatprep.subr.bf16.mxu0 0
        %3645 = vmatpush1.bf16.msra.mxu0 0
        %3646 = vmatprep.subr.bf16.mxu0 0
        %3647 = vmatpush1.bf16.msra.mxu0 0
        %3648 = vmatprep.subr.bf16.mxu0 0
        %3649 = vmatpush1.bf16.msra.mxu0 0
        %3650 = vmatprep.mubr.bf16.mxu0 0
        %3651 = vmatmul.mubr.bf16.gmra.mrb[0].mxu0 %v3601
        %v3652 = vpop.f32.mrb[0].mxu0
        %v3653 = vadd.f32 0.0, %v3652
        %v3654 = vpop.f32.mrb[0].mxu0
        %v3655 = vadd.f32 0.0, %v3654
        %v3656 = vpop.f32.mrb[0].mxu0
        %v3657 = vadd.f32 0.0, %v3656
        %v3658 = vpop.f32.mrb[0].mxu0
        %v3659 = vadd.f32 0.0, %v3658
        %3660 = vmatprep.mubr.bf16.mxu0 0
        %3661 = vmatmul.mubr.bf16.gmra.mrb[0].mxu0 %v3604
        %v3662 = vpop.f32.mrb[0].mxu0
        %v3663 = vadd.f32 0.0, %v3662
        %v3664 = vpop.f32.mrb[0].mxu0
        %v3665 = vadd.f32 0.0, %v3664
        %v3666 = vpop.f32.mrb[0].mxu0
        %v3667 = vadd.f32 0.0, %v3666
        %v3668 = vpop.f32.mrb[0].mxu0
        %v3669 = vadd.f32 0.0, %v3668
        %3670 = vmatprep.mubr.bf16.mxu0 0
        %3671 = vmatmul.mubr.bf16.gmra.mrb[0].mxu0 %v3607
        %v3672 = vpop.f32.mrb[0].mxu0
        %v3673 = vadd.f32 0.0, %v3672
        %v3674 = vpop.f32.mrb[0].mxu0
        %v3675 = vadd.f32 0.0, %v3674
        %v3676 = vpop.f32.mrb[0].mxu0
        %v3677 = vadd.f32 0.0, %v3676
        %v3678 = vpop.f32.mrb[0].mxu0
        %v3679 = vadd.f32 0.0, %v3678
        %3680 = vmatprep.mubr.bf16.mxu0 0
        %3681 = vmatmul.mubr.bf16.gmra.mrb[0].mxu0 %v3610
        %v3682 = vpop.f32.mrb[0].mxu0
        %v3683 = vadd.f32 0.0, %v3682
        %v3684 = vpop.f32.mrb[0].mxu0
        %v3685 = vadd.f32 0.0, %v3684
        %v3686 = vpop.f32.mrb[0].mxu0
        %v3687 = vpop.f32.mrb[0].mxu0
        %3688 = vdwg.mxu0
        %v3689 = vadd.f32 %v3557, %v3653
        %v3690 = vadd.f32 %v3558, %v3655
        %v3691 = vadd.f32 %v3559, %v3657
        %v3692 = vadd.f32 %v3560, %v3659
        %v3693 = vadd.f32 %v3561, %v3663
        %v3694 = vadd.f32 %v3562, %v3665
        %v3695 = vadd.f32 %v3563, %v3667
        %v3696 = vadd.f32 %v3564, %v3669
        %v3697 = vadd.f32 %v3565, %v3673
        %v3698 = vadd.f32 %v3566, %v3675
        %v3699 = vadd.f32 %v3567, %v3677
        %v3700 = vadd.f32 %v3568, %v3679
        %v3701 = vadd.f32 %v3569, %v3683
        %v3702 = vadd.f32 %v3570, %v3685
        %3703 = vst [vmem:[#allocation2] sm:$0xff] %v3689
        %3704 = vst.msk [vmem:[#allocation2 + $0x8] sm:$0xff] %vm768, %v3690
        %3705 = vst [vmem:[#allocation2 + $0x10] sm:$0xff] %v3691
        %3706 = vst.msk [vmem:[#allocation2 + $0x18] sm:$0xff] %vm768, %v3692
        %3707 = vst [vmem:[#allocation2 + $0x20] sm:$0xff] %v3693
        %3708 = vst.msk [vmem:[#allocation2 + $0x28] sm:$0xff] %vm768, %v3694
        %3709 = vst [vmem:[#allocation2 + $0x30] sm:$0xff] %v3695
        %3710 = vst.msk [vmem:[#allocation2 + $0x38] sm:$0xff] %vm768, %v3696
        %3711 = vst [vmem:[#allocation2 + $0x40] sm:$0xff] %v3697
        %3712 = vst.msk [vmem:[#allocation2 + $0x48] sm:$0xff] %vm768, %v3698
        %3713 = vst [vmem:[#allocation2 + $0x50] sm:$0xff] %v3699
        %3714 = vst.msk [vmem:[#allocation2 + $0x58] sm:$0xff] %vm768, %v3700
        %3715 = vst [vmem:[#allocation2 + $0x60] sm:$0xff] %v3701
        %3716 = vst.msk [vmem:[#allocation2 + $0x68] sm:$0xff] %vm768, %v3702
        %3717 = vmatprep.subr.bf16.mxu0 0
        %3718 = vmatpush1.bf16.msra.mxu0 %v966
        %3719 = vmatprep.subr.bf16.mxu0 0
        %3720 = vmatpush1.bf16.msra.mxu0 0
        %3721 = vmatprep.subr.bf16.mxu0 0
        %3722 = vmatpush1.bf16.msra.mxu0 0
        %3723 = vmatprep.subr.bf16.mxu0 0
        %3724 = vmatpush1.bf16.msra.mxu0 0
        %3725 = vmatprep.subr.bf16.mxu0 0
        %3726 = vmatpush1.bf16.msra.mxu0 0
        %3727 = vmatprep.subr.bf16.mxu0 0
        %3728 = vmatpush1.bf16.msra.mxu0 0
        %3729 = vmatprep.subr.bf16.mxu0 0
        %3730 = vmatpush1.bf16.msra.mxu0 0
        %3731 = vmatprep.subr.bf16.mxu0 0
        %3732 = vmatpush1.bf16.msra.mxu0 0
        %3733 = vmatprep.subr.bf16.mxu0 0
        %3734 = vmatpush1.bf16.msra.mxu0 0
        %3735 = vmatprep.subr.bf16.mxu0 0
        %3736 = vmatpush1.bf16.msra.mxu0 0
        %3737 = vmatprep.subr.bf16.mxu0 0
        %3738 = vmatpush1.bf16.msra.mxu0 0
        %3739 = vmatprep.subr.bf16.mxu0 0
        %3740 = vmatpush1.bf16.msra.mxu0 0
        %3741 = vmatprep.subr.bf16.mxu0 0
        %3742 = vmatpush1.bf16.msra.mxu0 0
        %3743 = vmatprep.subr.bf16.mxu0 0
        %3744 = vmatpush1.bf16.msra.mxu0 0
        %3745 = vmatprep.subr.bf16.mxu0 0
        %3746 = vmatpush1.bf16.msra.mxu0 0
        %3747 = vmatprep.subr.bf16.mxu0 0
        %3748 = vmatpush1.bf16.msra.mxu0 0
        %3749 = vmatprep.mubr.bf16.mxu0 0
        %3750 = vmatmul.mubr.bf16.gmra.mrb[0].mxu0 %v3601
        %v3751 = vpop.f32.mrb[0].mxu0
        %v3752 = vadd.f32 %v751, %v3751
        %v3753 = vpop.f32.mrb[0].mxu0
        %v3754 = vpop.f32.mrb[0].mxu0
        %v3755 = vadd.f32 %v751, %v3754
        %v3756 = vpop.f32.mrb[0].mxu0
        %3757 = vmatprep.mubr.bf16.mxu0 0
        %3758 = vmatmul.mubr.bf16.gmra.mrb[0].mxu0 %v3604
        %v3759 = vpop.f32.mrb[0].mxu0
        %v3760 = vadd.f32 %v751, %v3759
        %v3761 = vpop.f32.mrb[0].mxu0
        %v3762 = vpop.f32.mrb[0].mxu0
        %v3763 = vadd.f32 %v751, %v3762
        %v3764 = vpop.f32.mrb[0].mxu0
        %3765 = vmatprep.mubr.bf16.mxu0 0
        %3766 = vmatmul.mubr.bf16.gmra.mrb[0].mxu0 %v3607
        %v3767 = vpop.f32.mrb[0].mxu0
        %v3768 = vadd.f32 %v751, %v3767
        %v3769 = vpop.f32.mrb[0].mxu0
        %v3770 = vpop.f32.mrb[0].mxu0
        %v3771 = vadd.f32 %v751, %v3770
        %v3772 = vpop.f32.mrb[0].mxu0
        %3773 = vmatprep.mubr.bf16.mxu0 0
        %3774 = vmatmul.mubr.bf16.gmra.mrb[0].mxu0 %v3610
        %v3775 = vpop.f32.mrb[0].mxu0
        %v3776 = vadd.f32 %v751, %v3775
        %v3777 = vpop.f32.mrb[0].mxu0
        %v3778 = vpop.f32.mrb[0].mxu0
        %v3779 = vpop.f32.mrb[0].mxu0
        %3780 = vdwg.mxu0
        %v3781 = vmax.f32 %v3752, 0.0
        %v3782 = vmax.f32 %v3755, 0.0
        %v3783 = vmax.f32 %v3760, 0.0
        %v3784 = vmax.f32 %v3763, 0.0
        %v3785 = vmax.f32 %v3768, 0.0
        %v3786 = vmax.f32 %v3771, 0.0
        %v3787 = vmax.f32 %v3776, 0.0
        %v3788 = vpack.c.bf16 %v3782, %v3781
        %v3789 = vpack.c.bf16 %v3784, %v3783
        %v3790 = vpack.c.bf16 %v3786, %v3785
        %v3791 = vpack.c.bf16 %v3787, %v3787
        %v3792 = vld [vmem:[#allocation3] sm:$0xff]
        %v3793 = vld [vmem:[#allocation3 + $0x8] sm:$0xff]
        %v3794 = vld [vmem:[#allocation3 + $0x10] sm:$0xff]
        %v3795 = vld [vmem:[#allocation3 + $0x18] sm:$0xff]
        %v3796 = vld [vmem:[#allocation3 + $0x20] sm:$0xff]
        %v3797 = vld [vmem:[#allocation3 + $0x28] sm:$0xff]
        %v3798 = vld [vmem:[#allocation3 + $0x30] sm:$0xff]
        %s3799 = scalar_lea.vmem %s5, 128
        %v3800 = vld [vmem:[%s3799] sm:$0xf]
        %v3801 = vld [vmem:[%s3799 + $0x4] sm:$0xf]
        %v3802 = vld [vmem:[%s3799 + $0x8] sm:$0xf]
        %v3803 = vld [vmem:[%s3799 + $0xc] sm:$0xf]
        %v3804 = vld [vmem:[%s3799 + $0x10] sm:$0xf]
        %v3805 = vld [vmem:[%s3799 + $0x14] sm:$0xf]
        %v3806 = vld [vmem:[%s3799 + $0x18] sm:$0xf]
        %v3807 = vld [vmem:[%s3799 + $0x1c] sm:$0xf]
        %v3816 = vunpack.c.l.b16 %v3800
        %v3817 = vunpack.c.l.b16 %v3801
        %v3818 = vunpack.c.l.b16 %v3802
        %v3819 = vunpack.c.l.b16 %v3803
        %v3820 = vunpack.c.l.b16 %v3804
        %v3821 = vunpack.c.l.b16 %v3805
        %v3822 = vunpack.c.l.b16 %v3806
        %v3823 = vunpack.c.l.b16 %v3807
        %v3824 = vpack.c.b16 %v3817, %v3816
        %v3825 = vpack.c.b16 %v3819, %v3818
        %v3826 = vpack.c.b16 %v3821, %v3820
        %v3827 = vpack.c.b16 %v3823, %v3822
        %v3833 = vsel %vm768, %v3788, 0
        %v3836 = vsel %vm768, %v3789, 0
        %v3839 = vsel %vm768, %v3790, 0
        %v3842 = vsel %vm768, %v3791, 0
        %3844 = vmatprep.subr.bf16.mxu0 0
        %3845 = vmatpush1.bf16.msra.mxu0 %v3824
        %3846 = vmatprep.subr.bf16.mxu0 0
        %3847 = vmatpush1.bf16.msra.mxu0 %v3825
        %3848 = vmatprep.subr.bf16.mxu0 0
        %3849 = vmatpush1.bf16.msra.mxu0 %v3826
        %3850 = vmatprep.subr.bf16.mxu0 0
        %3851 = vmatpush1.bf16.msra.mxu0 %v3827
        %3852 = vmatprep.subr.bf16.mxu0 0
        %3853 = vmatpush1.bf16.msra.mxu0 0
        %3854 = vmatprep.subr.bf16.mxu0 0
        %3855 = vmatpush1.bf16.msra.mxu0 0
        %3856 = vmatprep.subr.bf16.mxu0 0
        %3857 = vmatpush1.bf16.msra.mxu0 0
        %3858 = vmatprep.subr.bf16.mxu0 0
        %3859 = vmatpush1.bf16.msra.mxu0 0
        %3860 = vmatprep.subr.bf16.mxu0 0
        %3861 = vmatpush1.bf16.msra.mxu0 0
        %3862 = vmatprep.subr.bf16.mxu0 0
        %3863 = vmatpush1.bf16.msra.mxu0 0
        %3864 = vmatprep.subr.bf16.mxu0 0
        %3865 = vmatpush1.bf16.msra.mxu0 0
        %3866 = vmatprep.subr.bf16.mxu0 0
        %3867 = vmatpush1.bf16.msra.mxu0 0
        %3868 = vmatprep.subr.bf16.mxu0 0
        %3869 = vmatpush1.bf16.msra.mxu0 0
        %3870 = vmatprep.subr.bf16.mxu0 0
        %3871 = vmatpush1.bf16.msra.mxu0 0
        %3872 = vmatprep.subr.bf16.mxu0 0
        %3873 = vmatpush1.bf16.msra.mxu0 0
        %3874 = vmatprep.subr.bf16.mxu0 0
        %3875 = vmatpush1.bf16.msra.mxu0 0
        %3876 = vmatprep.mubr.bf16.mxu0 0
        %3877 = vmatmul.mubr.bf16.gmra.mrb[0].mxu0 %v3833
        %v3878 = vpop.f32.mrb[0].mxu0
        %v3879 = vadd.f32 0.0, %v3878
        %v3880 = vpop.f32.mrb[0].mxu0
        %v3881 = vpop.f32.mrb[0].mxu0
        %v3882 = vadd.f32 0.0, %v3881
        %v3883 = vpop.f32.mrb[0].mxu0
        %3884 = vmatprep.mubr.bf16.mxu0 0
        %3885 = vmatmul.mubr.bf16.gmra.mrb[0].mxu0 %v3836
        %v3886 = vpop.f32.mrb[0].mxu0
        %v3887 = vadd.f32 0.0, %v3886
        %v3888 = vpop.f32.mrb[0].mxu0
        %v3889 = vpop.f32.mrb[0].mxu0
        %v3890 = vadd.f32 0.0, %v3889
        %v3891 = vpop.f32.mrb[0].mxu0
        %3892 = vmatprep.mubr.bf16.mxu0 0
        %3893 = vmatmul.mubr.bf16.gmra.mrb[0].mxu0 %v3839
        %v3894 = vpop.f32.mrb[0].mxu0
        %v3895 = vadd.f32 0.0, %v3894
        %v3896 = vpop.f32.mrb[0].mxu0
        %v3897 = vpop.f32.mrb[0].mxu0
        %v3898 = vadd.f32 0.0, %v3897
        %v3899 = vpop.f32.mrb[0].mxu0
        %3900 = vmatprep.mubr.bf16.mxu0 0
        %3901 = vmatmul.mubr.bf16.gmra.mrb[0].mxu0 %v3842
        %v3902 = vpop.f32.mrb[0].mxu0
        %v3903 = vadd.f32 0.0, %v3902
        %v3904 = vpop.f32.mrb[0].mxu0
        %v3905 = vpop.f32.mrb[0].mxu0
        %v3906 = vpop.f32.mrb[0].mxu0
        %3907 = vdwg.mxu0
        %v3908 = vadd.f32 %v3792, %v3879
        %v3909 = vadd.f32 %v3793, %v3882
        %v3910 = vadd.f32 %v3794, %v3887
        %v3911 = vadd.f32 %v3795, %v3890
        %v3912 = vadd.f32 %v3796, %v3895
        %v3913 = vadd.f32 %v3797, %v3898
        %v3914 = vadd.f32 %v3798, %v3903
        %3915 = vst.msk [vmem:[#allocation3] sm:$0xff] %vm782, %v3908
        %3916 = vst.msk [vmem:[#allocation3 + $0x8] sm:$0xff] %vm782, %v3909
        %3917 = vst.msk [vmem:[#allocation3 + $0x10] sm:$0xff] %vm782, %v3910
        %3918 = vst.msk [vmem:[#allocation3 + $0x18] sm:$0xff] %vm782, %v3911
        %3919 = vst.msk [vmem:[#allocation3 + $0x20] sm:$0xff] %vm782, %v3912
        %3920 = vst.msk [vmem:[#allocation3 + $0x28] sm:$0xff] %vm782, %v3913
        %3921 = vst.msk [vmem:[#allocation3 + $0x30] sm:$0xff] %vm782, %v3914
        %3922 = vmatprep.subr.bf16.mxu0 0
        %3923 = vmatpush1.bf16.msra.mxu0 %v1173
        %3924 = vmatprep.subr.bf16.mxu0 0
        %3925 = vmatpush1.bf16.msra.mxu0 0
        %3926 = vmatprep.subr.bf16.mxu0 0
        %3927 = vmatpush1.bf16.msra.mxu0 0
        %3928 = vmatprep.subr.bf16.mxu0 0
        %3929 = vmatpush1.bf16.msra.mxu0 0
        %3930 = vmatprep.subr.bf16.mxu0 0
        %3931 = vmatpush1.bf16.msra.mxu0 0
        %3932 = vmatprep.subr.bf16.mxu0 0
        %3933 = vmatpush1.bf16.msra.mxu0 0
        %3934 = vmatprep.subr.bf16.mxu0 0
        %3935 = vmatpush1.bf16.msra.mxu0 0
        %3936 = vmatprep.subr.bf16.mxu0 0
        %3937 = vmatpush1.bf16.msra.mxu0 0
        %3938 = vmatprep.subr.bf16.mxu0 0
        %3939 = vmatpush1.bf16.msra.mxu0 0
        %3940 = vmatprep.subr.bf16.mxu0 0
        %3941 = vmatpush1.bf16.msra.mxu0 0
        %3942 = vmatprep.subr.bf16.mxu0 0
        %3943 = vmatpush1.bf16.msra.mxu0 0
        %3944 = vmatprep.subr.bf16.mxu0 0
        %3945 = vmatpush1.bf16.msra.mxu0 0
        %3946 = vmatprep.subr.bf16.mxu0 0
        %3947 = vmatpush1.bf16.msra.mxu0 0
        %3948 = vmatprep.subr.bf16.mxu0 0
        %3949 = vmatpush1.bf16.msra.mxu0 0
        %3950 = vmatprep.subr.bf16.mxu0 0
        %3951 = vmatpush1.bf16.msra.mxu0 0
        %3952 = vmatprep.subr.bf16.mxu0 0
        %3953 = vmatpush1.bf16.msra.mxu0 0
        %3954 = vmatprep.mubr.bf16.mxu0 0
        %3955 = vmatmul.mubr.bf16.gmra.mrb[0].mxu0 %v3601
        %v3956 = vpop.f32.mrb[0].mxu0
        %v3957 = vadd.f32 %v758, %v3956
        %v3958 = vpop.f32.mrb[0].mxu0
        %v3959 = vpop.f32.mrb[0].mxu0
        %v3960 = vadd.f32 %v758, %v3959
        %v3961 = vpop.f32.mrb[0].mxu0
        %3962 = vmatprep.mubr.bf16.mxu0 0
        %3963 = vmatmul.mubr.bf16.gmra.mrb[0].mxu0 %v3604
        %v3964 = vpop.f32.mrb[0].mxu0
        %v3965 = vadd.f32 %v758, %v3964
        %v3966 = vpop.f32.mrb[0].mxu0
        %v3967 = vpop.f32.mrb[0].mxu0
        %v3968 = vadd.f32 %v758, %v3967
        %v3969 = vpop.f32.mrb[0].mxu0
        %3970 = vmatprep.mubr.bf16.mxu0 0
        %3971 = vmatmul.mubr.bf16.gmra.mrb[0].mxu0 %v3607
        %v3972 = vpop.f32.mrb[0].mxu0
        %v3973 = vadd.f32 %v758, %v3972
        %v3974 = vpop.f32.mrb[0].mxu0
        %v3975 = vpop.f32.mrb[0].mxu0
        %v3976 = vadd.f32 %v758, %v3975
        %v3977 = vpop.f32.mrb[0].mxu0
        %3978 = vmatprep.mubr.bf16.mxu0 0
        %3979 = vmatmul.mubr.bf16.gmra.mrb[0].mxu0 %v3610
        %v3980 = vpop.f32.mrb[0].mxu0
        %v3981 = vadd.f32 %v758, %v3980
        %v3982 = vpop.f32.mrb[0].mxu0
        %v3983 = vpop.f32.mrb[0].mxu0
        %v3984 = vpop.f32.mrb[0].mxu0
        %3985 = vdwg.mxu0
        %v3986 = vmax.f32 %v3957, 0.0
        %v3987 = vmax.f32 %v3960, 0.0
        %v3988 = vmax.f32 %v3965, 0.0
        %v3989 = vmax.f32 %v3968, 0.0
        %v3990 = vmax.f32 %v3973, 0.0
        %v3991 = vmax.f32 %v3976, 0.0
        %v3992 = vmax.f32 %v3981, 0.0
        %v3993 = vpack.c.bf16 %v3987, %v3986
        %v3994 = vpack.c.bf16 %v3989, %v3988
        %v3995 = vpack.c.bf16 %v3991, %v3990
        %v3996 = vpack.c.bf16 %v3992, %v3992
        %v3998 = vsel %vm768, %v3993, 0
        %v4001 = vsel %vm768, %v3994, 0
        %v4004 = vsel %vm768, %v3995, 0
        %v4007 = vsel %vm768, %v3996, 0
        %4009 = vmatprep.subr.bf16.mxu0 0
        %4010 = vmatpush1.bf16.msra.mxu0 %v1266
        %4011 = vmatprep.subr.bf16.mxu0 0
        %4012 = vmatpush1.bf16.msra.mxu0 %v1267
        %4013 = vmatprep.subr.bf16.mxu0 0
        %4014 = vmatpush1.bf16.msra.mxu0 %v1268
        %4015 = vmatprep.subr.bf16.mxu0 0
        %4016 = vmatpush1.bf16.msra.mxu0 %v1269
        %4017 = vmatprep.subr.bf16.mxu0 0
        %4018 = vmatpush1.bf16.msra.mxu0 0
        %4019 = vmatprep.subr.bf16.mxu0 0
        %4020 = vmatpush1.bf16.msra.mxu0 0
        %4021 = vmatprep.subr.bf16.mxu0 0
        %4022 = vmatpush1.bf16.msra.mxu0 0
        %4023 = vmatprep.subr.bf16.mxu0 0
        %4024 = vmatpush1.bf16.msra.mxu0 0
        %4025 = vmatprep.subr.bf16.mxu0 0
        %4026 = vmatpush1.bf16.msra.mxu0 0
        %4027 = vmatprep.subr.bf16.mxu0 0
        %4028 = vmatpush1.bf16.msra.mxu0 0
        %4029 = vmatprep.subr.bf16.mxu0 0
        %4030 = vmatpush1.bf16.msra.mxu0 0
        %4031 = vmatprep.subr.bf16.mxu0 0
        %4032 = vmatpush1.bf16.msra.mxu0 0
        %4033 = vmatprep.subr.bf16.mxu0 0
        %4034 = vmatpush1.bf16.msra.mxu0 0
        %4035 = vmatprep.subr.bf16.mxu0 0
        %4036 = vmatpush1.bf16.msra.mxu0 0
        %4037 = vmatprep.subr.bf16.mxu0 0
        %4038 = vmatpush1.bf16.msra.mxu0 0
        %4039 = vmatprep.subr.bf16.mxu0 0
        %4040 = vmatpush1.bf16.msra.mxu0 0
        %4041 = vmatprep.mubr.bf16.mxu0 0
        %4042 = vmatmul.mubr.bf16.gmra.mrb[0].mxu0 %v3998
        %v4043 = vpop.f32.mrb[0].mxu0
        %v4044 = vadd.f32 %v765, %v4043
        %v4045 = vpop.f32.mrb[0].mxu0
        %v4046 = vpop.f32.mrb[0].mxu0
        %v4047 = vadd.f32 %v765, %v4046
        %v4048 = vpop.f32.mrb[0].mxu0
        %4049 = vmatprep.mubr.bf16.mxu0 0
        %4050 = vmatmul.mubr.bf16.gmra.mrb[0].mxu0 %v4001
        %v4051 = vpop.f32.mrb[0].mxu0
        %v4052 = vadd.f32 %v765, %v4051
        %v4053 = vpop.f32.mrb[0].mxu0
        %v4054 = vpop.f32.mrb[0].mxu0
        %v4055 = vadd.f32 %v765, %v4054
        %v4056 = vpop.f32.mrb[0].mxu0
        %4057 = vmatprep.mubr.bf16.mxu0 0
        %4058 = vmatmul.mubr.bf16.gmra.mrb[0].mxu0 %v4004
        %v4059 = vpop.f32.mrb[0].mxu0
        %v4060 = vadd.f32 %v765, %v4059
        %v4061 = vpop.f32.mrb[0].mxu0
        %v4062 = vpop.f32.mrb[0].mxu0
        %v4063 = vadd.f32 %v765, %v4062
        %v4064 = vpop.f32.mrb[0].mxu0
        %4065 = vmatprep.mubr.bf16.mxu0 0
        %4066 = vmatmul.mubr.bf16.gmra.mrb[0].mxu0 %v4007
        %v4067 = vpop.f32.mrb[0].mxu0
        %v4068 = vadd.f32 %v765, %v4067
        %v4069 = vpop.f32.mrb[0].mxu0
        %v4070 = vpop.f32.mrb[0].mxu0
        %v4071 = vpop.f32.mrb[0].mxu0
        %4072 = vdwg.mxu0
        %v4073 = vmax.f32 %v4044, 0.0
        %v4074 = vmax.f32 %v4047, 0.0
        %v4075 = vmax.f32 %v4052, 0.0
        %v4076 = vmax.f32 %v4055, 0.0
        %v4077 = vmax.f32 %v4060, 0.0
        %v4078 = vmax.f32 %v4063, 0.0
        %v4079 = vmax.f32 %v4068, 0.0
        %v4080 = vpack.c.bf16 %v4074, %v4073
        %v4081 = vpack.c.bf16 %v4076, %v4075
        %v4082 = vpack.c.bf16 %v4078, %v4077
        %v4083 = vpack.c.bf16 %v4079, %v4079
        %v4084 = vld [vmem:[#allocation4] sm:$0xff]
        %v4085 = vld [vmem:[#allocation4 + $0x8] sm:$0xff]
        %v4086 = vld [vmem:[#allocation4 + $0x10] sm:$0xff]
        %v4087 = vld [vmem:[#allocation4 + $0x18] sm:$0xff]
        %v4088 = vld [vmem:[#allocation4 + $0x20] sm:$0xff]
        %v4089 = vld [vmem:[#allocation4 + $0x28] sm:$0xff]
        %v4090 = vld [vmem:[#allocation4 + $0x30] sm:$0xff]
        %s4091 = scalar_lea.vmem %s11, 192
        %v4092 = vld [vmem:[%s4091] sm:$0xf]
        %v4093 = vld [vmem:[%s4091 + $0x4] sm:$0xf]
        %v4094 = vld [vmem:[%s4091 + $0x8] sm:$0xf]
        %v4095 = vld [vmem:[%s4091 + $0xc] sm:$0xf]
        %v4096 = vld [vmem:[%s4091 + $0x10] sm:$0xf]
        %v4097 = vld [vmem:[%s4091 + $0x14] sm:$0xf]
        %v4098 = vld [vmem:[%s4091 + $0x18] sm:$0xf]
        %v4099 = vld [vmem:[%s4091 + $0x1c] sm:$0xf]
        %v4100 = vld [vmem:[%s4091 + $0x20] sm:$0xf]
        %v4101 = vld [vmem:[%s4091 + $0x24] sm:$0xf]
        %v4102 = vld [vmem:[%s4091 + $0x28] sm:$0xf]
        %v4103 = vld [vmem:[%s4091 + $0x2c] sm:$0xf]
        %v4116 = vunpack.c.l.b16 %v4092
        %v4117 = vunpack.c.l.b16 %v4093
        %v4118 = vunpack.c.l.b16 %v4094
        %v4119 = vunpack.c.l.b16 %v4095
        %v4120 = vunpack.c.l.b16 %v4096
        %v4121 = vunpack.c.l.b16 %v4097
        %v4122 = vunpack.c.l.b16 %v4098
        %v4123 = vunpack.c.l.b16 %v4099
        %v4124 = vunpack.c.l.b16 %v4100
        %v4125 = vunpack.c.l.b16 %v4101
        %v4126 = vunpack.c.l.b16 %v4102
        %v4127 = vunpack.c.l.b16 %v4103
        %v4128 = vpack.c.b16 %v4117, %v4116
        %v4129 = vpack.c.b16 %v4119, %v4118
        %v4130 = vpack.c.b16 %v4121, %v4120
        %v4131 = vpack.c.b16 %v4123, %v4122
        %v4132 = vpack.c.b16 %v4125, %v4124
        %v4133 = vpack.c.b16 %v4127, %v4126
        %v4141 = vsel %vm782, %v4080, 0
        %v4144 = vsel %vm782, %v4081, 0
        %v4147 = vsel %vm782, %v4082, 0
        %v4150 = vsel %vm782, %v4083, 0
        %4152 = vmatprep.subr.bf16.mxu0 0
        %4153 = vmatpush1.bf16.msra.mxu0 %v4128
        %4154 = vmatprep.subr.bf16.mxu0 0
        %4155 = vmatpush1.bf16.msra.mxu0 %v4129
        %4156 = vmatprep.subr.bf16.mxu0 0
        %4157 = vmatpush1.bf16.msra.mxu0 %v4130
        %4158 = vmatprep.subr.bf16.mxu0 0
        %4159 = vmatpush1.bf16.msra.mxu0 %v4131
        %4160 = vmatprep.subr.bf16.mxu0 0
        %4161 = vmatpush1.bf16.msra.mxu0 %v4132
        %4162 = vmatprep.subr.bf16.mxu0 0
        %4163 = vmatpush1.bf16.msra.mxu0 %v4133
        %4164 = vmatprep.subr.bf16.mxu0 0
        %4165 = vmatpush1.bf16.msra.mxu0 0
        %4166 = vmatprep.subr.bf16.mxu0 0
        %4167 = vmatpush1.bf16.msra.mxu0 0
        %4168 = vmatprep.subr.bf16.mxu0 0
        %4169 = vmatpush1.bf16.msra.mxu0 0
        %4170 = vmatprep.subr.bf16.mxu0 0
        %4171 = vmatpush1.bf16.msra.mxu0 0
        %4172 = vmatprep.subr.bf16.mxu0 0
        %4173 = vmatpush1.bf16.msra.mxu0 0
        %4174 = vmatprep.subr.bf16.mxu0 0
        %4175 = vmatpush1.bf16.msra.mxu0 0
        %4176 = vmatprep.subr.bf16.mxu0 0
        %4177 = vmatpush1.bf16.msra.mxu0 0
        %4178 = vmatprep.subr.bf16.mxu0 0
        %4179 = vmatpush1.bf16.msra.mxu0 0
        %4180 = vmatprep.subr.bf16.mxu0 0
        %4181 = vmatpush1.bf16.msra.mxu0 0
        %4182 = vmatprep.subr.bf16.mxu0 0
        %4183 = vmatpush1.bf16.msra.mxu0 0
        %4184 = vmatprep.mubr.bf16.mxu0 0
        %4185 = vmatmul.mubr.bf16.gmra.mrb[0].mxu0 %v4141
        %v4186 = vpop.f32.mrb[0].mxu0
        %v4187 = vadd.f32 0.0, %v4186
        %v4188 = vpop.f32.mrb[0].mxu0
        %v4189 = vpop.f32.mrb[0].mxu0
        %v4190 = vadd.f32 0.0, %v4189
        %v4191 = vpop.f32.mrb[0].mxu0
        %4192 = vmatprep.mubr.bf16.mxu0 0
        %4193 = vmatmul.mubr.bf16.gmra.mrb[0].mxu0 %v4144
        %v4194 = vpop.f32.mrb[0].mxu0
        %v4195 = vadd.f32 0.0, %v4194
        %v4196 = vpop.f32.mrb[0].mxu0
        %v4197 = vpop.f32.mrb[0].mxu0
        %v4198 = vadd.f32 0.0, %v4197
        %v4199 = vpop.f32.mrb[0].mxu0
        %4200 = vmatprep.mubr.bf16.mxu0 0
        %4201 = vmatmul.mubr.bf16.gmra.mrb[0].mxu0 %v4147
        %v4202 = vpop.f32.mrb[0].mxu0
        %v4203 = vadd.f32 0.0, %v4202
        %v4204 = vpop.f32.mrb[0].mxu0
        %v4205 = vpop.f32.mrb[0].mxu0
        %v4206 = vadd.f32 0.0, %v4205
        %v4207 = vpop.f32.mrb[0].mxu0
        %4208 = vmatprep.mubr.bf16.mxu0 0
        %4209 = vmatmul.mubr.bf16.gmra.mrb[0].mxu0 %v4150
        %v4210 = vpop.f32.mrb[0].mxu0
        %v4211 = vadd.f32 0.0, %v4210
        %v4212 = vpop.f32.mrb[0].mxu0
        %v4213 = vpop.f32.mrb[0].mxu0
        %v4214 = vpop.f32.mrb[0].mxu0
        %4215 = vdwg.mxu0
        %v4216 = vadd.f32 %v4084, %v4187
        %v4217 = vadd.f32 %v4085, %v4190
        %v4218 = vadd.f32 %v4086, %v4195
        %v4219 = vadd.f32 %v4087, %v4198
        %v4220 = vadd.f32 %v4088, %v4203
        %v4221 = vadd.f32 %v4089, %v4206
        %v4222 = vadd.f32 %v4090, %v4211
        %4223 = vst.msk [vmem:[#allocation4] sm:$0xff] %vm782, %v4216
        %4224 = vst.msk [vmem:[#allocation4 + $0x8] sm:$0xff] %vm782, %v4217
        %4225 = vst.msk [vmem:[#allocation4 + $0x10] sm:$0xff] %vm782, %v4218
        %4226 = vst.msk [vmem:[#allocation4 + $0x18] sm:$0xff] %vm782, %v4219
        %4227 = vst.msk [vmem:[#allocation4 + $0x20] sm:$0xff] %vm782, %v4220
        %4228 = vst.msk [vmem:[#allocation4 + $0x28] sm:$0xff] %vm782, %v4221
        %4229 = vst.msk [vmem:[#allocation4 + $0x30] sm:$0xff] %vm782, %v4222
        %s4230 = scalar_lea.vmem %s685, 140 [#allocation5]
        %v4231 = vld [vmem:[%s4230] sm:$0xf]
        %v4232 = vld [vmem:[%s4230 + $0x4] sm:$0xf]
        %v4233 = vld [vmem:[%s4230 + $0x8] sm:$0xf]
        %v4234 = vld [vmem:[%s4230 + $0xc] sm:$0xf]
        %v4235 = vld [vmem:[%s4230 + $0x10] sm:$0xf]
        %v4236 = vld [vmem:[%s4230 + $0x14] sm:$0xf]
        %v4237 = vld [vmem:[%s4230 + $0x18] sm:$0xf]
        %v4238 = vld [vmem:[#allocation2] sm:$0xff]
        %v4239 = vld [vmem:[#allocation2 + $0x8] sm:$0xff]
        %v4240 = vld [vmem:[#allocation2 + $0x10] sm:$0xff]
        %v4241 = vld [vmem:[#allocation2 + $0x18] sm:$0xff]
        %v4242 = vld [vmem:[#allocation2 + $0x20] sm:$0xff]
        %v4243 = vld [vmem:[#allocation2 + $0x28] sm:$0xff]
        %v4244 = vld [vmem:[#allocation2 + $0x30] sm:$0xff]
        %v4245 = vld [vmem:[#allocation2 + $0x38] sm:$0xff]
        %v4246 = vld [vmem:[#allocation2 + $0x40] sm:$0xff]
        %v4247 = vld [vmem:[#allocation2 + $0x48] sm:$0xff]
        %v4248 = vld [vmem:[#allocation2 + $0x50] sm:$0xff]
        %v4249 = vld [vmem:[#allocation2 + $0x58] sm:$0xff]
        %v4250 = vld [vmem:[#allocation2 + $0x60] sm:$0xff]
        %v4251 = vld [vmem:[#allocation2 + $0x68] sm:$0xff]
        %s4252 = scalar_lea.vmem %s1, 20
        %v4253 = vld [vmem:[%s4252] sm:$0xf]
        %v4261 = vunpack.c.l.b16 %v4231
        %v4262 = vunpack.c.l.b16 %v4232
        %v4263 = vunpack.c.l.b16 %v4233
        %v4264 = vunpack.c.l.b16 %v4234
        %v4265 = vunpack.c.l.b16 %v4235
        %v4266 = vunpack.c.l.b16 %v4236
        %v4267 = vunpack.c.l.b16 %v4237
        %v4268 = vpack.c.b16 %v4262, %v4261
        %v4269 = vpack.c.b16 %v4264, %v4263
        %v4270 = vpack.c.b16 %v4266, %v4265
        %v4271 = vpack.c.b16 %v4267, %v4267
        %v4274 = vunpack.c.l.s4 1983009808
        %v4275 = vunpack.c.0.s8 %v4274
        %v4276 = vlaneseq
        %v4277 = vshrl.u32 %v4276, 7
        %v4278 = vsub.s32 %v4275, %v4277
        %v4279 = vrot.slane %v4253, %v4278
        %v4280 = vcombine.high %v4279, %v4279
        %v4282 = vsel %vm846, %v4268, 0
        %v4285 = vsel %vm846, %v4269, 0
        %v4288 = vsel %vm846, %v4270, 0
        %v4291 = vsel %vm846, %v4271, 0
        %v4294 = vsel %vm859, %v4279, 0
        %v4297 = vsel %vm859, %v4280, 0
        %4299 = vmatprep.subr.bf16.mxu0 %v4297
        %4300 = vmatpush1.bf16.msra.mxu0 %v4294
        %4301 = vmatprep.subr.bf16.mxu0 0
        %4302 = vmatpush1.bf16.msra.mxu0 0
        %4303 = vmatprep.subr.bf16.mxu0 0
        %4304 = vmatpush1.bf16.msra.mxu0 0
        %4305 = vmatprep.subr.bf16.mxu0 0
        %4306 = vmatpush1.bf16.msra.mxu0 0
        %4307 = vmatprep.subr.bf16.mxu0 0
        %4308 = vmatpush1.bf16.msra.mxu0 0
        %4309 = vmatprep.subr.bf16.mxu0 0
        %4310 = vmatpush1.bf16.msra.mxu0 0
        %4311 = vmatprep.subr.bf16.mxu0 0
        %4312 = vmatpush1.bf16.msra.mxu0 0
        %4313 = vmatprep.subr.bf16.mxu0 0
        %4314 = vmatpush1.bf16.msra.mxu0 0
        %4315 = vmatprep.subr.bf16.mxu0 0
        %4316 = vmatpush1.bf16.msra.mxu0 0
        %4317 = vmatprep.subr.bf16.mxu0 0
        %4318 = vmatpush1.bf16.msra.mxu0 0
        %4319 = vmatprep.subr.bf16.mxu0 0
        %4320 = vmatpush1.bf16.msra.mxu0 0
        %4321 = vmatprep.subr.bf16.mxu0 0
        %4322 = vmatpush1.bf16.msra.mxu0 0
        %4323 = vmatprep.subr.bf16.mxu0 0
        %4324 = vmatpush1.bf16.msra.mxu0 0
        %4325 = vmatprep.subr.bf16.mxu0 0
        %4326 = vmatpush1.bf16.msra.mxu0 0
        %4327 = vmatprep.subr.bf16.mxu0 0
        %4328 = vmatpush1.bf16.msra.mxu0 0
        %4329 = vmatprep.subr.bf16.mxu0 0
        %4330 = vmatpush1.bf16.msra.mxu0 0
        %4331 = vmatprep.mubr.bf16.mxu0 0
        %4332 = vmatmul.mubr.bf16.gmra.mrb[0].mxu0 %v4282
        %v4333 = vpop.f32.mrb[0].mxu0
        %v4334 = vadd.f32 0.0, %v4333
        %v4335 = vpop.f32.mrb[0].mxu0
        %v4336 = vadd.f32 0.0, %v4335
        %v4337 = vpop.f32.mrb[0].mxu0
        %v4338 = vadd.f32 0.0, %v4337
        %v4339 = vpop.f32.mrb[0].mxu0
        %v4340 = vadd.f32 0.0, %v4339
        %4341 = vmatprep.mubr.bf16.mxu0 0
        %4342 = vmatmul.mubr.bf16.gmra.mrb[0].mxu0 %v4285
        %v4343 = vpop.f32.mrb[0].mxu0
        %v4344 = vadd.f32 0.0, %v4343
        %v4345 = vpop.f32.mrb[0].mxu0
        %v4346 = vadd.f32 0.0, %v4345
        %v4347 = vpop.f32.mrb[0].mxu0
        %v4348 = vadd.f32 0.0, %v4347
        %v4349 = vpop.f32.mrb[0].mxu0
        %v4350 = vadd.f32 0.0, %v4349
        %4351 = vmatprep.mubr.bf16.mxu0 0
        %4352 = vmatmul.mubr.bf16.gmra.mrb[0].mxu0 %v4288
        %v4353 = vpop.f32.mrb[0].mxu0
        %v4354 = vadd.f32 0.0, %v4353
        %v4355 = vpop.f32.mrb[0].mxu0
        %v4356 = vadd.f32 0.0, %v4355
        %v4357 = vpop.f32.mrb[0].mxu0
        %v4358 = vadd.f32 0.0, %v4357
        %v4359 = vpop.f32.mrb[0].mxu0
        %v4360 = vadd.f32 0.0, %v4359
        %4361 = vmatprep.mubr.bf16.mxu0 0
        %4362 = vmatmul.mubr.bf16.gmra.mrb[0].mxu0 %v4291
        %v4363 = vpop.f32.mrb[0].mxu0
        %v4364 = vadd.f32 0.0, %v4363
        %v4365 = vpop.f32.mrb[0].mxu0
        %v4366 = vadd.f32 0.0, %v4365
        %v4367 = vpop.f32.mrb[0].mxu0
        %v4368 = vpop.f32.mrb[0].mxu0
        %4369 = vdwg.mxu0
        %v4370 = vadd.f32 %v4238, %v4334
        %v4371 = vadd.f32 %v4239, %v4336
        %v4372 = vadd.f32 %v4240, %v4338
        %v4373 = vadd.f32 %v4241, %v4340
        %v4374 = vadd.f32 %v4242, %v4344
        %v4375 = vadd.f32 %v4243, %v4346
        %v4376 = vadd.f32 %v4244, %v4348
        %v4377 = vadd.f32 %v4245, %v4350
        %v4378 = vadd.f32 %v4246, %v4354
        %v4379 = vadd.f32 %v4247, %v4356
        %v4380 = vadd.f32 %v4248, %v4358
        %v4381 = vadd.f32 %v4249, %v4360
        %v4382 = vadd.f32 %v4250, %v4364
        %v4383 = vadd.f32 %v4251, %v4366
        %4384 = vst [vmem:[#allocation2] sm:$0xff] %v4370
        %4385 = vst.msk [vmem:[#allocation2 + $0x8] sm:$0xff] %vm768, %v4371
        %4386 = vst [vmem:[#allocation2 + $0x10] sm:$0xff] %v4372
        %4387 = vst.msk [vmem:[#allocation2 + $0x18] sm:$0xff] %vm768, %v4373
        %4388 = vst [vmem:[#allocation2 + $0x20] sm:$0xff] %v4374
        %4389 = vst.msk [vmem:[#allocation2 + $0x28] sm:$0xff] %vm768, %v4375
        %4390 = vst [vmem:[#allocation2 + $0x30] sm:$0xff] %v4376
        %4391 = vst.msk [vmem:[#allocation2 + $0x38] sm:$0xff] %vm768, %v4377
        %4392 = vst [vmem:[#allocation2 + $0x40] sm:$0xff] %v4378
        %4393 = vst.msk [vmem:[#allocation2 + $0x48] sm:$0xff] %vm768, %v4379
        %4394 = vst [vmem:[#allocation2 + $0x50] sm:$0xff] %v4380
        %4395 = vst.msk [vmem:[#allocation2 + $0x58] sm:$0xff] %vm768, %v4381
        %4396 = vst [vmem:[#allocation2 + $0x60] sm:$0xff] %v4382
        %4397 = vst.msk [vmem:[#allocation2 + $0x68] sm:$0xff] %vm768, %v4383
        %4398 = vmatprep.subr.bf16.mxu0 0
        %4399 = vmatpush1.bf16.msra.mxu0 %v966
        %4400 = vmatprep.subr.bf16.mxu0 0
        %4401 = vmatpush1.bf16.msra.mxu0 0
        %4402 = vmatprep.subr.bf16.mxu0 0
        %4403 = vmatpush1.bf16.msra.mxu0 0
        %4404 = vmatprep.subr.bf16.mxu0 0
        %4405 = vmatpush1.bf16.msra.mxu0 0
        %4406 = vmatprep.subr.bf16.mxu0 0
        %4407 = vmatpush1.bf16.msra.mxu0 0
        %4408 = vmatprep.subr.bf16.mxu0 0
        %4409 = vmatpush1.bf16.msra.mxu0 0
        %4410 = vmatprep.subr.bf16.mxu0 0
        %4411 = vmatpush1.bf16.msra.mxu0 0
        %4412 = vmatprep.subr.bf16.mxu0 0
        %4413 = vmatpush1.bf16.msra.mxu0 0
        %4414 = vmatprep.subr.bf16.mxu0 0
        %4415 = vmatpush1.bf16.msra.mxu0 0
        %4416 = vmatprep.subr.bf16.mxu0 0
        %4417 = vmatpush1.bf16.msra.mxu0 0
        %4418 = vmatprep.subr.bf16.mxu0 0
        %4419 = vmatpush1.bf16.msra.mxu0 0
        %4420 = vmatprep.subr.bf16.mxu0 0
        %4421 = vmatpush1.bf16.msra.mxu0 0
        %4422 = vmatprep.subr.bf16.mxu0 0
        %4423 = vmatpush1.bf16.msra.mxu0 0
        %4424 = vmatprep.subr.bf16.mxu0 0
        %4425 = vmatpush1.bf16.msra.mxu0 0
        %4426 = vmatprep.subr.bf16.mxu0 0
        %4427 = vmatpush1.bf16.msra.mxu0 0
        %4428 = vmatprep.subr.bf16.mxu0 0
        %4429 = vmatpush1.bf16.msra.mxu0 0
        %4430 = vmatprep.mubr.bf16.mxu0 0
        %4431 = vmatmul.mubr.bf16.gmra.mrb[0].mxu0 %v4282
        %v4432 = vpop.f32.mrb[0].mxu0
        %v4433 = vadd.f32 %v751, %v4432
        %v4434 = vpop.f32.mrb[0].mxu0
        %v4435 = vpop.f32.mrb[0].mxu0
        %v4436 = vadd.f32 %v751, %v4435
        %v4437 = vpop.f32.mrb[0].mxu0
        %4438 = vmatprep.mubr.bf16.mxu0 0
        %4439 = vmatmul.mubr.bf16.gmra.mrb[0].mxu0 %v4285
        %v4440 = vpop.f32.mrb[0].mxu0
        %v4441 = vadd.f32 %v751, %v4440
        %v4442 = vpop.f32.mrb[0].mxu0
        %v4443 = vpop.f32.mrb[0].mxu0
        %v4444 = vadd.f32 %v751, %v4443
        %v4445 = vpop.f32.mrb[0].mxu0
        %4446 = vmatprep.mubr.bf16.mxu0 0
        %4447 = vmatmul.mubr.bf16.gmra.mrb[0].mxu0 %v4288
        %v4448 = vpop.f32.mrb[0].mxu0
        %v4449 = vadd.f32 %v751, %v4448
        %v4450 = vpop.f32.mrb[0].mxu0
        %v4451 = vpop.f32.mrb[0].mxu0
        %v4452 = vadd.f32 %v751, %v4451
        %v4453 = vpop.f32.mrb[0].mxu0
        %4454 = vmatprep.mubr.bf16.mxu0 0
        %4455 = vmatmul.mubr.bf16.gmra.mrb[0].mxu0 %v4291
        %v4456 = vpop.f32.mrb[0].mxu0
        %v4457 = vadd.f32 %v751, %v4456
        %v4458 = vpop.f32.mrb[0].mxu0
        %v4459 = vpop.f32.mrb[0].mxu0
        %v4460 = vpop.f32.mrb[0].mxu0
        %4461 = vdwg.mxu0
        %v4462 = vmax.f32 %v4433, 0.0
        %v4463 = vmax.f32 %v4436, 0.0
        %v4464 = vmax.f32 %v4441, 0.0
        %v4465 = vmax.f32 %v4444, 0.0
        %v4466 = vmax.f32 %v4449, 0.0
        %v4467 = vmax.f32 %v4452, 0.0
        %v4468 = vmax.f32 %v4457, 0.0
        %v4469 = vpack.c.bf16 %v4463, %v4462
        %v4470 = vpack.c.bf16 %v4465, %v4464
        %v4471 = vpack.c.bf16 %v4467, %v4466
        %v4472 = vpack.c.bf16 %v4468, %v4468
        %v4473 = vld [vmem:[#allocation3] sm:$0xff]
        %v4474 = vld [vmem:[#allocation3 + $0x8] sm:$0xff]
        %v4475 = vld [vmem:[#allocation3 + $0x10] sm:$0xff]
        %v4476 = vld [vmem:[#allocation3 + $0x18] sm:$0xff]
        %v4477 = vld [vmem:[#allocation3 + $0x20] sm:$0xff]
        %v4478 = vld [vmem:[#allocation3 + $0x28] sm:$0xff]
        %v4479 = vld [vmem:[#allocation3 + $0x30] sm:$0xff]
        %s4480 = scalar_lea.vmem %s5, 160
        %v4481 = vld [vmem:[%s4480] sm:$0xf]
        %v4482 = vld [vmem:[%s4480 + $0x4] sm:$0xf]
        %v4483 = vld [vmem:[%s4480 + $0x8] sm:$0xf]
        %v4484 = vld [vmem:[%s4480 + $0xc] sm:$0xf]
        %v4485 = vld [vmem:[%s4480 + $0x10] sm:$0xf]
        %v4486 = vld [vmem:[%s4480 + $0x14] sm:$0xf]
        %v4487 = vld [vmem:[%s4480 + $0x18] sm:$0xf]
        %v4488 = vld [vmem:[%s4480 + $0x1c] sm:$0xf]
        %v4497 = vunpack.c.l.b16 %v4481
        %v4498 = vunpack.c.l.b16 %v4482
        %v4499 = vunpack.c.l.b16 %v4483
        %v4500 = vunpack.c.l.b16 %v4484
        %v4501 = vunpack.c.l.b16 %v4485
        %v4502 = vunpack.c.l.b16 %v4486
        %v4503 = vunpack.c.l.b16 %v4487
        %v4504 = vunpack.c.l.b16 %v4488
        %v4505 = vpack.c.b16 %v4498, %v4497
        %v4506 = vpack.c.b16 %v4500, %v4499
        %v4507 = vpack.c.b16 %v4502, %v4501
        %v4508 = vpack.c.b16 %v4504, %v4503
        %v4514 = vsel %vm768, %v4469, 0
        %v4517 = vsel %vm768, %v4470, 0
        %v4520 = vsel %vm768, %v4471, 0
        %v4523 = vsel %vm768, %v4472, 0
        %4525 = vmatprep.subr.bf16.mxu0 0
        %4526 = vmatpush1.bf16.msra.mxu0 %v4505
        %4527 = vmatprep.subr.bf16.mxu0 0
        %4528 = vmatpush1.bf16.msra.mxu0 %v4506
        %4529 = vmatprep.subr.bf16.mxu0 0
        %4530 = vmatpush1.bf16.msra.mxu0 %v4507
        %4531 = vmatprep.subr.bf16.mxu0 0
        %4532 = vmatpush1.bf16.msra.mxu0 %v4508
        %4533 = vmatprep.subr.bf16.mxu0 0
        %4534 = vmatpush1.bf16.msra.mxu0 0
        %4535 = vmatprep.subr.bf16.mxu0 0
        %4536 = vmatpush1.bf16.msra.mxu0 0
        %4537 = vmatprep.subr.bf16.mxu0 0
        %4538 = vmatpush1.bf16.msra.mxu0 0
        %4539 = vmatprep.subr.bf16.mxu0 0
        %4540 = vmatpush1.bf16.msra.mxu0 0
        %4541 = vmatprep.subr.bf16.mxu0 0
        %4542 = vmatpush1.bf16.msra.mxu0 0
        %4543 = vmatprep.subr.bf16.mxu0 0
        %4544 = vmatpush1.bf16.msra.mxu0 0
        %4545 = vmatprep.subr.bf16.mxu0 0
        %4546 = vmatpush1.bf16.msra.mxu0 0
        %4547 = vmatprep.subr.bf16.mxu0 0
        %4548 = vmatpush1.bf16.msra.mxu0 0
        %4549 = vmatprep.subr.bf16.mxu0 0
        %4550 = vmatpush1.bf16.msra.mxu0 0
        %4551 = vmatprep.subr.bf16.mxu0 0
        %4552 = vmatpush1.bf16.msra.mxu0 0
        %4553 = vmatprep.subr.bf16.mxu0 0
        %4554 = vmatpush1.bf16.msra.mxu0 0
        %4555 = vmatprep.subr.bf16.mxu0 0
        %4556 = vmatpush1.bf16.msra.mxu0 0
        %4557 = vmatprep.mubr.bf16.mxu0 0
        %4558 = vmatmul.mubr.bf16.gmra.mrb[0].mxu0 %v4514
        %v4559 = vpop.f32.mrb[0].mxu0
        %v4560 = vadd.f32 0.0, %v4559
        %v4561 = vpop.f32.mrb[0].mxu0
        %v4562 = vpop.f32.mrb[0].mxu0
        %v4563 = vadd.f32 0.0, %v4562
        %v4564 = vpop.f32.mrb[0].mxu0
        %4565 = vmatprep.mubr.bf16.mxu0 0
        %4566 = vmatmul.mubr.bf16.gmra.mrb[0].mxu0 %v4517
        %v4567 = vpop.f32.mrb[0].mxu0
        %v4568 = vadd.f32 0.0, %v4567
        %v4569 = vpop.f32.mrb[0].mxu0
        %v4570 = vpop.f32.mrb[0].mxu0
        %v4571 = vadd.f32 0.0, %v4570
        %v4572 = vpop.f32.mrb[0].mxu0
        %4573 = vmatprep.mubr.bf16.mxu0 0
        %4574 = vmatmul.mubr.bf16.gmra.mrb[0].mxu0 %v4520
        %v4575 = vpop.f32.mrb[0].mxu0
        %v4576 = vadd.f32 0.0, %v4575
        %v4577 = vpop.f32.mrb[0].mxu0
        %v4578 = vpop.f32.mrb[0].mxu0
        %v4579 = vadd.f32 0.0, %v4578
        %v4580 = vpop.f32.mrb[0].mxu0
        %4581 = vmatprep.mubr.bf16.mxu0 0
        %4582 = vmatmul.mubr.bf16.gmra.mrb[0].mxu0 %v4523
        %v4583 = vpop.f32.mrb[0].mxu0
        %v4584 = vadd.f32 0.0, %v4583
        %v4585 = vpop.f32.mrb[0].mxu0
        %v4586 = vpop.f32.mrb[0].mxu0
        %v4587 = vpop.f32.mrb[0].mxu0
        %4588 = vdwg.mxu0
        %v4589 = vadd.f32 %v4473, %v4560
        %v4590 = vadd.f32 %v4474, %v4563
        %v4591 = vadd.f32 %v4475, %v4568
        %v4592 = vadd.f32 %v4476, %v4571
        %v4593 = vadd.f32 %v4477, %v4576
        %v4594 = vadd.f32 %v4478, %v4579
        %v4595 = vadd.f32 %v4479, %v4584
        %4596 = vst.msk [vmem:[#allocation3] sm:$0xff] %vm782, %v4589
        %4597 = vst.msk [vmem:[#allocation3 + $0x8] sm:$0xff] %vm782, %v4590
        %4598 = vst.msk [vmem:[#allocation3 + $0x10] sm:$0xff] %vm782, %v4591
        %4599 = vst.msk [vmem:[#allocation3 + $0x18] sm:$0xff] %vm782, %v4592
        %4600 = vst.msk [vmem:[#allocation3 + $0x20] sm:$0xff] %vm782, %v4593
        %4601 = vst.msk [vmem:[#allocation3 + $0x28] sm:$0xff] %vm782, %v4594
        %4602 = vst.msk [vmem:[#allocation3 + $0x30] sm:$0xff] %vm782, %v4595
        %4603 = vmatprep.subr.bf16.mxu0 0
        %4604 = vmatpush1.bf16.msra.mxu0 %v1173
        %4605 = vmatprep.subr.bf16.mxu0 0
        %4606 = vmatpush1.bf16.msra.mxu0 0
        %4607 = vmatprep.subr.bf16.mxu0 0
        %4608 = vmatpush1.bf16.msra.mxu0 0
        %4609 = vmatprep.subr.bf16.mxu0 0
        %4610 = vmatpush1.bf16.msra.mxu0 0
        %4611 = vmatprep.subr.bf16.mxu0 0
        %4612 = vmatpush1.bf16.msra.mxu0 0
        %4613 = vmatprep.subr.bf16.mxu0 0
        %4614 = vmatpush1.bf16.msra.mxu0 0
        %4615 = vmatprep.subr.bf16.mxu0 0
        %4616 = vmatpush1.bf16.msra.mxu0 0
        %4617 = vmatprep.subr.bf16.mxu0 0
        %4618 = vmatpush1.bf16.msra.mxu0 0
        %4619 = vmatprep.subr.bf16.mxu0 0
        %4620 = vmatpush1.bf16.msra.mxu0 0
        %4621 = vmatprep.subr.bf16.mxu0 0
        %4622 = vmatpush1.bf16.msra.mxu0 0
        %4623 = vmatprep.subr.bf16.mxu0 0
        %4624 = vmatpush1.bf16.msra.mxu0 0
        %4625 = vmatprep.subr.bf16.mxu0 0
        %4626 = vmatpush1.bf16.msra.mxu0 0
        %4627 = vmatprep.subr.bf16.mxu0 0
        %4628 = vmatpush1.bf16.msra.mxu0 0
        %4629 = vmatprep.subr.bf16.mxu0 0
        %4630 = vmatpush1.bf16.msra.mxu0 0
        %4631 = vmatprep.subr.bf16.mxu0 0
        %4632 = vmatpush1.bf16.msra.mxu0 0
        %4633 = vmatprep.subr.bf16.mxu0 0
        %4634 = vmatpush1.bf16.msra.mxu0 0
        %4635 = vmatprep.mubr.bf16.mxu0 0
        %4636 = vmatmul.mubr.bf16.gmra.mrb[0].mxu0 %v4282
        %v4637 = vpop.f32.mrb[0].mxu0
        %v4638 = vadd.f32 %v758, %v4637
        %v4639 = vpop.f32.mrb[0].mxu0
        %v4640 = vpop.f32.mrb[0].mxu0
        %v4641 = vadd.f32 %v758, %v4640
        %v4642 = vpop.f32.mrb[0].mxu0
        %4643 = vmatprep.mubr.bf16.mxu0 0
        %4644 = vmatmul.mubr.bf16.gmra.mrb[0].mxu0 %v4285
        %v4645 = vpop.f32.mrb[0].mxu0
        %v4646 = vadd.f32 %v758, %v4645
        %v4647 = vpop.f32.mrb[0].mxu0
        %v4648 = vpop.f32.mrb[0].mxu0
        %v4649 = vadd.f32 %v758, %v4648
        %v4650 = vpop.f32.mrb[0].mxu0
        %4651 = vmatprep.mubr.bf16.mxu0 0
        %4652 = vmatmul.mubr.bf16.gmra.mrb[0].mxu0 %v4288
        %v4653 = vpop.f32.mrb[0].mxu0
        %v4654 = vadd.f32 %v758, %v4653
        %v4655 = vpop.f32.mrb[0].mxu0
        %v4656 = vpop.f32.mrb[0].mxu0
        %v4657 = vadd.f32 %v758, %v4656
        %v4658 = vpop.f32.mrb[0].mxu0
        %4659 = vmatprep.mubr.bf16.mxu0 0
        %4660 = vmatmul.mubr.bf16.gmra.mrb[0].mxu0 %v4291
        %v4661 = vpop.f32.mrb[0].mxu0
        %v4662 = vadd.f32 %v758, %v4661
        %v4663 = vpop.f32.mrb[0].mxu0
        %v4664 = vpop.f32.mrb[0].mxu0
        %v4665 = vpop.f32.mrb[0].mxu0
        %4666 = vdwg.mxu0
        %v4667 = vmax.f32 %v4638, 0.0
        %v4668 = vmax.f32 %v4641, 0.0
        %v4669 = vmax.f32 %v4646, 0.0
        %v4670 = vmax.f32 %v4649, 0.0
        %v4671 = vmax.f32 %v4654, 0.0
        %v4672 = vmax.f32 %v4657, 0.0
        %v4673 = vmax.f32 %v4662, 0.0
        %v4674 = vpack.c.bf16 %v4668, %v4667
        %v4675 = vpack.c.bf16 %v4670, %v4669
        %v4676 = vpack.c.bf16 %v4672, %v4671
        %v4677 = vpack.c.bf16 %v4673, %v4673
        %v4679 = vsel %vm768, %v4674, 0
        %v4682 = vsel %vm768, %v4675, 0
        %v4685 = vsel %vm768, %v4676, 0
        %v4688 = vsel %vm768, %v4677, 0
        %4690 = vmatprep.subr.bf16.mxu0 0
        %4691 = vmatpush1.bf16.msra.mxu0 %v1266
        %4692 = vmatprep.subr.bf16.mxu0 0
        %4693 = vmatpush1.bf16.msra.mxu0 %v1267
        %4694 = vmatprep.subr.bf16.mxu0 0
        %4695 = vmatpush1.bf16.msra.mxu0 %v1268
        %4696 = vmatprep.subr.bf16.mxu0 0
        %4697 = vmatpush1.bf16.msra.mxu0 %v1269
        %4698 = vmatprep.subr.bf16.mxu0 0
        %4699 = vmatpush1.bf16.msra.mxu0 0
        %4700 = vmatprep.subr.bf16.mxu0 0
        %4701 = vmatpush1.bf16.msra.mxu0 0
        %4702 = vmatprep.subr.bf16.mxu0 0
        %4703 = vmatpush1.bf16.msra.mxu0 0
        %4704 = vmatprep.subr.bf16.mxu0 0
        %4705 = vmatpush1.bf16.msra.mxu0 0
        %4706 = vmatprep.subr.bf16.mxu0 0
        %4707 = vmatpush1.bf16.msra.mxu0 0
        %4708 = vmatprep.subr.bf16.mxu0 0
        %4709 = vmatpush1.bf16.msra.mxu0 0
        %4710 = vmatprep.subr.bf16.mxu0 0
        %4711 = vmatpush1.bf16.msra.mxu0 0
        %4712 = vmatprep.subr.bf16.mxu0 0
        %4713 = vmatpush1.bf16.msra.mxu0 0
        %4714 = vmatprep.subr.bf16.mxu0 0
        %4715 = vmatpush1.bf16.msra.mxu0 0
        %4716 = vmatprep.subr.bf16.mxu0 0
        %4717 = vmatpush1.bf16.msra.mxu0 0
        %4718 = vmatprep.subr.bf16.mxu0 0
        %4719 = vmatpush1.bf16.msra.mxu0 0
        %4720 = vmatprep.subr.bf16.mxu0 0
        %4721 = vmatpush1.bf16.msra.mxu0 0
        %4722 = vmatprep.mubr.bf16.mxu0 0
        %4723 = vmatmul.mubr.bf16.gmra.mrb[0].mxu0 %v4679
        %v4724 = vpop.f32.mrb[0].mxu0
        %v4725 = vadd.f32 %v765, %v4724
        %v4726 = vpop.f32.mrb[0].mxu0
        %v4727 = vpop.f32.mrb[0].mxu0
        %v4728 = vadd.f32 %v765, %v4727
        %v4729 = vpop.f32.mrb[0].mxu0
        %4730 = vmatprep.mubr.bf16.mxu0 0
        %4731 = vmatmul.mubr.bf16.gmra.mrb[0].mxu0 %v4682
        %v4732 = vpop.f32.mrb[0].mxu0
        %v4733 = vadd.f32 %v765, %v4732
        %v4734 = vpop.f32.mrb[0].mxu0
        %v4735 = vpop.f32.mrb[0].mxu0
        %v4736 = vadd.f32 %v765, %v4735
        %v4737 = vpop.f32.mrb[0].mxu0
        %4738 = vmatprep.mubr.bf16.mxu0 0
        %4739 = vmatmul.mubr.bf16.gmra.mrb[0].mxu0 %v4685
        %v4740 = vpop.f32.mrb[0].mxu0
        %v4741 = vadd.f32 %v765, %v4740
        %v4742 = vpop.f32.mrb[0].mxu0
        %v4743 = vpop.f32.mrb[0].mxu0
        %v4744 = vadd.f32 %v765, %v4743
        %v4745 = vpop.f32.mrb[0].mxu0
        %4746 = vmatprep.mubr.bf16.mxu0 0
        %4747 = vmatmul.mubr.bf16.gmra.mrb[0].mxu0 %v4688
        %v4748 = vpop.f32.mrb[0].mxu0
        %v4749 = vadd.f32 %v765, %v4748
        %v4750 = vpop.f32.mrb[0].mxu0
        %v4751 = vpop.f32.mrb[0].mxu0
        %v4752 = vpop.f32.mrb[0].mxu0
        %4753 = vdwg.mxu0
        %v4754 = vmax.f32 %v4725, 0.0
        %v4755 = vmax.f32 %v4728, 0.0
        %v4756 = vmax.f32 %v4733, 0.0
        %v4757 = vmax.f32 %v4736, 0.0
        %v4758 = vmax.f32 %v4741, 0.0
        %v4759 = vmax.f32 %v4744, 0.0
        %v4760 = vmax.f32 %v4749, 0.0
        %v4761 = vpack.c.bf16 %v4755, %v4754
        %v4762 = vpack.c.bf16 %v4757, %v4756
        %v4763 = vpack.c.bf16 %v4759, %v4758
        %v4764 = vpack.c.bf16 %v4760, %v4760
        %v4765 = vld [vmem:[#allocation4] sm:$0xff]
        %v4766 = vld [vmem:[#allocation4 + $0x8] sm:$0xff]
        %v4767 = vld [vmem:[#allocation4 + $0x10] sm:$0xff]
        %v4768 = vld [vmem:[#allocation4 + $0x18] sm:$0xff]
        %v4769 = vld [vmem:[#allocation4 + $0x20] sm:$0xff]
        %v4770 = vld [vmem:[#allocation4 + $0x28] sm:$0xff]
        %v4771 = vld [vmem:[#allocation4 + $0x30] sm:$0xff]
        %s4772 = scalar_lea.vmem %s11, 240
        %v4773 = vld [vmem:[%s4772] sm:$0xf]
        %v4774 = vld [vmem:[%s4772 + $0x4] sm:$0xf]
        %v4775 = vld [vmem:[%s4772 + $0x8] sm:$0xf]
        %v4776 = vld [vmem:[%s4772 + $0xc] sm:$0xf]
        %v4777 = vld [vmem:[%s4772 + $0x10] sm:$0xf]
        %v4778 = vld [vmem:[%s4772 + $0x14] sm:$0xf]
        %v4779 = vld [vmem:[%s4772 + $0x18] sm:$0xf]
        %v4780 = vld [vmem:[%s4772 + $0x1c] sm:$0xf]
        %v4781 = vld [vmem:[%s4772 + $0x20] sm:$0xf]
        %v4782 = vld [vmem:[%s4772 + $0x24] sm:$0xf]
        %v4783 = vld [vmem:[%s4772 + $0x28] sm:$0xf]
        %v4784 = vld [vmem:[%s4772 + $0x2c] sm:$0xf]
        %v4797 = vunpack.c.l.b16 %v4773
        %v4798 = vunpack.c.l.b16 %v4774
        %v4799 = vunpack.c.l.b16 %v4775
        %v4800 = vunpack.c.l.b16 %v4776
        %v4801 = vunpack.c.l.b16 %v4777
        %v4802 = vunpack.c.l.b16 %v4778
        %v4803 = vunpack.c.l.b16 %v4779
        %v4804 = vunpack.c.l.b16 %v4780
        %v4805 = vunpack.c.l.b16 %v4781
        %v4806 = vunpack.c.l.b16 %v4782
        %v4807 = vunpack.c.l.b16 %v4783
        %v4808 = vunpack.c.l.b16 %v4784
        %v4809 = vpack.c.b16 %v4798, %v4797
        %v4810 = vpack.c.b16 %v4800, %v4799
        %v4811 = vpack.c.b16 %v4802, %v4801
        %v4812 = vpack.c.b16 %v4804, %v4803
        %v4813 = vpack.c.b16 %v4806, %v4805
        %v4814 = vpack.c.b16 %v4808, %v4807
        %v4822 = vsel %vm782, %v4761, 0
        %v4825 = vsel %vm782, %v4762, 0
        %v4828 = vsel %vm782, %v4763, 0
        %v4831 = vsel %vm782, %v4764, 0
        %4833 = vmatprep.subr.bf16.mxu0 0
        %4834 = vmatpush1.bf16.msra.mxu0 %v4809
        %4835 = vmatprep.subr.bf16.mxu0 0
        %4836 = vmatpush1.bf16.msra.mxu0 %v4810
        %4837 = vmatprep.subr.bf16.mxu0 0
        %4838 = vmatpush1.bf16.msra.mxu0 %v4811
        %4839 = vmatprep.subr.bf16.mxu0 0
        %4840 = vmatpush1.bf16.msra.mxu0 %v4812
        %4841 = vmatprep.subr.bf16.mxu0 0
        %4842 = vmatpush1.bf16.msra.mxu0 %v4813
        %4843 = vmatprep.subr.bf16.mxu0 0
        %4844 = vmatpush1.bf16.msra.mxu0 %v4814
        %4845 = vmatprep.subr.bf16.mxu0 0
        %4846 = vmatpush1.bf16.msra.mxu0 0
        %4847 = vmatprep.subr.bf16.mxu0 0
        %4848 = vmatpush1.bf16.msra.mxu0 0
        %4849 = vmatprep.subr.bf16.mxu0 0
        %4850 = vmatpush1.bf16.msra.mxu0 0
        %4851 = vmatprep.subr.bf16.mxu0 0
        %4852 = vmatpush1.bf16.msra.mxu0 0
        %4853 = vmatprep.subr.bf16.mxu0 0
        %4854 = vmatpush1.bf16.msra.mxu0 0
        %4855 = vmatprep.subr.bf16.mxu0 0
        %4856 = vmatpush1.bf16.msra.mxu0 0
        %4857 = vmatprep.subr.bf16.mxu0 0
        %4858 = vmatpush1.bf16.msra.mxu0 0
        %4859 = vmatprep.subr.bf16.mxu0 0
        %4860 = vmatpush1.bf16.msra.mxu0 0
        %4861 = vmatprep.subr.bf16.mxu0 0
        %4862 = vmatpush1.bf16.msra.mxu0 0
        %4863 = vmatprep.subr.bf16.mxu0 0
        %4864 = vmatpush1.bf16.msra.mxu0 0
        %4865 = vmatprep.mubr.bf16.mxu0 0
        %4866 = vmatmul.mubr.bf16.gmra.mrb[0].mxu0 %v4822
        %v4867 = vpop.f32.mrb[0].mxu0
        %v4868 = vadd.f32 0.0, %v4867
        %v4869 = vpop.f32.mrb[0].mxu0
        %v4870 = vpop.f32.mrb[0].mxu0
        %v4871 = vadd.f32 0.0, %v4870
        %v4872 = vpop.f32.mrb[0].mxu0
        %4873 = vmatprep.mubr.bf16.mxu0 0
        %4874 = vmatmul.mubr.bf16.gmra.mrb[0].mxu0 %v4825
        %v4875 = vpop.f32.mrb[0].mxu0
        %v4876 = vadd.f32 0.0, %v4875
        %v4877 = vpop.f32.mrb[0].mxu0
        %v4878 = vpop.f32.mrb[0].mxu0
        %v4879 = vadd.f32 0.0, %v4878
        %v4880 = vpop.f32.mrb[0].mxu0
        %4881 = vmatprep.mubr.bf16.mxu0 0
        %4882 = vmatmul.mubr.bf16.gmra.mrb[0].mxu0 %v4828
        %v4883 = vpop.f32.mrb[0].mxu0
        %v4884 = vadd.f32 0.0, %v4883
        %v4885 = vpop.f32.mrb[0].mxu0
        %v4886 = vpop.f32.mrb[0].mxu0
        %v4887 = vadd.f32 0.0, %v4886
        %v4888 = vpop.f32.mrb[0].mxu0
        %4889 = vmatprep.mubr.bf16.mxu0 0
        %4890 = vmatmul.mubr.bf16.gmra.mrb[0].mxu0 %v4831
        %v4891 = vpop.f32.mrb[0].mxu0
        %v4892 = vadd.f32 0.0, %v4891
        %v4893 = vpop.f32.mrb[0].mxu0
        %v4894 = vpop.f32.mrb[0].mxu0
        %v4895 = vpop.f32.mrb[0].mxu0
        %4896 = vdwg.mxu0
        %v4897 = vadd.f32 %v4765, %v4868
        %v4898 = vadd.f32 %v4766, %v4871
        %v4899 = vadd.f32 %v4767, %v4876
        %v4900 = vadd.f32 %v4768, %v4879
        %v4901 = vadd.f32 %v4769, %v4884
        %v4902 = vadd.f32 %v4770, %v4887
        %v4903 = vadd.f32 %v4771, %v4892
        %4904 = vst.msk [vmem:[#allocation4] sm:$0xff] %vm782, %v4897
        %4905 = vst.msk [vmem:[#allocation4 + $0x8] sm:$0xff] %vm782, %v4898
        %4906 = vst.msk [vmem:[#allocation4 + $0x10] sm:$0xff] %vm782, %v4899
        %4907 = vst.msk [vmem:[#allocation4 + $0x18] sm:$0xff] %vm782, %v4900
        %4908 = vst.msk [vmem:[#allocation4 + $0x20] sm:$0xff] %vm782, %v4901
        %4909 = vst.msk [vmem:[#allocation4 + $0x28] sm:$0xff] %vm782, %v4902
        %4910 = vst.msk [vmem:[#allocation4 + $0x30] sm:$0xff] %vm782, %v4903
        %s4911 = scalar_lea.vmem %s685, 168 [#allocation5]
        %v4912 = vld [vmem:[%s4911] sm:$0xf]
        %v4913 = vld [vmem:[%s4911 + $0x4] sm:$0xf]
        %v4914 = vld [vmem:[%s4911 + $0x8] sm:$0xf]
        %v4915 = vld [vmem:[%s4911 + $0xc] sm:$0xf]
        %v4916 = vld [vmem:[%s4911 + $0x10] sm:$0xf]
        %v4917 = vld [vmem:[%s4911 + $0x14] sm:$0xf]
        %v4918 = vld [vmem:[%s4911 + $0x18] sm:$0xf]
        %v4919 = vld [vmem:[#allocation2] sm:$0xff]
        %v4920 = vld [vmem:[#allocation2 + $0x8] sm:$0xff]
        %v4921 = vld [vmem:[#allocation2 + $0x10] sm:$0xff]
        %v4922 = vld [vmem:[#allocation2 + $0x18] sm:$0xff]
        %v4923 = vld [vmem:[#allocation2 + $0x20] sm:$0xff]
        %v4924 = vld [vmem:[#allocation2 + $0x28] sm:$0xff]
        %v4925 = vld [vmem:[#allocation2 + $0x30] sm:$0xff]
        %v4926 = vld [vmem:[#allocation2 + $0x38] sm:$0xff]
        %v4927 = vld [vmem:[#allocation2 + $0x40] sm:$0xff]
        %v4928 = vld [vmem:[#allocation2 + $0x48] sm:$0xff]
        %v4929 = vld [vmem:[#allocation2 + $0x50] sm:$0xff]
        %v4930 = vld [vmem:[#allocation2 + $0x58] sm:$0xff]
        %v4931 = vld [vmem:[#allocation2 + $0x60] sm:$0xff]
        %v4932 = vld [vmem:[#allocation2 + $0x68] sm:$0xff]
        %s4933 = scalar_lea.vmem %s1, 24
        %v4934 = vld [vmem:[%s4933] sm:$0xf]
        %v4942 = vunpack.c.l.b16 %v4912
        %v4943 = vunpack.c.l.b16 %v4913
        %v4944 = vunpack.c.l.b16 %v4914
        %v4945 = vunpack.c.l.b16 %v4915
        %v4946 = vunpack.c.l.b16 %v4916
        %v4947 = vunpack.c.l.b16 %v4917
        %v4948 = vunpack.c.l.b16 %v4918
        %v4949 = vpack.c.b16 %v4943, %v4942
        %v4950 = vpack.c.b16 %v4945, %v4944
        %v4951 = vpack.c.b16 %v4947, %v4946
        %v4952 = vpack.c.b16 %v4948, %v4948
        %v4955 = vunpack.c.l.s4 1983009808
        %v4956 = vunpack.c.0.s8 %v4955
        %v4957 = vlaneseq
        %v4958 = vshrl.u32 %v4957, 7
        %v4959 = vsub.s32 %v4956, %v4958
        %v4960 = vrot.slane %v4934, %v4959
        %v4961 = vcombine.high %v4960, %v4960
        %v4963 = vsel %vm846, %v4949, 0
        %v4966 = vsel %vm846, %v4950, 0
        %v4969 = vsel %vm846, %v4951, 0
        %v4972 = vsel %vm846, %v4952, 0
        %v4975 = vsel %vm859, %v4960, 0
        %v4978 = vsel %vm859, %v4961, 0
        %4980 = vmatprep.subr.bf16.mxu0 %v4978
        %4981 = vmatpush1.bf16.msra.mxu0 %v4975
        %4982 = vmatprep.subr.bf16.mxu0 0
        %4983 = vmatpush1.bf16.msra.mxu0 0
        %4984 = vmatprep.subr.bf16.mxu0 0
        %4985 = vmatpush1.bf16.msra.mxu0 0
        %4986 = vmatprep.subr.bf16.mxu0 0
        %4987 = vmatpush1.bf16.msra.mxu0 0
        %4988 = vmatprep.subr.bf16.mxu0 0
        %4989 = vmatpush1.bf16.msra.mxu0 0
        %4990 = vmatprep.subr.bf16.mxu0 0
        %4991 = vmatpush1.bf16.msra.mxu0 0
        %4992 = vmatprep.subr.bf16.mxu0 0
        %4993 = vmatpush1.bf16.msra.mxu0 0
        %4994 = vmatprep.subr.bf16.mxu0 0
        %4995 = vmatpush1.bf16.msra.mxu0 0
        %4996 = vmatprep.subr.bf16.mxu0 0
        %4997 = vmatpush1.bf16.msra.mxu0 0
        %4998 = vmatprep.subr.bf16.mxu0 0
        %4999 = vmatpush1.bf16.msra.mxu0 0
        %5000 = vmatprep.subr.bf16.mxu0 0
        %5001 = vmatpush1.bf16.msra.mxu0 0
        %5002 = vmatprep.subr.bf16.mxu0 0
        %5003 = vmatpush1.bf16.msra.mxu0 0
        %5004 = vmatprep.subr.bf16.mxu0 0
        %5005 = vmatpush1.bf16.msra.mxu0 0
        %5006 = vmatprep.subr.bf16.mxu0 0
        %5007 = vmatpush1.bf16.msra.mxu0 0
        %5008 = vmatprep.subr.bf16.mxu0 0
        %5009 = vmatpush1.bf16.msra.mxu0 0
        %5010 = vmatprep.subr.bf16.mxu0 0
        %5011 = vmatpush1.bf16.msra.mxu0 0
        %5012 = vmatprep.mubr.bf16.mxu0 0
        %5013 = vmatmul.mubr.bf16.gmra.mrb[0].mxu0 %v4963
        %v5014 = vpop.f32.mrb[0].mxu0
        %v5015 = vadd.f32 0.0, %v5014
        %v5016 = vpop.f32.mrb[0].mxu0
        %v5017 = vadd.f32 0.0, %v5016
        %v5018 = vpop.f32.mrb[0].mxu0
        %v5019 = vadd.f32 0.0, %v5018
        %v5020 = vpop.f32.mrb[0].mxu0
        %v5021 = vadd.f32 0.0, %v5020
        %5022 = vmatprep.mubr.bf16.mxu0 0
        %5023 = vmatmul.mubr.bf16.gmra.mrb[0].mxu0 %v4966
        %v5024 = vpop.f32.mrb[0].mxu0
        %v5025 = vadd.f32 0.0, %v5024
        %v5026 = vpop.f32.mrb[0].mxu0
        %v5027 = vadd.f32 0.0, %v5026
        %v5028 = vpop.f32.mrb[0].mxu0
        %v5029 = vadd.f32 0.0, %v5028
        %v5030 = vpop.f32.mrb[0].mxu0
        %v5031 = vadd.f32 0.0, %v5030
        %5032 = vmatprep.mubr.bf16.mxu0 0
        %5033 = vmatmul.mubr.bf16.gmra.mrb[0].mxu0 %v4969
        %v5034 = vpop.f32.mrb[0].mxu0
        %v5035 = vadd.f32 0.0, %v5034
        %v5036 = vpop.f32.mrb[0].mxu0
        %v5037 = vadd.f32 0.0, %v5036
        %v5038 = vpop.f32.mrb[0].mxu0
        %v5039 = vadd.f32 0.0, %v5038
        %v5040 = vpop.f32.mrb[0].mxu0
        %v5041 = vadd.f32 0.0, %v5040
        %5042 = vmatprep.mubr.bf16.mxu0 0
        %5043 = vmatmul.mubr.bf16.gmra.mrb[0].mxu0 %v4972
        %v5044 = vpop.f32.mrb[0].mxu0
        %v5045 = vadd.f32 0.0, %v5044
        %v5046 = vpop.f32.mrb[0].mxu0
        %v5047 = vadd.f32 0.0, %v5046
        %v5048 = vpop.f32.mrb[0].mxu0
        %v5049 = vpop.f32.mrb[0].mxu0
        %5050 = vdwg.mxu0
        %v5051 = vadd.f32 %v4919, %v5015
        %v5052 = vadd.f32 %v4920, %v5017
        %v5053 = vadd.f32 %v4921, %v5019
        %v5054 = vadd.f32 %v4922, %v5021
        %v5055 = vadd.f32 %v4923, %v5025
        %v5056 = vadd.f32 %v4924, %v5027
        %v5057 = vadd.f32 %v4925, %v5029
        %v5058 = vadd.f32 %v4926, %v5031
        %v5059 = vadd.f32 %v4927, %v5035
        %v5060 = vadd.f32 %v4928, %v5037
        %v5061 = vadd.f32 %v4929, %v5039
        %v5062 = vadd.f32 %v4930, %v5041
        %v5063 = vadd.f32 %v4931, %v5045
        %v5064 = vadd.f32 %v4932, %v5047
        %5065 = vst [vmem:[#allocation2] sm:$0xff] %v5051
        %5066 = vst.msk [vmem:[#allocation2 + $0x8] sm:$0xff] %vm768, %v5052
        %5067 = vst [vmem:[#allocation2 + $0x10] sm:$0xff] %v5053
        %5068 = vst.msk [vmem:[#allocation2 + $0x18] sm:$0xff] %vm768, %v5054
        %5069 = vst [vmem:[#allocation2 + $0x20] sm:$0xff] %v5055
        %5070 = vst.msk [vmem:[#allocation2 + $0x28] sm:$0xff] %vm768, %v5056
        %5071 = vst [vmem:[#allocation2 + $0x30] sm:$0xff] %v5057
        %5072 = vst.msk [vmem:[#allocation2 + $0x38] sm:$0xff] %vm768, %v5058
        %5073 = vst [vmem:[#allocation2 + $0x40] sm:$0xff] %v5059
        %5074 = vst.msk [vmem:[#allocation2 + $0x48] sm:$0xff] %vm768, %v5060
        %5075 = vst [vmem:[#allocation2 + $0x50] sm:$0xff] %v5061
        %5076 = vst.msk [vmem:[#allocation2 + $0x58] sm:$0xff] %vm768, %v5062
        %5077 = vst [vmem:[#allocation2 + $0x60] sm:$0xff] %v5063
        %5078 = vst.msk [vmem:[#allocation2 + $0x68] sm:$0xff] %vm768, %v5064
        %5079 = vmatprep.subr.bf16.mxu0 0
        %5080 = vmatpush1.bf16.msra.mxu0 %v966
        %5081 = vmatprep.subr.bf16.mxu0 0
        %5082 = vmatpush1.bf16.msra.mxu0 0
        %5083 = vmatprep.subr.bf16.mxu0 0
        %5084 = vmatpush1.bf16.msra.mxu0 0
        %5085 = vmatprep.subr.bf16.mxu0 0
        %5086 = vmatpush1.bf16.msra.mxu0 0
        %5087 = vmatprep.subr.bf16.mxu0 0
        %5088 = vmatpush1.bf16.msra.mxu0 0
        %5089 = vmatprep.subr.bf16.mxu0 0
        %5090 = vmatpush1.bf16.msra.mxu0 0
        %5091 = vmatprep.subr.bf16.mxu0 0
        %5092 = vmatpush1.bf16.msra.mxu0 0
        %5093 = vmatprep.subr.bf16.mxu0 0
        %5094 = vmatpush1.bf16.msra.mxu0 0
        %5095 = vmatprep.subr.bf16.mxu0 0
        %5096 = vmatpush1.bf16.msra.mxu0 0
        %5097 = vmatprep.subr.bf16.mxu0 0
        %5098 = vmatpush1.bf16.msra.mxu0 0
        %5099 = vmatprep.subr.bf16.mxu0 0
        %5100 = vmatpush1.bf16.msra.mxu0 0
        %5101 = vmatprep.subr.bf16.mxu0 0
        %5102 = vmatpush1.bf16.msra.mxu0 0
        %5103 = vmatprep.subr.bf16.mxu0 0
        %5104 = vmatpush1.bf16.msra.mxu0 0
        %5105 = vmatprep.subr.bf16.mxu0 0
        %5106 = vmatpush1.bf16.msra.mxu0 0
        %5107 = vmatprep.subr.bf16.mxu0 0
        %5108 = vmatpush1.bf16.msra.mxu0 0
        %5109 = vmatprep.subr.bf16.mxu0 0
        %5110 = vmatpush1.bf16.msra.mxu0 0
        %5111 = vmatprep.mubr.bf16.mxu0 0
        %5112 = vmatmul.mubr.bf16.gmra.mrb[0].mxu0 %v4963
        %v5113 = vpop.f32.mrb[0].mxu0
        %v5114 = vadd.f32 %v751, %v5113
        %v5115 = vpop.f32.mrb[0].mxu0
        %v5116 = vpop.f32.mrb[0].mxu0
        %v5117 = vadd.f32 %v751, %v5116
        %v5118 = vpop.f32.mrb[0].mxu0
        %5119 = vmatprep.mubr.bf16.mxu0 0
        %5120 = vmatmul.mubr.bf16.gmra.mrb[0].mxu0 %v4966
        %v5121 = vpop.f32.mrb[0].mxu0
        %v5122 = vadd.f32 %v751, %v5121
        %v5123 = vpop.f32.mrb[0].mxu0
        %v5124 = vpop.f32.mrb[0].mxu0
        %v5125 = vadd.f32 %v751, %v5124
        %v5126 = vpop.f32.mrb[0].mxu0
        %5127 = vmatprep.mubr.bf16.mxu0 0
        %5128 = vmatmul.mubr.bf16.gmra.mrb[0].mxu0 %v4969
        %v5129 = vpop.f32.mrb[0].mxu0
        %v5130 = vadd.f32 %v751, %v5129
        %v5131 = vpop.f32.mrb[0].mxu0
        %v5132 = vpop.f32.mrb[0].mxu0
        %v5133 = vadd.f32 %v751, %v5132
        %v5134 = vpop.f32.mrb[0].mxu0
        %5135 = vmatprep.mubr.bf16.mxu0 0
        %5136 = vmatmul.mubr.bf16.gmra.mrb[0].mxu0 %v4972
        %v5137 = vpop.f32.mrb[0].mxu0
        %v5138 = vadd.f32 %v751, %v5137
        %v5139 = vpop.f32.mrb[0].mxu0
        %v5140 = vpop.f32.mrb[0].mxu0
        %v5141 = vpop.f32.mrb[0].mxu0
        %5142 = vdwg.mxu0
        %v5143 = vmax.f32 %v5114, 0.0
        %v5144 = vmax.f32 %v5117, 0.0
        %v5145 = vmax.f32 %v5122, 0.0
        %v5146 = vmax.f32 %v5125, 0.0
        %v5147 = vmax.f32 %v5130, 0.0
        %v5148 = vmax.f32 %v5133, 0.0
        %v5149 = vmax.f32 %v5138, 0.0
        %v5150 = vpack.c.bf16 %v5144, %v5143
        %v5151 = vpack.c.bf16 %v5146, %v5145
        %v5152 = vpack.c.bf16 %v5148, %v5147
        %v5153 = vpack.c.bf16 %v5149, %v5149
        %v5154 = vld [vmem:[#allocation3] sm:$0xff]
        %v5155 = vld [vmem:[#allocation3 + $0x8] sm:$0xff]
        %v5156 = vld [vmem:[#allocation3 + $0x10] sm:$0xff]
        %v5157 = vld [vmem:[#allocation3 + $0x18] sm:$0xff]
        %v5158 = vld [vmem:[#allocation3 + $0x20] sm:$0xff]
        %v5159 = vld [vmem:[#allocation3 + $0x28] sm:$0xff]
        %v5160 = vld [vmem:[#allocation3 + $0x30] sm:$0xff]
        %s5161 = scalar_lea.vmem %s5, 192
        %v5162 = vld [vmem:[%s5161] sm:$0xf]
        %v5163 = vld [vmem:[%s5161 + $0x4] sm:$0xf]
        %v5164 = vld [vmem:[%s5161 + $0x8] sm:$0xf]
        %v5165 = vld [vmem:[%s5161 + $0xc] sm:$0xf]
        %v5166 = vld [vmem:[%s5161 + $0x10] sm:$0xf]
        %v5167 = vld [vmem:[%s5161 + $0x14] sm:$0xf]
        %v5168 = vld [vmem:[%s5161 + $0x18] sm:$0xf]
        %v5169 = vld [vmem:[%s5161 + $0x1c] sm:$0xf]
        %v5178 = vunpack.c.l.b16 %v5162
        %v5179 = vunpack.c.l.b16 %v5163
        %v5180 = vunpack.c.l.b16 %v5164
        %v5181 = vunpack.c.l.b16 %v5165
        %v5182 = vunpack.c.l.b16 %v5166
        %v5183 = vunpack.c.l.b16 %v5167
        %v5184 = vunpack.c.l.b16 %v5168
        %v5185 = vunpack.c.l.b16 %v5169
        %v5186 = vpack.c.b16 %v5179, %v5178
        %v5187 = vpack.c.b16 %v5181, %v5180
        %v5188 = vpack.c.b16 %v5183, %v5182
        %v5189 = vpack.c.b16 %v5185, %v5184
        %v5195 = vsel %vm768, %v5150, 0
        %v5198 = vsel %vm768, %v5151, 0
        %v5201 = vsel %vm768, %v5152, 0
        %v5204 = vsel %vm768, %v5153, 0
        %5206 = vmatprep.subr.bf16.mxu0 0
        %5207 = vmatpush1.bf16.msra.mxu0 %v5186
        %5208 = vmatprep.subr.bf16.mxu0 0
        %5209 = vmatpush1.bf16.msra.mxu0 %v5187
        %5210 = vmatprep.subr.bf16.mxu0 0
        %5211 = vmatpush1.bf16.msra.mxu0 %v5188
        %5212 = vmatprep.subr.bf16.mxu0 0
        %5213 = vmatpush1.bf16.msra.mxu0 %v5189
        %5214 = vmatprep.subr.bf16.mxu0 0
        %5215 = vmatpush1.bf16.msra.mxu0 0
        %5216 = vmatprep.subr.bf16.mxu0 0
        %5217 = vmatpush1.bf16.msra.mxu0 0
        %5218 = vmatprep.subr.bf16.mxu0 0
        %5219 = vmatpush1.bf16.msra.mxu0 0
        %5220 = vmatprep.subr.bf16.mxu0 0
        %5221 = vmatpush1.bf16.msra.mxu0 0
        %5222 = vmatprep.subr.bf16.mxu0 0
        %5223 = vmatpush1.bf16.msra.mxu0 0
        %5224 = vmatprep.subr.bf16.mxu0 0
        %5225 = vmatpush1.bf16.msra.mxu0 0
        %5226 = vmatprep.subr.bf16.mxu0 0
        %5227 = vmatpush1.bf16.msra.mxu0 0
        %5228 = vmatprep.subr.bf16.mxu0 0
        %5229 = vmatpush1.bf16.msra.mxu0 0
        %5230 = vmatprep.subr.bf16.mxu0 0
        %5231 = vmatpush1.bf16.msra.mxu0 0
        %5232 = vmatprep.subr.bf16.mxu0 0
        %5233 = vmatpush1.bf16.msra.mxu0 0
        %5234 = vmatprep.subr.bf16.mxu0 0
        %5235 = vmatpush1.bf16.msra.mxu0 0
        %5236 = vmatprep.subr.bf16.mxu0 0
        %5237 = vmatpush1.bf16.msra.mxu0 0
        %5238 = vmatprep.mubr.bf16.mxu0 0
        %5239 = vmatmul.mubr.bf16.gmra.mrb[0].mxu0 %v5195
        %v5240 = vpop.f32.mrb[0].mxu0
        %v5241 = vadd.f32 0.0, %v5240
        %v5242 = vpop.f32.mrb[0].mxu0
        %v5243 = vpop.f32.mrb[0].mxu0
        %v5244 = vadd.f32 0.0, %v5243
        %v5245 = vpop.f32.mrb[0].mxu0
        %5246 = vmatprep.mubr.bf16.mxu0 0
        %5247 = vmatmul.mubr.bf16.gmra.mrb[0].mxu0 %v5198
        %v5248 = vpop.f32.mrb[0].mxu0
        %v5249 = vadd.f32 0.0, %v5248
        %v5250 = vpop.f32.mrb[0].mxu0
        %v5251 = vpop.f32.mrb[0].mxu0
        %v5252 = vadd.f32 0.0, %v5251
        %v5253 = vpop.f32.mrb[0].mxu0
        %5254 = vmatprep.mubr.bf16.mxu0 0
        %5255 = vmatmul.mubr.bf16.gmra.mrb[0].mxu0 %v5201
        %v5256 = vpop.f32.mrb[0].mxu0
        %v5257 = vadd.f32 0.0, %v5256
        %v5258 = vpop.f32.mrb[0].mxu0
        %v5259 = vpop.f32.mrb[0].mxu0
        %v5260 = vadd.f32 0.0, %v5259
        %v5261 = vpop.f32.mrb[0].mxu0
        %5262 = vmatprep.mubr.bf16.mxu0 0
        %5263 = vmatmul.mubr.bf16.gmra.mrb[0].mxu0 %v5204
        %v5264 = vpop.f32.mrb[0].mxu0
        %v5265 = vadd.f32 0.0, %v5264
        %v5266 = vpop.f32.mrb[0].mxu0
        %v5267 = vpop.f32.mrb[0].mxu0
        %v5268 = vpop.f32.mrb[0].mxu0
        %5269 = vdwg.mxu0
        %v5270 = vadd.f32 %v5154, %v5241
        %v5271 = vadd.f32 %v5155, %v5244
        %v5272 = vadd.f32 %v5156, %v5249
        %v5273 = vadd.f32 %v5157, %v5252
        %v5274 = vadd.f32 %v5158, %v5257
        %v5275 = vadd.f32 %v5159, %v5260
        %v5276 = vadd.f32 %v5160, %v5265
        %5277 = vst.msk [vmem:[#allocation3] sm:$0xff] %vm782, %v5270
        %5278 = vst.msk [vmem:[#allocation3 + $0x8] sm:$0xff] %vm782, %v5271
        %5279 = vst.msk [vmem:[#allocation3 + $0x10] sm:$0xff] %vm782, %v5272
        %5280 = vst.msk [vmem:[#allocation3 + $0x18] sm:$0xff] %vm782, %v5273
        %5281 = vst.msk [vmem:[#allocation3 + $0x20] sm:$0xff] %vm782, %v5274
        %5282 = vst.msk [vmem:[#allocation3 + $0x28] sm:$0xff] %vm782, %v5275
        %5283 = vst.msk [vmem:[#allocation3 + $0x30] sm:$0xff] %vm782, %v5276
        %5284 = vmatprep.subr.bf16.mxu0 0
        %5285 = vmatpush1.bf16.msra.mxu0 %v1173
        %5286 = vmatprep.subr.bf16.mxu0 0
        %5287 = vmatpush1.bf16.msra.mxu0 0
        %5288 = vmatprep.subr.bf16.mxu0 0
        %5289 = vmatpush1.bf16.msra.mxu0 0
        %5290 = vmatprep.subr.bf16.mxu0 0
        %5291 = vmatpush1.bf16.msra.mxu0 0
        %5292 = vmatprep.subr.bf16.mxu0 0
        %5293 = vmatpush1.bf16.msra.mxu0 0
        %5294 = vmatprep.subr.bf16.mxu0 0
        %5295 = vmatpush1.bf16.msra.mxu0 0
        %5296 = vmatprep.subr.bf16.mxu0 0
        %5297 = vmatpush1.bf16.msra.mxu0 0
        %5298 = vmatprep.subr.bf16.mxu0 0
        %5299 = vmatpush1.bf16.msra.mxu0 0
        %5300 = vmatprep.subr.bf16.mxu0 0
        %5301 = vmatpush1.bf16.msra.mxu0 0
        %5302 = vmatprep.subr.bf16.mxu0 0
        %5303 = vmatpush1.bf16.msra.mxu0 0
        %5304 = vmatprep.subr.bf16.mxu0 0
        %5305 = vmatpush1.bf16.msra.mxu0 0
        %5306 = vmatprep.subr.bf16.mxu0 0
        %5307 = vmatpush1.bf16.msra.mxu0 0
        %5308 = vmatprep.subr.bf16.mxu0 0
        %5309 = vmatpush1.bf16.msra.mxu0 0
        %5310 = vmatprep.subr.bf16.mxu0 0
        %5311 = vmatpush1.bf16.msra.mxu0 0
        %5312 = vmatprep.subr.bf16.mxu0 0
        %5313 = vmatpush1.bf16.msra.mxu0 0
        %5314 = vmatprep.subr.bf16.mxu0 0
        %5315 = vmatpush1.bf16.msra.mxu0 0
        %5316 = vmatprep.mubr.bf16.mxu0 0
        %5317 = vmatmul.mubr.bf16.gmra.mrb[0].mxu0 %v4963
        %v5318 = vpop.f32.mrb[0].mxu0
        %v5319 = vadd.f32 %v758, %v5318
        %v5320 = vpop.f32.mrb[0].mxu0
        %v5321 = vpop.f32.mrb[0].mxu0
        %v5322 = vadd.f32 %v758, %v5321
        %v5323 = vpop.f32.mrb[0].mxu0
        %5324 = vmatprep.mubr.bf16.mxu0 0
        %5325 = vmatmul.mubr.bf16.gmra.mrb[0].mxu0 %v4966
        %v5326 = vpop.f32.mrb[0].mxu0
        %v5327 = vadd.f32 %v758, %v5326
        %v5328 = vpop.f32.mrb[0].mxu0
        %v5329 = vpop.f32.mrb[0].mxu0
        %v5330 = vadd.f32 %v758, %v5329
        %v5331 = vpop.f32.mrb[0].mxu0
        %5332 = vmatprep.mubr.bf16.mxu0 0
        %5333 = vmatmul.mubr.bf16.gmra.mrb[0].mxu0 %v4969
        %v5334 = vpop.f32.mrb[0].mxu0
        %v5335 = vadd.f32 %v758, %v5334
        %v5336 = vpop.f32.mrb[0].mxu0
        %v5337 = vpop.f32.mrb[0].mxu0
        %v5338 = vadd.f32 %v758, %v5337
        %v5339 = vpop.f32.mrb[0].mxu0
        %5340 = vmatprep.mubr.bf16.mxu0 0
        %5341 = vmatmul.mubr.bf16.gmra.mrb[0].mxu0 %v4972
        %v5342 = vpop.f32.mrb[0].mxu0
        %v5343 = vadd.f32 %v758, %v5342
        %v5344 = vpop.f32.mrb[0].mxu0
        %v5345 = vpop.f32.mrb[0].mxu0
        %v5346 = vpop.f32.mrb[0].mxu0
        %5347 = vdwg.mxu0
        %v5348 = vmax.f32 %v5319, 0.0
        %v5349 = vmax.f32 %v5322, 0.0
        %v5350 = vmax.f32 %v5327, 0.0
        %v5351 = vmax.f32 %v5330, 0.0
        %v5352 = vmax.f32 %v5335, 0.0
        %v5353 = vmax.f32 %v5338, 0.0
        %v5354 = vmax.f32 %v5343, 0.0
        %v5355 = vpack.c.bf16 %v5349, %v5348
        %v5356 = vpack.c.bf16 %v5351, %v5350
        %v5357 = vpack.c.bf16 %v5353, %v5352
        %v5358 = vpack.c.bf16 %v5354, %v5354
        %v5360 = vsel %vm768, %v5355, 0
        %v5363 = vsel %vm768, %v5356, 0
        %v5366 = vsel %vm768, %v5357, 0
        %v5369 = vsel %vm768, %v5358, 0
        %5371 = vmatprep.subr.bf16.mxu0 0
        %5372 = vmatpush1.bf16.msra.mxu0 %v1266
        %5373 = vmatprep.subr.bf16.mxu0 0
        %5374 = vmatpush1.bf16.msra.mxu0 %v1267
        %5375 = vmatprep.subr.bf16.mxu0 0
        %5376 = vmatpush1.bf16.msra.mxu0 %v1268
        %5377 = vmatprep.subr.bf16.mxu0 0
        %5378 = vmatpush1.bf16.msra.mxu0 %v1269
        %5379 = vmatprep.subr.bf16.mxu0 0
        %5380 = vmatpush1.bf16.msra.mxu0 0
        %5381 = vmatprep.subr.bf16.mxu0 0
        %5382 = vmatpush1.bf16.msra.mxu0 0
        %5383 = vmatprep.subr.bf16.mxu0 0
        %5384 = vmatpush1.bf16.msra.mxu0 0
        %5385 = vmatprep.subr.bf16.mxu0 0
        %5386 = vmatpush1.bf16.msra.mxu0 0
        %5387 = vmatprep.subr.bf16.mxu0 0
        %5388 = vmatpush1.bf16.msra.mxu0 0
        %5389 = vmatprep.subr.bf16.mxu0 0
        %5390 = vmatpush1.bf16.msra.mxu0 0
        %5391 = vmatprep.subr.bf16.mxu0 0
        %5392 = vmatpush1.bf16.msra.mxu0 0
        %5393 = vmatprep.subr.bf16.mxu0 0
        %5394 = vmatpush1.bf16.msra.mxu0 0
        %5395 = vmatprep.subr.bf16.mxu0 0
        %5396 = vmatpush1.bf16.msra.mxu0 0
        %5397 = vmatprep.subr.bf16.mxu0 0
        %5398 = vmatpush1.bf16.msra.mxu0 0
        %5399 = vmatprep.subr.bf16.mxu0 0
        %5400 = vmatpush1.bf16.msra.mxu0 0
        %5401 = vmatprep.subr.bf16.mxu0 0
        %5402 = vmatpush1.bf16.msra.mxu0 0
        %5403 = vmatprep.mubr.bf16.mxu0 0
        %5404 = vmatmul.mubr.bf16.gmra.mrb[0].mxu0 %v5360
        %v5405 = vpop.f32.mrb[0].mxu0
        %v5406 = vadd.f32 %v765, %v5405
        %v5407 = vpop.f32.mrb[0].mxu0
        %v5408 = vpop.f32.mrb[0].mxu0
        %v5409 = vadd.f32 %v765, %v5408
        %v5410 = vpop.f32.mrb[0].mxu0
        %5411 = vmatprep.mubr.bf16.mxu0 0
        %5412 = vmatmul.mubr.bf16.gmra.mrb[0].mxu0 %v5363
        %v5413 = vpop.f32.mrb[0].mxu0
        %v5414 = vadd.f32 %v765, %v5413
        %v5415 = vpop.f32.mrb[0].mxu0
        %v5416 = vpop.f32.mrb[0].mxu0
        %v5417 = vadd.f32 %v765, %v5416
        %v5418 = vpop.f32.mrb[0].mxu0
        %5419 = vmatprep.mubr.bf16.mxu0 0
        %5420 = vmatmul.mubr.bf16.gmra.mrb[0].mxu0 %v5366
        %v5421 = vpop.f32.mrb[0].mxu0
        %v5422 = vadd.f32 %v765, %v5421
        %v5423 = vpop.f32.mrb[0].mxu0
        %v5424 = vpop.f32.mrb[0].mxu0
        %v5425 = vadd.f32 %v765, %v5424
        %v5426 = vpop.f32.mrb[0].mxu0
        %5427 = vmatprep.mubr.bf16.mxu0 0
        %5428 = vmatmul.mubr.bf16.gmra.mrb[0].mxu0 %v5369
        %v5429 = vpop.f32.mrb[0].mxu0
        %v5430 = vadd.f32 %v765, %v5429
        %v5431 = vpop.f32.mrb[0].mxu0
        %v5432 = vpop.f32.mrb[0].mxu0
        %v5433 = vpop.f32.mrb[0].mxu0
        %5434 = vdwg.mxu0
        %v5435 = vmax.f32 %v5406, 0.0
        %v5436 = vmax.f32 %v5409, 0.0
        %v5437 = vmax.f32 %v5414, 0.0
        %v5438 = vmax.f32 %v5417, 0.0
        %v5439 = vmax.f32 %v5422, 0.0
        %v5440 = vmax.f32 %v5425, 0.0
        %v5441 = vmax.f32 %v5430, 0.0
        %v5442 = vpack.c.bf16 %v5436, %v5435
        %v5443 = vpack.c.bf16 %v5438, %v5437
        %v5444 = vpack.c.bf16 %v5440, %v5439
        %v5445 = vpack.c.bf16 %v5441, %v5441
        %v5446 = vld [vmem:[#allocation4] sm:$0xff]
        %v5447 = vld [vmem:[#allocation4 + $0x8] sm:$0xff]
        %v5448 = vld [vmem:[#allocation4 + $0x10] sm:$0xff]
        %v5449 = vld [vmem:[#allocation4 + $0x18] sm:$0xff]
        %v5450 = vld [vmem:[#allocation4 + $0x20] sm:$0xff]
        %v5451 = vld [vmem:[#allocation4 + $0x28] sm:$0xff]
        %v5452 = vld [vmem:[#allocation4 + $0x30] sm:$0xff]
        %s5453 = scalar_lea.vmem %s11, 288
        %v5454 = vld [vmem:[%s5453] sm:$0xf]
        %v5455 = vld [vmem:[%s5453 + $0x4] sm:$0xf]
        %v5456 = vld [vmem:[%s5453 + $0x8] sm:$0xf]
        %v5457 = vld [vmem:[%s5453 + $0xc] sm:$0xf]
        %v5458 = vld [vmem:[%s5453 + $0x10] sm:$0xf]
        %v5459 = vld [vmem:[%s5453 + $0x14] sm:$0xf]
        %v5460 = vld [vmem:[%s5453 + $0x18] sm:$0xf]
        %v5461 = vld [vmem:[%s5453 + $0x1c] sm:$0xf]
        %v5462 = vld [vmem:[%s5453 + $0x20] sm:$0xf]
        %v5463 = vld [vmem:[%s5453 + $0x24] sm:$0xf]
        %v5464 = vld [vmem:[%s5453 + $0x28] sm:$0xf]
        %v5465 = vld [vmem:[%s5453 + $0x2c] sm:$0xf]
        %v5478 = vunpack.c.l.b16 %v5454
        %v5479 = vunpack.c.l.b16 %v5455
        %v5480 = vunpack.c.l.b16 %v5456
        %v5481 = vunpack.c.l.b16 %v5457
        %v5482 = vunpack.c.l.b16 %v5458
        %v5483 = vunpack.c.l.b16 %v5459
        %v5484 = vunpack.c.l.b16 %v5460
        %v5485 = vunpack.c.l.b16 %v5461
        %v5486 = vunpack.c.l.b16 %v5462
        %v5487 = vunpack.c.l.b16 %v5463
        %v5488 = vunpack.c.l.b16 %v5464
        %v5489 = vunpack.c.l.b16 %v5465
        %v5490 = vpack.c.b16 %v5479, %v5478
        %v5491 = vpack.c.b16 %v5481, %v5480
        %v5492 = vpack.c.b16 %v5483, %v5482
        %v5493 = vpack.c.b16 %v5485, %v5484
        %v5494 = vpack.c.b16 %v5487, %v5486
        %v5495 = vpack.c.b16 %v5489, %v5488
        %v5503 = vsel %vm782, %v5442, 0
        %v5506 = vsel %vm782, %v5443, 0
        %v5509 = vsel %vm782, %v5444, 0
        %v5512 = vsel %vm782, %v5445, 0
        %5514 = vmatprep.subr.bf16.mxu0 0
        %5515 = vmatpush1.bf16.msra.mxu0 %v5490
        %5516 = vmatprep.subr.bf16.mxu0 0
        %5517 = vmatpush1.bf16.msra.mxu0 %v5491
        %5518 = vmatprep.subr.bf16.mxu0 0
        %5519 = vmatpush1.bf16.msra.mxu0 %v5492
        %5520 = vmatprep.subr.bf16.mxu0 0
        %5521 = vmatpush1.bf16.msra.mxu0 %v5493
        %5522 = vmatprep.subr.bf16.mxu0 0
        %5523 = vmatpush1.bf16.msra.mxu0 %v5494
        %5524 = vmatprep.subr.bf16.mxu0 0
        %5525 = vmatpush1.bf16.msra.mxu0 %v5495
        %5526 = vmatprep.subr.bf16.mxu0 0
        %5527 = vmatpush1.bf16.msra.mxu0 0
        %5528 = vmatprep.subr.bf16.mxu0 0
        %5529 = vmatpush1.bf16.msra.mxu0 0
        %5530 = vmatprep.subr.bf16.mxu0 0
        %5531 = vmatpush1.bf16.msra.mxu0 0
        %5532 = vmatprep.subr.bf16.mxu0 0
        %5533 = vmatpush1.bf16.msra.mxu0 0
        %5534 = vmatprep.subr.bf16.mxu0 0
        %5535 = vmatpush1.bf16.msra.mxu0 0
        %5536 = vmatprep.subr.bf16.mxu0 0
        %5537 = vmatpush1.bf16.msra.mxu0 0
        %5538 = vmatprep.subr.bf16.mxu0 0
        %5539 = vmatpush1.bf16.msra.mxu0 0
        %5540 = vmatprep.subr.bf16.mxu0 0
        %5541 = vmatpush1.bf16.msra.mxu0 0
        %5542 = vmatprep.subr.bf16.mxu0 0
        %5543 = vmatpush1.bf16.msra.mxu0 0
        %5544 = vmatprep.subr.bf16.mxu0 0
        %5545 = vmatpush1.bf16.msra.mxu0 0
        %5546 = vmatprep.mubr.bf16.mxu0 0
        %5547 = vmatmul.mubr.bf16.gmra.mrb[0].mxu0 %v5503
        %v5548 = vpop.f32.mrb[0].mxu0
        %v5549 = vadd.f32 0.0, %v5548
        %v5550 = vpop.f32.mrb[0].mxu0
        %v5551 = vpop.f32.mrb[0].mxu0
        %v5552 = vadd.f32 0.0, %v5551
        %v5553 = vpop.f32.mrb[0].mxu0
        %5554 = vmatprep.mubr.bf16.mxu0 0
        %5555 = vmatmul.mubr.bf16.gmra.mrb[0].mxu0 %v5506
        %v5556 = vpop.f32.mrb[0].mxu0
        %v5557 = vadd.f32 0.0, %v5556
        %v5558 = vpop.f32.mrb[0].mxu0
        %v5559 = vpop.f32.mrb[0].mxu0
        %v5560 = vadd.f32 0.0, %v5559
        %v5561 = vpop.f32.mrb[0].mxu0
        %5562 = vmatprep.mubr.bf16.mxu0 0
        %5563 = vmatmul.mubr.bf16.gmra.mrb[0].mxu0 %v5509
        %v5564 = vpop.f32.mrb[0].mxu0
        %v5565 = vadd.f32 0.0, %v5564
        %v5566 = vpop.f32.mrb[0].mxu0
        %v5567 = vpop.f32.mrb[0].mxu0
        %v5568 = vadd.f32 0.0, %v5567
        %v5569 = vpop.f32.mrb[0].mxu0
        %5570 = vmatprep.mubr.bf16.mxu0 0
        %5571 = vmatmul.mubr.bf16.gmra.mrb[0].mxu0 %v5512
        %v5572 = vpop.f32.mrb[0].mxu0
        %v5573 = vadd.f32 0.0, %v5572
        %v5574 = vpop.f32.mrb[0].mxu0
        %v5575 = vpop.f32.mrb[0].mxu0
        %v5576 = vpop.f32.mrb[0].mxu0
        %5577 = vdwg.mxu0
        %v5578 = vadd.f32 %v5446, %v5549
        %v5579 = vadd.f32 %v5447, %v5552
        %v5580 = vadd.f32 %v5448, %v5557
        %v5581 = vadd.f32 %v5449, %v5560
        %v5582 = vadd.f32 %v5450, %v5565
        %v5583 = vadd.f32 %v5451, %v5568
        %v5584 = vadd.f32 %v5452, %v5573
        %5585 = vst.msk [vmem:[#allocation4] sm:$0xff] %vm782, %v5578
        %5586 = vst.msk [vmem:[#allocation4 + $0x8] sm:$0xff] %vm782, %v5579
        %5587 = vst.msk [vmem:[#allocation4 + $0x10] sm:$0xff] %vm782, %v5580
        %5588 = vst.msk [vmem:[#allocation4 + $0x18] sm:$0xff] %vm782, %v5581
        %5589 = vst.msk [vmem:[#allocation4 + $0x20] sm:$0xff] %vm782, %v5582
        %5590 = vst.msk [vmem:[#allocation4 + $0x28] sm:$0xff] %vm782, %v5583
        %5591 = vst.msk [vmem:[#allocation4 + $0x30] sm:$0xff] %vm782, %v5584
        %s5592 = scalar_lea.vmem %s685, 196 [#allocation5]
        %v5593 = vld [vmem:[%s5592] sm:$0xf]
        %v5594 = vld [vmem:[%s5592 + $0x4] sm:$0xf]
        %v5595 = vld [vmem:[%s5592 + $0x8] sm:$0xf]
        %v5596 = vld [vmem:[%s5592 + $0xc] sm:$0xf]
        %v5597 = vld [vmem:[%s5592 + $0x10] sm:$0xf]
        %v5598 = vld [vmem:[%s5592 + $0x14] sm:$0xf]
        %v5599 = vld [vmem:[%s5592 + $0x18] sm:$0xf]
        %v5600 = vld [vmem:[#allocation2] sm:$0xff]
        %v5601 = vld [vmem:[#allocation2 + $0x8] sm:$0xff]
        %v5602 = vld [vmem:[#allocation2 + $0x10] sm:$0xff]
        %v5603 = vld [vmem:[#allocation2 + $0x18] sm:$0xff]
        %v5604 = vld [vmem:[#allocation2 + $0x20] sm:$0xff]
        %v5605 = vld [vmem:[#allocation2 + $0x28] sm:$0xff]
        %v5606 = vld [vmem:[#allocation2 + $0x30] sm:$0xff]
        %v5607 = vld [vmem:[#allocation2 + $0x38] sm:$0xff]
        %v5608 = vld [vmem:[#allocation2 + $0x40] sm:$0xff]
        %v5609 = vld [vmem:[#allocation2 + $0x48] sm:$0xff]
        %v5610 = vld [vmem:[#allocation2 + $0x50] sm:$0xff]
        %v5611 = vld [vmem:[#allocation2 + $0x58] sm:$0xff]
        %v5612 = vld [vmem:[#allocation2 + $0x60] sm:$0xff]
        %v5613 = vld [vmem:[#allocation2 + $0x68] sm:$0xff]
        %s5614 = scalar_lea.vmem %s1, 28
        %v5615 = vld [vmem:[%s5614] sm:$0xf]
        %v5623 = vunpack.c.l.b16 %v5593
        %v5624 = vunpack.c.l.b16 %v5594
        %v5625 = vunpack.c.l.b16 %v5595
        %v5626 = vunpack.c.l.b16 %v5596
        %v5627 = vunpack.c.l.b16 %v5597
        %v5628 = vunpack.c.l.b16 %v5598
        %v5629 = vunpack.c.l.b16 %v5599
        %v5630 = vpack.c.b16 %v5624, %v5623
        %v5631 = vpack.c.b16 %v5626, %v5625
        %v5632 = vpack.c.b16 %v5628, %v5627
        %v5633 = vpack.c.b16 %v5629, %v5629
        %v5636 = vunpack.c.l.s4 1983009808
        %v5637 = vunpack.c.0.s8 %v5636
        %v5638 = vlaneseq
        %v5639 = vshrl.u32 %v5638, 7
        %v5640 = vsub.s32 %v5637, %v5639
        %v5641 = vrot.slane %v5615, %v5640
        %v5642 = vcombine.high %v5641, %v5641
        %v5644 = vsel %vm846, %v5630, 0
        %v5647 = vsel %vm846, %v5631, 0
        %v5650 = vsel %vm846, %v5632, 0
        %v5653 = vsel %vm846, %v5633, 0
        %v5656 = vsel %vm859, %v5641, 0
        %v5659 = vsel %vm859, %v5642, 0
        %5661 = vmatprep.subr.bf16.mxu0 %v5659
        %5662 = vmatpush1.bf16.msra.mxu0 %v5656
        %5663 = vmatprep.subr.bf16.mxu0 0
        %5664 = vmatpush1.bf16.msra.mxu0 0
        %5665 = vmatprep.subr.bf16.mxu0 0
        %5666 = vmatpush1.bf16.msra.mxu0 0
        %5667 = vmatprep.subr.bf16.mxu0 0
        %5668 = vmatpush1.bf16.msra.mxu0 0
        %5669 = vmatprep.subr.bf16.mxu0 0
        %5670 = vmatpush1.bf16.msra.mxu0 0
        %5671 = vmatprep.subr.bf16.mxu0 0
        %5672 = vmatpush1.bf16.msra.mxu0 0
        %5673 = vmatprep.subr.bf16.mxu0 0
        %5674 = vmatpush1.bf16.msra.mxu0 0
        %5675 = vmatprep.subr.bf16.mxu0 0
        %5676 = vmatpush1.bf16.msra.mxu0 0
        %5677 = vmatprep.subr.bf16.mxu0 0
        %5678 = vmatpush1.bf16.msra.mxu0 0
        %5679 = vmatprep.subr.bf16.mxu0 0
        %5680 = vmatpush1.bf16.msra.mxu0 0
        %5681 = vmatprep.subr.bf16.mxu0 0
        %5682 = vmatpush1.bf16.msra.mxu0 0
        %5683 = vmatprep.subr.bf16.mxu0 0
        %5684 = vmatpush1.bf16.msra.mxu0 0
        %5685 = vmatprep.subr.bf16.mxu0 0
        %5686 = vmatpush1.bf16.msra.mxu0 0
        %5687 = vmatprep.subr.bf16.mxu0 0
        %5688 = vmatpush1.bf16.msra.mxu0 0
        %5689 = vmatprep.subr.bf16.mxu0 0
        %5690 = vmatpush1.bf16.msra.mxu0 0
        %5691 = vmatprep.subr.bf16.mxu0 0
        %5692 = vmatpush1.bf16.msra.mxu0 0
        %5693 = vmatprep.mubr.bf16.mxu0 0
        %5694 = vmatmul.mubr.bf16.gmra.mrb[0].mxu0 %v5644
        %v5695 = vpop.f32.mrb[0].mxu0
        %v5696 = vadd.f32 0.0, %v5695
        %v5697 = vpop.f32.mrb[0].mxu0
        %v5698 = vadd.f32 0.0, %v5697
        %v5699 = vpop.f32.mrb[0].mxu0
        %v5700 = vadd.f32 0.0, %v5699
        %v5701 = vpop.f32.mrb[0].mxu0
        %v5702 = vadd.f32 0.0, %v5701
        %5703 = vmatprep.mubr.bf16.mxu0 0
        %5704 = vmatmul.mubr.bf16.gmra.mrb[0].mxu0 %v5647
        %v5705 = vpop.f32.mrb[0].mxu0
        %v5706 = vadd.f32 0.0, %v5705
        %v5707 = vpop.f32.mrb[0].mxu0
        %v5708 = vadd.f32 0.0, %v5707
        %v5709 = vpop.f32.mrb[0].mxu0
        %v5710 = vadd.f32 0.0, %v5709
        %v5711 = vpop.f32.mrb[0].mxu0
        %v5712 = vadd.f32 0.0, %v5711
        %5713 = vmatprep.mubr.bf16.mxu0 0
        %5714 = vmatmul.mubr.bf16.gmra.mrb[0].mxu0 %v5650
        %v5715 = vpop.f32.mrb[0].mxu0
        %v5716 = vadd.f32 0.0, %v5715
        %v5717 = vpop.f32.mrb[0].mxu0
        %v5718 = vadd.f32 0.0, %v5717
        %v5719 = vpop.f32.mrb[0].mxu0
        %v5720 = vadd.f32 0.0, %v5719
        %v5721 = vpop.f32.mrb[0].mxu0
        %v5722 = vadd.f32 0.0, %v5721
        %5723 = vmatprep.mubr.bf16.mxu0 0
        %5724 = vmatmul.mubr.bf16.gmra.mrb[0].mxu0 %v5653
        %v5725 = vpop.f32.mrb[0].mxu0
        %v5726 = vadd.f32 0.0, %v5725
        %v5727 = vpop.f32.mrb[0].mxu0
        %v5728 = vadd.f32 0.0, %v5727
        %v5729 = vpop.f32.mrb[0].mxu0
        %v5730 = vpop.f32.mrb[0].mxu0
        %5731 = vdwg.mxu0
        %v5732 = vadd.f32 %v5600, %v5696
        %v5733 = vadd.f32 %v5601, %v5698
        %v5734 = vadd.f32 %v5602, %v5700
        %v5735 = vadd.f32 %v5603, %v5702
        %v5736 = vadd.f32 %v5604, %v5706
        %v5737 = vadd.f32 %v5605, %v5708
        %v5738 = vadd.f32 %v5606, %v5710
        %v5739 = vadd.f32 %v5607, %v5712
        %v5740 = vadd.f32 %v5608, %v5716
        %v5741 = vadd.f32 %v5609, %v5718
        %v5742 = vadd.f32 %v5610, %v5720
        %v5743 = vadd.f32 %v5611, %v5722
        %v5744 = vadd.f32 %v5612, %v5726
        %v5745 = vadd.f32 %v5613, %v5728
        %5746 = vst [vmem:[#allocation2] sm:$0xff] %v5732
        %5747 = vst.msk [vmem:[#allocation2 + $0x8] sm:$0xff] %vm768, %v5733
        %5748 = vst [vmem:[#allocation2 + $0x10] sm:$0xff] %v5734
        %5749 = vst.msk [vmem:[#allocation2 + $0x18] sm:$0xff] %vm768, %v5735
        %5750 = vst [vmem:[#allocation2 + $0x20] sm:$0xff] %v5736
        %5751 = vst.msk [vmem:[#allocation2 + $0x28] sm:$0xff] %vm768, %v5737
        %5752 = vst [vmem:[#allocation2 + $0x30] sm:$0xff] %v5738
        %5753 = vst.msk [vmem:[#allocation2 + $0x38] sm:$0xff] %vm768, %v5739
        %5754 = vst [vmem:[#allocation2 + $0x40] sm:$0xff] %v5740
        %5755 = vst.msk [vmem:[#allocation2 + $0x48] sm:$0xff] %vm768, %v5741
        %5756 = vst [vmem:[#allocation2 + $0x50] sm:$0xff] %v5742
        %5757 = vst.msk [vmem:[#allocation2 + $0x58] sm:$0xff] %vm768, %v5743
        %5758 = vst [vmem:[#allocation2 + $0x60] sm:$0xff] %v5744
        %5759 = vst.msk [vmem:[#allocation2 + $0x68] sm:$0xff] %vm768, %v5745
        %5760 = vmatprep.subr.bf16.mxu0 0
        %5761 = vmatpush1.bf16.msra.mxu0 %v966
        %5762 = vmatprep.subr.bf16.mxu0 0
        %5763 = vmatpush1.bf16.msra.mxu0 0
        %5764 = vmatprep.subr.bf16.mxu0 0
        %5765 = vmatpush1.bf16.msra.mxu0 0
        %5766 = vmatprep.subr.bf16.mxu0 0
        %5767 = vmatpush1.bf16.msra.mxu0 0
        %5768 = vmatprep.subr.bf16.mxu0 0
        %5769 = vmatpush1.bf16.msra.mxu0 0
        %5770 = vmatprep.subr.bf16.mxu0 0
        %5771 = vmatpush1.bf16.msra.mxu0 0
        %5772 = vmatprep.subr.bf16.mxu0 0
        %5773 = vmatpush1.bf16.msra.mxu0 0
        %5774 = vmatprep.subr.bf16.mxu0 0
        %5775 = vmatpush1.bf16.msra.mxu0 0
        %5776 = vmatprep.subr.bf16.mxu0 0
        %5777 = vmatpush1.bf16.msra.mxu0 0
        %5778 = vmatprep.subr.bf16.mxu0 0
        %5779 = vmatpush1.bf16.msra.mxu0 0
        %5780 = vmatprep.subr.bf16.mxu0 0
        %5781 = vmatpush1.bf16.msra.mxu0 0
        %5782 = vmatprep.subr.bf16.mxu0 0
        %5783 = vmatpush1.bf16.msra.mxu0 0
        %5784 = vmatprep.subr.bf16.mxu0 0
        %5785 = vmatpush1.bf16.msra.mxu0 0
        %5786 = vmatprep.subr.bf16.mxu0 0
        %5787 = vmatpush1.bf16.msra.mxu0 0
        %5788 = vmatprep.subr.bf16.mxu0 0
        %5789 = vmatpush1.bf16.msra.mxu0 0
        %5790 = vmatprep.subr.bf16.mxu0 0
        %5791 = vmatpush1.bf16.msra.mxu0 0
        %5792 = vmatprep.mubr.bf16.mxu0 0
        %5793 = vmatmul.mubr.bf16.gmra.mrb[0].mxu0 %v5644
        %v5794 = vpop.f32.mrb[0].mxu0
        %v5795 = vadd.f32 %v751, %v5794
        %v5796 = vpop.f32.mrb[0].mxu0
        %v5797 = vpop.f32.mrb[0].mxu0
        %v5798 = vadd.f32 %v751, %v5797
        %v5799 = vpop.f32.mrb[0].mxu0
        %5800 = vmatprep.mubr.bf16.mxu0 0
        %5801 = vmatmul.mubr.bf16.gmra.mrb[0].mxu0 %v5647
        %v5802 = vpop.f32.mrb[0].mxu0
        %v5803 = vadd.f32 %v751, %v5802
        %v5804 = vpop.f32.mrb[0].mxu0
        %v5805 = vpop.f32.mrb[0].mxu0
        %v5806 = vadd.f32 %v751, %v5805
        %v5807 = vpop.f32.mrb[0].mxu0
        %5808 = vmatprep.mubr.bf16.mxu0 0
        %5809 = vmatmul.mubr.bf16.gmra.mrb[0].mxu0 %v5650
        %v5810 = vpop.f32.mrb[0].mxu0
        %v5811 = vadd.f32 %v751, %v5810
        %v5812 = vpop.f32.mrb[0].mxu0
        %v5813 = vpop.f32.mrb[0].mxu0
        %v5814 = vadd.f32 %v751, %v5813
        %v5815 = vpop.f32.mrb[0].mxu0
        %5816 = vmatprep.mubr.bf16.mxu0 0
        %5817 = vmatmul.mubr.bf16.gmra.mrb[0].mxu0 %v5653
        %v5818 = vpop.f32.mrb[0].mxu0
        %v5819 = vadd.f32 %v751, %v5818
        %v5820 = vpop.f32.mrb[0].mxu0
        %v5821 = vpop.f32.mrb[0].mxu0
        %v5822 = vpop.f32.mrb[0].mxu0
        %5823 = vdwg.mxu0
        %v5824 = vmax.f32 %v5795, 0.0
        %v5825 = vmax.f32 %v5798, 0.0
        %v5826 = vmax.f32 %v5803, 0.0
        %v5827 = vmax.f32 %v5806, 0.0
        %v5828 = vmax.f32 %v5811, 0.0
        %v5829 = vmax.f32 %v5814, 0.0
        %v5830 = vmax.f32 %v5819, 0.0
        %v5831 = vpack.c.bf16 %v5825, %v5824
        %v5832 = vpack.c.bf16 %v5827, %v5826
        %v5833 = vpack.c.bf16 %v5829, %v5828
        %v5834 = vpack.c.bf16 %v5830, %v5830
        %v5835 = vld [vmem:[#allocation3] sm:$0xff]
        %v5836 = vld [vmem:[#allocation3 + $0x8] sm:$0xff]
        %v5837 = vld [vmem:[#allocation3 + $0x10] sm:$0xff]
        %v5838 = vld [vmem:[#allocation3 + $0x18] sm:$0xff]
        %v5839 = vld [vmem:[#allocation3 + $0x20] sm:$0xff]
        %v5840 = vld [vmem:[#allocation3 + $0x28] sm:$0xff]
        %v5841 = vld [vmem:[#allocation3 + $0x30] sm:$0xff]
        %s5842 = scalar_lea.vmem %s5, 224
        %v5843 = vld [vmem:[%s5842] sm:$0xf]
        %v5844 = vld [vmem:[%s5842 + $0x4] sm:$0xf]
        %v5845 = vld [vmem:[%s5842 + $0x8] sm:$0xf]
        %v5846 = vld [vmem:[%s5842 + $0xc] sm:$0xf]
        %v5847 = vld [vmem:[%s5842 + $0x10] sm:$0xf]
        %v5848 = vld [vmem:[%s5842 + $0x14] sm:$0xf]
        %v5849 = vld [vmem:[%s5842 + $0x18] sm:$0xf]
        %v5850 = vld [vmem:[%s5842 + $0x1c] sm:$0xf]
        %v5859 = vunpack.c.l.b16 %v5843
        %v5860 = vunpack.c.l.b16 %v5844
        %v5861 = vunpack.c.l.b16 %v5845
        %v5862 = vunpack.c.l.b16 %v5846
        %v5863 = vunpack.c.l.b16 %v5847
        %v5864 = vunpack.c.l.b16 %v5848
        %v5865 = vunpack.c.l.b16 %v5849
        %v5866 = vunpack.c.l.b16 %v5850
        %v5867 = vpack.c.b16 %v5860, %v5859
        %v5868 = vpack.c.b16 %v5862, %v5861
        %v5869 = vpack.c.b16 %v5864, %v5863
        %v5870 = vpack.c.b16 %v5866, %v5865
        %v5876 = vsel %vm768, %v5831, 0
        %v5879 = vsel %vm768, %v5832, 0
        %v5882 = vsel %vm768, %v5833, 0
        %v5885 = vsel %vm768, %v5834, 0
        %5887 = vmatprep.subr.bf16.mxu0 0
        %5888 = vmatpush1.bf16.msra.mxu0 %v5867
        %5889 = vmatprep.subr.bf16.mxu0 0
        %5890 = vmatpush1.bf16.msra.mxu0 %v5868
        %5891 = vmatprep.subr.bf16.mxu0 0
        %5892 = vmatpush1.bf16.msra.mxu0 %v5869
        %5893 = vmatprep.subr.bf16.mxu0 0
        %5894 = vmatpush1.bf16.msra.mxu0 %v5870
        %5895 = vmatprep.subr.bf16.mxu0 0
        %5896 = vmatpush1.bf16.msra.mxu0 0
        %5897 = vmatprep.subr.bf16.mxu0 0
        %5898 = vmatpush1.bf16.msra.mxu0 0
        %5899 = vmatprep.subr.bf16.mxu0 0
        %5900 = vmatpush1.bf16.msra.mxu0 0
        %5901 = vmatprep.subr.bf16.mxu0 0
        %5902 = vmatpush1.bf16.msra.mxu0 0
        %5903 = vmatprep.subr.bf16.mxu0 0
        %5904 = vmatpush1.bf16.msra.mxu0 0
        %5905 = vmatprep.subr.bf16.mxu0 0
        %5906 = vmatpush1.bf16.msra.mxu0 0
        %5907 = vmatprep.subr.bf16.mxu0 0
        %5908 = vmatpush1.bf16.msra.mxu0 0
        %5909 = vmatprep.subr.bf16.mxu0 0
        %5910 = vmatpush1.bf16.msra.mxu0 0
        %5911 = vmatprep.subr.bf16.mxu0 0
        %5912 = vmatpush1.bf16.msra.mxu0 0
        %5913 = vmatprep.subr.bf16.mxu0 0
        %5914 = vmatpush1.bf16.msra.mxu0 0
        %5915 = vmatprep.subr.bf16.mxu0 0
        %5916 = vmatpush1.bf16.msra.mxu0 0
        %5917 = vmatprep.subr.bf16.mxu0 0
        %5918 = vmatpush1.bf16.msra.mxu0 0
        %5919 = vmatprep.mubr.bf16.mxu0 0
        %5920 = vmatmul.mubr.bf16.gmra.mrb[0].mxu0 %v5876
        %v5921 = vpop.f32.mrb[0].mxu0
        %v5922 = vadd.f32 0.0, %v5921
        %v5923 = vpop.f32.mrb[0].mxu0
        %v5924 = vpop.f32.mrb[0].mxu0
        %v5925 = vadd.f32 0.0, %v5924
        %v5926 = vpop.f32.mrb[0].mxu0
        %5927 = vmatprep.mubr.bf16.mxu0 0
        %5928 = vmatmul.mubr.bf16.gmra.mrb[0].mxu0 %v5879
        %v5929 = vpop.f32.mrb[0].mxu0
        %v5930 = vadd.f32 0.0, %v5929
        %v5931 = vpop.f32.mrb[0].mxu0
        %v5932 = vpop.f32.mrb[0].mxu0
        %v5933 = vadd.f32 0.0, %v5932
        %v5934 = vpop.f32.mrb[0].mxu0
        %5935 = vmatprep.mubr.bf16.mxu0 0
        %5936 = vmatmul.mubr.bf16.gmra.mrb[0].mxu0 %v5882
        %v5937 = vpop.f32.mrb[0].mxu0
        %v5938 = vadd.f32 0.0, %v5937
        %v5939 = vpop.f32.mrb[0].mxu0
        %v5940 = vpop.f32.mrb[0].mxu0
        %v5941 = vadd.f32 0.0, %v5940
        %v5942 = vpop.f32.mrb[0].mxu0
        %5943 = vmatprep.mubr.bf16.mxu0 0
        %5944 = vmatmul.mubr.bf16.gmra.mrb[0].mxu0 %v5885
        %v5945 = vpop.f32.mrb[0].mxu0
        %v5946 = vadd.f32 0.0, %v5945
        %v5947 = vpop.f32.mrb[0].mxu0
        %v5948 = vpop.f32.mrb[0].mxu0
        %v5949 = vpop.f32.mrb[0].mxu0
        %5950 = vdwg.mxu0
        %v5951 = vadd.f32 %v5835, %v5922
        %v5952 = vadd.f32 %v5836, %v5925
        %v5953 = vadd.f32 %v5837, %v5930
        %v5954 = vadd.f32 %v5838, %v5933
        %v5955 = vadd.f32 %v5839, %v5938
        %v5956 = vadd.f32 %v5840, %v5941
        %v5957 = vadd.f32 %v5841, %v5946
        %5958 = vst.msk [vmem:[#allocation3] sm:$0xff] %vm782, %v5951
        %5959 = vst.msk [vmem:[#allocation3 + $0x8] sm:$0xff] %vm782, %v5952
        %5960 = vst.msk [vmem:[#allocation3 + $0x10] sm:$0xff] %vm782, %v5953
        %5961 = vst.msk [vmem:[#allocation3 + $0x18] sm:$0xff] %vm782, %v5954
        %5962 = vst.msk [vmem:[#allocation3 + $0x20] sm:$0xff] %vm782, %v5955
        %5963 = vst.msk [vmem:[#allocation3 + $0x28] sm:$0xff] %vm782, %v5956
        %5964 = vst.msk [vmem:[#allocation3 + $0x30] sm:$0xff] %vm782, %v5957
        %5965 = vmatprep.subr.bf16.mxu0 0
        %5966 = vmatpush1.bf16.msra.mxu0 %v1173
        %5967 = vmatprep.subr.bf16.mxu0 0
        %5968 = vmatpush1.bf16.msra.mxu0 0
        %5969 = vmatprep.subr.bf16.mxu0 0
        %5970 = vmatpush1.bf16.msra.mxu0 0
        %5971 = vmatprep.subr.bf16.mxu0 0
        %5972 = vmatpush1.bf16.msra.mxu0 0
        %5973 = vmatprep.subr.bf16.mxu0 0
        %5974 = vmatpush1.bf16.msra.mxu0 0
        %5975 = vmatprep.subr.bf16.mxu0 0
        %5976 = vmatpush1.bf16.msra.mxu0 0
        %5977 = vmatprep.subr.bf16.mxu0 0
        %5978 = vmatpush1.bf16.msra.mxu0 0
        %5979 = vmatprep.subr.bf16.mxu0 0
        %5980 = vmatpush1.bf16.msra.mxu0 0
        %5981 = vmatprep.subr.bf16.mxu0 0
        %5982 = vmatpush1.bf16.msra.mxu0 0
        %5983 = vmatprep.subr.bf16.mxu0 0
        %5984 = vmatpush1.bf16.msra.mxu0 0
        %5985 = vmatprep.subr.bf16.mxu0 0
        %5986 = vmatpush1.bf16.msra.mxu0 0
        %5987 = vmatprep.subr.bf16.mxu0 0
        %5988 = vmatpush1.bf16.msra.mxu0 0
        %5989 = vmatprep.subr.bf16.mxu0 0
        %5990 = vmatpush1.bf16.msra.mxu0 0
        %5991 = vmatprep.subr.bf16.mxu0 0
        %5992 = vmatpush1.bf16.msra.mxu0 0
        %5993 = vmatprep.subr.bf16.mxu0 0
        %5994 = vmatpush1.bf16.msra.mxu0 0
        %5995 = vmatprep.subr.bf16.mxu0 0
        %5996 = vmatpush1.bf16.msra.mxu0 0
        %5997 = vmatprep.mubr.bf16.mxu0 0
        %5998 = vmatmul.mubr.bf16.gmra.mrb[0].mxu0 %v5644
        %v5999 = vpop.f32.mrb[0].mxu0
        %v6000 = vadd.f32 %v758, %v5999
        %v6001 = vpop.f32.mrb[0].mxu0
        %v6002 = vpop.f32.mrb[0].mxu0
        %v6003 = vadd.f32 %v758, %v6002
        %v6004 = vpop.f32.mrb[0].mxu0
        %6005 = vmatprep.mubr.bf16.mxu0 0
        %6006 = vmatmul.mubr.bf16.gmra.mrb[0].mxu0 %v5647
        %v6007 = vpop.f32.mrb[0].mxu0
        %v6008 = vadd.f32 %v758, %v6007
        %v6009 = vpop.f32.mrb[0].mxu0
        %v6010 = vpop.f32.mrb[0].mxu0
        %v6011 = vadd.f32 %v758, %v6010
        %v6012 = vpop.f32.mrb[0].mxu0
        %6013 = vmatprep.mubr.bf16.mxu0 0
        %6014 = vmatmul.mubr.bf16.gmra.mrb[0].mxu0 %v5650
        %v6015 = vpop.f32.mrb[0].mxu0
        %v6016 = vadd.f32 %v758, %v6015
        %v6017 = vpop.f32.mrb[0].mxu0
        %v6018 = vpop.f32.mrb[0].mxu0
        %v6019 = vadd.f32 %v758, %v6018
        %v6020 = vpop.f32.mrb[0].mxu0
        %6021 = vmatprep.mubr.bf16.mxu0 0
        %6022 = vmatmul.mubr.bf16.gmra.mrb[0].mxu0 %v5653
        %v6023 = vpop.f32.mrb[0].mxu0
        %v6024 = vadd.f32 %v758, %v6023
        %v6025 = vpop.f32.mrb[0].mxu0
        %v6026 = vpop.f32.mrb[0].mxu0
        %v6027 = vpop.f32.mrb[0].mxu0
        %6028 = vdwg.mxu0
        %v6029 = vmax.f32 %v6000, 0.0
        %v6030 = vmax.f32 %v6003, 0.0
        %v6031 = vmax.f32 %v6008, 0.0
        %v6032 = vmax.f32 %v6011, 0.0
        %v6033 = vmax.f32 %v6016, 0.0
        %v6034 = vmax.f32 %v6019, 0.0
        %v6035 = vmax.f32 %v6024, 0.0
        %v6036 = vpack.c.bf16 %v6030, %v6029
        %v6037 = vpack.c.bf16 %v6032, %v6031
        %v6038 = vpack.c.bf16 %v6034, %v6033
        %v6039 = vpack.c.bf16 %v6035, %v6035
        %v6041 = vsel %vm768, %v6036, 0
        %v6044 = vsel %vm768, %v6037, 0
        %v6047 = vsel %vm768, %v6038, 0
        %v6050 = vsel %vm768, %v6039, 0
        %6052 = vmatprep.subr.bf16.mxu0 0
        %6053 = vmatpush1.bf16.msra.mxu0 %v1266
        %6054 = vmatprep.subr.bf16.mxu0 0
        %6055 = vmatpush1.bf16.msra.mxu0 %v1267
        %6056 = vmatprep.subr.bf16.mxu0 0
        %6057 = vmatpush1.bf16.msra.mxu0 %v1268
        %6058 = vmatprep.subr.bf16.mxu0 0
        %6059 = vmatpush1.bf16.msra.mxu0 %v1269
        %6060 = vmatprep.subr.bf16.mxu0 0
        %6061 = vmatpush1.bf16.msra.mxu0 0
        %6062 = vmatprep.subr.bf16.mxu0 0
        %6063 = vmatpush1.bf16.msra.mxu0 0
        %6064 = vmatprep.subr.bf16.mxu0 0
        %6065 = vmatpush1.bf16.msra.mxu0 0
        %6066 = vmatprep.subr.bf16.mxu0 0
        %6067 = vmatpush1.bf16.msra.mxu0 0
        %6068 = vmatprep.subr.bf16.mxu0 0
        %6069 = vmatpush1.bf16.msra.mxu0 0
        %6070 = vmatprep.subr.bf16.mxu0 0
        %6071 = vmatpush1.bf16.msra.mxu0 0
        %6072 = vmatprep.subr.bf16.mxu0 0
        %6073 = vmatpush1.bf16.msra.mxu0 0
        %6074 = vmatprep.subr.bf16.mxu0 0
        %6075 = vmatpush1.bf16.msra.mxu0 0
        %6076 = vmatprep.subr.bf16.mxu0 0
        %6077 = vmatpush1.bf16.msra.mxu0 0
        %6078 = vmatprep.subr.bf16.mxu0 0
        %6079 = vmatpush1.bf16.msra.mxu0 0
        %6080 = vmatprep.subr.bf16.mxu0 0
        %6081 = vmatpush1.bf16.msra.mxu0 0
        %6082 = vmatprep.subr.bf16.mxu0 0
        %6083 = vmatpush1.bf16.msra.mxu0 0
        %6084 = vmatprep.mubr.bf16.mxu0 0
        %6085 = vmatmul.mubr.bf16.gmra.mrb[0].mxu0 %v6041
        %v6086 = vpop.f32.mrb[0].mxu0
        %v6087 = vadd.f32 %v765, %v6086
        %v6088 = vpop.f32.mrb[0].mxu0
        %v6089 = vpop.f32.mrb[0].mxu0
        %v6090 = vadd.f32 %v765, %v6089
        %v6091 = vpop.f32.mrb[0].mxu0
        %6092 = vmatprep.mubr.bf16.mxu0 0
        %6093 = vmatmul.mubr.bf16.gmra.mrb[0].mxu0 %v6044
        %v6094 = vpop.f32.mrb[0].mxu0
        %v6095 = vadd.f32 %v765, %v6094
        %v6096 = vpop.f32.mrb[0].mxu0
        %v6097 = vpop.f32.mrb[0].mxu0
        %v6098 = vadd.f32 %v765, %v6097
        %v6099 = vpop.f32.mrb[0].mxu0
        %6100 = vmatprep.mubr.bf16.mxu0 0
        %6101 = vmatmul.mubr.bf16.gmra.mrb[0].mxu0 %v6047
        %v6102 = vpop.f32.mrb[0].mxu0
        %v6103 = vadd.f32 %v765, %v6102
        %v6104 = vpop.f32.mrb[0].mxu0
        %v6105 = vpop.f32.mrb[0].mxu0
        %v6106 = vadd.f32 %v765, %v6105
        %v6107 = vpop.f32.mrb[0].mxu0
        %6108 = vmatprep.mubr.bf16.mxu0 0
        %6109 = vmatmul.mubr.bf16.gmra.mrb[0].mxu0 %v6050
        %v6110 = vpop.f32.mrb[0].mxu0
        %v6111 = vadd.f32 %v765, %v6110
        %v6112 = vpop.f32.mrb[0].mxu0
        %v6113 = vpop.f32.mrb[0].mxu0
        %v6114 = vpop.f32.mrb[0].mxu0
        %6115 = vdwg.mxu0
        %v6116 = vmax.f32 %v6087, 0.0
        %v6117 = vmax.f32 %v6090, 0.0
        %v6118 = vmax.f32 %v6095, 0.0
        %v6119 = vmax.f32 %v6098, 0.0
        %v6120 = vmax.f32 %v6103, 0.0
        %v6121 = vmax.f32 %v6106, 0.0
        %v6122 = vmax.f32 %v6111, 0.0
        %v6123 = vpack.c.bf16 %v6117, %v6116
        %v6124 = vpack.c.bf16 %v6119, %v6118
        %v6125 = vpack.c.bf16 %v6121, %v6120
        %v6126 = vpack.c.bf16 %v6122, %v6122
        %v6127 = vld [vmem:[#allocation4] sm:$0xff]
        %v6128 = vld [vmem:[#allocation4 + $0x8] sm:$0xff]
        %v6129 = vld [vmem:[#allocation4 + $0x10] sm:$0xff]
        %v6130 = vld [vmem:[#allocation4 + $0x18] sm:$0xff]
        %v6131 = vld [vmem:[#allocation4 + $0x20] sm:$0xff]
        %v6132 = vld [vmem:[#allocation4 + $0x28] sm:$0xff]
        %v6133 = vld [vmem:[#allocation4 + $0x30] sm:$0xff]
        %s6134 = scalar_lea.vmem %s11, 336
        %v6135 = vld [vmem:[%s6134] sm:$0xf]
        %v6136 = vld [vmem:[%s6134 + $0x4] sm:$0xf]
        %v6137 = vld [vmem:[%s6134 + $0x8] sm:$0xf]
        %v6138 = vld [vmem:[%s6134 + $0xc] sm:$0xf]
        %v6139 = vld [vmem:[%s6134 + $0x10] sm:$0xf]
        %v6140 = vld [vmem:[%s6134 + $0x14] sm:$0xf]
        %v6141 = vld [vmem:[%s6134 + $0x18] sm:$0xf]
        %v6142 = vld [vmem:[%s6134 + $0x1c] sm:$0xf]
        %v6143 = vld [vmem:[%s6134 + $0x20] sm:$0xf]
        %v6144 = vld [vmem:[%s6134 + $0x24] sm:$0xf]
        %v6145 = vld [vmem:[%s6134 + $0x28] sm:$0xf]
        %v6146 = vld [vmem:[%s6134 + $0x2c] sm:$0xf]
        %v6159 = vunpack.c.l.b16 %v6135
        %v6160 = vunpack.c.l.b16 %v6136
        %v6161 = vunpack.c.l.b16 %v6137
        %v6162 = vunpack.c.l.b16 %v6138
        %v6163 = vunpack.c.l.b16 %v6139
        %v6164 = vunpack.c.l.b16 %v6140
        %v6165 = vunpack.c.l.b16 %v6141
        %v6166 = vunpack.c.l.b16 %v6142
        %v6167 = vunpack.c.l.b16 %v6143
        %v6168 = vunpack.c.l.b16 %v6144
        %v6169 = vunpack.c.l.b16 %v6145
        %v6170 = vunpack.c.l.b16 %v6146
        %v6171 = vpack.c.b16 %v6160, %v6159
        %v6172 = vpack.c.b16 %v6162, %v6161
        %v6173 = vpack.c.b16 %v6164, %v6163
        %v6174 = vpack.c.b16 %v6166, %v6165
        %v6175 = vpack.c.b16 %v6168, %v6167
        %v6176 = vpack.c.b16 %v6170, %v6169
        %v6184 = vsel %vm782, %v6123, 0
        %v6187 = vsel %vm782, %v6124, 0
        %v6190 = vsel %vm782, %v6125, 0
        %v6193 = vsel %vm782, %v6126, 0
        %6195 = vmatprep.subr.bf16.mxu0 0
        %6196 = vmatpush1.bf16.msra.mxu0 %v6171
        %6197 = vmatprep.subr.bf16.mxu0 0
        %6198 = vmatpush1.bf16.msra.mxu0 %v6172
        %6199 = vmatprep.subr.bf16.mxu0 0
        %6200 = vmatpush1.bf16.msra.mxu0 %v6173
        %6201 = vmatprep.subr.bf16.mxu0 0
        %6202 = vmatpush1.bf16.msra.mxu0 %v6174
        %6203 = vmatprep.subr.bf16.mxu0 0
        %6204 = vmatpush1.bf16.msra.mxu0 %v6175
        %6205 = vmatprep.subr.bf16.mxu0 0
        %6206 = vmatpush1.bf16.msra.mxu0 %v6176
        %6207 = vmatprep.subr.bf16.mxu0 0
        %6208 = vmatpush1.bf16.msra.mxu0 0
        %6209 = vmatprep.subr.bf16.mxu0 0
        %6210 = vmatpush1.bf16.msra.mxu0 0
        %6211 = vmatprep.subr.bf16.mxu0 0
        %6212 = vmatpush1.bf16.msra.mxu0 0
        %6213 = vmatprep.subr.bf16.mxu0 0
        %6214 = vmatpush1.bf16.msra.mxu0 0
        %6215 = vmatprep.subr.bf16.mxu0 0
        %6216 = vmatpush1.bf16.msra.mxu0 0
        %6217 = vmatprep.subr.bf16.mxu0 0
        %6218 = vmatpush1.bf16.msra.mxu0 0
        %6219 = vmatprep.subr.bf16.mxu0 0
        %6220 = vmatpush1.bf16.msra.mxu0 0
        %6221 = vmatprep.subr.bf16.mxu0 0
        %6222 = vmatpush1.bf16.msra.mxu0 0
        %6223 = vmatprep.subr.bf16.mxu0 0
        %6224 = vmatpush1.bf16.msra.mxu0 0
        %6225 = vmatprep.subr.bf16.mxu0 0
        %6226 = vmatpush1.bf16.msra.mxu0 0
        %6227 = vmatprep.mubr.bf16.mxu0 0
        %6228 = vmatmul.mubr.bf16.gmra.mrb[0].mxu0 %v6184
        %v6229 = vpop.f32.mrb[0].mxu0
        %v6230 = vadd.f32 0.0, %v6229
        %v6231 = vpop.f32.mrb[0].mxu0
        %v6232 = vpop.f32.mrb[0].mxu0
        %v6233 = vadd.f32 0.0, %v6232
        %v6234 = vpop.f32.mrb[0].mxu0
        %6235 = vmatprep.mubr.bf16.mxu0 0
        %6236 = vmatmul.mubr.bf16.gmra.mrb[0].mxu0 %v6187
        %v6237 = vpop.f32.mrb[0].mxu0
        %v6238 = vadd.f32 0.0, %v6237
        %v6239 = vpop.f32.mrb[0].mxu0
        %v6240 = vpop.f32.mrb[0].mxu0
        %v6241 = vadd.f32 0.0, %v6240
        %v6242 = vpop.f32.mrb[0].mxu0
        %6243 = vmatprep.mubr.bf16.mxu0 0
        %6244 = vmatmul.mubr.bf16.gmra.mrb[0].mxu0 %v6190
        %v6245 = vpop.f32.mrb[0].mxu0
        %v6246 = vadd.f32 0.0, %v6245
        %v6247 = vpop.f32.mrb[0].mxu0
        %v6248 = vpop.f32.mrb[0].mxu0
        %v6249 = vadd.f32 0.0, %v6248
        %v6250 = vpop.f32.mrb[0].mxu0
        %6251 = vmatprep.mubr.bf16.mxu0 0
        %6252 = vmatmul.mubr.bf16.gmra.mrb[0].mxu0 %v6193
        %v6253 = vpop.f32.mrb[0].mxu0
        %v6254 = vadd.f32 0.0, %v6253
        %v6255 = vpop.f32.mrb[0].mxu0
        %v6256 = vpop.f32.mrb[0].mxu0
        %v6257 = vpop.f32.mrb[0].mxu0
        %6258 = vdwg.mxu0
        %v6259 = vadd.f32 %v6127, %v6230
        %v6260 = vadd.f32 %v6128, %v6233
        %v6261 = vadd.f32 %v6129, %v6238
        %v6262 = vadd.f32 %v6130, %v6241
        %v6263 = vadd.f32 %v6131, %v6246
        %v6264 = vadd.f32 %v6132, %v6249
        %v6265 = vadd.f32 %v6133, %v6254
        %6266 = vst.msk [vmem:[#allocation4] sm:$0xff] %vm782, %v6259
        %6267 = vst.msk [vmem:[#allocation4 + $0x8] sm:$0xff] %vm782, %v6260
        %6268 = vst.msk [vmem:[#allocation4 + $0x10] sm:$0xff] %vm782, %v6261
        %6269 = vst.msk [vmem:[#allocation4 + $0x18] sm:$0xff] %vm782, %v6262
        %6270 = vst.msk [vmem:[#allocation4 + $0x20] sm:$0xff] %vm782, %v6263
        %6271 = vst.msk [vmem:[#allocation4 + $0x28] sm:$0xff] %vm782, %v6264
        %6272 = vst.msk [vmem:[#allocation4 + $0x30] sm:$0xff] %vm782, %v6265
        %s6273 = scalar_lea.vmem %s685, 224 [#allocation5]
        %v6274 = vld [vmem:[%s6273] sm:$0xf]
        %v6275 = vld [vmem:[%s6273 + $0x4] sm:$0xf]
        %v6276 = vld [vmem:[%s6273 + $0x8] sm:$0xf]
        %v6277 = vld [vmem:[%s6273 + $0xc] sm:$0xf]
        %v6278 = vld [vmem:[%s6273 + $0x10] sm:$0xf]
        %v6279 = vld [vmem:[%s6273 + $0x14] sm:$0xf]
        %v6280 = vld [vmem:[%s6273 + $0x18] sm:$0xf]
        %v6281 = vld [vmem:[#allocation2] sm:$0xff]
        %v6282 = vld [vmem:[#allocation2 + $0x8] sm:$0xff]
        %v6283 = vld [vmem:[#allocation2 + $0x10] sm:$0xff]
        %v6284 = vld [vmem:[#allocation2 + $0x18] sm:$0xff]
        %v6285 = vld [vmem:[#allocation2 + $0x20] sm:$0xff]
        %v6286 = vld [vmem:[#allocation2 + $0x28] sm:$0xff]
        %v6287 = vld [vmem:[#allocation2 + $0x30] sm:$0xff]
        %v6288 = vld [vmem:[#allocation2 + $0x38] sm:$0xff]
        %v6289 = vld [vmem:[#allocation2 + $0x40] sm:$0xff]
        %v6290 = vld [vmem:[#allocation2 + $0x48] sm:$0xff]
        %v6291 = vld [vmem:[#allocation2 + $0x50] sm:$0xff]
        %v6292 = vld [vmem:[#allocation2 + $0x58] sm:$0xff]
        %v6293 = vld [vmem:[#allocation2 + $0x60] sm:$0xff]
        %v6294 = vld [vmem:[#allocation2 + $0x68] sm:$0xff]
        %s6295 = scalar_lea.vmem %s1, 32
        %v6296 = vld [vmem:[%s6295] sm:$0xf]
        %v6304 = vunpack.c.l.b16 %v6274
        %v6305 = vunpack.c.l.b16 %v6275
        %v6306 = vunpack.c.l.b16 %v6276
        %v6307 = vunpack.c.l.b16 %v6277
        %v6308 = vunpack.c.l.b16 %v6278
        %v6309 = vunpack.c.l.b16 %v6279
        %v6310 = vunpack.c.l.b16 %v6280
        %v6311 = vpack.c.b16 %v6305, %v6304
        %v6312 = vpack.c.b16 %v6307, %v6306
        %v6313 = vpack.c.b16 %v6309, %v6308
        %v6314 = vpack.c.b16 %v6310, %v6310
        %v6317 = vunpack.c.l.s4 1983009808
        %v6318 = vunpack.c.0.s8 %v6317
        %v6319 = vlaneseq
        %v6320 = vshrl.u32 %v6319, 7
        %v6321 = vsub.s32 %v6318, %v6320
        %v6322 = vrot.slane %v6296, %v6321
        %v6323 = vcombine.high %v6322, %v6322
        %v6325 = vsel %vm846, %v6311, 0
        %v6328 = vsel %vm846, %v6312, 0
        %v6331 = vsel %vm846, %v6313, 0
        %v6334 = vsel %vm846, %v6314, 0
        %v6337 = vsel %vm859, %v6322, 0
        %v6340 = vsel %vm859, %v6323, 0
        %6342 = vmatprep.subr.bf16.mxu0 %v6340
        %6343 = vmatpush1.bf16.msra.mxu0 %v6337
        %6344 = vmatprep.subr.bf16.mxu0 0
        %6345 = vmatpush1.bf16.msra.mxu0 0
        %6346 = vmatprep.subr.bf16.mxu0 0
        %6347 = vmatpush1.bf16.msra.mxu0 0
        %6348 = vmatprep.subr.bf16.mxu0 0
        %6349 = vmatpush1.bf16.msra.mxu0 0
        %6350 = vmatprep.subr.bf16.mxu0 0
        %6351 = vmatpush1.bf16.msra.mxu0 0
        %6352 = vmatprep.subr.bf16.mxu0 0
        %6353 = vmatpush1.bf16.msra.mxu0 0
        %6354 = vmatprep.subr.bf16.mxu0 0
        %6355 = vmatpush1.bf16.msra.mxu0 0
        %6356 = vmatprep.subr.bf16.mxu0 0
        %6357 = vmatpush1.bf16.msra.mxu0 0
        %6358 = vmatprep.subr.bf16.mxu0 0
        %6359 = vmatpush1.bf16.msra.mxu0 0
        %6360 = vmatprep.subr.bf16.mxu0 0
        %6361 = vmatpush1.bf16.msra.mxu0 0
        %6362 = vmatprep.subr.bf16.mxu0 0
        %6363 = vmatpush1.bf16.msra.mxu0 0
        %6364 = vmatprep.subr.bf16.mxu0 0
        %6365 = vmatpush1.bf16.msra.mxu0 0
        %6366 = vmatprep.subr.bf16.mxu0 0
        %6367 = vmatpush1.bf16.msra.mxu0 0
        %6368 = vmatprep.subr.bf16.mxu0 0
        %6369 = vmatpush1.bf16.msra.mxu0 0
        %6370 = vmatprep.subr.bf16.mxu0 0
        %6371 = vmatpush1.bf16.msra.mxu0 0
        %6372 = vmatprep.subr.bf16.mxu0 0
        %6373 = vmatpush1.bf16.msra.mxu0 0
        %6374 = vmatprep.mubr.bf16.mxu0 0
        %6375 = vmatmul.mubr.bf16.gmra.mrb[0].mxu0 %v6325
        %v6376 = vpop.f32.mrb[0].mxu0
        %v6377 = vadd.f32 0.0, %v6376
        %v6378 = vpop.f32.mrb[0].mxu0
        %v6379 = vadd.f32 0.0, %v6378
        %v6380 = vpop.f32.mrb[0].mxu0
        %v6381 = vadd.f32 0.0, %v6380
        %v6382 = vpop.f32.mrb[0].mxu0
        %v6383 = vadd.f32 0.0, %v6382
        %6384 = vmatprep.mubr.bf16.mxu0 0
        %6385 = vmatmul.mubr.bf16.gmra.mrb[0].mxu0 %v6328
        %v6386 = vpop.f32.mrb[0].mxu0
        %v6387 = vadd.f32 0.0, %v6386
        %v6388 = vpop.f32.mrb[0].mxu0
        %v6389 = vadd.f32 0.0, %v6388
        %v6390 = vpop.f32.mrb[0].mxu0
        %v6391 = vadd.f32 0.0, %v6390
        %v6392 = vpop.f32.mrb[0].mxu0
        %v6393 = vadd.f32 0.0, %v6392
        %6394 = vmatprep.mubr.bf16.mxu0 0
        %6395 = vmatmul.mubr.bf16.gmra.mrb[0].mxu0 %v6331
        %v6396 = vpop.f32.mrb[0].mxu0
        %v6397 = vadd.f32 0.0, %v6396
        %v6398 = vpop.f32.mrb[0].mxu0
        %v6399 = vadd.f32 0.0, %v6398
        %v6400 = vpop.f32.mrb[0].mxu0
        %v6401 = vadd.f32 0.0, %v6400
        %v6402 = vpop.f32.mrb[0].mxu0
        %v6403 = vadd.f32 0.0, %v6402
        %6404 = vmatprep.mubr.bf16.mxu0 0
        %6405 = vmatmul.mubr.bf16.gmra.mrb[0].mxu0 %v6334
        %v6406 = vpop.f32.mrb[0].mxu0
        %v6407 = vadd.f32 0.0, %v6406
        %v6408 = vpop.f32.mrb[0].mxu0
        %v6409 = vadd.f32 0.0, %v6408
        %v6410 = vpop.f32.mrb[0].mxu0
        %v6411 = vpop.f32.mrb[0].mxu0
        %6412 = vdwg.mxu0
        %v6413 = vadd.f32 %v6281, %v6377
        %v6414 = vadd.f32 %v6282, %v6379
        %v6415 = vadd.f32 %v6283, %v6381
        %v6416 = vadd.f32 %v6284, %v6383
        %v6417 = vadd.f32 %v6285, %v6387
        %v6418 = vadd.f32 %v6286, %v6389
        %v6419 = vadd.f32 %v6287, %v6391
        %v6420 = vadd.f32 %v6288, %v6393
        %v6421 = vadd.f32 %v6289, %v6397
        %v6422 = vadd.f32 %v6290, %v6399
        %v6423 = vadd.f32 %v6291, %v6401
        %v6424 = vadd.f32 %v6292, %v6403
        %v6425 = vadd.f32 %v6293, %v6407
        %v6426 = vadd.f32 %v6294, %v6409
        %6427 = vst [vmem:[#allocation2] sm:$0xff] %v6413
        %6428 = vst.msk [vmem:[#allocation2 + $0x8] sm:$0xff] %vm768, %v6414
        %6429 = vst [vmem:[#allocation2 + $0x10] sm:$0xff] %v6415
        %6430 = vst.msk [vmem:[#allocation2 + $0x18] sm:$0xff] %vm768, %v6416
        %6431 = vst [vmem:[#allocation2 + $0x20] sm:$0xff] %v6417
        %6432 = vst.msk [vmem:[#allocation2 + $0x28] sm:$0xff] %vm768, %v6418
        %6433 = vst [vmem:[#allocation2 + $0x30] sm:$0xff] %v6419
        %6434 = vst.msk [vmem:[#allocation2 + $0x38] sm:$0xff] %vm768, %v6420
        %6435 = vst [vmem:[#allocation2 + $0x40] sm:$0xff] %v6421
        %6436 = vst.msk [vmem:[#allocation2 + $0x48] sm:$0xff] %vm768, %v6422
        %6437 = vst [vmem:[#allocation2 + $0x50] sm:$0xff] %v6423
        %6438 = vst.msk [vmem:[#allocation2 + $0x58] sm:$0xff] %vm768, %v6424
        %6439 = vst [vmem:[#allocation2 + $0x60] sm:$0xff] %v6425
        %6440 = vst.msk [vmem:[#allocation2 + $0x68] sm:$0xff] %vm768, %v6426
        %6441 = vmatprep.subr.bf16.mxu0 0
        %6442 = vmatpush1.bf16.msra.mxu0 %v966
        %6443 = vmatprep.subr.bf16.mxu0 0
        %6444 = vmatpush1.bf16.msra.mxu0 0
        %6445 = vmatprep.subr.bf16.mxu0 0
        %6446 = vmatpush1.bf16.msra.mxu0 0
        %6447 = vmatprep.subr.bf16.mxu0 0
        %6448 = vmatpush1.bf16.msra.mxu0 0
        %6449 = vmatprep.subr.bf16.mxu0 0
        %6450 = vmatpush1.bf16.msra.mxu0 0
        %6451 = vmatprep.subr.bf16.mxu0 0
        %6452 = vmatpush1.bf16.msra.mxu0 0
        %6453 = vmatprep.subr.bf16.mxu0 0
        %6454 = vmatpush1.bf16.msra.mxu0 0
        %6455 = vmatprep.subr.bf16.mxu0 0
        %6456 = vmatpush1.bf16.msra.mxu0 0
        %6457 = vmatprep.subr.bf16.mxu0 0
        %6458 = vmatpush1.bf16.msra.mxu0 0
        %6459 = vmatprep.subr.bf16.mxu0 0
        %6460 = vmatpush1.bf16.msra.mxu0 0
        %6461 = vmatprep.subr.bf16.mxu0 0
        %6462 = vmatpush1.bf16.msra.mxu0 0
        %6463 = vmatprep.subr.bf16.mxu0 0
        %6464 = vmatpush1.bf16.msra.mxu0 0
        %6465 = vmatprep.subr.bf16.mxu0 0
        %6466 = vmatpush1.bf16.msra.mxu0 0
        %6467 = vmatprep.subr.bf16.mxu0 0
        %6468 = vmatpush1.bf16.msra.mxu0 0
        %6469 = vmatprep.subr.bf16.mxu0 0
        %6470 = vmatpush1.bf16.msra.mxu0 0
        %6471 = vmatprep.subr.bf16.mxu0 0
        %6472 = vmatpush1.bf16.msra.mxu0 0
        %6473 = vmatprep.mubr.bf16.mxu0 0
        %6474 = vmatmul.mubr.bf16.gmra.mrb[0].mxu0 %v6325
        %v6475 = vpop.f32.mrb[0].mxu0
        %v6476 = vadd.f32 %v751, %v6475
        %v6477 = vpop.f32.mrb[0].mxu0
        %v6478 = vpop.f32.mrb[0].mxu0
        %v6479 = vadd.f32 %v751, %v6478
        %v6480 = vpop.f32.mrb[0].mxu0
        %6481 = vmatprep.mubr.bf16.mxu0 0
        %6482 = vmatmul.mubr.bf16.gmra.mrb[0].mxu0 %v6328
        %v6483 = vpop.f32.mrb[0].mxu0
        %v6484 = vadd.f32 %v751, %v6483
        %v6485 = vpop.f32.mrb[0].mxu0
        %v6486 = vpop.f32.mrb[0].mxu0
        %v6487 = vadd.f32 %v751, %v6486
        %v6488 = vpop.f32.mrb[0].mxu0
        %6489 = vmatprep.mubr.bf16.mxu0 0
        %6490 = vmatmul.mubr.bf16.gmra.mrb[0].mxu0 %v6331
        %v6491 = vpop.f32.mrb[0].mxu0
        %v6492 = vadd.f32 %v751, %v6491
        %v6493 = vpop.f32.mrb[0].mxu0
        %v6494 = vpop.f32.mrb[0].mxu0
        %v6495 = vadd.f32 %v751, %v6494
        %v6496 = vpop.f32.mrb[0].mxu0
        %6497 = vmatprep.mubr.bf16.mxu0 0
        %6498 = vmatmul.mubr.bf16.gmra.mrb[0].mxu0 %v6334
        %v6499 = vpop.f32.mrb[0].mxu0
        %v6500 = vadd.f32 %v751, %v6499
        %v6501 = vpop.f32.mrb[0].mxu0
        %v6502 = vpop.f32.mrb[0].mxu0
        %v6503 = vpop.f32.mrb[0].mxu0
        %6504 = vdwg.mxu0
        %v6505 = vmax.f32 %v6476, 0.0
        %v6506 = vmax.f32 %v6479, 0.0
        %v6507 = vmax.f32 %v6484, 0.0
        %v6508 = vmax.f32 %v6487, 0.0
        %v6509 = vmax.f32 %v6492, 0.0
        %v6510 = vmax.f32 %v6495, 0.0
        %v6511 = vmax.f32 %v6500, 0.0
        %v6512 = vpack.c.bf16 %v6506, %v6505
        %v6513 = vpack.c.bf16 %v6508, %v6507
        %v6514 = vpack.c.bf16 %v6510, %v6509
        %v6515 = vpack.c.bf16 %v6511, %v6511
        %v6516 = vld [vmem:[#allocation3] sm:$0xff]
        %v6517 = vld [vmem:[#allocation3 + $0x8] sm:$0xff]
        %v6518 = vld [vmem:[#allocation3 + $0x10] sm:$0xff]
        %v6519 = vld [vmem:[#allocation3 + $0x18] sm:$0xff]
        %v6520 = vld [vmem:[#allocation3 + $0x20] sm:$0xff]
        %v6521 = vld [vmem:[#allocation3 + $0x28] sm:$0xff]
        %v6522 = vld [vmem:[#allocation3 + $0x30] sm:$0xff]
        %s6523 = scalar_lea.vmem %s5, 256
        %v6524 = vld [vmem:[%s6523] sm:$0xf]
        %v6525 = vld [vmem:[%s6523 + $0x4] sm:$0xf]
        %v6526 = vld [vmem:[%s6523 + $0x8] sm:$0xf]
        %v6527 = vld [vmem:[%s6523 + $0xc] sm:$0xf]
        %v6528 = vld [vmem:[%s6523 + $0x10] sm:$0xf]
        %v6529 = vld [vmem:[%s6523 + $0x14] sm:$0xf]
        %v6530 = vld [vmem:[%s6523 + $0x18] sm:$0xf]
        %v6531 = vld [vmem:[%s6523 + $0x1c] sm:$0xf]
        %v6540 = vunpack.c.l.b16 %v6524
        %v6541 = vunpack.c.l.b16 %v6525
        %v6542 = vunpack.c.l.b16 %v6526
        %v6543 = vunpack.c.l.b16 %v6527
        %v6544 = vunpack.c.l.b16 %v6528
        %v6545 = vunpack.c.l.b16 %v6529
        %v6546 = vunpack.c.l.b16 %v6530
        %v6547 = vunpack.c.l.b16 %v6531
        %v6548 = vpack.c.b16 %v6541, %v6540
        %v6549 = vpack.c.b16 %v6543, %v6542
        %v6550 = vpack.c.b16 %v6545, %v6544
        %v6551 = vpack.c.b16 %v6547, %v6546
        %v6557 = vsel %vm768, %v6512, 0
        %v6560 = vsel %vm768, %v6513, 0
        %v6563 = vsel %vm768, %v6514, 0
        %v6566 = vsel %vm768, %v6515, 0
        %6568 = vmatprep.subr.bf16.mxu0 0
        %6569 = vmatpush1.bf16.msra.mxu0 %v6548
        %6570 = vmatprep.subr.bf16.mxu0 0
        %6571 = vmatpush1.bf16.msra.mxu0 %v6549
        %6572 = vmatprep.subr.bf16.mxu0 0
        %6573 = vmatpush1.bf16.msra.mxu0 %v6550
        %6574 = vmatprep.subr.bf16.mxu0 0
        %6575 = vmatpush1.bf16.msra.mxu0 %v6551
        %6576 = vmatprep.subr.bf16.mxu0 0
        %6577 = vmatpush1.bf16.msra.mxu0 0
        %6578 = vmatprep.subr.bf16.mxu0 0
        %6579 = vmatpush1.bf16.msra.mxu0 0
        %6580 = vmatprep.subr.bf16.mxu0 0
        %6581 = vmatpush1.bf16.msra.mxu0 0
        %6582 = vmatprep.subr.bf16.mxu0 0
        %6583 = vmatpush1.bf16.msra.mxu0 0
        %6584 = vmatprep.subr.bf16.mxu0 0
        %6585 = vmatpush1.bf16.msra.mxu0 0
        %6586 = vmatprep.subr.bf16.mxu0 0
        %6587 = vmatpush1.bf16.msra.mxu0 0
        %6588 = vmatprep.subr.bf16.mxu0 0
        %6589 = vmatpush1.bf16.msra.mxu0 0
        %6590 = vmatprep.subr.bf16.mxu0 0
        %6591 = vmatpush1.bf16.msra.mxu0 0
        %6592 = vmatprep.subr.bf16.mxu0 0
        %6593 = vmatpush1.bf16.msra.mxu0 0
        %6594 = vmatprep.subr.bf16.mxu0 0
        %6595 = vmatpush1.bf16.msra.mxu0 0
        %6596 = vmatprep.subr.bf16.mxu0 0
        %6597 = vmatpush1.bf16.msra.mxu0 0
        %6598 = vmatprep.subr.bf16.mxu0 0
        %6599 = vmatpush1.bf16.msra.mxu0 0
        %6600 = vmatprep.mubr.bf16.mxu0 0
        %6601 = vmatmul.mubr.bf16.gmra.mrb[0].mxu0 %v6557
        %v6602 = vpop.f32.mrb[0].mxu0
        %v6603 = vadd.f32 0.0, %v6602
        %v6604 = vpop.f32.mrb[0].mxu0
        %v6605 = vpop.f32.mrb[0].mxu0
        %v6606 = vadd.f32 0.0, %v6605
        %v6607 = vpop.f32.mrb[0].mxu0
        %6608 = vmatprep.mubr.bf16.mxu0 0
        %6609 = vmatmul.mubr.bf16.gmra.mrb[0].mxu0 %v6560
        %v6610 = vpop.f32.mrb[0].mxu0
        %v6611 = vadd.f32 0.0, %v6610
        %v6612 = vpop.f32.mrb[0].mxu0
        %v6613 = vpop.f32.mrb[0].mxu0
        %v6614 = vadd.f32 0.0, %v6613
        %v6615 = vpop.f32.mrb[0].mxu0
        %6616 = vmatprep.mubr.bf16.mxu0 0
        %6617 = vmatmul.mubr.bf16.gmra.mrb[0].mxu0 %v6563
        %v6618 = vpop.f32.mrb[0].mxu0
        %v6619 = vadd.f32 0.0, %v6618
        %v6620 = vpop.f32.mrb[0].mxu0
        %v6621 = vpop.f32.mrb[0].mxu0
        %v6622 = vadd.f32 0.0, %v6621
        %v6623 = vpop.f32.mrb[0].mxu0
        %6624 = vmatprep.mubr.bf16.mxu0 0
        %6625 = vmatmul.mubr.bf16.gmra.mrb[0].mxu0 %v6566
        %v6626 = vpop.f32.mrb[0].mxu0
        %v6627 = vadd.f32 0.0, %v6626
        %v6628 = vpop.f32.mrb[0].mxu0
        %v6629 = vpop.f32.mrb[0].mxu0
        %v6630 = vpop.f32.mrb[0].mxu0
        %6631 = vdwg.mxu0
        %v6632 = vadd.f32 %v6516, %v6603
        %v6633 = vadd.f32 %v6517, %v6606
        %v6634 = vadd.f32 %v6518, %v6611
        %v6635 = vadd.f32 %v6519, %v6614
        %v6636 = vadd.f32 %v6520, %v6619
        %v6637 = vadd.f32 %v6521, %v6622
        %v6638 = vadd.f32 %v6522, %v6627
        %6639 = vst.msk [vmem:[#allocation3] sm:$0xff] %vm782, %v6632
        %6640 = vst.msk [vmem:[#allocation3 + $0x8] sm:$0xff] %vm782, %v6633
        %6641 = vst.msk [vmem:[#allocation3 + $0x10] sm:$0xff] %vm782, %v6634
        %6642 = vst.msk [vmem:[#allocation3 + $0x18] sm:$0xff] %vm782, %v6635
        %6643 = vst.msk [vmem:[#allocation3 + $0x20] sm:$0xff] %vm782, %v6636
        %6644 = vst.msk [vmem:[#allocation3 + $0x28] sm:$0xff] %vm782, %v6637
        %6645 = vst.msk [vmem:[#allocation3 + $0x30] sm:$0xff] %vm782, %v6638
        %6646 = vmatprep.subr.bf16.mxu0 0
        %6647 = vmatpush1.bf16.msra.mxu0 %v1173
        %6648 = vmatprep.subr.bf16.mxu0 0
        %6649 = vmatpush1.bf16.msra.mxu0 0
        %6650 = vmatprep.subr.bf16.mxu0 0
        %6651 = vmatpush1.bf16.msra.mxu0 0
        %6652 = vmatprep.subr.bf16.mxu0 0
        %6653 = vmatpush1.bf16.msra.mxu0 0
        %6654 = vmatprep.subr.bf16.mxu0 0
        %6655 = vmatpush1.bf16.msra.mxu0 0
        %6656 = vmatprep.subr.bf16.mxu0 0
        %6657 = vmatpush1.bf16.msra.mxu0 0
        %6658 = vmatprep.subr.bf16.mxu0 0
        %6659 = vmatpush1.bf16.msra.mxu0 0
        %6660 = vmatprep.subr.bf16.mxu0 0
        %6661 = vmatpush1.bf16.msra.mxu0 0
        %6662 = vmatprep.subr.bf16.mxu0 0
        %6663 = vmatpush1.bf16.msra.mxu0 0
        %6664 = vmatprep.subr.bf16.mxu0 0
        %6665 = vmatpush1.bf16.msra.mxu0 0
        %6666 = vmatprep.subr.bf16.mxu0 0
        %6667 = vmatpush1.bf16.msra.mxu0 0
        %6668 = vmatprep.subr.bf16.mxu0 0
        %6669 = vmatpush1.bf16.msra.mxu0 0
        %6670 = vmatprep.subr.bf16.mxu0 0
        %6671 = vmatpush1.bf16.msra.mxu0 0
        %6672 = vmatprep.subr.bf16.mxu0 0
        %6673 = vmatpush1.bf16.msra.mxu0 0
        %6674 = vmatprep.subr.bf16.mxu0 0
        %6675 = vmatpush1.bf16.msra.mxu0 0
        %6676 = vmatprep.subr.bf16.mxu0 0
        %6677 = vmatpush1.bf16.msra.mxu0 0
        %6678 = vmatprep.mubr.bf16.mxu0 0
        %6679 = vmatmul.mubr.bf16.gmra.mrb[0].mxu0 %v6325
        %v6680 = vpop.f32.mrb[0].mxu0
        %v6681 = vadd.f32 %v758, %v6680
        %v6682 = vpop.f32.mrb[0].mxu0
        %v6683 = vpop.f32.mrb[0].mxu0
        %v6684 = vadd.f32 %v758, %v6683
        %v6685 = vpop.f32.mrb[0].mxu0
        %6686 = vmatprep.mubr.bf16.mxu0 0
        %6687 = vmatmul.mubr.bf16.gmra.mrb[0].mxu0 %v6328
        %v6688 = vpop.f32.mrb[0].mxu0
        %v6689 = vadd.f32 %v758, %v6688
        %v6690 = vpop.f32.mrb[0].mxu0
        %v6691 = vpop.f32.mrb[0].mxu0
        %v6692 = vadd.f32 %v758, %v6691
        %v6693 = vpop.f32.mrb[0].mxu0
        %6694 = vmatprep.mubr.bf16.mxu0 0
        %6695 = vmatmul.mubr.bf16.gmra.mrb[0].mxu0 %v6331
        %v6696 = vpop.f32.mrb[0].mxu0
        %v6697 = vadd.f32 %v758, %v6696
        %v6698 = vpop.f32.mrb[0].mxu0
        %v6699 = vpop.f32.mrb[0].mxu0
        %v6700 = vadd.f32 %v758, %v6699
        %v6701 = vpop.f32.mrb[0].mxu0
        %6702 = vmatprep.mubr.bf16.mxu0 0
        %6703 = vmatmul.mubr.bf16.gmra.mrb[0].mxu0 %v6334
        %v6704 = vpop.f32.mrb[0].mxu0
        %v6705 = vadd.f32 %v758, %v6704
        %v6706 = vpop.f32.mrb[0].mxu0
        %v6707 = vpop.f32.mrb[0].mxu0
        %v6708 = vpop.f32.mrb[0].mxu0
        %6709 = vdwg.mxu0
        %v6710 = vmax.f32 %v6681, 0.0
        %v6711 = vmax.f32 %v6684, 0.0
        %v6712 = vmax.f32 %v6689, 0.0
        %v6713 = vmax.f32 %v6692, 0.0
        %v6714 = vmax.f32 %v6697, 0.0
        %v6715 = vmax.f32 %v6700, 0.0
        %v6716 = vmax.f32 %v6705, 0.0
        %v6717 = vpack.c.bf16 %v6711, %v6710
        %v6718 = vpack.c.bf16 %v6713, %v6712
        %v6719 = vpack.c.bf16 %v6715, %v6714
        %v6720 = vpack.c.bf16 %v6716, %v6716
        %v6722 = vsel %vm768, %v6717, 0
        %v6725 = vsel %vm768, %v6718, 0
        %v6728 = vsel %vm768, %v6719, 0
        %v6731 = vsel %vm768, %v6720, 0
        %6733 = vmatprep.subr.bf16.mxu0 0
        %6734 = vmatpush1.bf16.msra.mxu0 %v1266
        %6735 = vmatprep.subr.bf16.mxu0 0
        %6736 = vmatpush1.bf16.msra.mxu0 %v1267
        %6737 = vmatprep.subr.bf16.mxu0 0
        %6738 = vmatpush1.bf16.msra.mxu0 %v1268
        %6739 = vmatprep.subr.bf16.mxu0 0
        %6740 = vmatpush1.bf16.msra.mxu0 %v1269
        %6741 = vmatprep.subr.bf16.mxu0 0
        %6742 = vmatpush1.bf16.msra.mxu0 0
        %6743 = vmatprep.subr.bf16.mxu0 0
        %6744 = vmatpush1.bf16.msra.mxu0 0
        %6745 = vmatprep.subr.bf16.mxu0 0
        %6746 = vmatpush1.bf16.msra.mxu0 0
        %6747 = vmatprep.subr.bf16.mxu0 0
        %6748 = vmatpush1.bf16.msra.mxu0 0
        %6749 = vmatprep.subr.bf16.mxu0 0
        %6750 = vmatpush1.bf16.msra.mxu0 0
        %6751 = vmatprep.subr.bf16.mxu0 0
        %6752 = vmatpush1.bf16.msra.mxu0 0
        %6753 = vmatprep.subr.bf16.mxu0 0
        %6754 = vmatpush1.bf16.msra.mxu0 0
        %6755 = vmatprep.subr.bf16.mxu0 0
        %6756 = vmatpush1.bf16.msra.mxu0 0
        %6757 = vmatprep.subr.bf16.mxu0 0
        %6758 = vmatpush1.bf16.msra.mxu0 0
        %6759 = vmatprep.subr.bf16.mxu0 0
        %6760 = vmatpush1.bf16.msra.mxu0 0
        %6761 = vmatprep.subr.bf16.mxu0 0
        %6762 = vmatpush1.bf16.msra.mxu0 0
        %6763 = vmatprep.subr.bf16.mxu0 0
        %6764 = vmatpush1.bf16.msra.mxu0 0
        %6765 = vmatprep.mubr.bf16.mxu0 0
        %6766 = vmatmul.mubr.bf16.gmra.mrb[0].mxu0 %v6722
        %v6767 = vpop.f32.mrb[0].mxu0
        %v6768 = vadd.f32 %v765, %v6767
        %v6769 = vpop.f32.mrb[0].mxu0
        %v6770 = vpop.f32.mrb[0].mxu0
        %v6771 = vadd.f32 %v765, %v6770
        %v6772 = vpop.f32.mrb[0].mxu0
        %6773 = vmatprep.mubr.bf16.mxu0 0
        %6774 = vmatmul.mubr.bf16.gmra.mrb[0].mxu0 %v6725
        %v6775 = vpop.f32.mrb[0].mxu0
        %v6776 = vadd.f32 %v765, %v6775
        %v6777 = vpop.f32.mrb[0].mxu0
        %v6778 = vpop.f32.mrb[0].mxu0
        %v6779 = vadd.f32 %v765, %v6778
        %v6780 = vpop.f32.mrb[0].mxu0
        %6781 = vmatprep.mubr.bf16.mxu0 0
        %6782 = vmatmul.mubr.bf16.gmra.mrb[0].mxu0 %v6728
        %v6783 = vpop.f32.mrb[0].mxu0
        %v6784 = vadd.f32 %v765, %v6783
        %v6785 = vpop.f32.mrb[0].mxu0
        %v6786 = vpop.f32.mrb[0].mxu0
        %v6787 = vadd.f32 %v765, %v6786
        %v6788 = vpop.f32.mrb[0].mxu0
        %6789 = vmatprep.mubr.bf16.mxu0 0
        %6790 = vmatmul.mubr.bf16.gmra.mrb[0].mxu0 %v6731
        %v6791 = vpop.f32.mrb[0].mxu0
        %v6792 = vadd.f32 %v765, %v6791
        %v6793 = vpop.f32.mrb[0].mxu0
        %v6794 = vpop.f32.mrb[0].mxu0
        %v6795 = vpop.f32.mrb[0].mxu0
        %6796 = vdwg.mxu0
        %v6797 = vmax.f32 %v6768, 0.0
        %v6798 = vmax.f32 %v6771, 0.0
        %v6799 = vmax.f32 %v6776, 0.0
        %v6800 = vmax.f32 %v6779, 0.0
        %v6801 = vmax.f32 %v6784, 0.0
        %v6802 = vmax.f32 %v6787, 0.0
        %v6803 = vmax.f32 %v6792, 0.0
        %v6804 = vpack.c.bf16 %v6798, %v6797
        %v6805 = vpack.c.bf16 %v6800, %v6799
        %v6806 = vpack.c.bf16 %v6802, %v6801
        %v6807 = vpack.c.bf16 %v6803, %v6803
        %v6808 = vld [vmem:[#allocation4] sm:$0xff]
        %v6809 = vld [vmem:[#allocation4 + $0x8] sm:$0xff]
        %v6810 = vld [vmem:[#allocation4 + $0x10] sm:$0xff]
        %v6811 = vld [vmem:[#allocation4 + $0x18] sm:$0xff]
        %v6812 = vld [vmem:[#allocation4 + $0x20] sm:$0xff]
        %v6813 = vld [vmem:[#allocation4 + $0x28] sm:$0xff]
        %v6814 = vld [vmem:[#allocation4 + $0x30] sm:$0xff]
        %s6815 = scalar_lea.vmem %s11, 384
        %v6816 = vld [vmem:[%s6815] sm:$0xf]
        %v6817 = vld [vmem:[%s6815 + $0x4] sm:$0xf]
        %v6818 = vld [vmem:[%s6815 + $0x8] sm:$0xf]
        %v6819 = vld [vmem:[%s6815 + $0xc] sm:$0xf]
        %v6820 = vld [vmem:[%s6815 + $0x10] sm:$0xf]
        %v6821 = vld [vmem:[%s6815 + $0x14] sm:$0xf]
        %v6822 = vld [vmem:[%s6815 + $0x18] sm:$0xf]
        %v6823 = vld [vmem:[%s6815 + $0x1c] sm:$0xf]
        %v6824 = vld [vmem:[%s6815 + $0x20] sm:$0xf]
        %v6825 = vld [vmem:[%s6815 + $0x24] sm:$0xf]
        %v6826 = vld [vmem:[%s6815 + $0x28] sm:$0xf]
        %v6827 = vld [vmem:[%s6815 + $0x2c] sm:$0xf]
        %v6840 = vunpack.c.l.b16 %v6816
        %v6841 = vunpack.c.l.b16 %v6817
        %v6842 = vunpack.c.l.b16 %v6818
        %v6843 = vunpack.c.l.b16 %v6819
        %v6844 = vunpack.c.l.b16 %v6820
        %v6845 = vunpack.c.l.b16 %v6821
        %v6846 = vunpack.c.l.b16 %v6822
        %v6847 = vunpack.c.l.b16 %v6823
        %v6848 = vunpack.c.l.b16 %v6824
        %v6849 = vunpack.c.l.b16 %v6825
        %v6850 = vunpack.c.l.b16 %v6826
        %v6851 = vunpack.c.l.b16 %v6827
        %v6852 = vpack.c.b16 %v6841, %v6840
        %v6853 = vpack.c.b16 %v6843, %v6842
        %v6854 = vpack.c.b16 %v6845, %v6844
        %v6855 = vpack.c.b16 %v6847, %v6846
        %v6856 = vpack.c.b16 %v6849, %v6848
        %v6857 = vpack.c.b16 %v6851, %v6850
        %v6865 = vsel %vm782, %v6804, 0
        %v6868 = vsel %vm782, %v6805, 0
        %v6871 = vsel %vm782, %v6806, 0
        %v6874 = vsel %vm782, %v6807, 0
        %6876 = vmatprep.subr.bf16.mxu0 0
        %6877 = vmatpush1.bf16.msra.mxu0 %v6852
        %6878 = vmatprep.subr.bf16.mxu0 0
        %6879 = vmatpush1.bf16.msra.mxu0 %v6853
        %6880 = vmatprep.subr.bf16.mxu0 0
        %6881 = vmatpush1.bf16.msra.mxu0 %v6854
        %6882 = vmatprep.subr.bf16.mxu0 0
        %6883 = vmatpush1.bf16.msra.mxu0 %v6855
        %6884 = vmatprep.subr.bf16.mxu0 0
        %6885 = vmatpush1.bf16.msra.mxu0 %v6856
        %6886 = vmatprep.subr.bf16.mxu0 0
        %6887 = vmatpush1.bf16.msra.mxu0 %v6857
        %6888 = vmatprep.subr.bf16.mxu0 0
        %6889 = vmatpush1.bf16.msra.mxu0 0
        %6890 = vmatprep.subr.bf16.mxu0 0
        %6891 = vmatpush1.bf16.msra.mxu0 0
        %6892 = vmatprep.subr.bf16.mxu0 0
        %6893 = vmatpush1.bf16.msra.mxu0 0
        %6894 = vmatprep.subr.bf16.mxu0 0
        %6895 = vmatpush1.bf16.msra.mxu0 0
        %6896 = vmatprep.subr.bf16.mxu0 0
        %6897 = vmatpush1.bf16.msra.mxu0 0
        %6898 = vmatprep.subr.bf16.mxu0 0
        %6899 = vmatpush1.bf16.msra.mxu0 0
        %6900 = vmatprep.subr.bf16.mxu0 0
        %6901 = vmatpush1.bf16.msra.mxu0 0
        %6902 = vmatprep.subr.bf16.mxu0 0
        %6903 = vmatpush1.bf16.msra.mxu0 0
        %6904 = vmatprep.subr.bf16.mxu0 0
        %6905 = vmatpush1.bf16.msra.mxu0 0
        %6906 = vmatprep.subr.bf16.mxu0 0
        %6907 = vmatpush1.bf16.msra.mxu0 0
        %6908 = vmatprep.mubr.bf16.mxu0 0
        %6909 = vmatmul.mubr.bf16.gmra.mrb[0].mxu0 %v6865
        %v6910 = vpop.f32.mrb[0].mxu0
        %v6911 = vadd.f32 0.0, %v6910
        %v6912 = vpop.f32.mrb[0].mxu0
        %v6913 = vpop.f32.mrb[0].mxu0
        %v6914 = vadd.f32 0.0, %v6913
        %v6915 = vpop.f32.mrb[0].mxu0
        %6916 = vmatprep.mubr.bf16.mxu0 0
        %6917 = vmatmul.mubr.bf16.gmra.mrb[0].mxu0 %v6868
        %v6918 = vpop.f32.mrb[0].mxu0
        %v6919 = vadd.f32 0.0, %v6918
        %v6920 = vpop.f32.mrb[0].mxu0
        %v6921 = vpop.f32.mrb[0].mxu0
        %v6922 = vadd.f32 0.0, %v6921
        %v6923 = vpop.f32.mrb[0].mxu0
        %6924 = vmatprep.mubr.bf16.mxu0 0
        %6925 = vmatmul.mubr.bf16.gmra.mrb[0].mxu0 %v6871
        %v6926 = vpop.f32.mrb[0].mxu0
        %v6927 = vadd.f32 0.0, %v6926
        %v6928 = vpop.f32.mrb[0].mxu0
        %v6929 = vpop.f32.mrb[0].mxu0
        %v6930 = vadd.f32 0.0, %v6929
        %v6931 = vpop.f32.mrb[0].mxu0
        %6932 = vmatprep.mubr.bf16.mxu0 0
        %6933 = vmatmul.mubr.bf16.gmra.mrb[0].mxu0 %v6874
        %v6934 = vpop.f32.mrb[0].mxu0
        %v6935 = vadd.f32 0.0, %v6934
        %v6936 = vpop.f32.mrb[0].mxu0
        %v6937 = vpop.f32.mrb[0].mxu0
        %v6938 = vpop.f32.mrb[0].mxu0
        %6939 = vdwg.mxu0
        %v6940 = vadd.f32 %v6808, %v6911
        %v6941 = vadd.f32 %v6809, %v6914
        %v6942 = vadd.f32 %v6810, %v6919
        %v6943 = vadd.f32 %v6811, %v6922
        %v6944 = vadd.f32 %v6812, %v6927
        %v6945 = vadd.f32 %v6813, %v6930
        %v6946 = vadd.f32 %v6814, %v6935
        %6947 = vst.msk [vmem:[#allocation4] sm:$0xff] %vm782, %v6940
        %6948 = vst.msk [vmem:[#allocation4 + $0x8] sm:$0xff] %vm782, %v6941
        %6949 = vst.msk [vmem:[#allocation4 + $0x10] sm:$0xff] %vm782, %v6942
        %6950 = vst.msk [vmem:[#allocation4 + $0x18] sm:$0xff] %vm782, %v6943
        %6951 = vst.msk [vmem:[#allocation4 + $0x20] sm:$0xff] %vm782, %v6944
        %6952 = vst.msk [vmem:[#allocation4 + $0x28] sm:$0xff] %vm782, %v6945
        %6953 = vst.msk [vmem:[#allocation4 + $0x30] sm:$0xff] %vm782, %v6946
        %v6954 = vld [vmem:[#allocation2] sm:$0xff]
        %v6955 = vld [vmem:[#allocation2 + $0x8] sm:$0xff]
        %v6956 = vld [vmem:[#allocation2 + $0x10] sm:$0xff]
        %v6957 = vld [vmem:[#allocation2 + $0x18] sm:$0xff]
        %v6958 = vld [vmem:[#allocation2 + $0x20] sm:$0xff]
        %v6959 = vld [vmem:[#allocation2 + $0x28] sm:$0xff]
        %v6960 = vld [vmem:[#allocation2 + $0x30] sm:$0xff]
        %v6961 = vld [vmem:[#allocation2 + $0x38] sm:$0xff]
        %v6962 = vld [vmem:[#allocation2 + $0x40] sm:$0xff]
        %v6963 = vld [vmem:[#allocation2 + $0x48] sm:$0xff]
        %v6964 = vld [vmem:[#allocation2 + $0x50] sm:$0xff]
        %v6965 = vld [vmem:[#allocation2 + $0x58] sm:$0xff]
        %v6966 = vld [vmem:[#allocation2 + $0x60] sm:$0xff]
        %v6967 = vld [vmem:[#allocation2 + $0x68] sm:$0xff]
        %v6968 = vld [vmem:[%s2] sm:$0x3]
        %v6970 = vlaneseq
        %v6971 = vshrl.u32 %v6970, 7
        %v6972 = vsub.s32 0, %v6971
        %v6973 = vrot.slane %v6968, %v6972
        %v6974 = vlaneseq
        %v6975 = vshrl.u32 %v6974, 7
        %v6976 = vsub.s32 1, %v6975
        %v6977 = vrot.slane %v6968, %v6976
        %v6980 = vadd.f32 %v6954, %v6973
        %v6981 = vadd.f32 %v6955, %v6977
        %v6982 = vadd.f32 %v6956, %v6973
        %v6983 = vadd.f32 %v6957, %v6977
        %v6984 = vadd.f32 %v6958, %v6973
        %v6985 = vadd.f32 %v6959, %v6977
        %v6986 = vadd.f32 %v6960, %v6973
        %v6987 = vadd.f32 %v6961, %v6977
        %v6988 = vadd.f32 %v6962, %v6973
        %v6989 = vadd.f32 %v6963, %v6977
        %v6990 = vadd.f32 %v6964, %v6973
        %v6991 = vadd.f32 %v6965, %v6977
        %v6992 = vadd.f32 %v6966, %v6973
        %v6993 = vadd.f32 %v6967, %v6977
        %v6994 = vmax.f32 %v6980, 0.0
        %v6995 = vmax.f32 %v6981, 0.0
        %v6996 = vmax.f32 %v6982, 0.0
        %v6997 = vmax.f32 %v6983, 0.0
        %v6998 = vmax.f32 %v6984, 0.0
        %v6999 = vmax.f32 %v6985, 0.0
        %v7000 = vmax.f32 %v6986, 0.0
        %v7001 = vmax.f32 %v6987, 0.0
        %v7002 = vmax.f32 %v6988, 0.0
        %v7003 = vmax.f32 %v6989, 0.0
        %v7004 = vmax.f32 %v6990, 0.0
        %v7005 = vmax.f32 %v6991, 0.0
        %v7006 = vmax.f32 %v6992, 0.0
        %v7007 = vmax.f32 %v6993, 0.0
        %v7008 = vpack.c.bf16 %v6996, %v6994
        %v7009 = vpack.c.bf16 %v6997, %v6995
        %v7010 = vpack.c.bf16 %v7000, %v6998
        %v7011 = vpack.c.bf16 %v7001, %v6999
        %v7012 = vpack.c.bf16 %v7004, %v7002
        %v7013 = vpack.c.bf16 %v7005, %v7003
        %v7014 = vpack.c.bf16 %v7006, %v7006
        %v7015 = vpack.c.bf16 %v7007, %v7007
        %v7016 = vld [vmem:[#allocation3] sm:$0xff]
        %v7017 = vld [vmem:[#allocation3 + $0x8] sm:$0xff]
        %v7018 = vld [vmem:[#allocation3 + $0x10] sm:$0xff]
        %v7019 = vld [vmem:[#allocation3 + $0x18] sm:$0xff]
        %v7020 = vld [vmem:[#allocation3 + $0x20] sm:$0xff]
        %v7021 = vld [vmem:[#allocation3 + $0x28] sm:$0xff]
        %v7022 = vld [vmem:[#allocation3 + $0x30] sm:$0xff]
        %v7023 = vld [vmem:[%s6] sm:$0x1]
        %v7025 = vlaneseq
        %v7026 = vshrl.u32 %v7025, 7
        %v7027 = vsub.s32 0, %v7026
        %v7028 = vrot.slane %v7023, %v7027
        %v7030 = vadd.f32 %v7016, %v7028
        %v7031 = vadd.f32 %v7017, %v7028
        %v7032 = vadd.f32 %v7018, %v7028
        %v7033 = vadd.f32 %v7019, %v7028
        %v7034 = vadd.f32 %v7020, %v7028
        %v7035 = vadd.f32 %v7021, %v7028
        %v7036 = vadd.f32 %v7022, %v7028
        %v7037 = vmax.f32 %v7030, 0.0
        %v7038 = vmax.f32 %v7031, 0.0
        %v7039 = vmax.f32 %v7032, 0.0
        %v7040 = vmax.f32 %v7033, 0.0
        %v7041 = vmax.f32 %v7034, 0.0
        %v7042 = vmax.f32 %v7035, 0.0
        %v7043 = vmax.f32 %v7036, 0.0
        %v7044 = vpack.c.bf16 %v7038, %v7037
        %v7045 = vpack.c.bf16 %v7040, %v7039
        %v7046 = vpack.c.bf16 %v7042, %v7041
        %v7047 = vpack.c.bf16 %v7043, %v7043
        %v7048 = vld [vmem:[#allocation4] sm:$0xff]
        %v7049 = vld [vmem:[#allocation4 + $0x8] sm:$0xff]
        %v7050 = vld [vmem:[#allocation4 + $0x10] sm:$0xff]
        %v7051 = vld [vmem:[#allocation4 + $0x18] sm:$0xff]
        %v7052 = vld [vmem:[#allocation4 + $0x20] sm:$0xff]
        %v7053 = vld [vmem:[#allocation4 + $0x28] sm:$0xff]
        %v7054 = vld [vmem:[#allocation4 + $0x30] sm:$0xff]
        %v7055 = vld [vmem:[%s12] sm:$0x1]
        %v7057 = vlaneseq
        %v7058 = vshrl.u32 %v7057, 7
        %v7059 = vsub.s32 0, %v7058
        %v7060 = vrot.slane %v7055, %v7059
        %v7062 = vadd.f32 %v7048, %v7060
        %v7063 = vadd.f32 %v7049, %v7060
        %v7064 = vadd.f32 %v7050, %v7060
        %v7065 = vadd.f32 %v7051, %v7060
        %v7066 = vadd.f32 %v7052, %v7060
        %v7067 = vadd.f32 %v7053, %v7060
        %v7068 = vadd.f32 %v7054, %v7060
        %v7069 = vmax.f32 %v7062, 0.0
        %v7070 = vmax.f32 %v7063, 0.0
        %v7071 = vmax.f32 %v7064, 0.0
        %v7072 = vmax.f32 %v7065, 0.0
        %v7073 = vmax.f32 %v7066, 0.0
        %v7074 = vmax.f32 %v7067, 0.0
        %v7075 = vmax.f32 %v7068, 0.0
        %v7076 = vpack.c.bf16 %v7070, %v7069
        %v7077 = vpack.c.bf16 %v7072, %v7071
        %v7078 = vpack.c.bf16 %v7074, %v7073
        %v7079 = vpack.c.bf16 %v7075, %v7075
        %7084 = vrot.lane.b32.xlu0 %v7044, 64
        %v7085 = vpop.permute.xlu0 %7084
        %7086 = vrot.lane.b32.xlu0 %v7045, 64
        %v7087 = vpop.permute.xlu0 %7086
        %7088 = vrot.lane.b32.xlu0 %v7046, 64
        %v7089 = vpop.permute.xlu0 %7088
        %7090 = vrot.lane.b32.xlu0 %v7047, 64
        %v7091 = vpop.permute.xlu0 %7090
        %7096 = vrot.lane.b32.xlu0 %v7076, 32
        %v7097 = vpop.permute.xlu0 %7096
        %7098 = vrot.lane.b32.xlu0 %v7077, 32
        %v7099 = vpop.permute.xlu0 %7098
        %7100 = vrot.lane.b32.xlu0 %v7078, 32
        %v7101 = vpop.permute.xlu0 %7100
        %7102 = vrot.lane.b32.xlu0 %v7079, 32
        %v7103 = vpop.permute.xlu0 %7102
        %v7106 = vsel %vm768, %v7009, %v7085
        %v7109 = vsel %vm768, %v7011, %v7087
        %v7112 = vsel %vm768, %v7013, %v7089
        %v7115 = vsel %vm768, %v7015, %v7091
        %vm7116 = vcmask 261120
        %v7118 = vsel %vm7116, %v7085, %v7097
        %v7120 = vsel %vm7116, %v7087, %v7099
        %v7122 = vsel %vm7116, %v7089, %v7101
        %v7124 = vsel %vm7116, %v7091, %v7103
        %v7137 = vunpack.c.l.b16 %v7008
        %v7138 = vunpack.c.l.b16 %v7106
        %v7139 = vunpack.c.l.b16 %v7118
        %v7140 = vunpack.c.h.b16 %v7008
        %v7141 = vunpack.c.h.b16 %v7106
        %v7142 = vunpack.c.h.b16 %v7118
        %v7143 = vunpack.c.l.b16 %v7010
        %v7144 = vunpack.c.l.b16 %v7109
        %v7145 = vunpack.c.l.b16 %v7120
        %v7146 = vunpack.c.h.b16 %v7010
        %v7147 = vunpack.c.h.b16 %v7109
        %v7148 = vunpack.c.h.b16 %v7120
        %v7149 = vunpack.c.l.b16 %v7012
        %v7150 = vunpack.c.l.b16 %v7112
        %v7151 = vunpack.c.l.b16 %v7122
        %v7152 = vunpack.c.h.b16 %v7012
        %v7153 = vunpack.c.h.b16 %v7112
        %v7154 = vunpack.c.h.b16 %v7122
        %v7155 = vunpack.c.l.b16 %v7014
        %v7156 = vunpack.c.l.b16 %v7115
        %v7157 = vunpack.c.l.b16 %v7124
        %v7158 = vpack.c.b16 %v7138, %v7137
        %v7159 = vpack.c.b16 %v7139, %v7139
        %v7160 = vpack.c.b16 %v7141, %v7140
        %v7161 = vpack.c.b16 %v7142, %v7142
        %v7162 = vpack.c.b16 %v7144, %v7143
        %v7163 = vpack.c.b16 %v7145, %v7145
        %v7164 = vpack.c.b16 %v7147, %v7146
        %v7165 = vpack.c.b16 %v7148, %v7148
        %v7166 = vpack.c.b16 %v7150, %v7149
        %v7167 = vpack.c.b16 %v7151, %v7151
        %v7168 = vpack.c.b16 %v7153, %v7152
        %v7169 = vpack.c.b16 %v7154, %v7154
        %v7170 = vpack.c.b16 %v7156, %v7155
        %v7171 = vpack.c.b16 %v7157, %v7157
        %7186 = vst [vmem:[%s733] sm:$0xff] %v7158
        %7187 = vst [vmem:[%s733 + $0x8] sm:$0xf] %v7159
        %7188 = vst [vmem:[%s733 + $0xc] sm:$0xff] %v7160
        %7189 = vst [vmem:[%s733 + $0x14] sm:$0xf] %v7161
        %7190 = vst [vmem:[%s733 + $0x18] sm:$0xff] %v7162
        %7191 = vst [vmem:[%s733 + $0x20] sm:$0xf] %v7163
        %7192 = vst [vmem:[%s733 + $0x24] sm:$0xff] %v7164
        %7193 = vst [vmem:[%s733 + $0x2c] sm:$0xf] %v7165
        %7194 = vst [vmem:[%s733 + $0x30] sm:$0xff] %v7166
        %7195 = vst [vmem:[%s733 + $0x38] sm:$0xf] %v7167
        %7196 = vst [vmem:[%s733 + $0x3c] sm:$0xff] %v7168
        %7197 = vst [vmem:[%s733 + $0x44] sm:$0xf] %v7169
        %7198 = vst [vmem:[%s733 + $0x48] sm:$0xff] %v7170
        %7199 = vst [vmem:[%s733 + $0x50] sm:$0xf] %v7171
        %s7200 = smul.u32 7, %s24
        %p7201 = scmp.lt.s32.totalorder %s7200, 13
        %s7202 = scalar_select %p7201, %s7200, 13
        %s7203 = smul.addr %s7202, 3
        %s7204 = smul.addr %s7203, 4
        %s7205 = scalar_lea.vmem %s13, %s7204
        // Predicated region
        $region114: #{inception_a_forward.1} parent=108 // pred_check
          %p7206 = pneg %p320
        $region115: #{inception_a_forward.1} parent=108 // pred_check_branch
          %7208 = sbr.rel (%p7206) target = $region117
        $region116: #{inception_a_forward.1} parent=108 // pred_region
          %s7209 = smul.u32 7, %s24
        $region117: #{inception_a_forward.1} parent=108 // pred_fallthru
          _
      $region109: #{inception_a_forward.1} parent=5 // pred_fallthru
        _
      %p7210 = scmp.le.s32.totalorder 2, %s19
      // Predicated region
      $region118: #{inception_a_forward.1} parent=5 // pred_check
        %p7211 = pneg %p7210
      $region119: #{inception_a_forward.1} parent=5 // pred_check_branch
        %7213 = sbr.rel (%p7211) target = $region121
      $region120: #{inception_a_forward.1} parent=5 // pred_region
        %s7214 = ssub.s32 %s19, 2
        // Predicated region
        $region122: #{inception_a_forward.1} parent=120 // pred_check
          %p7215 = pneg %p326
        $region123: #{inception_a_forward.1} parent=120 // pred_check_branch
          %7217 = sbr.rel (%p7215) target = $region125
        $region124: #{inception_a_forward.1} parent=120 // pred_region
          %s7218 = smul.u32 7, %s25
          %p7219 = scmp.lt.s32.totalorder %s7218, 13
          %s7220 = scalar_select %p7219, %s7218, 13
          %s7221 = smul.addr %s7220, 3
          %s7222 = smul.addr %s7221, 4
          %s7223 = scalar_lea.vmem %s13, %s7222
        $region125: #{inception_a_forward.1} parent=120 // pred_fallthru
          _
      $region121: #{inception_a_forward.1} parent=5 // pred_fallthru
        _
    $region6: #{inception_a_forward.1} parent=1 // loop_footer
      %s23 = sadd.s32 1, %s19
    $region7: #{inception_a_forward.1} parent=1 // loop_footer_branch
      %18 = sbr.rel target = $region3
    $region8: #{inception_a_forward.1} parent=1 // loop_exit
      _

</llo_original>
